<compile_context>
chip_gen: v7x
topology: tpu7x:2x2x1
jax: 0.10.0
libtpu: 0.0.40
codegen_flags: <defaults>
</compile_context>

<pallas_src>
import jax
import jax.numpy as jnp
import numpy as np
from jax.experimental import pallas as pl
from jax.experimental.pallas import tpu as pltpu


# ------------------------------ fused kernel ------------------------------ #
def _make_fused_kernel(meta, batch, has_head):
    """meta: per *body* layer (kh, kw, cin, cout, hin, win, hout, wout)."""
    n_body = len(meta)
    n_w = n_body + (1 if has_head else 0)

    def kernel(x_ref, *rest):
        w_refs = rest[:n_body]
        head_ref = rest[n_body] if has_head else None
        o_ref = rest[n_w]
        scratch_refs = rest[n_w + 1:]

        # Activation stays channel-last, flattened to (batch*H*W, C) -- the
        # flat form is exactly what the MXU matmul wants.
        a2d = x_ref[...]
        si = 0
        for (kh, kw, cin, cout, hin, win, hout, wout), w_ref in zip(meta, w_refs):
            if kh == 1 and kw == 1:
                patches = a2d                                   # (M, cin)
            else:
                # im2col into VMEM scratch: one kw*cin-lane-wide store per
                # kernel row (dy) and a single reshape per layer -- no
                # per-tap relayouts or narrow stores.
                a4 = a2d.reshape(batch, hin, win, cin)
                scr = scratch_refs[si]
                si += 1
                row_k = kw * cin
                for dy in range(kh):
                    slab = jnp.concatenate(
                        [a4[:, dy:dy + hout, dx:dx + wout, :]
                         for dx in range(kw)], axis=-1)         # (b,ho,wo,kw*cin)
                    scr[:, :, :, dy * row_k:(dy + 1) * row_k] = slab
                patches = scr[...].reshape(batch * hout * wout, kh * kw * cin)
            # One MXU matmul per layer with a real contraction depth.
            a2d = jnp.dot(patches, w_ref[...],
                          preferred_element_type=jnp.float32)   # (M', cout)

        if has_head:
            # Final (folded) 1x1 layer computed channel-major so the kernel
            # output is lane-dense: (cf, batch*hf*wf) instead of (M, 1).
            a_t = jnp.transpose(a2d)                            # (c_body, M)
            out = jnp.dot(head_ref[...], a_t,
                          preferred_element_type=jnp.float32)   # (cf, M)
            o_ref[...] = out.astype(o_ref.dtype)
        else:
            o_ref[...] = a2d.astype(o_ref.dtype)                # (M, cf)

    return kernel


# ------------------------------ glue helpers ------------------------------ #
def _prepare_layers(x_nhwc, weights):
    """Layout/algebra prep in XLA glue.

    Returns (x_flat, (B, h0, w0, c0), layers) where x_flat is (B*h0*w0, c0)
    and layers = [(kh, kw, cin, cout, w2d)] with w2d = (kh*kw*cin, cout).
    """
    x = x_nhwc
    layers = []
    for li, w in enumerate(weights):
        kh, kw, cin, cout = w.shape
        if li == 0 and (kh > 1 or kw > 1):
            # First layer: im2col in glue (cin == 1 in this module, so the
            # in-kernel version would be all width-1 lane traffic).
            b, hh, ww, _ = x.shape
            ho, wo = hh - kh + 1, ww - kw + 1
            cols = [x[:, dy:dy + ho, dx:dx + wo, :]
                    for dy in range(kh) for dx in range(kw)]
            x = jnp.concatenate(cols, axis=-1)          # (B, ho, wo, kh*kw*cin)
            w2d = w.reshape(kh * kw * cin, cout)        # (dy, dx, c) order
            kh = kw = 1
            cin = w2d.shape[0]
        else:
            w2d = w.reshape(kh * kw * cin, cout)

        if (kh == 1 and kw == 1 and layers
                and layers[-1][0] == 1 and layers[-1][1] == 1):
            # Fold consecutive 1x1 convs (exact: no nonlinearities).
            pkh, pkw, pcin, _pcout, pw2d = layers[-1]
            layers[-1] = (1, 1, pcin, cout, jnp.dot(pw2d, w2d))
        else:
            layers.append((kh, kw, cin, cout, w2d))

    b, h0, w0, c0 = x.shape
    x_flat = x.reshape(b * h0 * w0, c0)                 # pre-flattened for L1
    return x_flat, (b, h0, w0, c0), layers


def _fused_conv_stack(x_flat, geom, layers):
    """Run the whole (stride-1) conv stack in ONE pallas_call, single grid step.

    Returns (B, hf, wf, cf) float32.
    """
    b, h, w, c0 = geom
    # Trailing 1x1 layer becomes the lane-dense "head" (output channel-major).
    has_head = (len(layers) >= 2
                and layers[-1][0] == 1 and layers[-1][1] == 1)
    body = layers[:-1] if has_head else layers

    meta = []
    for (kh, kw, cin, cout, _w2d) in body:
        hout, wout = h - kh + 1, w - kw + 1
        meta.append((kh, kw, cin, cout, h, w, hout, wout))
        h, w = hout, wout
    hf, wf = h, w
    cf = layers[-1][3]
    m_out = b * hf * wf

    w2ds = [l[4] for l in body]
    operands = [x_flat] + w2ds
    in_specs = ([pl.BlockSpec(x_flat.shape, lambda i: (0, 0))]
                + [pl.BlockSpec(wm.shape, lambda i: (0, 0)) for wm in w2ds])

    if has_head:
        w_head_t = jnp.transpose(layers[-1][4])         # (cf, c_body)
        operands.append(w_head_t)
        in_specs.append(pl.BlockSpec(w_head_t.shape, lambda i: (0, 0)))
        out_shape = jax.ShapeDtypeStruct((cf, m_out), jnp.float32)
        out_spec = pl.BlockSpec((cf, m_out), lambda i: (0, 0))
    else:
        out_shape = jax.ShapeDtypeStruct((m_out, cf), jnp.float32)
        out_spec = pl.BlockSpec((m_out, cf), lambda i: (0, 0))

    scratch_shapes = [
        pltpu.VMEM((b, mm[6], mm[7], mm[0] * mm[1] * mm[2]), jnp.float32)
        for mm in meta if mm[0] * mm[1] > 1
    ]

    out2d = pl.pallas_call(
        _make_fused_kernel(tuple(meta), b, has_head),
        out_shape=out_shape,
        grid=(1,),                                       # single step: no grid
        in_specs=in_specs,
        out_specs=out_spec,
        scratch_shapes=scratch_shapes,
        compiler_params=pltpu.CompilerParams(
            dimension_semantics=("arbitrary",)),
    )(*operands)

    if has_head:
        out = jnp.transpose(out2d.reshape(cf, b, hf, wf), (1, 2, 3, 0))
    else:
        out = out2d.reshape(b, hf, wf, cf)
    return out


# ----------------------------- Generator glue ----------------------------- #
def make_generator_weights(key, struct, g_chan):
    """Deterministic weight init. Weights stored HWIO: (kh, kw, Cin, Cout)."""
    weights = []
    cin = 1
    for i, k in enumerate(struct):
        cout = 1 if i == len(struct) - 1 else g_chan
        wkey = jax.random.fold_in(key, i)
        fan_in = k * k * cin
        w = jax.random.normal(wkey, (k, k, cin, cout), jnp.float32)
        w = w * (1.0 / np.sqrt(fan_in))
        weights.append(w)
        cin = cout
    return weights


def _generator_forward(x, weights, stride):
    """x: (1, C, H, W) f32 -> (1, C, h, w) f32 (PyTorch Generator.forward)."""
    h = jnp.transpose(x, (1, 0, 2, 3))        # input_tensor.transpose(0, 1)
    h = jnp.transpose(h, (0, 2, 3, 1))        # NCHW -> NHWC: (C, H, W, 1)
    x_flat, geom, layers = _prepare_layers(h, weights)
    out = _fused_conv_stack(x_flat, geom, layers)   # (C, hf, wf, 1), stride-1
    if stride > 1:
        out = out[:, ::stride, ::stride, :]   # exact strided valid conv
    out = jnp.transpose(out, (0, 3, 1, 2))    # NHWC -> NCHW: (C, 1, h, w)
    return jnp.transpose(out, (1, 0, 2, 3))   # output.transpose(0, 1)


generator_forward = jax.jit(_generator_forward, static_argnums=(2,))


def reference_forward(x, weights, stride):
    """Pure-JAX (XLA conv) reference for validation."""
    h = jnp.transpose(x, (1, 0, 2, 3))
    n_layers = len(weights)
    for i, w in enumerate(weights):
        w_oihw = jnp.transpose(w, (3, 2, 0, 1))
        s = stride if i == n_layers - 1 else 1
        h = jax.lax.conv_general_dilated(
            h, w_oihw, window_strides=(s, s), padding="VALID",
            dimension_numbers=("NCHW", "OIHW", "NCHW"))
    return jnp.transpose(h, (1, 0, 2, 3))


if __name__ == "__main__":
    # KernelGAN defaults, shrunk: G_structure=[7,5,3,1,1,1], small G_chan/crop.
    struct = [7, 5, 3, 1, 1, 1]
    g_chan = 16
    scale_factor = 0.5
    input_crop_size = 24
    stride = int(1 / scale_factor)

    key = jax.random.PRNGKey(0)
    wkey, xkey = jax.random.split(key)
    weights = make_generator_weights(wkey, struct, g_chan)

    # Mirror the __init__ self-probe: output_size / forward_shave.
    probe = jnp.ones((1, 1, input_crop_size, input_crop_size), jnp.float32)
    output_size = int(generator_forward(probe, weights, stride).shape[-1])
    forward_shave = int(input_crop_size * scale_factor) - output_size

    # Example input: (1, C=3, H, W) NCHW, as in PyTorch.
    x = jax.random.normal(xkey, (1, 3, input_crop_size, input_crop_size),
                          jnp.float32)

    out = jax.block_until_ready(generator_forward(x, weights, stride))
    ref = jax.block_until_ready(reference_forward(x, weights, stride))

    assert out.shape == ref.shape, (out.shape, ref.shape)
    assert out.shape[-1] == output_size
    np.testing.assert_allclose(np.asarray(out), np.asarray(ref),
                               rtol=1e-4, atol=1e-4)
    _ = forward_shave  # computed for parity with the PyTorch __init__

    print("KERNEL_OK")
</pallas_src>

<mosaic_0001>
module attributes {stable_mosaic.version = 11 : i64} {
  func.func @kernel(%arg0: i32, %arg1: memref<324x49xf32, #tpu.memory_space<vmem>>, %arg2: memref<49x16xf32, #tpu.memory_space<vmem>>, %arg3: memref<400x16xf32, #tpu.memory_space<vmem>>, %arg4: memref<144x16xf32, #tpu.memory_space<vmem>>, %arg5: memref<1x16xf32, #tpu.memory_space<vmem>>, %arg6: memref<1x144xf32, #tpu.memory_space<vmem>>, %arg7: memref<1x14x14x400xf32, #tpu.memory_space<vmem>>, %arg8: memref<1x12x12x144xf32, #tpu.memory_space<vmem>>) attributes {dimension_semantics = [#tpu.dimension_semantics<arbitrary>], iteration_bounds = array<i64: 1>, scalar_prefetch = 0 : i64, scratch_operands = 2 : i64, tpu.core_type = #tpu.core_type<tc>, window_params = [{pipeline_mode = #tpu.pipeline_mode<synchronous>, transform_indices = @transform_0, window_bounds = array<i64: 324, 49>}, {pipeline_mode = #tpu.pipeline_mode<synchronous>, transform_indices = @transform_1, window_bounds = array<i64: 49, 16>}, {pipeline_mode = #tpu.pipeline_mode<synchronous>, transform_indices = @transform_2, window_bounds = array<i64: 400, 16>}, {pipeline_mode = #tpu.pipeline_mode<synchronous>, transform_indices = @transform_3, window_bounds = array<i64: 144, 16>}, {pipeline_mode = #tpu.pipeline_mode<synchronous>, transform_indices = @transform_4, window_bounds = array<i64: 1, 16>}, {pipeline_mode = #tpu.pipeline_mode<synchronous>, transform_indices = @transform_5, window_bounds = array<i64: 1, 144>}]} {
    %c0 = arith.constant 0 : index
    %c0_0 = arith.constant 0 : index
    %0 = vector.load %arg1[%c0, %c0_0] : memref<324x49xf32, #tpu.memory_space<vmem>>, vector<324x49xf32>
    %c0_1 = arith.constant 0 : index
    %c0_2 = arith.constant 0 : index
    %1 = vector.load %arg2[%c0_1, %c0_2] : memref<49x16xf32, #tpu.memory_space<vmem>>, vector<49x16xf32>
    %cst = arith.constant dense<0.000000e+00> : vector<324x16xf32>
    %2 = tpu.matmul %0, %1, %cst {dimension_numbers = #tpu.dot_dimension_numbers<[1], [0], [0], [1], [0, 0, 1, 1], [], []>} : vector<324x49xf32>, vector<49x16xf32>, vector<324x16xf32> -> vector<324x16xf32>
    %3 = vector.shape_cast %2 : vector<324x16xf32> to vector<1x18x18x16xf32>
    %4 = vector.extract_strided_slice %3 {offsets = [0, 0, 0, 0], sizes = [1, 14, 14, 16], strides = [1, 1, 1, 1]} : vector<1x18x18x16xf32> to vector<1x14x14x16xf32>
    %5 = vector.extract_strided_slice %3 {offsets = [0, 0, 1, 0], sizes = [1, 14, 14, 16], strides = [1, 1, 1, 1]} : vector<1x18x18x16xf32> to vector<1x14x14x16xf32>
    %6 = vector.extract_strided_slice %3 {offsets = [0, 0, 2, 0], sizes = [1, 14, 14, 16], strides = [1, 1, 1, 1]} : vector<1x18x18x16xf32> to vector<1x14x14x16xf32>
    %7 = vector.extract_strided_slice %3 {offsets = [0, 0, 3, 0], sizes = [1, 14, 14, 16], strides = [1, 1, 1, 1]} : vector<1x18x18x16xf32> to vector<1x14x14x16xf32>
    %8 = vector.extract_strided_slice %3 {offsets = [0, 0, 4, 0], sizes = [1, 14, 14, 16], strides = [1, 1, 1, 1]} : vector<1x18x18x16xf32> to vector<1x14x14x16xf32>
    %9 = tpu.concatenate %4, %5, %6, %7, %8 in 3 : vector<1x14x14x16xf32>, vector<1x14x14x16xf32>, vector<1x14x14x16xf32>, vector<1x14x14x16xf32>, vector<1x14x14x16xf32> -> vector<1x14x14x80xf32>
    %c0_3 = arith.constant 0 : index
    %c0_4 = arith.constant 0 : index
    %c0_5 = arith.constant 0 : index
    %c0_6 = arith.constant 0 : index
    %10 = vector.load %arg7[%c0_3, %c0_4, %c0_5, %c0_6] : memref<1x14x14x400xf32, #tpu.memory_space<vmem>>, vector<1x14x14x80xf32>
    tpu.vector_store %arg7[%c0_3, %c0_4, %c0_5, %c0_6], %9 {strides = array<i32>} : memref<1x14x14x400xf32, #tpu.memory_space<vmem>>, vector<1x14x14x80xf32>,
    %11 = vector.extract_strided_slice %3 {offsets = [0, 1, 0, 0], sizes = [1, 14, 14, 16], strides = [1, 1, 1, 1]} : vector<1x18x18x16xf32> to vector<1x14x14x16xf32>
    %12 = vector.extract_strided_slice %3 {offsets = [0, 1, 1, 0], sizes = [1, 14, 14, 16], strides = [1, 1, 1, 1]} : vector<1x18x18x16xf32> to vector<1x14x14x16xf32>
    %13 = vector.extract_strided_slice %3 {offsets = [0, 1, 2, 0], sizes = [1, 14, 14, 16], strides = [1, 1, 1, 1]} : vector<1x18x18x16xf32> to vector<1x14x14x16xf32>
    %14 = vector.extract_strided_slice %3 {offsets = [0, 1, 3, 0], sizes = [1, 14, 14, 16], strides = [1, 1, 1, 1]} : vector<1x18x18x16xf32> to vector<1x14x14x16xf32>
    %15 = vector.extract_strided_slice %3 {offsets = [0, 1, 4, 0], sizes = [1, 14, 14, 16], strides = [1, 1, 1, 1]} : vector<1x18x18x16xf32> to vector<1x14x14x16xf32>
    %16 = tpu.concatenate %11, %12, %13, %14, %15 in 3 : vector<1x14x14x16xf32>, vector<1x14x14x16xf32>, vector<1x14x14x16xf32>, vector<1x14x14x16xf32>, vector<1x14x14x16xf32> -> vector<1x14x14x80xf32>
    %c0_7 = arith.constant 0 : index
    %c0_8 = arith.constant 0 : index
    %c0_9 = arith.constant 0 : index
    %c80 = arith.constant 80 : index
    %17 = vector.load %arg7[%c0_7, %c0_8, %c0_9, %c80] : memref<1x14x14x400xf32, #tpu.memory_space<vmem>>, vector<1x14x14x80xf32>
    tpu.vector_store %arg7[%c0_7, %c0_8, %c0_9, %c80], %16 {strides = array<i32>} : memref<1x14x14x400xf32, #tpu.memory_space<vmem>>, vector<1x14x14x80xf32>,
    %18 = vector.extract_strided_slice %3 {offsets = [0, 2, 0, 0], sizes = [1, 14, 14, 16], strides = [1, 1, 1, 1]} : vector<1x18x18x16xf32> to vector<1x14x14x16xf32>
    %19 = vector.extract_strided_slice %3 {offsets = [0, 2, 1, 0], sizes = [1, 14, 14, 16], strides = [1, 1, 1, 1]} : vector<1x18x18x16xf32> to vector<1x14x14x16xf32>
    %20 = vector.extract_strided_slice %3 {offsets = [0, 2, 2, 0], sizes = [1, 14, 14, 16], strides = [1, 1, 1, 1]} : vector<1x18x18x16xf32> to vector<1x14x14x16xf32>
    %21 = vector.extract_strided_slice %3 {offsets = [0, 2, 3, 0], sizes = [1, 14, 14, 16], strides = [1, 1, 1, 1]} : vector<1x18x18x16xf32> to vector<1x14x14x16xf32>
    %22 = vector.extract_strided_slice %3 {offsets = [0, 2, 4, 0], sizes = [1, 14, 14, 16], strides = [1, 1, 1, 1]} : vector<1x18x18x16xf32> to vector<1x14x14x16xf32>
    %23 = tpu.concatenate %18, %19, %20, %21, %22 in 3 : vector<1x14x14x16xf32>, vector<1x14x14x16xf32>, vector<1x14x14x16xf32>, vector<1x14x14x16xf32>, vector<1x14x14x16xf32> -> vector<1x14x14x80xf32>
    %c0_10 = arith.constant 0 : index
    %c0_11 = arith.constant 0 : index
    %c0_12 = arith.constant 0 : index
    %c160 = arith.constant 160 : index
    %24 = vector.load %arg7[%c0_10, %c0_11, %c0_12, %c160] : memref<1x14x14x400xf32, #tpu.memory_space<vmem>>, vector<1x14x14x80xf32>
    tpu.vector_store %arg7[%c0_10, %c0_11, %c0_12, %c160], %23 {strides = array<i32>} : memref<1x14x14x400xf32, #tpu.memory_space<vmem>>, vector<1x14x14x80xf32>,
    %25 = vector.extract_strided_slice %3 {offsets = [0, 3, 0, 0], sizes = [1, 14, 14, 16], strides = [1, 1, 1, 1]} : vector<1x18x18x16xf32> to vector<1x14x14x16xf32>
    %26 = vector.extract_strided_slice %3 {offsets = [0, 3, 1, 0], sizes = [1, 14, 14, 16], strides = [1, 1, 1, 1]} : vector<1x18x18x16xf32> to vector<1x14x14x16xf32>
    %27 = vector.extract_strided_slice %3 {offsets = [0, 3, 2, 0], sizes = [1, 14, 14, 16], strides = [1, 1, 1, 1]} : vector<1x18x18x16xf32> to vector<1x14x14x16xf32>
    %28 = vector.extract_strided_slice %3 {offsets = [0, 3, 3, 0], sizes = [1, 14, 14, 16], strides = [1, 1, 1, 1]} : vector<1x18x18x16xf32> to vector<1x14x14x16xf32>
    %29 = vector.extract_strided_slice %3 {offsets = [0, 3, 4, 0], sizes = [1, 14, 14, 16], strides = [1, 1, 1, 1]} : vector<1x18x18x16xf32> to vector<1x14x14x16xf32>
    %30 = tpu.concatenate %25, %26, %27, %28, %29 in 3 : vector<1x14x14x16xf32>, vector<1x14x14x16xf32>, vector<1x14x14x16xf32>, vector<1x14x14x16xf32>, vector<1x14x14x16xf32> -> vector<1x14x14x80xf32>
    %c0_13 = arith.constant 0 : index
    %c0_14 = arith.constant 0 : index
    %c0_15 = arith.constant 0 : index
    %c240 = arith.constant 240 : index
    %31 = vector.load %arg7[%c0_13, %c0_14, %c0_15, %c240] : memref<1x14x14x400xf32, #tpu.memory_space<vmem>>, vector<1x14x14x80xf32>
    tpu.vector_store %arg7[%c0_13, %c0_14, %c0_15, %c240], %30 {strides = array<i32>} : memref<1x14x14x400xf32, #tpu.memory_space<vmem>>, vector<1x14x14x80xf32>,
    %32 = vector.extract_strided_slice %3 {offsets = [0, 4, 0, 0], sizes = [1, 14, 14, 16], strides = [1, 1, 1, 1]} : vector<1x18x18x16xf32> to vector<1x14x14x16xf32>
    %33 = vector.extract_strided_slice %3 {offsets = [0, 4, 1, 0], sizes = [1, 14, 14, 16], strides = [1, 1, 1, 1]} : vector<1x18x18x16xf32> to vector<1x14x14x16xf32>
    %34 = vector.extract_strided_slice %3 {offsets = [0, 4, 2, 0], sizes = [1, 14, 14, 16], strides = [1, 1, 1, 1]} : vector<1x18x18x16xf32> to vector<1x14x14x16xf32>
    %35 = vector.extract_strided_slice %3 {offsets = [0, 4, 3, 0], sizes = [1, 14, 14, 16], strides = [1, 1, 1, 1]} : vector<1x18x18x16xf32> to vector<1x14x14x16xf32>
    %36 = vector.extract_strided_slice %3 {offsets = [0, 4, 4, 0], sizes = [1, 14, 14, 16], strides = [1, 1, 1, 1]} : vector<1x18x18x16xf32> to vector<1x14x14x16xf32>
    %37 = tpu.concatenate %32, %33, %34, %35, %36 in 3 : vector<1x14x14x16xf32>, vector<1x14x14x16xf32>, vector<1x14x14x16xf32>, vector<1x14x14x16xf32>, vector<1x14x14x16xf32> -> vector<1x14x14x80xf32>
    %c0_16 = arith.constant 0 : index
    %c0_17 = arith.constant 0 : index
    %c0_18 = arith.constant 0 : index
    %c320 = arith.constant 320 : index
    %38 = vector.load %arg7[%c0_16, %c0_17, %c0_18, %c320] : memref<1x14x14x400xf32, #tpu.memory_space<vmem>>, vector<1x14x14x80xf32>
    tpu.vector_store %arg7[%c0_16, %c0_17, %c0_18, %c320], %37 {strides = array<i32>} : memref<1x14x14x400xf32, #tpu.memory_space<vmem>>, vector<1x14x14x80xf32>,
    %c0_19 = arith.constant 0 : index
    %c0_20 = arith.constant 0 : index
    %c0_21 = arith.constant 0 : index
    %c0_22 = arith.constant 0 : index
    %39 = vector.load %arg7[%c0_19, %c0_20, %c0_21, %c0_22] : memref<1x14x14x400xf32, #tpu.memory_space<vmem>>, vector<1x14x14x400xf32>
    %40 = vector.shape_cast %39 : vector<1x14x14x400xf32> to vector<196x400xf32>
    %c0_23 = arith.constant 0 : index
    %c0_24 = arith.constant 0 : index
    %41 = vector.load %arg3[%c0_23, %c0_24] : memref<400x16xf32, #tpu.memory_space<vmem>>, vector<400x16xf32>
    %cst_25 = arith.constant dense<0.000000e+00> : vector<196x16xf32>
    %42 = tpu.matmul %40, %41, %cst_25 {dimension_numbers = #tpu.dot_dimension_numbers<[1], [0], [0], [1], [0, 0, 1, 1], [], []>} : vector<196x400xf32>, vector<400x16xf32>, vector<196x16xf32> -> vector<196x16xf32>
    %43 = vector.shape_cast %42 : vector<196x16xf32> to vector<1x14x14x16xf32>
    %44 = vector.extract_strided_slice %43 {offsets = [0, 0, 0, 0], sizes = [1, 12, 12, 16], strides = [1, 1, 1, 1]} : vector<1x14x14x16xf32> to vector<1x12x12x16xf32>
    %45 = vector.extract_strided_slice %43 {offsets = [0, 0, 1, 0], sizes = [1, 12, 12, 16], strides = [1, 1, 1, 1]} : vector<1x14x14x16xf32> to vector<1x12x12x16xf32>
    %46 = vector.extract_strided_slice %43 {offsets = [0, 0, 2, 0], sizes = [1, 12, 12, 16], strides = [1, 1, 1, 1]} : vector<1x14x14x16xf32> to vector<1x12x12x16xf32>
    %47 = tpu.concatenate %44, %45, %46 in 3 : vector<1x12x12x16xf32>, vector<1x12x12x16xf32>, vector<1x12x12x16xf32> -> vector<1x12x12x48xf32>
    %c0_26 = arith.constant 0 : index
    %c0_27 = arith.constant 0 : index
    %c0_28 = arith.constant 0 : index
    %c0_29 = arith.constant 0 : index
    %48 = vector.load %arg8[%c0_26, %c0_27, %c0_28, %c0_29] : memref<1x12x12x144xf32, #tpu.memory_space<vmem>>, vector<1x12x12x48xf32>
    tpu.vector_store %arg8[%c0_26, %c0_27, %c0_28, %c0_29], %47 {strides = array<i32>} : memref<1x12x12x144xf32, #tpu.memory_space<vmem>>, vector<1x12x12x48xf32>,
    %49 = vector.extract_strided_slice %43 {offsets = [0, 1, 0, 0], sizes = [1, 12, 12, 16], strides = [1, 1, 1, 1]} : vector<1x14x14x16xf32> to vector<1x12x12x16xf32>
    %50 = vector.extract_strided_slice %43 {offsets = [0, 1, 1, 0], sizes = [1, 12, 12, 16], strides = [1, 1, 1, 1]} : vector<1x14x14x16xf32> to vector<1x12x12x16xf32>
    %51 = vector.extract_strided_slice %43 {offsets = [0, 1, 2, 0], sizes = [1, 12, 12, 16], strides = [1, 1, 1, 1]} : vector<1x14x14x16xf32> to vector<1x12x12x16xf32>
    %52 = tpu.concatenate %49, %50, %51 in 3 : vector<1x12x12x16xf32>, vector<1x12x12x16xf32>, vector<1x12x12x16xf32> -> vector<1x12x12x48xf32>
    %c0_30 = arith.constant 0 : index
    %c0_31 = arith.constant 0 : index
    %c0_32 = arith.constant 0 : index
    %c48 = arith.constant 48 : index
    %53 = vector.load %arg8[%c0_30, %c0_31, %c0_32, %c48] : memref<1x12x12x144xf32, #tpu.memory_space<vmem>>, vector<1x12x12x48xf32>
    tpu.vector_store %arg8[%c0_30, %c0_31, %c0_32, %c48], %52 {strides = array<i32>} : memref<1x12x12x144xf32, #tpu.memory_space<vmem>>, vector<1x12x12x48xf32>,
    %54 = vector.extract_strided_slice %43 {offsets = [0, 2, 0, 0], sizes = [1, 12, 12, 16], strides = [1, 1, 1, 1]} : vector<1x14x14x16xf32> to vector<1x12x12x16xf32>
    %55 = vector.extract_strided_slice %43 {offsets = [0, 2, 1, 0], sizes = [1, 12, 12, 16], strides = [1, 1, 1, 1]} : vector<1x14x14x16xf32> to vector<1x12x12x16xf32>
    %56 = vector.extract_strided_slice %43 {offsets = [0, 2, 2, 0], sizes = [1, 12, 12, 16], strides = [1, 1, 1, 1]} : vector<1x14x14x16xf32> to vector<1x12x12x16xf32>
    %57 = tpu.concatenate %54, %55, %56 in 3 : vector<1x12x12x16xf32>, vector<1x12x12x16xf32>, vector<1x12x12x16xf32> -> vector<1x12x12x48xf32>
    %c0_33 = arith.constant 0 : index
    %c0_34 = arith.constant 0 : index
    %c0_35 = arith.constant 0 : index
    %c96 = arith.constant 96 : index
    %58 = vector.load %arg8[%c0_33, %c0_34, %c0_35, %c96] : memref<1x12x12x144xf32, #tpu.memory_space<vmem>>, vector<1x12x12x48xf32>
    tpu.vector_store %arg8[%c0_33, %c0_34, %c0_35, %c96], %57 {strides = array<i32>} : memref<1x12x12x144xf32, #tpu.memory_space<vmem>>, vector<1x12x12x48xf32>,
    %c0_36 = arith.constant 0 : index
    %c0_37 = arith.constant 0 : index
    %c0_38 = arith.constant 0 : index
    %c0_39 = arith.constant 0 : index
    %59 = vector.load %arg8[%c0_36, %c0_37, %c0_38, %c0_39] : memref<1x12x12x144xf32, #tpu.memory_space<vmem>>, vector<1x12x12x144xf32>
    %60 = vector.shape_cast %59 : vector<1x12x12x144xf32> to vector<144x144xf32>
    %c0_40 = arith.constant 0 : index
    %c0_41 = arith.constant 0 : index
    %61 = vector.load %arg4[%c0_40, %c0_41] : memref<144x16xf32, #tpu.memory_space<vmem>>, vector<144x16xf32>
    %cst_42 = arith.constant dense<0.000000e+00> : vector<144x16xf32>
    %62 = tpu.matmul %60, %61, %cst_42 {dimension_numbers = #tpu.dot_dimension_numbers<[1], [0], [0], [1], [0, 0, 1, 1], [], []>} : vector<144x144xf32>, vector<144x16xf32>, vector<144x16xf32> -> vector<144x16xf32>
    %63 = tpu.transpose %62, [1, 0] : vector<144x16xf32> -> vector<16x144xf32>
    %c0_43 = arith.constant 0 : index
    %c0_44 = arith.constant 0 : index
    %64 = vector.load %arg5[%c0_43, %c0_44] : memref<1x16xf32, #tpu.memory_space<vmem>>, vector<1x16xf32>
    %cst_45 = arith.constant dense<0.000000e+00> : vector<1x144xf32>
    %65 = tpu.matmul %64, %63, %cst_45 {dimension_numbers = #tpu.dot_dimension_numbers<[1], [0], [0], [1], [0, 0, 1, 1], [], []>} : vector<1x16xf32>, vector<16x144xf32>, vector<1x144xf32> -> vector<1x144xf32>
    %c0_46 = arith.constant 0 : index
    %c0_47 = arith.constant 0 : index
    %66 = vector.load %arg6[%c0_46, %c0_47] : memref<1x144xf32, #tpu.memory_space<vmem>>, vector<1x144xf32>
    tpu.vector_store %arg6[%c0_46, %c0_47], %65 {strides = array<i32>} : memref<1x144xf32, #tpu.memory_space<vmem>>, vector<1x144xf32>,
    return
  }
  func.func @transform_0(%arg0: i32) -> (i32, i32) {
    %c0_i32 = arith.constant 0 : i32
    %c0_i32_0 = arith.constant 0 : i32
    %c0_i32_1 = arith.constant 0 : i32
    return %c0_i32, %c0_i32_0 : i32, i32
  }
  func.func @transform_1(%arg0: i32) -> (i32, i32) {
    %c0_i32 = arith.constant 0 : i32
    %c0_i32_0 = arith.constant 0 : i32
    %c0_i32_1 = arith.constant 0 : i32
    return %c0_i32, %c0_i32_0 : i32, i32
  }
  func.func @transform_2(%arg0: i32) -> (i32, i32) {
    %c0_i32 = arith.constant 0 : i32
    %c0_i32_0 = arith.constant 0 : i32
    %c0_i32_1 = arith.constant 0 : i32
    return %c0_i32, %c0_i32_0 : i32, i32
  }
  func.func @transform_3(%arg0: i32) -> (i32, i32) {
    %c0_i32 = arith.constant 0 : i32
    %c0_i32_0 = arith.constant 0 : i32
    %c0_i32_1 = arith.constant 0 : i32
    return %c0_i32, %c0_i32_0 : i32, i32
  }
  func.func @transform_4(%arg0: i32) -> (i32, i32) {
    %c0_i32 = arith.constant 0 : i32
    %c0_i32_0 = arith.constant 0 : i32
    %c0_i32_1 = arith.constant 0 : i32
    return %c0_i32, %c0_i32_0 : i32, i32
  }
  func.func @transform_5(%arg0: i32) -> (i32, i32) {
    %c0_i32 = arith.constant 0 : i32
    %c0_i32_0 = arith.constant 0 : i32
    %c0_i32_1 = arith.constant 0 : i32
    return %c0_i32, %c0_i32_0 : i32, i32
  }
}

</mosaic_0001>

<llo_original>
// kernel: _generator_forward.1
$region0: #{_generator_forward.1}
  #allocation0 [shape = 'u32[]', space=smem, size = 0x4, offset = 0x4, fixed_abs, tag = 'smem constant byte address 0x4 - core index']
  #allocation1 [shape = 'u32[144,128]{1,0:T(1,128)}', space=vmem, size = 0x12000, scoped, tag = 'internal scratch']
  #allocation2 [shape = 'f32[1,14,14,400]{3,2,1,0:T(8,128)}', space=vmem, size = 0x70000, scoped, tag = 'scratch operand']
  #allocation3 [shape = 'f32[1,12,12,144]{3,2,1,0:T(8,128)}', space=vmem, size = 0x30000, scoped, tag = 'scratch operand']
  %s0 = inlined_call_operand.vmem [shape: f32[324,49], index: 0, kind: input, shape index: {}]
  %s1 = inlined_call_operand.vmem [shape: f32[49,16], index: 1, kind: input, shape index: {}]
  %s2 = inlined_call_operand.vmem [shape: f32[400,16], index: 2, kind: input, shape index: {}]
  %s3 = inlined_call_operand.vmem [shape: f32[144,16], index: 3, kind: input, shape index: {}]
  %s4 = inlined_call_operand.vmem [shape: f32[1,16], index: 4, kind: input, shape index: {}]
  %s5 = inlined_call_operand.vmem [shape: f32[1,144], index: 5, kind: output, shape index: {}]
  %s6 = sld [smem:[#allocation0]]
  $region30: #{_generator_forward.1} parent=0
    _
  %s8 = ssub.s32 1, %s6
  %s9 = scalar_select 0, %s8, %s6
  // Predicated region
  $region2: #{_generator_forward.1} parent=0 // pred_check
    _
  $region3: #{_generator_forward.1} parent=0 // pred_check_branch
    %11 = sbr.rel (0) target = $region5
  $region4: #{_generator_forward.1} parent=0 // pred_region
    _
  $region5: #{_generator_forward.1} parent=0 // pred_fallthru
    _
  // Predicated region
  $region6: #{_generator_forward.1} parent=0 // pred_check
    _
  $region7: #{_generator_forward.1} parent=0 // pred_check_branch
    %13 = sbr.rel (0) target = $region9
  $region8: #{_generator_forward.1} parent=0 // pred_region
    _
  $region9: #{_generator_forward.1} parent=0 // pred_fallthru
    _
  // Predicated region
  $region10: #{_generator_forward.1} parent=0 // pred_check
    _
  $region11: #{_generator_forward.1} parent=0 // pred_check_branch
    %15 = sbr.rel (0) target = $region13
  $region12: #{_generator_forward.1} parent=0 // pred_region
    _
  $region13: #{_generator_forward.1} parent=0 // pred_fallthru
    _
  // Predicated region
  $region14: #{_generator_forward.1} parent=0 // pred_check
    _
  $region15: #{_generator_forward.1} parent=0 // pred_check_branch
    %17 = sbr.rel (0) target = $region17
  $region16: #{_generator_forward.1} parent=0 // pred_region
    _
  $region17: #{_generator_forward.1} parent=0 // pred_fallthru
    _
  // Predicated region
  $region18: #{_generator_forward.1} parent=0 // pred_check
    _
  $region19: #{_generator_forward.1} parent=0 // pred_check_branch
    %19 = sbr.rel (0) target = $region21
  $region20: #{_generator_forward.1} parent=0 // pred_region
    _
  $region21: #{_generator_forward.1} parent=0 // pred_fallthru
    _
  %v20 = vld [vmem:[%s0] sm:$0xff]
  %v21 = vld [vmem:[%s0 + $0x8] sm:$0xff]
  %v22 = vld [vmem:[%s0 + $0x10] sm:$0xff]
  %v23 = vld [vmem:[%s0 + $0x18] sm:$0xff]
  %v24 = vld [vmem:[%s0 + $0x20] sm:$0xff]
  %v25 = vld [vmem:[%s0 + $0x28] sm:$0xff]
  %v26 = vld [vmem:[%s0 + $0x30] sm:$0xff]
  %v27 = vld [vmem:[%s0 + $0x38] sm:$0xff]
  %v28 = vld [vmem:[%s0 + $0x40] sm:$0xff]
  %v29 = vld [vmem:[%s0 + $0x48] sm:$0xff]
  %v30 = vld [vmem:[%s0 + $0x50] sm:$0xff]
  %v31 = vld [vmem:[%s0 + $0x58] sm:$0xff]
  %v32 = vld [vmem:[%s0 + $0x60] sm:$0xff]
  %v33 = vld [vmem:[%s0 + $0x68] sm:$0xff]
  %v34 = vld [vmem:[%s0 + $0x70] sm:$0xff]
  %v35 = vld [vmem:[%s0 + $0x78] sm:$0xff]
  %v36 = vld [vmem:[%s0 + $0x80] sm:$0xff]
  %v37 = vld [vmem:[%s0 + $0x88] sm:$0xff]
  %v38 = vld [vmem:[%s0 + $0x90] sm:$0xff]
  %v39 = vld [vmem:[%s0 + $0x98] sm:$0xff]
  %v40 = vld [vmem:[%s0 + $0xa0] sm:$0xff]
  %v41 = vld [vmem:[%s0 + $0xa8] sm:$0xff]
  %v42 = vld [vmem:[%s0 + $0xb0] sm:$0xff]
  %v43 = vld [vmem:[%s0 + $0xb8] sm:$0xff]
  %v44 = vld [vmem:[%s0 + $0xc0] sm:$0xff]
  %v45 = vld [vmem:[%s0 + $0xc8] sm:$0xff]
  %v46 = vld [vmem:[%s0 + $0xd0] sm:$0xff]
  %v47 = vld [vmem:[%s0 + $0xd8] sm:$0xff]
  %v48 = vld [vmem:[%s0 + $0xe0] sm:$0xff]
  %v49 = vld [vmem:[%s0 + $0xe8] sm:$0xff]
  %v50 = vld [vmem:[%s0 + $0xf0] sm:$0xff]
  %v51 = vld [vmem:[%s0 + $0xf8] sm:$0xff]
  %v52 = vld [vmem:[%s0 + $0x100] sm:$0xff]
  %v53 = vld [vmem:[%s0 + $0x108] sm:$0xff]
  %v54 = vld [vmem:[%s0 + $0x110] sm:$0xff]
  %v55 = vld [vmem:[%s0 + $0x118] sm:$0xff]
  %v56 = vld [vmem:[%s0 + $0x120] sm:$0xff]
  %v57 = vld [vmem:[%s0 + $0x128] sm:$0xff]
  %v58 = vld [vmem:[%s0 + $0x130] sm:$0xff]
  %v59 = vld [vmem:[%s0 + $0x138] sm:$0xff]
  %v60 = vld [vmem:[%s0 + $0x140] sm:$0xf]
  %v61 = vld [vmem:[%s1] sm:$0xff]
  %v62 = vld [vmem:[%s1 + $0x8] sm:$0xff]
  %v63 = vld [vmem:[%s1 + $0x10] sm:$0xff]
  %v64 = vld [vmem:[%s1 + $0x18] sm:$0xff]
  %v65 = vld [vmem:[%s1 + $0x20] sm:$0xff]
  %v66 = vld [vmem:[%s1 + $0x28] sm:$0xff]
  %v67 = vld [vmem:[%s1 + $0x30] sm:$0x1]
  %vm68 = vcmask 400384
  %v70 = vsel %vm68, %v20, 0
  %v73 = vsel %vm68, %v21, 0
  %v76 = vsel %vm68, %v22, 0
  %v79 = vsel %vm68, %v23, 0
  %v82 = vsel %vm68, %v24, 0
  %v85 = vsel %vm68, %v25, 0
  %v88 = vsel %vm68, %v26, 0
  %v91 = vsel %vm68, %v27, 0
  %v94 = vsel %vm68, %v28, 0
  %v97 = vsel %vm68, %v29, 0
  %v100 = vsel %vm68, %v30, 0
  %v103 = vsel %vm68, %v31, 0
  %v106 = vsel %vm68, %v32, 0
  %v109 = vsel %vm68, %v33, 0
  %v112 = vsel %vm68, %v34, 0
  %v115 = vsel %vm68, %v35, 0
  %v118 = vsel %vm68, %v36, 0
  %v121 = vsel %vm68, %v37, 0
  %v124 = vsel %vm68, %v38, 0
  %v127 = vsel %vm68, %v39, 0
  %v130 = vsel %vm68, %v40, 0
  %v133 = vsel %vm68, %v41, 0
  %v136 = vsel %vm68, %v42, 0
  %v139 = vsel %vm68, %v43, 0
  %v142 = vsel %vm68, %v44, 0
  %v145 = vsel %vm68, %v45, 0
  %v148 = vsel %vm68, %v46, 0
  %v151 = vsel %vm68, %v47, 0
  %v154 = vsel %vm68, %v48, 0
  %v157 = vsel %vm68, %v49, 0
  %v160 = vsel %vm68, %v50, 0
  %v163 = vsel %vm68, %v51, 0
  %v166 = vsel %vm68, %v52, 0
  %v169 = vsel %vm68, %v53, 0
  %v172 = vsel %vm68, %v54, 0
  %v175 = vsel %vm68, %v55, 0
  %v178 = vsel %vm68, %v56, 0
  %v181 = vsel %vm68, %v57, 0
  %v184 = vsel %vm68, %v58, 0
  %v187 = vsel %vm68, %v59, 0
  %v190 = vsel %vm68, %v60, 0
  %vm192 = vcmask 1040384
  %v194 = vsel %vm192, %v67, 0
  %196 = vmatprep.subr.mxu0 0.0
  %197 = vmatpush1.msra.mxu0 %v61
  %198 = vmatprep.subr.mxu0 0.0
  %199 = vmatpush1.msra.mxu0 %v62
  %200 = vmatprep.subr.mxu0 0.0
  %201 = vmatpush1.msra.mxu0 %v63
  %202 = vmatprep.subr.mxu0 0.0
  %203 = vmatpush1.msra.mxu0 %v64
  %204 = vmatprep.subr.mxu0 0.0
  %205 = vmatpush1.msra.mxu0 %v65
  %206 = vmatprep.subr.mxu0 0.0
  %207 = vmatpush1.msra.mxu0 %v66
  %208 = vmatprep.subr.mxu0 0.0
  %209 = vmatpush1.msra.mxu0 %v194
  %210 = vmatprep.subr.mxu0 0.0
  %211 = vmatpush1.msra.mxu0 0.0
  %212 = vmatprep.subr.mxu0 0.0
  %213 = vmatpush1.msra.mxu0 0.0
  %214 = vmatprep.subr.mxu0 0.0
  %215 = vmatpush1.msra.mxu0 0.0
  %216 = vmatprep.subr.mxu0 0.0
  %217 = vmatpush1.msra.mxu0 0.0
  %218 = vmatprep.subr.mxu0 0.0
  %219 = vmatpush1.msra.mxu0 0.0
  %220 = vmatprep.subr.mxu0 0.0
  %221 = vmatpush1.msra.mxu0 0.0
  %222 = vmatprep.subr.mxu0 0.0
  %223 = vmatpush1.msra.mxu0 0.0
  %224 = vmatprep.subr.mxu0 0.0
  %225 = vmatpush1.msra.mxu0 0.0
  %226 = vmatprep.subr.mxu0 0.0
  %227 = vmatpush1.msra.mxu0 0.0
  %228 = vmatprep.subr.mxu0 0.0
  %229 = vmatpush1.msra.mxu0 0.0
  %230 = vmatprep.subr.mxu0 0.0
  %231 = vmatpush1.msra.mxu0 0.0
  %232 = vmatprep.subr.mxu0 0.0
  %233 = vmatpush1.msra.mxu0 0.0
  %234 = vmatprep.subr.mxu0 0.0
  %235 = vmatpush1.msra.mxu0 0.0
  %236 = vmatprep.subr.mxu0 0.0
  %237 = vmatpush1.msra.mxu0 0.0
  %238 = vmatprep.subr.mxu0 0.0
  %239 = vmatpush1.msra.mxu0 0.0
  %240 = vmatprep.subr.mxu0 0.0
  %241 = vmatpush1.msra.mxu0 0.0
  %242 = vmatprep.subr.mxu0 0.0
  %243 = vmatpush1.msra.mxu0 0.0
  %244 = vmatprep.subr.mxu0 0.0
  %245 = vmatpush1.msra.mxu0 0.0
  %246 = vmatprep.subr.mxu0 0.0
  %247 = vmatpush1.msra.mxu0 0.0
  %248 = vmatprep.subr.mxu0 0.0
  %249 = vmatpush1.msra.mxu0 0.0
  %250 = vmatprep.subr.mxu0 0.0
  %251 = vmatpush1.msra.mxu0 0.0
  %252 = vmatprep.subr.mxu0 0.0
  %253 = vmatpush1.msra.mxu0 0.0
  %254 = vmatprep.subr.mxu0 0.0
  %255 = vmatpush1.msra.mxu0 0.0
  %256 = vmatprep.subr.mxu0 0.0
  %257 = vmatpush1.msra.mxu0 0.0
  %258 = vmatprep.subr.mxu0 0.0
  %259 = vmatpush1.msra.mxu0 0.0
  %260 = vmatprep.mubr.f32.mxu0 0.0
  %261 = vmatmul.mubr.f32.gmra.mrb[0].mxu0 %v70
  %v262 = vpop.f32.mrb[0].mxu0
  %v263 = vadd.f32 0.0, %v262
  %v264 = vpop.f32.mrb[0].mxu0
  %265 = vmatprep.mubr.f32.mxu0 0.0
  %266 = vmatmul.mubr.f32.gmra.mrb[0].mxu0 %v73
  %v267 = vpop.f32.mrb[0].mxu0
  %v268 = vadd.f32 0.0, %v267
  %v269 = vpop.f32.mrb[0].mxu0
  %270 = vmatprep.mubr.f32.mxu0 0.0
  %271 = vmatmul.mubr.f32.gmra.mrb[0].mxu0 %v76
  %v272 = vpop.f32.mrb[0].mxu0
  %v273 = vadd.f32 0.0, %v272
  %v274 = vpop.f32.mrb[0].mxu0
  %275 = vmatprep.mubr.f32.mxu0 0.0
  %276 = vmatmul.mubr.f32.gmra.mrb[0].mxu0 %v79
  %v277 = vpop.f32.mrb[0].mxu0
  %v278 = vadd.f32 0.0, %v277
  %v279 = vpop.f32.mrb[0].mxu0
  %280 = vmatprep.mubr.f32.mxu0 0.0
  %281 = vmatmul.mubr.f32.gmra.mrb[0].mxu0 %v82
  %v282 = vpop.f32.mrb[0].mxu0
  %v283 = vadd.f32 0.0, %v282
  %v284 = vpop.f32.mrb[0].mxu0
  %285 = vmatprep.mubr.f32.mxu0 0.0
  %286 = vmatmul.mubr.f32.gmra.mrb[0].mxu0 %v85
  %v287 = vpop.f32.mrb[0].mxu0
  %v288 = vadd.f32 0.0, %v287
  %v289 = vpop.f32.mrb[0].mxu0
  %290 = vmatprep.mubr.f32.mxu0 0.0
  %291 = vmatmul.mubr.f32.gmra.mrb[0].mxu0 %v88
  %v292 = vpop.f32.mrb[0].mxu0
  %v293 = vadd.f32 0.0, %v292
  %v294 = vpop.f32.mrb[0].mxu0
  %295 = vmatprep.mubr.f32.mxu0 0.0
  %296 = vmatmul.mubr.f32.gmra.mrb[0].mxu0 %v91
  %v297 = vpop.f32.mrb[0].mxu0
  %v298 = vadd.f32 0.0, %v297
  %v299 = vpop.f32.mrb[0].mxu0
  %300 = vmatprep.mubr.f32.mxu0 0.0
  %301 = vmatmul.mubr.f32.gmra.mrb[0].mxu0 %v94
  %v302 = vpop.f32.mrb[0].mxu0
  %v303 = vadd.f32 0.0, %v302
  %v304 = vpop.f32.mrb[0].mxu0
  %305 = vmatprep.mubr.f32.mxu0 0.0
  %306 = vmatmul.mubr.f32.gmra.mrb[0].mxu0 %v97
  %v307 = vpop.f32.mrb[0].mxu0
  %v308 = vadd.f32 0.0, %v307
  %v309 = vpop.f32.mrb[0].mxu0
  %310 = vmatprep.mubr.f32.mxu0 0.0
  %311 = vmatmul.mubr.f32.gmra.mrb[0].mxu0 %v100
  %v312 = vpop.f32.mrb[0].mxu0
  %v313 = vadd.f32 0.0, %v312
  %v314 = vpop.f32.mrb[0].mxu0
  %315 = vmatprep.mubr.f32.mxu0 0.0
  %316 = vmatmul.mubr.f32.gmra.mrb[0].mxu0 %v103
  %v317 = vpop.f32.mrb[0].mxu0
  %v318 = vadd.f32 0.0, %v317
  %v319 = vpop.f32.mrb[0].mxu0
  %320 = vmatprep.mubr.f32.mxu0 0.0
  %321 = vmatmul.mubr.f32.gmra.mrb[0].mxu0 %v106
  %v322 = vpop.f32.mrb[0].mxu0
  %v323 = vadd.f32 0.0, %v322
  %v324 = vpop.f32.mrb[0].mxu0
  %325 = vmatprep.mubr.f32.mxu0 0.0
  %326 = vmatmul.mubr.f32.gmra.mrb[0].mxu0 %v109
  %v327 = vpop.f32.mrb[0].mxu0
  %v328 = vadd.f32 0.0, %v327
  %v329 = vpop.f32.mrb[0].mxu0
  %330 = vmatprep.mubr.f32.mxu0 0.0
  %331 = vmatmul.mubr.f32.gmra.mrb[0].mxu0 %v112
  %v332 = vpop.f32.mrb[0].mxu0
  %v333 = vadd.f32 0.0, %v332
  %v334 = vpop.f32.mrb[0].mxu0
  %335 = vmatprep.mubr.f32.mxu0 0.0
  %336 = vmatmul.mubr.f32.gmra.mrb[0].mxu0 %v115
  %v337 = vpop.f32.mrb[0].mxu0
  %v338 = vadd.f32 0.0, %v337
  %v339 = vpop.f32.mrb[0].mxu0
  %340 = vmatprep.mubr.f32.mxu0 0.0
  %341 = vmatmul.mubr.f32.gmra.mrb[0].mxu0 %v118
  %v342 = vpop.f32.mrb[0].mxu0
  %v343 = vadd.f32 0.0, %v342
  %v344 = vpop.f32.mrb[0].mxu0
  %345 = vmatprep.mubr.f32.mxu0 0.0
  %346 = vmatmul.mubr.f32.gmra.mrb[0].mxu0 %v121
  %v347 = vpop.f32.mrb[0].mxu0
  %v348 = vadd.f32 0.0, %v347
  %v349 = vpop.f32.mrb[0].mxu0
  %350 = vmatprep.mubr.f32.mxu0 0.0
  %351 = vmatmul.mubr.f32.gmra.mrb[0].mxu0 %v124
  %v352 = vpop.f32.mrb[0].mxu0
  %v353 = vadd.f32 0.0, %v352
  %v354 = vpop.f32.mrb[0].mxu0
  %355 = vmatprep.mubr.f32.mxu0 0.0
  %356 = vmatmul.mubr.f32.gmra.mrb[0].mxu0 %v127
  %v357 = vpop.f32.mrb[0].mxu0
  %v358 = vadd.f32 0.0, %v357
  %v359 = vpop.f32.mrb[0].mxu0
  %360 = vmatprep.mubr.f32.mxu0 0.0
  %361 = vmatmul.mubr.f32.gmra.mrb[0].mxu0 %v130
  %v362 = vpop.f32.mrb[0].mxu0
  %v363 = vadd.f32 0.0, %v362
  %v364 = vpop.f32.mrb[0].mxu0
  %365 = vmatprep.mubr.f32.mxu0 0.0
  %366 = vmatmul.mubr.f32.gmra.mrb[0].mxu0 %v133
  %v367 = vpop.f32.mrb[0].mxu0
  %v368 = vadd.f32 0.0, %v367
  %v369 = vpop.f32.mrb[0].mxu0
  %370 = vmatprep.mubr.f32.mxu0 0.0
  %371 = vmatmul.mubr.f32.gmra.mrb[0].mxu0 %v136
  %v372 = vpop.f32.mrb[0].mxu0
  %v373 = vadd.f32 0.0, %v372
  %v374 = vpop.f32.mrb[0].mxu0
  %375 = vmatprep.mubr.f32.mxu0 0.0
  %376 = vmatmul.mubr.f32.gmra.mrb[0].mxu0 %v139
  %v377 = vpop.f32.mrb[0].mxu0
  %v378 = vadd.f32 0.0, %v377
  %v379 = vpop.f32.mrb[0].mxu0
  %380 = vmatprep.mubr.f32.mxu0 0.0
  %381 = vmatmul.mubr.f32.gmra.mrb[0].mxu0 %v142
  %v382 = vpop.f32.mrb[0].mxu0
  %v383 = vadd.f32 0.0, %v382
  %v384 = vpop.f32.mrb[0].mxu0
  %385 = vmatprep.mubr.f32.mxu0 0.0
  %386 = vmatmul.mubr.f32.gmra.mrb[0].mxu0 %v145
  %v387 = vpop.f32.mrb[0].mxu0
  %v388 = vadd.f32 0.0, %v387
  %v389 = vpop.f32.mrb[0].mxu0
  %390 = vmatprep.mubr.f32.mxu0 0.0
  %391 = vmatmul.mubr.f32.gmra.mrb[0].mxu0 %v148
  %v392 = vpop.f32.mrb[0].mxu0
  %v393 = vadd.f32 0.0, %v392
  %v394 = vpop.f32.mrb[0].mxu0
  %395 = vmatprep.mubr.f32.mxu0 0.0
  %396 = vmatmul.mubr.f32.gmra.mrb[0].mxu0 %v151
  %v397 = vpop.f32.mrb[0].mxu0
  %v398 = vadd.f32 0.0, %v397
  %v399 = vpop.f32.mrb[0].mxu0
  %400 = vmatprep.mubr.f32.mxu0 0.0
  %401 = vmatmul.mubr.f32.gmra.mrb[0].mxu0 %v154
  %v402 = vpop.f32.mrb[0].mxu0
  %v403 = vadd.f32 0.0, %v402
  %v404 = vpop.f32.mrb[0].mxu0
  %405 = vmatprep.mubr.f32.mxu0 0.0
  %406 = vmatmul.mubr.f32.gmra.mrb[0].mxu0 %v157
  %v407 = vpop.f32.mrb[0].mxu0
  %v408 = vadd.f32 0.0, %v407
  %v409 = vpop.f32.mrb[0].mxu0
  %410 = vmatprep.mubr.f32.mxu0 0.0
  %411 = vmatmul.mubr.f32.gmra.mrb[0].mxu0 %v160
  %v412 = vpop.f32.mrb[0].mxu0
  %v413 = vadd.f32 0.0, %v412
  %v414 = vpop.f32.mrb[0].mxu0
  %415 = vmatprep.mubr.f32.mxu0 0.0
  %416 = vmatmul.mubr.f32.gmra.mrb[0].mxu0 %v163
  %v417 = vpop.f32.mrb[0].mxu0
  %v418 = vadd.f32 0.0, %v417
  %v419 = vpop.f32.mrb[0].mxu0
  %420 = vmatprep.mubr.f32.mxu0 0.0
  %421 = vmatmul.mubr.f32.gmra.mrb[0].mxu0 %v166
  %v422 = vpop.f32.mrb[0].mxu0
  %v423 = vadd.f32 0.0, %v422
  %v424 = vpop.f32.mrb[0].mxu0
  %425 = vmatprep.mubr.f32.mxu0 0.0
  %426 = vmatmul.mubr.f32.gmra.mrb[0].mxu0 %v169
  %v427 = vpop.f32.mrb[0].mxu0
  %v428 = vadd.f32 0.0, %v427
  %v429 = vpop.f32.mrb[0].mxu0
  %430 = vmatprep.mubr.f32.mxu0 0.0
  %431 = vmatmul.mubr.f32.gmra.mrb[0].mxu0 %v172
  %v432 = vpop.f32.mrb[0].mxu0
  %v433 = vadd.f32 0.0, %v432
  %v434 = vpop.f32.mrb[0].mxu0
  %435 = vmatprep.mubr.f32.mxu0 0.0
  %436 = vmatmul.mubr.f32.gmra.mrb[0].mxu0 %v175
  %v437 = vpop.f32.mrb[0].mxu0
  %v438 = vadd.f32 0.0, %v437
  %v439 = vpop.f32.mrb[0].mxu0
  %440 = vmatprep.mubr.f32.mxu0 0.0
  %441 = vmatmul.mubr.f32.gmra.mrb[0].mxu0 %v178
  %v442 = vpop.f32.mrb[0].mxu0
  %v443 = vadd.f32 0.0, %v442
  %v444 = vpop.f32.mrb[0].mxu0
  %445 = vmatprep.mubr.f32.mxu0 0.0
  %446 = vmatmul.mubr.f32.gmra.mrb[0].mxu0 %v181
  %v447 = vpop.f32.mrb[0].mxu0
  %v448 = vadd.f32 0.0, %v447
  %v449 = vpop.f32.mrb[0].mxu0
  %450 = vmatprep.mubr.f32.mxu0 0.0
  %451 = vmatmul.mubr.f32.gmra.mrb[0].mxu0 %v184
  %v452 = vpop.f32.mrb[0].mxu0
  %v453 = vadd.f32 0.0, %v452
  %v454 = vpop.f32.mrb[0].mxu0
  %455 = vmatprep.mubr.f32.mxu0 0.0
  %456 = vmatmul.mubr.f32.gmra.mrb[0].mxu0 %v187
  %v457 = vpop.f32.mrb[0].mxu0
  %v458 = vadd.f32 0.0, %v457
  %v459 = vpop.f32.mrb[0].mxu0
  %460 = vmatprep.mubr.f32.mxu0 0.0
  %461 = vmatmul.mubr.f32.gmra.mrb[0].mxu0 %v190
  %v462 = vpop.f32.mrb[0].mxu0
  %v463 = vadd.f32 0.0, %v462
  %v464 = vpop.f32.mrb[0].mxu0
  %465 = vdwg.mxu0
  %v507 = vcombine.high %v263, %v263
  %v509 = vunpack.c.l.s4 1983009808
  %v510 = vunpack.c.0.s8 %v509
  %v511 = vlaneseq
  %v512 = vshrl.u32 %v511, 7
  %v513 = vsub.s32 %v510, %v512
  %v514 = vrot.slane %v263, %v513
  %v516 = vunpack.c.l.s4 1983009808
  %v517 = vunpack.c.0.s8 %v516
  %v518 = vlaneseq
  %v519 = vshrl.u32 %v518, 7
  %v520 = vsub.s32 %v517, %v519
  %v521 = vrot.slane %v507, %v520
  %v522 = vcombine.high %v514, %v514
  %v523 = vcombine.high %v521, %v521
  %v524 = vcombine.high %v268, %v268
  %v526 = vunpack.c.l.s4 1983009808
  %v527 = vunpack.c.0.s8 %v526
  %v528 = vlaneseq
  %v529 = vshrl.u32 %v528, 7
  %v530 = vsub.s32 %v527, %v529
  %v531 = vrot.slane %v268, %v530
  %v533 = vunpack.c.l.s4 1983009808
  %v534 = vunpack.c.0.s8 %v533
  %v535 = vlaneseq
  %v536 = vshrl.u32 %v535, 7
  %v537 = vsub.s32 %v534, %v536
  %v538 = vrot.slane %v524, %v537
  %v539 = vcombine.high %v531, %v531
  %v540 = vcombine.high %v538, %v538
  %v541 = vcombine.high %v273, %v273
  %v543 = vunpack.c.l.s4 1983009808
  %v544 = vunpack.c.0.s8 %v543
  %v545 = vlaneseq
  %v546 = vshrl.u32 %v545, 7
  %v547 = vsub.s32 %v544, %v546
  %v548 = vrot.slane %v273, %v547
  %v550 = vunpack.c.l.s4 1983009808
  %v551 = vunpack.c.0.s8 %v550
  %v552 = vlaneseq
  %v553 = vshrl.u32 %v552, 7
  %v554 = vsub.s32 %v551, %v553
  %v555 = vrot.slane %v541, %v554
  %v556 = vcombine.high %v548, %v548
  %v557 = vcombine.high %v555, %v555
  %v558 = vcombine.high %v278, %v278
  %v560 = vunpack.c.l.s4 1983009808
  %v561 = vunpack.c.0.s8 %v560
  %v562 = vlaneseq
  %v563 = vshrl.u32 %v562, 7
  %v564 = vsub.s32 %v561, %v563
  %v565 = vrot.slane %v278, %v564
  %v567 = vunpack.c.l.s4 1983009808
  %v568 = vunpack.c.0.s8 %v567
  %v569 = vlaneseq
  %v570 = vshrl.u32 %v569, 7
  %v571 = vsub.s32 %v568, %v570
  %v572 = vrot.slane %v558, %v571
  %v573 = vcombine.high %v565, %v565
  %v574 = vcombine.high %v572, %v572
  %v575 = vcombine.high %v283, %v283
  %v577 = vunpack.c.l.s4 1983009808
  %v578 = vunpack.c.0.s8 %v577
  %v579 = vlaneseq
  %v580 = vshrl.u32 %v579, 7
  %v581 = vsub.s32 %v578, %v580
  %v582 = vrot.slane %v283, %v581
  %v584 = vunpack.c.l.s4 1983009808
  %v585 = vunpack.c.0.s8 %v584
  %v586 = vlaneseq
  %v587 = vshrl.u32 %v586, 7
  %v588 = vsub.s32 %v585, %v587
  %v589 = vrot.slane %v575, %v588
  %v590 = vcombine.high %v582, %v582
  %v591 = vcombine.high %v589, %v589
  %v592 = vcombine.high %v288, %v288
  %v594 = vunpack.c.l.s4 1983009808
  %v595 = vunpack.c.0.s8 %v594
  %v596 = vlaneseq
  %v597 = vshrl.u32 %v596, 7
  %v598 = vsub.s32 %v595, %v597
  %v599 = vrot.slane %v288, %v598
  %v601 = vunpack.c.l.s4 1983009808
  %v602 = vunpack.c.0.s8 %v601
  %v603 = vlaneseq
  %v604 = vshrl.u32 %v603, 7
  %v605 = vsub.s32 %v602, %v604
  %v606 = vrot.slane %v592, %v605
  %v607 = vcombine.high %v599, %v599
  %v608 = vcombine.high %v606, %v606
  %v609 = vcombine.high %v293, %v293
  %v611 = vunpack.c.l.s4 1983009808
  %v612 = vunpack.c.0.s8 %v611
  %v613 = vlaneseq
  %v614 = vshrl.u32 %v613, 7
  %v615 = vsub.s32 %v612, %v614
  %v616 = vrot.slane %v293, %v615
  %v618 = vunpack.c.l.s4 1983009808
  %v619 = vunpack.c.0.s8 %v618
  %v620 = vlaneseq
  %v621 = vshrl.u32 %v620, 7
  %v622 = vsub.s32 %v619, %v621
  %v623 = vrot.slane %v609, %v622
  %v624 = vcombine.high %v616, %v616
  %v625 = vcombine.high %v623, %v623
  %v626 = vcombine.high %v298, %v298
  %v628 = vunpack.c.l.s4 1983009808
  %v629 = vunpack.c.0.s8 %v628
  %v630 = vlaneseq
  %v631 = vshrl.u32 %v630, 7
  %v632 = vsub.s32 %v629, %v631
  %v633 = vrot.slane %v298, %v632
  %v635 = vunpack.c.l.s4 1983009808
  %v636 = vunpack.c.0.s8 %v635
  %v637 = vlaneseq
  %v638 = vshrl.u32 %v637, 7
  %v639 = vsub.s32 %v636, %v638
  %v640 = vrot.slane %v626, %v639
  %v641 = vcombine.high %v633, %v633
  %v642 = vcombine.high %v640, %v640
  %v643 = vcombine.high %v303, %v303
  %v645 = vunpack.c.l.s4 1983009808
  %v646 = vunpack.c.0.s8 %v645
  %v647 = vlaneseq
  %v648 = vshrl.u32 %v647, 7
  %v649 = vsub.s32 %v646, %v648
  %v650 = vrot.slane %v303, %v649
  %v652 = vunpack.c.l.s4 1983009808
  %v653 = vunpack.c.0.s8 %v652
  %v654 = vlaneseq
  %v655 = vshrl.u32 %v654, 7
  %v656 = vsub.s32 %v653, %v655
  %v657 = vrot.slane %v643, %v656
  %v658 = vcombine.high %v650, %v650
  %v659 = vcombine.high %v657, %v657
  %v660 = vcombine.high %v308, %v308
  %v662 = vunpack.c.l.s4 1983009808
  %v663 = vunpack.c.0.s8 %v662
  %v664 = vlaneseq
  %v665 = vshrl.u32 %v664, 7
  %v666 = vsub.s32 %v663, %v665
  %v667 = vrot.slane %v308, %v666
  %v669 = vunpack.c.l.s4 1983009808
  %v670 = vunpack.c.0.s8 %v669
  %v671 = vlaneseq
  %v672 = vshrl.u32 %v671, 7
  %v673 = vsub.s32 %v670, %v672
  %v674 = vrot.slane %v660, %v673
  %v675 = vcombine.high %v667, %v667
  %v676 = vcombine.high %v674, %v674
  %v677 = vcombine.high %v313, %v313
  %v679 = vunpack.c.l.s4 1983009808
  %v680 = vunpack.c.0.s8 %v679
  %v681 = vlaneseq
  %v682 = vshrl.u32 %v681, 7
  %v683 = vsub.s32 %v680, %v682
  %v684 = vrot.slane %v313, %v683
  %v686 = vunpack.c.l.s4 1983009808
  %v687 = vunpack.c.0.s8 %v686
  %v688 = vlaneseq
  %v689 = vshrl.u32 %v688, 7
  %v690 = vsub.s32 %v687, %v689
  %v691 = vrot.slane %v677, %v690
  %v692 = vcombine.high %v684, %v684
  %v693 = vcombine.high %v691, %v691
  %v694 = vcombine.high %v318, %v318
  %v696 = vunpack.c.l.s4 1983009808
  %v697 = vunpack.c.0.s8 %v696
  %v698 = vlaneseq
  %v699 = vshrl.u32 %v698, 7
  %v700 = vsub.s32 %v697, %v699
  %v701 = vrot.slane %v318, %v700
  %v703 = vunpack.c.l.s4 1983009808
  %v704 = vunpack.c.0.s8 %v703
  %v705 = vlaneseq
  %v706 = vshrl.u32 %v705, 7
  %v707 = vsub.s32 %v704, %v706
  %v708 = vrot.slane %v694, %v707
  %v709 = vcombine.high %v701, %v701
  %v710 = vcombine.high %v708, %v708
  %v711 = vcombine.high %v323, %v323
  %v713 = vunpack.c.l.s4 1983009808
  %v714 = vunpack.c.0.s8 %v713
  %v715 = vlaneseq
  %v716 = vshrl.u32 %v715, 7
  %v717 = vsub.s32 %v714, %v716
  %v718 = vrot.slane %v323, %v717
  %v720 = vunpack.c.l.s4 1983009808
  %v721 = vunpack.c.0.s8 %v720
  %v722 = vlaneseq
  %v723 = vshrl.u32 %v722, 7
  %v724 = vsub.s32 %v721, %v723
  %v725 = vrot.slane %v711, %v724
  %v726 = vcombine.high %v718, %v718
  %v727 = vcombine.high %v725, %v725
  %v728 = vcombine.high %v328, %v328
  %v730 = vunpack.c.l.s4 1983009808
  %v731 = vunpack.c.0.s8 %v730
  %v732 = vlaneseq
  %v733 = vshrl.u32 %v732, 7
  %v734 = vsub.s32 %v731, %v733
  %v735 = vrot.slane %v328, %v734
  %v737 = vunpack.c.l.s4 1983009808
  %v738 = vunpack.c.0.s8 %v737
  %v739 = vlaneseq
  %v740 = vshrl.u32 %v739, 7
  %v741 = vsub.s32 %v738, %v740
  %v742 = vrot.slane %v728, %v741
  %v743 = vcombine.high %v735, %v735
  %v744 = vcombine.high %v742, %v742
  %v745 = vcombine.high %v333, %v333
  %v747 = vunpack.c.l.s4 1983009808
  %v748 = vunpack.c.0.s8 %v747
  %v749 = vlaneseq
  %v750 = vshrl.u32 %v749, 7
  %v751 = vsub.s32 %v748, %v750
  %v752 = vrot.slane %v333, %v751
  %v754 = vunpack.c.l.s4 1983009808
  %v755 = vunpack.c.0.s8 %v754
  %v756 = vlaneseq
  %v757 = vshrl.u32 %v756, 7
  %v758 = vsub.s32 %v755, %v757
  %v759 = vrot.slane %v745, %v758
  %v760 = vcombine.high %v752, %v752
  %v761 = vcombine.high %v759, %v759
  %v762 = vcombine.high %v338, %v338
  %v764 = vunpack.c.l.s4 1983009808
  %v765 = vunpack.c.0.s8 %v764
  %v766 = vlaneseq
  %v767 = vshrl.u32 %v766, 7
  %v768 = vsub.s32 %v765, %v767
  %v769 = vrot.slane %v338, %v768
  %v771 = vunpack.c.l.s4 1983009808
  %v772 = vunpack.c.0.s8 %v771
  %v773 = vlaneseq
  %v774 = vshrl.u32 %v773, 7
  %v775 = vsub.s32 %v772, %v774
  %v776 = vrot.slane %v762, %v775
  %v777 = vcombine.high %v769, %v769
  %v778 = vcombine.high %v776, %v776
  %v779 = vcombine.high %v343, %v343
  %v781 = vunpack.c.l.s4 1983009808
  %v782 = vunpack.c.0.s8 %v781
  %v783 = vlaneseq
  %v784 = vshrl.u32 %v783, 7
  %v785 = vsub.s32 %v782, %v784
  %v786 = vrot.slane %v343, %v785
  %v788 = vunpack.c.l.s4 1983009808
  %v789 = vunpack.c.0.s8 %v788
  %v790 = vlaneseq
  %v791 = vshrl.u32 %v790, 7
  %v792 = vsub.s32 %v789, %v791
  %v793 = vrot.slane %v779, %v792
  %v794 = vcombine.high %v786, %v786
  %v795 = vcombine.high %v793, %v793
  %v796 = vcombine.high %v348, %v348
  %v798 = vunpack.c.l.s4 1983009808
  %v799 = vunpack.c.0.s8 %v798
  %v800 = vlaneseq
  %v801 = vshrl.u32 %v800, 7
  %v802 = vsub.s32 %v799, %v801
  %v803 = vrot.slane %v348, %v802
  %v805 = vunpack.c.l.s4 1983009808
  %v806 = vunpack.c.0.s8 %v805
  %v807 = vlaneseq
  %v808 = vshrl.u32 %v807, 7
  %v809 = vsub.s32 %v806, %v808
  %v810 = vrot.slane %v796, %v809
  %v811 = vcombine.high %v803, %v803
  %v812 = vcombine.high %v810, %v810
  %v813 = vcombine.high %v353, %v353
  %v815 = vunpack.c.l.s4 1983009808
  %v816 = vunpack.c.0.s8 %v815
  %v817 = vlaneseq
  %v818 = vshrl.u32 %v817, 7
  %v819 = vsub.s32 %v816, %v818
  %v820 = vrot.slane %v353, %v819
  %v822 = vunpack.c.l.s4 1983009808
  %v823 = vunpack.c.0.s8 %v822
  %v824 = vlaneseq
  %v825 = vshrl.u32 %v824, 7
  %v826 = vsub.s32 %v823, %v825
  %v827 = vrot.slane %v813, %v826
  %v828 = vcombine.high %v820, %v820
  %v829 = vcombine.high %v827, %v827
  %v830 = vcombine.high %v358, %v358
  %v832 = vunpack.c.l.s4 1983009808
  %v833 = vunpack.c.0.s8 %v832
  %v834 = vlaneseq
  %v835 = vshrl.u32 %v834, 7
  %v836 = vsub.s32 %v833, %v835
  %v837 = vrot.slane %v358, %v836
  %v839 = vunpack.c.l.s4 1983009808
  %v840 = vunpack.c.0.s8 %v839
  %v841 = vlaneseq
  %v842 = vshrl.u32 %v841, 7
  %v843 = vsub.s32 %v840, %v842
  %v844 = vrot.slane %v830, %v843
  %v845 = vcombine.high %v837, %v837
  %v846 = vcombine.high %v844, %v844
  %v847 = vcombine.high %v363, %v363
  %v849 = vunpack.c.l.s4 1983009808
  %v850 = vunpack.c.0.s8 %v849
  %v851 = vlaneseq
  %v852 = vshrl.u32 %v851, 7
  %v853 = vsub.s32 %v850, %v852
  %v854 = vrot.slane %v363, %v853
  %v856 = vunpack.c.l.s4 1983009808
  %v857 = vunpack.c.0.s8 %v856
  %v858 = vlaneseq
  %v859 = vshrl.u32 %v858, 7
  %v860 = vsub.s32 %v857, %v859
  %v861 = vrot.slane %v847, %v860
  %v862 = vcombine.high %v854, %v854
  %v863 = vcombine.high %v861, %v861
  %v864 = vcombine.high %v368, %v368
  %v866 = vunpack.c.l.s4 1983009808
  %v867 = vunpack.c.0.s8 %v866
  %v868 = vlaneseq
  %v869 = vshrl.u32 %v868, 7
  %v870 = vsub.s32 %v867, %v869
  %v871 = vrot.slane %v368, %v870
  %v873 = vunpack.c.l.s4 1983009808
  %v874 = vunpack.c.0.s8 %v873
  %v875 = vlaneseq
  %v876 = vshrl.u32 %v875, 7
  %v877 = vsub.s32 %v874, %v876
  %v878 = vrot.slane %v864, %v877
  %v879 = vcombine.high %v871, %v871
  %v880 = vcombine.high %v878, %v878
  %v881 = vcombine.high %v373, %v373
  %v883 = vunpack.c.l.s4 1983009808
  %v884 = vunpack.c.0.s8 %v883
  %v885 = vlaneseq
  %v886 = vshrl.u32 %v885, 7
  %v887 = vsub.s32 %v884, %v886
  %v888 = vrot.slane %v373, %v887
  %v890 = vunpack.c.l.s4 1983009808
  %v891 = vunpack.c.0.s8 %v890
  %v892 = vlaneseq
  %v893 = vshrl.u32 %v892, 7
  %v894 = vsub.s32 %v891, %v893
  %v895 = vrot.slane %v881, %v894
  %v896 = vcombine.high %v888, %v888
  %v897 = vcombine.high %v895, %v895
  %v898 = vcombine.high %v378, %v378
  %v900 = vunpack.c.l.s4 1983009808
  %v901 = vunpack.c.0.s8 %v900
  %v902 = vlaneseq
  %v903 = vshrl.u32 %v902, 7
  %v904 = vsub.s32 %v901, %v903
  %v905 = vrot.slane %v378, %v904
  %v907 = vunpack.c.l.s4 1983009808
  %v908 = vunpack.c.0.s8 %v907
  %v909 = vlaneseq
  %v910 = vshrl.u32 %v909, 7
  %v911 = vsub.s32 %v908, %v910
  %v912 = vrot.slane %v898, %v911
  %v913 = vcombine.high %v905, %v905
  %v914 = vcombine.high %v912, %v912
  %v915 = vcombine.high %v383, %v383
  %v917 = vunpack.c.l.s4 1983009808
  %v918 = vunpack.c.0.s8 %v917
  %v919 = vlaneseq
  %v920 = vshrl.u32 %v919, 7
  %v921 = vsub.s32 %v918, %v920
  %v922 = vrot.slane %v383, %v921
  %v924 = vunpack.c.l.s4 1983009808
  %v925 = vunpack.c.0.s8 %v924
  %v926 = vlaneseq
  %v927 = vshrl.u32 %v926, 7
  %v928 = vsub.s32 %v925, %v927
  %v929 = vrot.slane %v915, %v928
  %v930 = vcombine.high %v922, %v922
  %v931 = vcombine.high %v929, %v929
  %v932 = vcombine.high %v388, %v388
  %v934 = vunpack.c.l.s4 1983009808
  %v935 = vunpack.c.0.s8 %v934
  %v936 = vlaneseq
  %v937 = vshrl.u32 %v936, 7
  %v938 = vsub.s32 %v935, %v937
  %v939 = vrot.slane %v388, %v938
  %v941 = vunpack.c.l.s4 1983009808
  %v942 = vunpack.c.0.s8 %v941
  %v943 = vlaneseq
  %v944 = vshrl.u32 %v943, 7
  %v945 = vsub.s32 %v942, %v944
  %v946 = vrot.slane %v932, %v945
  %v947 = vcombine.high %v939, %v939
  %v948 = vcombine.high %v946, %v946
  %v949 = vcombine.high %v393, %v393
  %v951 = vunpack.c.l.s4 1983009808
  %v952 = vunpack.c.0.s8 %v951
  %v953 = vlaneseq
  %v954 = vshrl.u32 %v953, 7
  %v955 = vsub.s32 %v952, %v954
  %v956 = vrot.slane %v393, %v955
  %v958 = vunpack.c.l.s4 1983009808
  %v959 = vunpack.c.0.s8 %v958
  %v960 = vlaneseq
  %v961 = vshrl.u32 %v960, 7
  %v962 = vsub.s32 %v959, %v961
  %v963 = vrot.slane %v949, %v962
  %v964 = vcombine.high %v956, %v956
  %v965 = vcombine.high %v963, %v963
  %v966 = vcombine.high %v398, %v398
  %v968 = vunpack.c.l.s4 1983009808
  %v969 = vunpack.c.0.s8 %v968
  %v970 = vlaneseq
  %v971 = vshrl.u32 %v970, 7
  %v972 = vsub.s32 %v969, %v971
  %v973 = vrot.slane %v398, %v972
  %v975 = vunpack.c.l.s4 1983009808
  %v976 = vunpack.c.0.s8 %v975
  %v977 = vlaneseq
  %v978 = vshrl.u32 %v977, 7
  %v979 = vsub.s32 %v976, %v978
  %v980 = vrot.slane %v966, %v979
  %v981 = vcombine.high %v973, %v973
  %v982 = vcombine.high %v980, %v980
  %v983 = vcombine.high %v403, %v403
  %v985 = vunpack.c.l.s4 1983009808
  %v986 = vunpack.c.0.s8 %v985
  %v987 = vlaneseq
  %v988 = vshrl.u32 %v987, 7
  %v989 = vsub.s32 %v986, %v988
  %v990 = vrot.slane %v403, %v989
  %v992 = vunpack.c.l.s4 1983009808
  %v993 = vunpack.c.0.s8 %v992
  %v994 = vlaneseq
  %v995 = vshrl.u32 %v994, 7
  %v996 = vsub.s32 %v993, %v995
  %v997 = vrot.slane %v983, %v996
  %v998 = vcombine.high %v990, %v990
  %v999 = vcombine.high %v997, %v997
  %v1000 = vcombine.high %v408, %v408
  %v1002 = vunpack.c.l.s4 1983009808
  %v1003 = vunpack.c.0.s8 %v1002
  %v1004 = vlaneseq
  %v1005 = vshrl.u32 %v1004, 7
  %v1006 = vsub.s32 %v1003, %v1005
  %v1007 = vrot.slane %v408, %v1006
  %v1009 = vunpack.c.l.s4 1983009808
  %v1010 = vunpack.c.0.s8 %v1009
  %v1011 = vlaneseq
  %v1012 = vshrl.u32 %v1011, 7
  %v1013 = vsub.s32 %v1010, %v1012
  %v1014 = vrot.slane %v1000, %v1013
  %v1015 = vcombine.high %v1007, %v1007
  %v1016 = vcombine.high %v1014, %v1014
  %v1017 = vcombine.high %v413, %v413
  %v1019 = vunpack.c.l.s4 1983009808
  %v1020 = vunpack.c.0.s8 %v1019
  %v1021 = vlaneseq
  %v1022 = vshrl.u32 %v1021, 7
  %v1023 = vsub.s32 %v1020, %v1022
  %v1024 = vrot.slane %v413, %v1023
  %v1026 = vunpack.c.l.s4 1983009808
  %v1027 = vunpack.c.0.s8 %v1026
  %v1028 = vlaneseq
  %v1029 = vshrl.u32 %v1028, 7
  %v1030 = vsub.s32 %v1027, %v1029
  %v1031 = vrot.slane %v1017, %v1030
  %v1032 = vcombine.high %v1024, %v1024
  %v1033 = vcombine.high %v1031, %v1031
  %v1034 = vcombine.high %v418, %v418
  %v1036 = vunpack.c.l.s4 1983009808
  %v1037 = vunpack.c.0.s8 %v1036
  %v1038 = vlaneseq
  %v1039 = vshrl.u32 %v1038, 7
  %v1040 = vsub.s32 %v1037, %v1039
  %v1041 = vrot.slane %v418, %v1040
  %v1043 = vunpack.c.l.s4 1983009808
  %v1044 = vunpack.c.0.s8 %v1043
  %v1045 = vlaneseq
  %v1046 = vshrl.u32 %v1045, 7
  %v1047 = vsub.s32 %v1044, %v1046
  %v1048 = vrot.slane %v1034, %v1047
  %v1049 = vcombine.high %v1041, %v1041
  %v1050 = vcombine.high %v1048, %v1048
  %v1051 = vcombine.high %v423, %v423
  %v1053 = vunpack.c.l.s4 1983009808
  %v1054 = vunpack.c.0.s8 %v1053
  %v1055 = vlaneseq
  %v1056 = vshrl.u32 %v1055, 7
  %v1057 = vsub.s32 %v1054, %v1056
  %v1058 = vrot.slane %v423, %v1057
  %v1060 = vunpack.c.l.s4 1983009808
  %v1061 = vunpack.c.0.s8 %v1060
  %v1062 = vlaneseq
  %v1063 = vshrl.u32 %v1062, 7
  %v1064 = vsub.s32 %v1061, %v1063
  %v1065 = vrot.slane %v1051, %v1064
  %v1066 = vcombine.high %v1058, %v1058
  %v1067 = vcombine.high %v1065, %v1065
  %v1068 = vcombine.high %v428, %v428
  %v1070 = vunpack.c.l.s4 1983009808
  %v1071 = vunpack.c.0.s8 %v1070
  %v1072 = vlaneseq
  %v1073 = vshrl.u32 %v1072, 7
  %v1074 = vsub.s32 %v1071, %v1073
  %v1075 = vrot.slane %v428, %v1074
  %v1077 = vunpack.c.l.s4 1983009808
  %v1078 = vunpack.c.0.s8 %v1077
  %v1079 = vlaneseq
  %v1080 = vshrl.u32 %v1079, 7
  %v1081 = vsub.s32 %v1078, %v1080
  %v1082 = vrot.slane %v1068, %v1081
  %v1083 = vcombine.high %v1075, %v1075
  %v1084 = vcombine.high %v1082, %v1082
  %v1085 = vcombine.high %v433, %v433
  %v1087 = vunpack.c.l.s4 1983009808
  %v1088 = vunpack.c.0.s8 %v1087
  %v1089 = vlaneseq
  %v1090 = vshrl.u32 %v1089, 7
  %v1091 = vsub.s32 %v1088, %v1090
  %v1092 = vrot.slane %v433, %v1091
  %v1094 = vunpack.c.l.s4 1983009808
  %v1095 = vunpack.c.0.s8 %v1094
  %v1096 = vlaneseq
  %v1097 = vshrl.u32 %v1096, 7
  %v1098 = vsub.s32 %v1095, %v1097
  %v1099 = vrot.slane %v1085, %v1098
  %v1100 = vcombine.high %v1092, %v1092
  %v1101 = vcombine.high %v1099, %v1099
  %v1102 = vcombine.high %v438, %v438
  %v1104 = vunpack.c.l.s4 1983009808
  %v1105 = vunpack.c.0.s8 %v1104
  %v1106 = vlaneseq
  %v1107 = vshrl.u32 %v1106, 7
  %v1108 = vsub.s32 %v1105, %v1107
  %v1109 = vrot.slane %v438, %v1108
  %v1111 = vunpack.c.l.s4 1983009808
  %v1112 = vunpack.c.0.s8 %v1111
  %v1113 = vlaneseq
  %v1114 = vshrl.u32 %v1113, 7
  %v1115 = vsub.s32 %v1112, %v1114
  %v1116 = vrot.slane %v1102, %v1115
  %v1117 = vcombine.high %v1109, %v1109
  %v1118 = vcombine.high %v1116, %v1116
  %v1119 = vcombine.high %v443, %v443
  %v1121 = vunpack.c.l.s4 1983009808
  %v1122 = vunpack.c.0.s8 %v1121
  %v1123 = vlaneseq
  %v1124 = vshrl.u32 %v1123, 7
  %v1125 = vsub.s32 %v1122, %v1124
  %v1126 = vrot.slane %v443, %v1125
  %v1128 = vunpack.c.l.s4 1983009808
  %v1129 = vunpack.c.0.s8 %v1128
  %v1130 = vlaneseq
  %v1131 = vshrl.u32 %v1130, 7
  %v1132 = vsub.s32 %v1129, %v1131
  %v1133 = vrot.slane %v1119, %v1132
  %v1134 = vcombine.high %v1126, %v1126
  %v1135 = vcombine.high %v1133, %v1133
  %v1136 = vcombine.high %v448, %v448
  %v1138 = vunpack.c.l.s4 1983009808
  %v1139 = vunpack.c.0.s8 %v1138
  %v1140 = vlaneseq
  %v1141 = vshrl.u32 %v1140, 7
  %v1142 = vsub.s32 %v1139, %v1141
  %v1143 = vrot.slane %v448, %v1142
  %v1145 = vunpack.c.l.s4 1983009808
  %v1146 = vunpack.c.0.s8 %v1145
  %v1147 = vlaneseq
  %v1148 = vshrl.u32 %v1147, 7
  %v1149 = vsub.s32 %v1146, %v1148
  %v1150 = vrot.slane %v1136, %v1149
  %v1151 = vcombine.high %v1143, %v1143
  %v1152 = vcombine.high %v1150, %v1150
  %v1153 = vcombine.high %v453, %v453
  %v1155 = vunpack.c.l.s4 1983009808
  %v1156 = vunpack.c.0.s8 %v1155
  %v1157 = vlaneseq
  %v1158 = vshrl.u32 %v1157, 7
  %v1159 = vsub.s32 %v1156, %v1158
  %v1160 = vrot.slane %v453, %v1159
  %v1162 = vunpack.c.l.s4 1983009808
  %v1163 = vunpack.c.0.s8 %v1162
  %v1164 = vlaneseq
  %v1165 = vshrl.u32 %v1164, 7
  %v1166 = vsub.s32 %v1163, %v1165
  %v1167 = vrot.slane %v1153, %v1166
  %v1168 = vcombine.high %v1160, %v1160
  %v1169 = vcombine.high %v1167, %v1167
  %v1170 = vcombine.high %v458, %v458
  %v1172 = vunpack.c.l.s4 1983009808
  %v1173 = vunpack.c.0.s8 %v1172
  %v1174 = vlaneseq
  %v1175 = vshrl.u32 %v1174, 7
  %v1176 = vsub.s32 %v1173, %v1175
  %v1177 = vrot.slane %v458, %v1176
  %v1179 = vunpack.c.l.s4 1983009808
  %v1180 = vunpack.c.0.s8 %v1179
  %v1181 = vlaneseq
  %v1182 = vshrl.u32 %v1181, 7
  %v1183 = vsub.s32 %v1180, %v1182
  %v1184 = vrot.slane %v1170, %v1183
  %v1185 = vcombine.high %v1177, %v1177
  %v1186 = vcombine.high %v1184, %v1184
  %v1188 = vunpack.c.l.s4 1983009808
  %v1189 = vunpack.c.0.s8 %v1188
  %v1190 = vlaneseq
  %v1191 = vshrl.u32 %v1190, 7
  %v1192 = vsub.s32 %v1189, %v1191
  %v1193 = vrot.slane %v463, %v1192
  %v1194 = vcombine.high %v1193, %v1193
  %v1195 = vcombine.low %v514, %v522
  %v1196 = vcombine.low %v521, %v523
  %v1198 = vunpack.c.l.s4 1983009808
  %v1199 = vunpack.c.0.s8 %v1198
  %v1200 = vlaneseq
  %v1201 = vshrl.u32 %v1200, 7
  %v1202 = vsub.s32 %v1199, %v1201
  %v1203 = vrot.slane %v1195, %v1202
  %v1205 = vunpack.c.l.s4 1983009808
  %v1206 = vunpack.c.0.s8 %v1205
  %v1207 = vlaneseq
  %v1208 = vshrl.u32 %v1207, 7
  %v1209 = vsub.s32 %v1206, %v1208
  %v1210 = vrot.slane %v1196, %v1209
  %v1211 = vcombine.low %v1203, %v1210
  %v1212 = vcombine.low %v531, %v539
  %v1214 = vunpack.c.l.s4 1983009808
  %v1215 = vunpack.c.0.s8 %v1214
  %v1216 = vlaneseq
  %v1217 = vshrl.u32 %v1216, 7
  %v1218 = vsub.s32 %v1215, %v1217
  %v1219 = vrot.slane %v1212, %v1218
  %v1221 = vunpack.c.l.s4 1983009808
  %v1222 = vunpack.c.0.s8 %v1221
  %v1223 = vlaneseq
  %v1224 = vshrl.u32 %v1223, 7
  %v1225 = vsub.s32 %v1222, %v1224
  %v1226 = vrot.slane %v538, %v1225
  %v1227 = vcombine.low %v1219, %v1226
  %v1228 = vcombine.low %v556, %v555
  %v1229 = vcombine.low %v557, %v565
  %v1231 = vunpack.c.l.s4 1983009808
  %v1232 = vunpack.c.0.s8 %v1231
  %v1233 = vlaneseq
  %v1234 = vshrl.u32 %v1233, 7
  %v1235 = vsub.s32 %v1232, %v1234
  %v1236 = vrot.slane %v1228, %v1235
  %v1238 = vunpack.c.l.s4 1983009808
  %v1239 = vunpack.c.0.s8 %v1238
  %v1240 = vlaneseq
  %v1241 = vshrl.u32 %v1240, 7
  %v1242 = vsub.s32 %v1239, %v1241
  %v1243 = vrot.slane %v1229, %v1242
  %v1244 = vcombine.low %v1236, %v1243
  %v1245 = vcombine.low %v573, %v572
  %v1247 = vunpack.c.l.s4 1983009808
  %v1248 = vunpack.c.0.s8 %v1247
  %v1249 = vlaneseq
  %v1250 = vshrl.u32 %v1249, 7
  %v1251 = vsub.s32 %v1248, %v1250
  %v1252 = vrot.slane %v1245, %v1251
  %v1254 = vunpack.c.l.s4 1983009808
  %v1255 = vunpack.c.0.s8 %v1254
  %v1256 = vlaneseq
  %v1257 = vshrl.u32 %v1256, 7
  %v1258 = vsub.s32 %v1255, %v1257
  %v1259 = vrot.slane %v574, %v1258
  %v1260 = vcombine.low %v1252, %v1259
  %v1261 = vcombine.low %v589, %v591
  %v1262 = vcombine.low %v599, %v607
  %v1264 = vunpack.c.l.s4 1983009808
  %v1265 = vunpack.c.0.s8 %v1264
  %v1266 = vlaneseq
  %v1267 = vshrl.u32 %v1266, 7
  %v1268 = vsub.s32 %v1265, %v1267
  %v1269 = vrot.slane %v1261, %v1268
  %v1271 = vunpack.c.l.s4 1983009808
  %v1272 = vunpack.c.0.s8 %v1271
  %v1273 = vlaneseq
  %v1274 = vshrl.u32 %v1273, 7
  %v1275 = vsub.s32 %v1272, %v1274
  %v1276 = vrot.slane %v1262, %v1275
  %v1277 = vcombine.low %v1269, %v1276
  %v1278 = vcombine.low %v606, %v608
  %v1280 = vunpack.c.l.s4 1983009808
  %v1281 = vunpack.c.0.s8 %v1280
  %v1282 = vlaneseq
  %v1283 = vshrl.u32 %v1282, 7
  %v1284 = vsub.s32 %v1281, %v1283
  %v1285 = vrot.slane %v1278, %v1284
  %v1287 = vunpack.c.l.s4 1983009808
  %v1288 = vunpack.c.0.s8 %v1287
  %v1289 = vlaneseq
  %v1290 = vshrl.u32 %v1289, 7
  %v1291 = vsub.s32 %v1288, %v1290
  %v1292 = vrot.slane %v616, %v1291
  %v1293 = vcombine.low %v1285, %v1292
  %v1294 = vcombine.low %v625, %v633
  %v1295 = vcombine.low %v641, %v640
  %v1297 = vunpack.c.l.s4 1983009808
  %v1298 = vunpack.c.0.s8 %v1297
  %v1299 = vlaneseq
  %v1300 = vshrl.u32 %v1299, 7
  %v1301 = vsub.s32 %v1298, %v1300
  %v1302 = vrot.slane %v1294, %v1301
  %v1304 = vunpack.c.l.s4 1983009808
  %v1305 = vunpack.c.0.s8 %v1304
  %v1306 = vlaneseq
  %v1307 = vshrl.u32 %v1306, 7
  %v1308 = vsub.s32 %v1305, %v1307
  %v1309 = vrot.slane %v1295, %v1308
  %v1310 = vcombine.low %v1302, %v1309
  %v1311 = vcombine.low %v642, %v650
  %v1313 = vunpack.c.l.s4 1983009808
  %v1314 = vunpack.c.0.s8 %v1313
  %v1315 = vlaneseq
  %v1316 = vshrl.u32 %v1315, 7
  %v1317 = vsub.s32 %v1314, %v1316
  %v1318 = vrot.slane %v1311, %v1317
  %v1320 = vunpack.c.l.s4 1983009808
  %v1321 = vunpack.c.0.s8 %v1320
  %v1322 = vlaneseq
  %v1323 = vshrl.u32 %v1322, 7
  %v1324 = vsub.s32 %v1321, %v1323
  %v1325 = vrot.slane %v658, %v1324
  %v1326 = vcombine.low %v1318, %v1325
  %v1327 = vcombine.low %v667, %v675
  %v1328 = vcombine.low %v674, %v676
  %v1330 = vunpack.c.l.s4 1983009808
  %v1331 = vunpack.c.0.s8 %v1330
  %v1332 = vlaneseq
  %v1333 = vshrl.u32 %v1332, 7
  %v1334 = vsub.s32 %v1331, %v1333
  %v1335 = vrot.slane %v1327, %v1334
  %v1337 = vunpack.c.l.s4 1983009808
  %v1338 = vunpack.c.0.s8 %v1337
  %v1339 = vlaneseq
  %v1340 = vshrl.u32 %v1339, 7
  %v1341 = vsub.s32 %v1338, %v1340
  %v1342 = vrot.slane %v1328, %v1341
  %v1343 = vcombine.low %v1335, %v1342
  %v1344 = vcombine.low %v684, %v692
  %v1346 = vunpack.c.l.s4 1983009808
  %v1347 = vunpack.c.0.s8 %v1346
  %v1348 = vlaneseq
  %v1349 = vshrl.u32 %v1348, 7
  %v1350 = vsub.s32 %v1347, %v1349
  %v1351 = vrot.slane %v1344, %v1350
  %v1353 = vunpack.c.l.s4 1983009808
  %v1354 = vunpack.c.0.s8 %v1353
  %v1355 = vlaneseq
  %v1356 = vshrl.u32 %v1355, 7
  %v1357 = vsub.s32 %v1354, %v1356
  %v1358 = vrot.slane %v691, %v1357
  %v1359 = vcombine.low %v1351, %v1358
  %v1360 = vcombine.low %v709, %v708
  %v1361 = vcombine.low %v710, %v718
  %v1363 = vunpack.c.l.s4 1983009808
  %v1364 = vunpack.c.0.s8 %v1363
  %v1365 = vlaneseq
  %v1366 = vshrl.u32 %v1365, 7
  %v1367 = vsub.s32 %v1364, %v1366
  %v1368 = vrot.slane %v1360, %v1367
  %v1370 = vunpack.c.l.s4 1983009808
  %v1371 = vunpack.c.0.s8 %v1370
  %v1372 = vlaneseq
  %v1373 = vshrl.u32 %v1372, 7
  %v1374 = vsub.s32 %v1371, %v1373
  %v1375 = vrot.slane %v1361, %v1374
  %v1376 = vcombine.low %v1368, %v1375
  %v1377 = vcombine.low %v726, %v725
  %v1379 = vunpack.c.l.s4 1983009808
  %v1380 = vunpack.c.0.s8 %v1379
  %v1381 = vlaneseq
  %v1382 = vshrl.u32 %v1381, 7
  %v1383 = vsub.s32 %v1380, %v1382
  %v1384 = vrot.slane %v1377, %v1383
  %v1386 = vunpack.c.l.s4 1983009808
  %v1387 = vunpack.c.0.s8 %v1386
  %v1388 = vlaneseq
  %v1389 = vshrl.u32 %v1388, 7
  %v1390 = vsub.s32 %v1387, %v1389
  %v1391 = vrot.slane %v727, %v1390
  %v1392 = vcombine.low %v1384, %v1391
  %v1393 = vcombine.low %v742, %v744
  %v1394 = vcombine.low %v752, %v760
  %v1396 = vunpack.c.l.s4 1983009808
  %v1397 = vunpack.c.0.s8 %v1396
  %v1398 = vlaneseq
  %v1399 = vshrl.u32 %v1398, 7
  %v1400 = vsub.s32 %v1397, %v1399
  %v1401 = vrot.slane %v1393, %v1400
  %v1403 = vunpack.c.l.s4 1983009808
  %v1404 = vunpack.c.0.s8 %v1403
  %v1405 = vlaneseq
  %v1406 = vshrl.u32 %v1405, 7
  %v1407 = vsub.s32 %v1404, %v1406
  %v1408 = vrot.slane %v1394, %v1407
  %v1409 = vcombine.low %v1401, %v1408
  %v1410 = vcombine.low %v759, %v761
  %v1412 = vunpack.c.l.s4 1983009808
  %v1413 = vunpack.c.0.s8 %v1412
  %v1414 = vlaneseq
  %v1415 = vshrl.u32 %v1414, 7
  %v1416 = vsub.s32 %v1413, %v1415
  %v1417 = vrot.slane %v1410, %v1416
  %v1419 = vunpack.c.l.s4 1983009808
  %v1420 = vunpack.c.0.s8 %v1419
  %v1421 = vlaneseq
  %v1422 = vshrl.u32 %v1421, 7
  %v1423 = vsub.s32 %v1420, %v1422
  %v1424 = vrot.slane %v769, %v1423
  %v1425 = vcombine.low %v1417, %v1424
  %v1426 = vcombine.low %v778, %v786
  %v1427 = vcombine.low %v794, %v793
  %v1429 = vunpack.c.l.s4 1983009808
  %v1430 = vunpack.c.0.s8 %v1429
  %v1431 = vlaneseq
  %v1432 = vshrl.u32 %v1431, 7
  %v1433 = vsub.s32 %v1430, %v1432
  %v1434 = vrot.slane %v1426, %v1433
  %v1436 = vunpack.c.l.s4 1983009808
  %v1437 = vunpack.c.0.s8 %v1436
  %v1438 = vlaneseq
  %v1439 = vshrl.u32 %v1438, 7
  %v1440 = vsub.s32 %v1437, %v1439
  %v1441 = vrot.slane %v1427, %v1440
  %v1442 = vcombine.low %v1434, %v1441
  %v1443 = vcombine.low %v795, %v803
  %v1445 = vunpack.c.l.s4 1983009808
  %v1446 = vunpack.c.0.s8 %v1445
  %v1447 = vlaneseq
  %v1448 = vshrl.u32 %v1447, 7
  %v1449 = vsub.s32 %v1446, %v1448
  %v1450 = vrot.slane %v1443, %v1449
  %v1452 = vunpack.c.l.s4 1983009808
  %v1453 = vunpack.c.0.s8 %v1452
  %v1454 = vlaneseq
  %v1455 = vshrl.u32 %v1454, 7
  %v1456 = vsub.s32 %v1453, %v1455
  %v1457 = vrot.slane %v811, %v1456
  %v1458 = vcombine.low %v1450, %v1457
  %v1459 = vcombine.low %v820, %v828
  %v1460 = vcombine.low %v827, %v829
  %v1462 = vunpack.c.l.s4 1983009808
  %v1463 = vunpack.c.0.s8 %v1462
  %v1464 = vlaneseq
  %v1465 = vshrl.u32 %v1464, 7
  %v1466 = vsub.s32 %v1463, %v1465
  %v1467 = vrot.slane %v1459, %v1466
  %v1469 = vunpack.c.l.s4 1983009808
  %v1470 = vunpack.c.0.s8 %v1469
  %v1471 = vlaneseq
  %v1472 = vshrl.u32 %v1471, 7
  %v1473 = vsub.s32 %v1470, %v1472
  %v1474 = vrot.slane %v1460, %v1473
  %v1475 = vcombine.low %v1467, %v1474
  %v1476 = vcombine.low %v837, %v845
  %v1478 = vunpack.c.l.s4 1983009808
  %v1479 = vunpack.c.0.s8 %v1478
  %v1480 = vlaneseq
  %v1481 = vshrl.u32 %v1480, 7
  %v1482 = vsub.s32 %v1479, %v1481
  %v1483 = vrot.slane %v1476, %v1482
  %v1485 = vunpack.c.l.s4 1983009808
  %v1486 = vunpack.c.0.s8 %v1485
  %v1487 = vlaneseq
  %v1488 = vshrl.u32 %v1487, 7
  %v1489 = vsub.s32 %v1486, %v1488
  %v1490 = vrot.slane %v844, %v1489
  %v1491 = vcombine.low %v1483, %v1490
  %v1492 = vcombine.low %v862, %v861
  %v1493 = vcombine.low %v863, %v871
  %v1495 = vunpack.c.l.s4 1983009808
  %v1496 = vunpack.c.0.s8 %v1495
  %v1497 = vlaneseq
  %v1498 = vshrl.u32 %v1497, 7
  %v1499 = vsub.s32 %v1496, %v1498
  %v1500 = vrot.slane %v1492, %v1499
  %v1502 = vunpack.c.l.s4 1983009808
  %v1503 = vunpack.c.0.s8 %v1502
  %v1504 = vlaneseq
  %v1505 = vshrl.u32 %v1504, 7
  %v1506 = vsub.s32 %v1503, %v1505
  %v1507 = vrot.slane %v1493, %v1506
  %v1508 = vcombine.low %v1500, %v1507
  %v1509 = vcombine.low %v879, %v878
  %v1511 = vunpack.c.l.s4 1983009808
  %v1512 = vunpack.c.0.s8 %v1511
  %v1513 = vlaneseq
  %v1514 = vshrl.u32 %v1513, 7
  %v1515 = vsub.s32 %v1512, %v1514
  %v1516 = vrot.slane %v1509, %v1515
  %v1518 = vunpack.c.l.s4 1983009808
  %v1519 = vunpack.c.0.s8 %v1518
  %v1520 = vlaneseq
  %v1521 = vshrl.u32 %v1520, 7
  %v1522 = vsub.s32 %v1519, %v1521
  %v1523 = vrot.slane %v880, %v1522
  %v1524 = vcombine.low %v1516, %v1523
  %v1525 = vcombine.low %v895, %v897
  %v1526 = vcombine.low %v905, %v913
  %v1528 = vunpack.c.l.s4 1983009808
  %v1529 = vunpack.c.0.s8 %v1528
  %v1530 = vlaneseq
  %v1531 = vshrl.u32 %v1530, 7
  %v1532 = vsub.s32 %v1529, %v1531
  %v1533 = vrot.slane %v1525, %v1532
  %v1535 = vunpack.c.l.s4 1983009808
  %v1536 = vunpack.c.0.s8 %v1535
  %v1537 = vlaneseq
  %v1538 = vshrl.u32 %v1537, 7
  %v1539 = vsub.s32 %v1536, %v1538
  %v1540 = vrot.slane %v1526, %v1539
  %v1541 = vcombine.low %v1533, %v1540
  %v1542 = vcombine.low %v912, %v914
  %v1544 = vunpack.c.l.s4 1983009808
  %v1545 = vunpack.c.0.s8 %v1544
  %v1546 = vlaneseq
  %v1547 = vshrl.u32 %v1546, 7
  %v1548 = vsub.s32 %v1545, %v1547
  %v1549 = vrot.slane %v1542, %v1548
  %v1551 = vunpack.c.l.s4 1983009808
  %v1552 = vunpack.c.0.s8 %v1551
  %v1553 = vlaneseq
  %v1554 = vshrl.u32 %v1553, 7
  %v1555 = vsub.s32 %v1552, %v1554
  %v1556 = vrot.slane %v922, %v1555
  %v1557 = vcombine.low %v1549, %v1556
  %v1558 = vcombine.low %v931, %v939
  %v1559 = vcombine.low %v947, %v946
  %v1561 = vunpack.c.l.s4 1983009808
  %v1562 = vunpack.c.0.s8 %v1561
  %v1563 = vlaneseq
  %v1564 = vshrl.u32 %v1563, 7
  %v1565 = vsub.s32 %v1562, %v1564
  %v1566 = vrot.slane %v1558, %v1565
  %v1568 = vunpack.c.l.s4 1983009808
  %v1569 = vunpack.c.0.s8 %v1568
  %v1570 = vlaneseq
  %v1571 = vshrl.u32 %v1570, 7
  %v1572 = vsub.s32 %v1569, %v1571
  %v1573 = vrot.slane %v1559, %v1572
  %v1574 = vcombine.low %v1566, %v1573
  %v1575 = vcombine.low %v948, %v956
  %v1577 = vunpack.c.l.s4 1983009808
  %v1578 = vunpack.c.0.s8 %v1577
  %v1579 = vlaneseq
  %v1580 = vshrl.u32 %v1579, 7
  %v1581 = vsub.s32 %v1578, %v1580
  %v1582 = vrot.slane %v1575, %v1581
  %v1584 = vunpack.c.l.s4 1983009808
  %v1585 = vunpack.c.0.s8 %v1584
  %v1586 = vlaneseq
  %v1587 = vshrl.u32 %v1586, 7
  %v1588 = vsub.s32 %v1585, %v1587
  %v1589 = vrot.slane %v964, %v1588
  %v1590 = vcombine.low %v1582, %v1589
  %v1591 = vcombine.low %v973, %v981
  %v1592 = vcombine.low %v980, %v982
  %v1594 = vunpack.c.l.s4 1983009808
  %v1595 = vunpack.c.0.s8 %v1594
  %v1596 = vlaneseq
  %v1597 = vshrl.u32 %v1596, 7
  %v1598 = vsub.s32 %v1595, %v1597
  %v1599 = vrot.slane %v1591, %v1598
  %v1601 = vunpack.c.l.s4 1983009808
  %v1602 = vunpack.c.0.s8 %v1601
  %v1603 = vlaneseq
  %v1604 = vshrl.u32 %v1603, 7
  %v1605 = vsub.s32 %v1602, %v1604
  %v1606 = vrot.slane %v1592, %v1605
  %v1607 = vcombine.low %v1599, %v1606
  %v1608 = vcombine.low %v990, %v998
  %v1610 = vunpack.c.l.s4 1983009808
  %v1611 = vunpack.c.0.s8 %v1610
  %v1612 = vlaneseq
  %v1613 = vshrl.u32 %v1612, 7
  %v1614 = vsub.s32 %v1611, %v1613
  %v1615 = vrot.slane %v1608, %v1614
  %v1617 = vunpack.c.l.s4 1983009808
  %v1618 = vunpack.c.0.s8 %v1617
  %v1619 = vlaneseq
  %v1620 = vshrl.u32 %v1619, 7
  %v1621 = vsub.s32 %v1618, %v1620
  %v1622 = vrot.slane %v997, %v1621
  %v1623 = vcombine.low %v1615, %v1622
  %v1624 = vcombine.low %v1015, %v1014
  %v1625 = vcombine.low %v1016, %v1024
  %v1627 = vunpack.c.l.s4 1983009808
  %v1628 = vunpack.c.0.s8 %v1627
  %v1629 = vlaneseq
  %v1630 = vshrl.u32 %v1629, 7
  %v1631 = vsub.s32 %v1628, %v1630
  %v1632 = vrot.slane %v1624, %v1631
  %v1634 = vunpack.c.l.s4 1983009808
  %v1635 = vunpack.c.0.s8 %v1634
  %v1636 = vlaneseq
  %v1637 = vshrl.u32 %v1636, 7
  %v1638 = vsub.s32 %v1635, %v1637
  %v1639 = vrot.slane %v1625, %v1638
  %v1640 = vcombine.low %v1632, %v1639
  %v1641 = vcombine.low %v1032, %v1031
  %v1643 = vunpack.c.l.s4 1983009808
  %v1644 = vunpack.c.0.s8 %v1643
  %v1645 = vlaneseq
  %v1646 = vshrl.u32 %v1645, 7
  %v1647 = vsub.s32 %v1644, %v1646
  %v1648 = vrot.slane %v1641, %v1647
  %v1650 = vunpack.c.l.s4 1983009808
  %v1651 = vunpack.c.0.s8 %v1650
  %v1652 = vlaneseq
  %v1653 = vshrl.u32 %v1652, 7
  %v1654 = vsub.s32 %v1651, %v1653
  %v1655 = vrot.slane %v1033, %v1654
  %v1656 = vcombine.low %v1648, %v1655
  %v1685 = vcombine.low %v538, %v540
  %v1687 = vunpack.c.l.s4 1983009808
  %v1688 = vunpack.c.0.s8 %v1687
  %v1689 = vlaneseq
  %v1690 = vshrl.u32 %v1689, 7
  %v1691 = vsub.s32 %v1688, %v1690
  %v1692 = vrot.slane %v1685, %v1691
  %v1693 = vcombine.low %v1219, %v1692
  %v1694 = vcombine.low %v574, %v582
  %v1696 = vunpack.c.l.s4 1983009808
  %v1697 = vunpack.c.0.s8 %v1696
  %v1698 = vlaneseq
  %v1699 = vshrl.u32 %v1698, 7
  %v1700 = vsub.s32 %v1697, %v1699
  %v1701 = vrot.slane %v1694, %v1700
  %v1702 = vcombine.low %v1252, %v1701
  %v1703 = vcombine.low %v616, %v624
  %v1705 = vunpack.c.l.s4 1983009808
  %v1706 = vunpack.c.0.s8 %v1705
  %v1707 = vlaneseq
  %v1708 = vshrl.u32 %v1707, 7
  %v1709 = vsub.s32 %v1706, %v1708
  %v1710 = vrot.slane %v1703, %v1709
  %v1711 = vcombine.low %v1285, %v1710
  %v1712 = vcombine.low %v658, %v657
  %v1714 = vunpack.c.l.s4 1983009808
  %v1715 = vunpack.c.0.s8 %v1714
  %v1716 = vlaneseq
  %v1717 = vshrl.u32 %v1716, 7
  %v1718 = vsub.s32 %v1715, %v1717
  %v1719 = vrot.slane %v1712, %v1718
  %v1720 = vcombine.low %v1318, %v1719
  %v1721 = vcombine.low %v691, %v693
  %v1723 = vunpack.c.l.s4 1983009808
  %v1724 = vunpack.c.0.s8 %v1723
  %v1725 = vlaneseq
  %v1726 = vshrl.u32 %v1725, 7
  %v1727 = vsub.s32 %v1724, %v1726
  %v1728 = vrot.slane %v1721, %v1727
  %v1729 = vcombine.low %v1351, %v1728
  %v1730 = vcombine.low %v727, %v735
  %v1732 = vunpack.c.l.s4 1983009808
  %v1733 = vunpack.c.0.s8 %v1732
  %v1734 = vlaneseq
  %v1735 = vshrl.u32 %v1734, 7
  %v1736 = vsub.s32 %v1733, %v1735
  %v1737 = vrot.slane %v1730, %v1736
  %v1738 = vcombine.low %v1384, %v1737
  %v1739 = vcombine.low %v769, %v777
  %v1741 = vunpack.c.l.s4 1983009808
  %v1742 = vunpack.c.0.s8 %v1741
  %v1743 = vlaneseq
  %v1744 = vshrl.u32 %v1743, 7
  %v1745 = vsub.s32 %v1742, %v1744
  %v1746 = vrot.slane %v1739, %v1745
  %v1747 = vcombine.low %v1417, %v1746
  %v1748 = vcombine.low %v811, %v810
  %v1750 = vunpack.c.l.s4 1983009808
  %v1751 = vunpack.c.0.s8 %v1750
  %v1752 = vlaneseq
  %v1753 = vshrl.u32 %v1752, 7
  %v1754 = vsub.s32 %v1751, %v1753
  %v1755 = vrot.slane %v1748, %v1754
  %v1756 = vcombine.low %v1450, %v1755
  %v1757 = vcombine.low %v844, %v846
  %v1759 = vunpack.c.l.s4 1983009808
  %v1760 = vunpack.c.0.s8 %v1759
  %v1761 = vlaneseq
  %v1762 = vshrl.u32 %v1761, 7
  %v1763 = vsub.s32 %v1760, %v1762
  %v1764 = vrot.slane %v1757, %v1763
  %v1765 = vcombine.low %v1483, %v1764
  %v1766 = vcombine.low %v880, %v888
  %v1768 = vunpack.c.l.s4 1983009808
  %v1769 = vunpack.c.0.s8 %v1768
  %v1770 = vlaneseq
  %v1771 = vshrl.u32 %v1770, 7
  %v1772 = vsub.s32 %v1769, %v1771
  %v1773 = vrot.slane %v1766, %v1772
  %v1774 = vcombine.low %v1516, %v1773
  %v1775 = vcombine.low %v922, %v930
  %v1777 = vunpack.c.l.s4 1983009808
  %v1778 = vunpack.c.0.s8 %v1777
  %v1779 = vlaneseq
  %v1780 = vshrl.u32 %v1779, 7
  %v1781 = vsub.s32 %v1778, %v1780
  %v1782 = vrot.slane %v1775, %v1781
  %v1783 = vcombine.low %v1549, %v1782
  %v1784 = vcombine.low %v964, %v963
  %v1786 = vunpack.c.l.s4 1983009808
  %v1787 = vunpack.c.0.s8 %v1786
  %v1788 = vlaneseq
  %v1789 = vshrl.u32 %v1788, 7
  %v1790 = vsub.s32 %v1787, %v1789
  %v1791 = vrot.slane %v1784, %v1790
  %v1792 = vcombine.low %v1582, %v1791
  %v1793 = vcombine.low %v997, %v999
  %v1795 = vunpack.c.l.s4 1983009808
  %v1796 = vunpack.c.0.s8 %v1795
  %v1797 = vlaneseq
  %v1798 = vshrl.u32 %v1797, 7
  %v1799 = vsub.s32 %v1796, %v1798
  %v1800 = vrot.slane %v1793, %v1799
  %v1801 = vcombine.low %v1615, %v1800
  %v1802 = vcombine.low %v1033, %v1041
  %v1804 = vunpack.c.l.s4 1983009808
  %v1805 = vunpack.c.0.s8 %v1804
  %v1806 = vlaneseq
  %v1807 = vshrl.u32 %v1806, 7
  %v1808 = vsub.s32 %v1805, %v1807
  %v1809 = vrot.slane %v1802, %v1808
  %v1810 = vcombine.low %v1648, %v1809
  %vm1811 = vcmask 1046528
  %v1812 = vrot.slane %v1211, 1
  %v1813 = vrot.slane %v1693, 1
  %v1814 = vsel %vm1811, %v1812, %v1813
  %v1815 = vrot.slane %v1244, 1
  %v1816 = vrot.slane %v1702, 1
  %v1817 = vsel %vm1811, %v1815, %v1816
  %v1818 = vrot.slane %v1277, 1
  %v1819 = vrot.slane %v1711, 1
  %v1820 = vsel %vm1811, %v1818, %v1819
  %v1821 = vrot.slane %v1310, 1
  %v1822 = vrot.slane %v1720, 1
  %v1823 = vsel %vm1811, %v1821, %v1822
  %v1824 = vrot.slane %v1343, 1
  %v1825 = vrot.slane %v1729, 1
  %v1826 = vsel %vm1811, %v1824, %v1825
  %v1827 = vrot.slane %v1376, 1
  %v1828 = vrot.slane %v1738, 1
  %v1829 = vsel %vm1811, %v1827, %v1828
  %v1830 = vrot.slane %v1409, 1
  %v1831 = vrot.slane %v1747, 1
  %v1832 = vsel %vm1811, %v1830, %v1831
  %v1833 = vrot.slane %v1442, 1
  %v1834 = vrot.slane %v1756, 1
  %v1835 = vsel %vm1811, %v1833, %v1834
  %v1836 = vrot.slane %v1475, 1
  %v1837 = vrot.slane %v1765, 1
  %v1838 = vsel %vm1811, %v1836, %v1837
  %v1839 = vrot.slane %v1508, 1
  %v1840 = vrot.slane %v1774, 1
  %v1841 = vsel %vm1811, %v1839, %v1840
  %v1842 = vrot.slane %v1541, 1
  %v1843 = vrot.slane %v1783, 1
  %v1844 = vsel %vm1811, %v1842, %v1843
  %v1845 = vrot.slane %v1574, 1
  %v1846 = vrot.slane %v1792, 1
  %v1847 = vsel %vm1811, %v1845, %v1846
  %v1848 = vrot.slane %v1607, 1
  %v1849 = vrot.slane %v1801, 1
  %v1850 = vsel %vm1811, %v1848, %v1849
  %v1851 = vrot.slane %v1640, 1
  %v1852 = vrot.slane %v1810, 1
  %v1853 = vsel %vm1811, %v1851, %v1852
  %1854 = vrot.lane.b32.xlu0 %v1814, 16
  %v1855 = vpop.permute.xlu0 %1854
  %1856 = vrot.lane.b32.xlu0 %v1813, 16
  %v1857 = vpop.permute.xlu0 %1856
  %1858 = vrot.lane.b32.xlu0 %v1817, 16
  %v1859 = vpop.permute.xlu0 %1858
  %1860 = vrot.lane.b32.xlu0 %v1816, 16
  %v1861 = vpop.permute.xlu0 %1860
  %1862 = vrot.lane.b32.xlu0 %v1820, 16
  %v1863 = vpop.permute.xlu0 %1862
  %1864 = vrot.lane.b32.xlu0 %v1819, 16
  %v1865 = vpop.permute.xlu0 %1864
  %1866 = vrot.lane.b32.xlu0 %v1823, 16
  %v1867 = vpop.permute.xlu0 %1866
  %1868 = vrot.lane.b32.xlu0 %v1822, 16
  %v1869 = vpop.permute.xlu0 %1868
  %1870 = vrot.lane.b32.xlu0 %v1826, 16
  %v1871 = vpop.permute.xlu0 %1870
  %1872 = vrot.lane.b32.xlu0 %v1825, 16
  %v1873 = vpop.permute.xlu0 %1872
  %1874 = vrot.lane.b32.xlu0 %v1829, 16
  %v1875 = vpop.permute.xlu0 %1874
  %1876 = vrot.lane.b32.xlu0 %v1828, 16
  %v1877 = vpop.permute.xlu0 %1876
  %1878 = vrot.lane.b32.xlu0 %v1832, 16
  %v1879 = vpop.permute.xlu0 %1878
  %1880 = vrot.lane.b32.xlu0 %v1831, 16
  %v1881 = vpop.permute.xlu0 %1880
  %1882 = vrot.lane.b32.xlu0 %v1835, 16
  %v1883 = vpop.permute.xlu0 %1882
  %1884 = vrot.lane.b32.xlu0 %v1834, 16
  %v1885 = vpop.permute.xlu0 %1884
  %1886 = vrot.lane.b32.xlu0 %v1838, 16
  %v1887 = vpop.permute.xlu0 %1886
  %1888 = vrot.lane.b32.xlu0 %v1837, 16
  %v1889 = vpop.permute.xlu0 %1888
  %1890 = vrot.lane.b32.xlu0 %v1841, 16
  %v1891 = vpop.permute.xlu0 %1890
  %1892 = vrot.lane.b32.xlu0 %v1840, 16
  %v1893 = vpop.permute.xlu0 %1892
  %1894 = vrot.lane.b32.xlu0 %v1844, 16
  %v1895 = vpop.permute.xlu0 %1894
  %1896 = vrot.lane.b32.xlu0 %v1843, 16
  %v1897 = vpop.permute.xlu0 %1896
  %1898 = vrot.lane.b32.xlu0 %v1847, 16
  %v1899 = vpop.permute.xlu0 %1898
  %1900 = vrot.lane.b32.xlu0 %v1846, 16
  %v1901 = vpop.permute.xlu0 %1900
  %1902 = vrot.lane.b32.xlu0 %v1850, 16
  %v1903 = vpop.permute.xlu0 %1902
  %1904 = vrot.lane.b32.xlu0 %v1849, 16
  %v1905 = vpop.permute.xlu0 %1904
  %1906 = vrot.lane.b32.xlu0 %v1853, 16
  %v1907 = vpop.permute.xlu0 %1906
  %1908 = vrot.lane.b32.xlu0 %v1852, 16
  %v1909 = vpop.permute.xlu0 %1908
  %v1938 = vcombine.low %v522, %v521
  %v1939 = vcombine.low %v523, %v531
  %v1941 = vunpack.c.l.s4 1983009808
  %v1942 = vunpack.c.0.s8 %v1941
  %v1943 = vlaneseq
  %v1944 = vshrl.u32 %v1943, 7
  %v1945 = vsub.s32 %v1942, %v1944
  %v1946 = vrot.slane %v1938, %v1945
  %v1948 = vunpack.c.l.s4 1983009808
  %v1949 = vunpack.c.0.s8 %v1948
  %v1950 = vlaneseq
  %v1951 = vshrl.u32 %v1950, 7
  %v1952 = vsub.s32 %v1949, %v1951
  %v1953 = vrot.slane %v1939, %v1952
  %v1954 = vcombine.low %v1946, %v1953
  %v1955 = vcombine.low %v539, %v538
  %v1957 = vunpack.c.l.s4 1983009808
  %v1958 = vunpack.c.0.s8 %v1957
  %v1959 = vlaneseq
  %v1960 = vshrl.u32 %v1959, 7
  %v1961 = vsub.s32 %v1958, %v1960
  %v1962 = vrot.slane %v1955, %v1961
  %v1964 = vunpack.c.l.s4 1983009808
  %v1965 = vunpack.c.0.s8 %v1964
  %v1966 = vlaneseq
  %v1967 = vshrl.u32 %v1966, 7
  %v1968 = vsub.s32 %v1965, %v1967
  %v1969 = vrot.slane %v540, %v1968
  %v1970 = vcombine.low %v1962, %v1969
  %v1971 = vcombine.low %v555, %v557
  %v1972 = vcombine.low %v565, %v573
  %v1974 = vunpack.c.l.s4 1983009808
  %v1975 = vunpack.c.0.s8 %v1974
  %v1976 = vlaneseq
  %v1977 = vshrl.u32 %v1976, 7
  %v1978 = vsub.s32 %v1975, %v1977
  %v1979 = vrot.slane %v1971, %v1978
  %v1981 = vunpack.c.l.s4 1983009808
  %v1982 = vunpack.c.0.s8 %v1981
  %v1983 = vlaneseq
  %v1984 = vshrl.u32 %v1983, 7
  %v1985 = vsub.s32 %v1982, %v1984
  %v1986 = vrot.slane %v1972, %v1985
  %v1987 = vcombine.low %v1979, %v1986
  %v1988 = vcombine.low %v572, %v574
  %v1990 = vunpack.c.l.s4 1983009808
  %v1991 = vunpack.c.0.s8 %v1990
  %v1992 = vlaneseq
  %v1993 = vshrl.u32 %v1992, 7
  %v1994 = vsub.s32 %v1991, %v1993
  %v1995 = vrot.slane %v1988, %v1994
  %v1997 = vunpack.c.l.s4 1983009808
  %v1998 = vunpack.c.0.s8 %v1997
  %v1999 = vlaneseq
  %v2000 = vshrl.u32 %v1999, 7
  %v2001 = vsub.s32 %v1998, %v2000
  %v2002 = vrot.slane %v582, %v2001
  %v2003 = vcombine.low %v1995, %v2002
  %v2004 = vcombine.low %v591, %v599
  %v2005 = vcombine.low %v607, %v606
  %v2007 = vunpack.c.l.s4 1983009808
  %v2008 = vunpack.c.0.s8 %v2007
  %v2009 = vlaneseq
  %v2010 = vshrl.u32 %v2009, 7
  %v2011 = vsub.s32 %v2008, %v2010
  %v2012 = vrot.slane %v2004, %v2011
  %v2014 = vunpack.c.l.s4 1983009808
  %v2015 = vunpack.c.0.s8 %v2014
  %v2016 = vlaneseq
  %v2017 = vshrl.u32 %v2016, 7
  %v2018 = vsub.s32 %v2015, %v2017
  %v2019 = vrot.slane %v2005, %v2018
  %v2020 = vcombine.low %v2012, %v2019
  %v2021 = vcombine.low %v608, %v616
  %v2023 = vunpack.c.l.s4 1983009808
  %v2024 = vunpack.c.0.s8 %v2023
  %v2025 = vlaneseq
  %v2026 = vshrl.u32 %v2025, 7
  %v2027 = vsub.s32 %v2024, %v2026
  %v2028 = vrot.slane %v2021, %v2027
  %v2030 = vunpack.c.l.s4 1983009808
  %v2031 = vunpack.c.0.s8 %v2030
  %v2032 = vlaneseq
  %v2033 = vshrl.u32 %v2032, 7
  %v2034 = vsub.s32 %v2031, %v2033
  %v2035 = vrot.slane %v624, %v2034
  %v2036 = vcombine.low %v2028, %v2035
  %v2037 = vcombine.low %v633, %v641
  %v2038 = vcombine.low %v640, %v642
  %v2040 = vunpack.c.l.s4 1983009808
  %v2041 = vunpack.c.0.s8 %v2040
  %v2042 = vlaneseq
  %v2043 = vshrl.u32 %v2042, 7
  %v2044 = vsub.s32 %v2041, %v2043
  %v2045 = vrot.slane %v2037, %v2044
  %v2047 = vunpack.c.l.s4 1983009808
  %v2048 = vunpack.c.0.s8 %v2047
  %v2049 = vlaneseq
  %v2050 = vshrl.u32 %v2049, 7
  %v2051 = vsub.s32 %v2048, %v2050
  %v2052 = vrot.slane %v2038, %v2051
  %v2053 = vcombine.low %v2045, %v2052
  %v2054 = vcombine.low %v650, %v658
  %v2056 = vunpack.c.l.s4 1983009808
  %v2057 = vunpack.c.0.s8 %v2056
  %v2058 = vlaneseq
  %v2059 = vshrl.u32 %v2058, 7
  %v2060 = vsub.s32 %v2057, %v2059
  %v2061 = vrot.slane %v2054, %v2060
  %v2063 = vunpack.c.l.s4 1983009808
  %v2064 = vunpack.c.0.s8 %v2063
  %v2065 = vlaneseq
  %v2066 = vshrl.u32 %v2065, 7
  %v2067 = vsub.s32 %v2064, %v2066
  %v2068 = vrot.slane %v657, %v2067
  %v2069 = vcombine.low %v2061, %v2068
  %v2070 = vcombine.low %v675, %v674
  %v2071 = vcombine.low %v676, %v684
  %v2073 = vunpack.c.l.s4 1983009808
  %v2074 = vunpack.c.0.s8 %v2073
  %v2075 = vlaneseq
  %v2076 = vshrl.u32 %v2075, 7
  %v2077 = vsub.s32 %v2074, %v2076
  %v2078 = vrot.slane %v2070, %v2077
  %v2080 = vunpack.c.l.s4 1983009808
  %v2081 = vunpack.c.0.s8 %v2080
  %v2082 = vlaneseq
  %v2083 = vshrl.u32 %v2082, 7
  %v2084 = vsub.s32 %v2081, %v2083
  %v2085 = vrot.slane %v2071, %v2084
  %v2086 = vcombine.low %v2078, %v2085
  %v2087 = vcombine.low %v692, %v691
  %v2089 = vunpack.c.l.s4 1983009808
  %v2090 = vunpack.c.0.s8 %v2089
  %v2091 = vlaneseq
  %v2092 = vshrl.u32 %v2091, 7
  %v2093 = vsub.s32 %v2090, %v2092
  %v2094 = vrot.slane %v2087, %v2093
  %v2096 = vunpack.c.l.s4 1983009808
  %v2097 = vunpack.c.0.s8 %v2096
  %v2098 = vlaneseq
  %v2099 = vshrl.u32 %v2098, 7
  %v2100 = vsub.s32 %v2097, %v2099
  %v2101 = vrot.slane %v693, %v2100
  %v2102 = vcombine.low %v2094, %v2101
  %v2103 = vcombine.low %v708, %v710
  %v2104 = vcombine.low %v718, %v726
  %v2106 = vunpack.c.l.s4 1983009808
  %v2107 = vunpack.c.0.s8 %v2106
  %v2108 = vlaneseq
  %v2109 = vshrl.u32 %v2108, 7
  %v2110 = vsub.s32 %v2107, %v2109
  %v2111 = vrot.slane %v2103, %v2110
  %v2113 = vunpack.c.l.s4 1983009808
  %v2114 = vunpack.c.0.s8 %v2113
  %v2115 = vlaneseq
  %v2116 = vshrl.u32 %v2115, 7
  %v2117 = vsub.s32 %v2114, %v2116
  %v2118 = vrot.slane %v2104, %v2117
  %v2119 = vcombine.low %v2111, %v2118
  %v2120 = vcombine.low %v725, %v727
  %v2122 = vunpack.c.l.s4 1983009808
  %v2123 = vunpack.c.0.s8 %v2122
  %v2124 = vlaneseq
  %v2125 = vshrl.u32 %v2124, 7
  %v2126 = vsub.s32 %v2123, %v2125
  %v2127 = vrot.slane %v2120, %v2126
  %v2129 = vunpack.c.l.s4 1983009808
  %v2130 = vunpack.c.0.s8 %v2129
  %v2131 = vlaneseq
  %v2132 = vshrl.u32 %v2131, 7
  %v2133 = vsub.s32 %v2130, %v2132
  %v2134 = vrot.slane %v735, %v2133
  %v2135 = vcombine.low %v2127, %v2134
  %v2136 = vcombine.low %v744, %v752
  %v2137 = vcombine.low %v760, %v759
  %v2139 = vunpack.c.l.s4 1983009808
  %v2140 = vunpack.c.0.s8 %v2139
  %v2141 = vlaneseq
  %v2142 = vshrl.u32 %v2141, 7
  %v2143 = vsub.s32 %v2140, %v2142
  %v2144 = vrot.slane %v2136, %v2143
  %v2146 = vunpack.c.l.s4 1983009808
  %v2147 = vunpack.c.0.s8 %v2146
  %v2148 = vlaneseq
  %v2149 = vshrl.u32 %v2148, 7
  %v2150 = vsub.s32 %v2147, %v2149
  %v2151 = vrot.slane %v2137, %v2150
  %v2152 = vcombine.low %v2144, %v2151
  %v2153 = vcombine.low %v761, %v769
  %v2155 = vunpack.c.l.s4 1983009808
  %v2156 = vunpack.c.0.s8 %v2155
  %v2157 = vlaneseq
  %v2158 = vshrl.u32 %v2157, 7
  %v2159 = vsub.s32 %v2156, %v2158
  %v2160 = vrot.slane %v2153, %v2159
  %v2162 = vunpack.c.l.s4 1983009808
  %v2163 = vunpack.c.0.s8 %v2162
  %v2164 = vlaneseq
  %v2165 = vshrl.u32 %v2164, 7
  %v2166 = vsub.s32 %v2163, %v2165
  %v2167 = vrot.slane %v777, %v2166
  %v2168 = vcombine.low %v2160, %v2167
  %v2169 = vcombine.low %v786, %v794
  %v2170 = vcombine.low %v793, %v795
  %v2172 = vunpack.c.l.s4 1983009808
  %v2173 = vunpack.c.0.s8 %v2172
  %v2174 = vlaneseq
  %v2175 = vshrl.u32 %v2174, 7
  %v2176 = vsub.s32 %v2173, %v2175
  %v2177 = vrot.slane %v2169, %v2176
  %v2179 = vunpack.c.l.s4 1983009808
  %v2180 = vunpack.c.0.s8 %v2179
  %v2181 = vlaneseq
  %v2182 = vshrl.u32 %v2181, 7
  %v2183 = vsub.s32 %v2180, %v2182
  %v2184 = vrot.slane %v2170, %v2183
  %v2185 = vcombine.low %v2177, %v2184
  %v2186 = vcombine.low %v803, %v811
  %v2188 = vunpack.c.l.s4 1983009808
  %v2189 = vunpack.c.0.s8 %v2188
  %v2190 = vlaneseq
  %v2191 = vshrl.u32 %v2190, 7
  %v2192 = vsub.s32 %v2189, %v2191
  %v2193 = vrot.slane %v2186, %v2192
  %v2195 = vunpack.c.l.s4 1983009808
  %v2196 = vunpack.c.0.s8 %v2195
  %v2197 = vlaneseq
  %v2198 = vshrl.u32 %v2197, 7
  %v2199 = vsub.s32 %v2196, %v2198
  %v2200 = vrot.slane %v810, %v2199
  %v2201 = vcombine.low %v2193, %v2200
  %v2202 = vcombine.low %v828, %v827
  %v2203 = vcombine.low %v829, %v837
  %v2205 = vunpack.c.l.s4 1983009808
  %v2206 = vunpack.c.0.s8 %v2205
  %v2207 = vlaneseq
  %v2208 = vshrl.u32 %v2207, 7
  %v2209 = vsub.s32 %v2206, %v2208
  %v2210 = vrot.slane %v2202, %v2209
  %v2212 = vunpack.c.l.s4 1983009808
  %v2213 = vunpack.c.0.s8 %v2212
  %v2214 = vlaneseq
  %v2215 = vshrl.u32 %v2214, 7
  %v2216 = vsub.s32 %v2213, %v2215
  %v2217 = vrot.slane %v2203, %v2216
  %v2218 = vcombine.low %v2210, %v2217
  %v2219 = vcombine.low %v845, %v844
  %v2221 = vunpack.c.l.s4 1983009808
  %v2222 = vunpack.c.0.s8 %v2221
  %v2223 = vlaneseq
  %v2224 = vshrl.u32 %v2223, 7
  %v2225 = vsub.s32 %v2222, %v2224
  %v2226 = vrot.slane %v2219, %v2225
  %v2228 = vunpack.c.l.s4 1983009808
  %v2229 = vunpack.c.0.s8 %v2228
  %v2230 = vlaneseq
  %v2231 = vshrl.u32 %v2230, 7
  %v2232 = vsub.s32 %v2229, %v2231
  %v2233 = vrot.slane %v846, %v2232
  %v2234 = vcombine.low %v2226, %v2233
  %v2235 = vcombine.low %v861, %v863
  %v2236 = vcombine.low %v871, %v879
  %v2238 = vunpack.c.l.s4 1983009808
  %v2239 = vunpack.c.0.s8 %v2238
  %v2240 = vlaneseq
  %v2241 = vshrl.u32 %v2240, 7
  %v2242 = vsub.s32 %v2239, %v2241
  %v2243 = vrot.slane %v2235, %v2242
  %v2245 = vunpack.c.l.s4 1983009808
  %v2246 = vunpack.c.0.s8 %v2245
  %v2247 = vlaneseq
  %v2248 = vshrl.u32 %v2247, 7
  %v2249 = vsub.s32 %v2246, %v2248
  %v2250 = vrot.slane %v2236, %v2249
  %v2251 = vcombine.low %v2243, %v2250
  %v2252 = vcombine.low %v878, %v880
  %v2254 = vunpack.c.l.s4 1983009808
  %v2255 = vunpack.c.0.s8 %v2254
  %v2256 = vlaneseq
  %v2257 = vshrl.u32 %v2256, 7
  %v2258 = vsub.s32 %v2255, %v2257
  %v2259 = vrot.slane %v2252, %v2258
  %v2261 = vunpack.c.l.s4 1983009808
  %v2262 = vunpack.c.0.s8 %v2261
  %v2263 = vlaneseq
  %v2264 = vshrl.u32 %v2263, 7
  %v2265 = vsub.s32 %v2262, %v2264
  %v2266 = vrot.slane %v888, %v2265
  %v2267 = vcombine.low %v2259, %v2266
  %v2268 = vcombine.low %v897, %v905
  %v2269 = vcombine.low %v913, %v912
  %v2271 = vunpack.c.l.s4 1983009808
  %v2272 = vunpack.c.0.s8 %v2271
  %v2273 = vlaneseq
  %v2274 = vshrl.u32 %v2273, 7
  %v2275 = vsub.s32 %v2272, %v2274
  %v2276 = vrot.slane %v2268, %v2275
  %v2278 = vunpack.c.l.s4 1983009808
  %v2279 = vunpack.c.0.s8 %v2278
  %v2280 = vlaneseq
  %v2281 = vshrl.u32 %v2280, 7
  %v2282 = vsub.s32 %v2279, %v2281
  %v2283 = vrot.slane %v2269, %v2282
  %v2284 = vcombine.low %v2276, %v2283
  %v2285 = vcombine.low %v914, %v922
  %v2287 = vunpack.c.l.s4 1983009808
  %v2288 = vunpack.c.0.s8 %v2287
  %v2289 = vlaneseq
  %v2290 = vshrl.u32 %v2289, 7
  %v2291 = vsub.s32 %v2288, %v2290
  %v2292 = vrot.slane %v2285, %v2291
  %v2294 = vunpack.c.l.s4 1983009808
  %v2295 = vunpack.c.0.s8 %v2294
  %v2296 = vlaneseq
  %v2297 = vshrl.u32 %v2296, 7
  %v2298 = vsub.s32 %v2295, %v2297
  %v2299 = vrot.slane %v930, %v2298
  %v2300 = vcombine.low %v2292, %v2299
  %v2301 = vcombine.low %v939, %v947
  %v2302 = vcombine.low %v946, %v948
  %v2304 = vunpack.c.l.s4 1983009808
  %v2305 = vunpack.c.0.s8 %v2304
  %v2306 = vlaneseq
  %v2307 = vshrl.u32 %v2306, 7
  %v2308 = vsub.s32 %v2305, %v2307
  %v2309 = vrot.slane %v2301, %v2308
  %v2311 = vunpack.c.l.s4 1983009808
  %v2312 = vunpack.c.0.s8 %v2311
  %v2313 = vlaneseq
  %v2314 = vshrl.u32 %v2313, 7
  %v2315 = vsub.s32 %v2312, %v2314
  %v2316 = vrot.slane %v2302, %v2315
  %v2317 = vcombine.low %v2309, %v2316
  %v2318 = vcombine.low %v956, %v964
  %v2320 = vunpack.c.l.s4 1983009808
  %v2321 = vunpack.c.0.s8 %v2320
  %v2322 = vlaneseq
  %v2323 = vshrl.u32 %v2322, 7
  %v2324 = vsub.s32 %v2321, %v2323
  %v2325 = vrot.slane %v2318, %v2324
  %v2327 = vunpack.c.l.s4 1983009808
  %v2328 = vunpack.c.0.s8 %v2327
  %v2329 = vlaneseq
  %v2330 = vshrl.u32 %v2329, 7
  %v2331 = vsub.s32 %v2328, %v2330
  %v2332 = vrot.slane %v963, %v2331
  %v2333 = vcombine.low %v2325, %v2332
  %v2334 = vcombine.low %v981, %v980
  %v2335 = vcombine.low %v982, %v990
  %v2337 = vunpack.c.l.s4 1983009808
  %v2338 = vunpack.c.0.s8 %v2337
  %v2339 = vlaneseq
  %v2340 = vshrl.u32 %v2339, 7
  %v2341 = vsub.s32 %v2338, %v2340
  %v2342 = vrot.slane %v2334, %v2341
  %v2344 = vunpack.c.l.s4 1983009808
  %v2345 = vunpack.c.0.s8 %v2344
  %v2346 = vlaneseq
  %v2347 = vshrl.u32 %v2346, 7
  %v2348 = vsub.s32 %v2345, %v2347
  %v2349 = vrot.slane %v2335, %v2348
  %v2350 = vcombine.low %v2342, %v2349
  %v2351 = vcombine.low %v998, %v997
  %v2353 = vunpack.c.l.s4 1983009808
  %v2354 = vunpack.c.0.s8 %v2353
  %v2355 = vlaneseq
  %v2356 = vshrl.u32 %v2355, 7
  %v2357 = vsub.s32 %v2354, %v2356
  %v2358 = vrot.slane %v2351, %v2357
  %v2360 = vunpack.c.l.s4 1983009808
  %v2361 = vunpack.c.0.s8 %v2360
  %v2362 = vlaneseq
  %v2363 = vshrl.u32 %v2362, 7
  %v2364 = vsub.s32 %v2361, %v2363
  %v2365 = vrot.slane %v999, %v2364
  %v2366 = vcombine.low %v2358, %v2365
  %v2367 = vcombine.low %v1014, %v1016
  %v2368 = vcombine.low %v1024, %v1032
  %v2370 = vunpack.c.l.s4 1983009808
  %v2371 = vunpack.c.0.s8 %v2370
  %v2372 = vlaneseq
  %v2373 = vshrl.u32 %v2372, 7
  %v2374 = vsub.s32 %v2371, %v2373
  %v2375 = vrot.slane %v2367, %v2374
  %v2377 = vunpack.c.l.s4 1983009808
  %v2378 = vunpack.c.0.s8 %v2377
  %v2379 = vlaneseq
  %v2380 = vshrl.u32 %v2379, 7
  %v2381 = vsub.s32 %v2378, %v2380
  %v2382 = vrot.slane %v2368, %v2381
  %v2383 = vcombine.low %v2375, %v2382
  %v2384 = vcombine.low %v1031, %v1033
  %v2386 = vunpack.c.l.s4 1983009808
  %v2387 = vunpack.c.0.s8 %v2386
  %v2388 = vlaneseq
  %v2389 = vshrl.u32 %v2388, 7
  %v2390 = vsub.s32 %v2387, %v2389
  %v2391 = vrot.slane %v2384, %v2390
  %v2393 = vunpack.c.l.s4 1983009808
  %v2394 = vunpack.c.0.s8 %v2393
  %v2395 = vlaneseq
  %v2396 = vshrl.u32 %v2395, 7
  %v2397 = vsub.s32 %v2394, %v2396
  %v2398 = vrot.slane %v1041, %v2397
  %v2399 = vcombine.low %v2391, %v2398
  %2400 = vrot.lane.b32.xlu0 %v1954, 32
  %v2401 = vpop.permute.xlu0 %2400
  %2402 = vrot.lane.b32.xlu0 %v1970, 32
  %v2403 = vpop.permute.xlu0 %2402
  %2404 = vrot.lane.b32.xlu0 %v1987, 32
  %v2405 = vpop.permute.xlu0 %2404
  %2406 = vrot.lane.b32.xlu0 %v2003, 32
  %v2407 = vpop.permute.xlu0 %2406
  %2408 = vrot.lane.b32.xlu0 %v2020, 32
  %v2409 = vpop.permute.xlu0 %2408
  %2410 = vrot.lane.b32.xlu0 %v2036, 32
  %v2411 = vpop.permute.xlu0 %2410
  %2412 = vrot.lane.b32.xlu0 %v2053, 32
  %v2413 = vpop.permute.xlu0 %2412
  %2414 = vrot.lane.b32.xlu0 %v2069, 32
  %v2415 = vpop.permute.xlu0 %2414
  %2416 = vrot.lane.b32.xlu0 %v2086, 32
  %v2417 = vpop.permute.xlu0 %2416
  %2418 = vrot.lane.b32.xlu0 %v2102, 32
  %v2419 = vpop.permute.xlu0 %2418
  %2420 = vrot.lane.b32.xlu0 %v2119, 32
  %v2421 = vpop.permute.xlu0 %2420
  %2422 = vrot.lane.b32.xlu0 %v2135, 32
  %v2423 = vpop.permute.xlu0 %2422
  %2424 = vrot.lane.b32.xlu0 %v2152, 32
  %v2425 = vpop.permute.xlu0 %2424
  %2426 = vrot.lane.b32.xlu0 %v2168, 32
  %v2427 = vpop.permute.xlu0 %2426
  %2428 = vrot.lane.b32.xlu0 %v2185, 32
  %v2429 = vpop.permute.xlu0 %2428
  %2430 = vrot.lane.b32.xlu0 %v2201, 32
  %v2431 = vpop.permute.xlu0 %2430
  %2432 = vrot.lane.b32.xlu0 %v2218, 32
  %v2433 = vpop.permute.xlu0 %2432
  %2434 = vrot.lane.b32.xlu0 %v2234, 32
  %v2435 = vpop.permute.xlu0 %2434
  %2436 = vrot.lane.b32.xlu0 %v2251, 32
  %v2437 = vpop.permute.xlu0 %2436
  %2438 = vrot.lane.b32.xlu0 %v2267, 32
  %v2439 = vpop.permute.xlu0 %2438
  %2440 = vrot.lane.b32.xlu0 %v2284, 32
  %v2441 = vpop.permute.xlu0 %2440
  %2442 = vrot.lane.b32.xlu0 %v2300, 32
  %v2443 = vpop.permute.xlu0 %2442
  %2444 = vrot.lane.b32.xlu0 %v2317, 32
  %v2445 = vpop.permute.xlu0 %2444
  %2446 = vrot.lane.b32.xlu0 %v2333, 32
  %v2447 = vpop.permute.xlu0 %2446
  %2448 = vrot.lane.b32.xlu0 %v2350, 32
  %v2449 = vpop.permute.xlu0 %2448
  %2450 = vrot.lane.b32.xlu0 %v2366, 32
  %v2451 = vpop.permute.xlu0 %2450
  %2452 = vrot.lane.b32.xlu0 %v2383, 32
  %v2453 = vpop.permute.xlu0 %2452
  %2454 = vrot.lane.b32.xlu0 %v2399, 32
  %v2455 = vpop.permute.xlu0 %2454
  %v2484 = vcombine.low %v540, %v548
  %v2486 = vunpack.c.l.s4 1983009808
  %v2487 = vunpack.c.0.s8 %v2486
  %v2488 = vlaneseq
  %v2489 = vshrl.u32 %v2488, 7
  %v2490 = vsub.s32 %v2487, %v2489
  %v2491 = vrot.slane %v2484, %v2490
  %v2492 = vcombine.low %v1962, %v2491
  %v2493 = vcombine.low %v582, %v590
  %v2495 = vunpack.c.l.s4 1983009808
  %v2496 = vunpack.c.0.s8 %v2495
  %v2497 = vlaneseq
  %v2498 = vshrl.u32 %v2497, 7
  %v2499 = vsub.s32 %v2496, %v2498
  %v2500 = vrot.slane %v2493, %v2499
  %v2501 = vcombine.low %v1995, %v2500
  %v2502 = vcombine.low %v624, %v623
  %v2504 = vunpack.c.l.s4 1983009808
  %v2505 = vunpack.c.0.s8 %v2504
  %v2506 = vlaneseq
  %v2507 = vshrl.u32 %v2506, 7
  %v2508 = vsub.s32 %v2505, %v2507
  %v2509 = vrot.slane %v2502, %v2508
  %v2510 = vcombine.low %v2028, %v2509
  %v2511 = vcombine.low %v657, %v659
  %v2513 = vunpack.c.l.s4 1983009808
  %v2514 = vunpack.c.0.s8 %v2513
  %v2515 = vlaneseq
  %v2516 = vshrl.u32 %v2515, 7
  %v2517 = vsub.s32 %v2514, %v2516
  %v2518 = vrot.slane %v2511, %v2517
  %v2519 = vcombine.low %v2061, %v2518
  %v2520 = vcombine.low %v693, %v701
  %v2522 = vunpack.c.l.s4 1983009808
  %v2523 = vunpack.c.0.s8 %v2522
  %v2524 = vlaneseq
  %v2525 = vshrl.u32 %v2524, 7
  %v2526 = vsub.s32 %v2523, %v2525
  %v2527 = vrot.slane %v2520, %v2526
  %v2528 = vcombine.low %v2094, %v2527
  %v2529 = vcombine.low %v735, %v743
  %v2531 = vunpack.c.l.s4 1983009808
  %v2532 = vunpack.c.0.s8 %v2531
  %v2533 = vlaneseq
  %v2534 = vshrl.u32 %v2533, 7
  %v2535 = vsub.s32 %v2532, %v2534
  %v2536 = vrot.slane %v2529, %v2535
  %v2537 = vcombine.low %v2127, %v2536
  %v2538 = vcombine.low %v777, %v776
  %v2540 = vunpack.c.l.s4 1983009808
  %v2541 = vunpack.c.0.s8 %v2540
  %v2542 = vlaneseq
  %v2543 = vshrl.u32 %v2542, 7
  %v2544 = vsub.s32 %v2541, %v2543
  %v2545 = vrot.slane %v2538, %v2544
  %v2546 = vcombine.low %v2160, %v2545
  %v2547 = vcombine.low %v810, %v812
  %v2549 = vunpack.c.l.s4 1983009808
  %v2550 = vunpack.c.0.s8 %v2549
  %v2551 = vlaneseq
  %v2552 = vshrl.u32 %v2551, 7
  %v2553 = vsub.s32 %v2550, %v2552
  %v2554 = vrot.slane %v2547, %v2553
  %v2555 = vcombine.low %v2193, %v2554
  %v2556 = vcombine.low %v846, %v854
  %v2558 = vunpack.c.l.s4 1983009808
  %v2559 = vunpack.c.0.s8 %v2558
  %v2560 = vlaneseq
  %v2561 = vshrl.u32 %v2560, 7
  %v2562 = vsub.s32 %v2559, %v2561
  %v2563 = vrot.slane %v2556, %v2562
  %v2564 = vcombine.low %v2226, %v2563
  %v2565 = vcombine.low %v888, %v896
  %v2567 = vunpack.c.l.s4 1983009808
  %v2568 = vunpack.c.0.s8 %v2567
  %v2569 = vlaneseq
  %v2570 = vshrl.u32 %v2569, 7
  %v2571 = vsub.s32 %v2568, %v2570
  %v2572 = vrot.slane %v2565, %v2571
  %v2573 = vcombine.low %v2259, %v2572
  %v2574 = vcombine.low %v930, %v929
  %v2576 = vunpack.c.l.s4 1983009808
  %v2577 = vunpack.c.0.s8 %v2576
  %v2578 = vlaneseq
  %v2579 = vshrl.u32 %v2578, 7
  %v2580 = vsub.s32 %v2577, %v2579
  %v2581 = vrot.slane %v2574, %v2580
  %v2582 = vcombine.low %v2292, %v2581
  %v2583 = vcombine.low %v963, %v965
  %v2585 = vunpack.c.l.s4 1983009808
  %v2586 = vunpack.c.0.s8 %v2585
  %v2587 = vlaneseq
  %v2588 = vshrl.u32 %v2587, 7
  %v2589 = vsub.s32 %v2586, %v2588
  %v2590 = vrot.slane %v2583, %v2589
  %v2591 = vcombine.low %v2325, %v2590
  %v2592 = vcombine.low %v999, %v1007
  %v2594 = vunpack.c.l.s4 1983009808
  %v2595 = vunpack.c.0.s8 %v2594
  %v2596 = vlaneseq
  %v2597 = vshrl.u32 %v2596, 7
  %v2598 = vsub.s32 %v2595, %v2597
  %v2599 = vrot.slane %v2592, %v2598
  %v2600 = vcombine.low %v2358, %v2599
  %v2601 = vcombine.low %v1041, %v1049
  %v2603 = vunpack.c.l.s4 1983009808
  %v2604 = vunpack.c.0.s8 %v2603
  %v2605 = vlaneseq
  %v2606 = vshrl.u32 %v2605, 7
  %v2607 = vsub.s32 %v2604, %v2606
  %v2608 = vrot.slane %v2601, %v2607
  %v2609 = vcombine.low %v2391, %v2608
  %v2610 = vrot.slane %v1954, 1
  %v2611 = vrot.slane %v2492, 1
  %v2612 = vsel %vm1811, %v2610, %v2611
  %v2613 = vrot.slane %v1987, 1
  %v2614 = vrot.slane %v2501, 1
  %v2615 = vsel %vm1811, %v2613, %v2614
  %v2616 = vrot.slane %v2020, 1
  %v2617 = vrot.slane %v2510, 1
  %v2618 = vsel %vm1811, %v2616, %v2617
  %v2619 = vrot.slane %v2053, 1
  %v2620 = vrot.slane %v2519, 1
  %v2621 = vsel %vm1811, %v2619, %v2620
  %v2622 = vrot.slane %v2086, 1
  %v2623 = vrot.slane %v2528, 1
  %v2624 = vsel %vm1811, %v2622, %v2623
  %v2625 = vrot.slane %v2119, 1
  %v2626 = vrot.slane %v2537, 1
  %v2627 = vsel %vm1811, %v2625, %v2626
  %v2628 = vrot.slane %v2152, 1
  %v2629 = vrot.slane %v2546, 1
  %v2630 = vsel %vm1811, %v2628, %v2629
  %v2631 = vrot.slane %v2185, 1
  %v2632 = vrot.slane %v2555, 1
  %v2633 = vsel %vm1811, %v2631, %v2632
  %v2634 = vrot.slane %v2218, 1
  %v2635 = vrot.slane %v2564, 1
  %v2636 = vsel %vm1811, %v2634, %v2635
  %v2637 = vrot.slane %v2251, 1
  %v2638 = vrot.slane %v2573, 1
  %v2639 = vsel %vm1811, %v2637, %v2638
  %v2640 = vrot.slane %v2284, 1
  %v2641 = vrot.slane %v2582, 1
  %v2642 = vsel %vm1811, %v2640, %v2641
  %v2643 = vrot.slane %v2317, 1
  %v2644 = vrot.slane %v2591, 1
  %v2645 = vsel %vm1811, %v2643, %v2644
  %v2646 = vrot.slane %v2350, 1
  %v2647 = vrot.slane %v2600, 1
  %v2648 = vsel %vm1811, %v2646, %v2647
  %v2649 = vrot.slane %v2383, 1
  %v2650 = vrot.slane %v2609, 1
  %v2651 = vsel %vm1811, %v2649, %v2650
  %2652 = vrot.lane.b32.xlu0 %v2612, 48
  %v2653 = vpop.permute.xlu0 %2652
  %2654 = vrot.lane.b32.xlu0 %v2611, 48
  %v2655 = vpop.permute.xlu0 %2654
  %2656 = vrot.lane.b32.xlu0 %v2615, 48
  %v2657 = vpop.permute.xlu0 %2656
  %2658 = vrot.lane.b32.xlu0 %v2614, 48
  %v2659 = vpop.permute.xlu0 %2658
  %2660 = vrot.lane.b32.xlu0 %v2618, 48
  %v2661 = vpop.permute.xlu0 %2660
  %2662 = vrot.lane.b32.xlu0 %v2617, 48
  %v2663 = vpop.permute.xlu0 %2662
  %2664 = vrot.lane.b32.xlu0 %v2621, 48
  %v2665 = vpop.permute.xlu0 %2664
  %2666 = vrot.lane.b32.xlu0 %v2620, 48
  %v2667 = vpop.permute.xlu0 %2666
  %2668 = vrot.lane.b32.xlu0 %v2624, 48
  %v2669 = vpop.permute.xlu0 %2668
  %2670 = vrot.lane.b32.xlu0 %v2623, 48
  %v2671 = vpop.permute.xlu0 %2670
  %2672 = vrot.lane.b32.xlu0 %v2627, 48
  %v2673 = vpop.permute.xlu0 %2672
  %2674 = vrot.lane.b32.xlu0 %v2626, 48
  %v2675 = vpop.permute.xlu0 %2674
  %2676 = vrot.lane.b32.xlu0 %v2630, 48
  %v2677 = vpop.permute.xlu0 %2676
  %2678 = vrot.lane.b32.xlu0 %v2629, 48
  %v2679 = vpop.permute.xlu0 %2678
  %2680 = vrot.lane.b32.xlu0 %v2633, 48
  %v2681 = vpop.permute.xlu0 %2680
  %2682 = vrot.lane.b32.xlu0 %v2632, 48
  %v2683 = vpop.permute.xlu0 %2682
  %2684 = vrot.lane.b32.xlu0 %v2636, 48
  %v2685 = vpop.permute.xlu0 %2684
  %2686 = vrot.lane.b32.xlu0 %v2635, 48
  %v2687 = vpop.permute.xlu0 %2686
  %2688 = vrot.lane.b32.xlu0 %v2639, 48
  %v2689 = vpop.permute.xlu0 %2688
  %2690 = vrot.lane.b32.xlu0 %v2638, 48
  %v2691 = vpop.permute.xlu0 %2690
  %2692 = vrot.lane.b32.xlu0 %v2642, 48
  %v2693 = vpop.permute.xlu0 %2692
  %2694 = vrot.lane.b32.xlu0 %v2641, 48
  %v2695 = vpop.permute.xlu0 %2694
  %2696 = vrot.lane.b32.xlu0 %v2645, 48
  %v2697 = vpop.permute.xlu0 %2696
  %2698 = vrot.lane.b32.xlu0 %v2644, 48
  %v2699 = vpop.permute.xlu0 %2698
  %2700 = vrot.lane.b32.xlu0 %v2648, 48
  %v2701 = vpop.permute.xlu0 %2700
  %2702 = vrot.lane.b32.xlu0 %v2647, 48
  %v2703 = vpop.permute.xlu0 %2702
  %2704 = vrot.lane.b32.xlu0 %v2651, 48
  %v2705 = vpop.permute.xlu0 %2704
  %2706 = vrot.lane.b32.xlu0 %v2650, 48
  %v2707 = vpop.permute.xlu0 %2706
  %v2736 = vcombine.low %v1210, %v1219
  %v2738 = vunpack.c.l.s4 1983009808
  %v2739 = vunpack.c.0.s8 %v2738
  %v2740 = vlaneseq
  %v2741 = vshrl.u32 %v2740, 7
  %v2742 = vsub.s32 %v2739, %v2741
  %v2743 = vrot.slane %v548, %v2742
  %v2744 = vcombine.low %v1692, %v2743
  %v2745 = vcombine.low %v1243, %v1252
  %v2747 = vunpack.c.l.s4 1983009808
  %v2748 = vunpack.c.0.s8 %v2747
  %v2749 = vlaneseq
  %v2750 = vshrl.u32 %v2749, 7
  %v2751 = vsub.s32 %v2748, %v2750
  %v2752 = vrot.slane %v590, %v2751
  %v2753 = vcombine.low %v1701, %v2752
  %v2754 = vcombine.low %v1276, %v1285
  %v2756 = vunpack.c.l.s4 1983009808
  %v2757 = vunpack.c.0.s8 %v2756
  %v2758 = vlaneseq
  %v2759 = vshrl.u32 %v2758, 7
  %v2760 = vsub.s32 %v2757, %v2759
  %v2761 = vrot.slane %v623, %v2760
  %v2762 = vcombine.low %v1710, %v2761
  %v2763 = vcombine.low %v1309, %v1318
  %v2765 = vunpack.c.l.s4 1983009808
  %v2766 = vunpack.c.0.s8 %v2765
  %v2767 = vlaneseq
  %v2768 = vshrl.u32 %v2767, 7
  %v2769 = vsub.s32 %v2766, %v2768
  %v2770 = vrot.slane %v659, %v2769
  %v2771 = vcombine.low %v1719, %v2770
  %v2772 = vcombine.low %v1342, %v1351
  %v2774 = vunpack.c.l.s4 1983009808
  %v2775 = vunpack.c.0.s8 %v2774
  %v2776 = vlaneseq
  %v2777 = vshrl.u32 %v2776, 7
  %v2778 = vsub.s32 %v2775, %v2777
  %v2779 = vrot.slane %v701, %v2778
  %v2780 = vcombine.low %v1728, %v2779
  %v2781 = vcombine.low %v1375, %v1384
  %v2783 = vunpack.c.l.s4 1983009808
  %v2784 = vunpack.c.0.s8 %v2783
  %v2785 = vlaneseq
  %v2786 = vshrl.u32 %v2785, 7
  %v2787 = vsub.s32 %v2784, %v2786
  %v2788 = vrot.slane %v743, %v2787
  %v2789 = vcombine.low %v1737, %v2788
  %v2790 = vcombine.low %v1408, %v1417
  %v2792 = vunpack.c.l.s4 1983009808
  %v2793 = vunpack.c.0.s8 %v2792
  %v2794 = vlaneseq
  %v2795 = vshrl.u32 %v2794, 7
  %v2796 = vsub.s32 %v2793, %v2795
  %v2797 = vrot.slane %v776, %v2796
  %v2798 = vcombine.low %v1746, %v2797
  %v2799 = vcombine.low %v1441, %v1450
  %v2801 = vunpack.c.l.s4 1983009808
  %v2802 = vunpack.c.0.s8 %v2801
  %v2803 = vlaneseq
  %v2804 = vshrl.u32 %v2803, 7
  %v2805 = vsub.s32 %v2802, %v2804
  %v2806 = vrot.slane %v812, %v2805
  %v2807 = vcombine.low %v1755, %v2806
  %v2808 = vcombine.low %v1474, %v1483
  %v2810 = vunpack.c.l.s4 1983009808
  %v2811 = vunpack.c.0.s8 %v2810
  %v2812 = vlaneseq
  %v2813 = vshrl.u32 %v2812, 7
  %v2814 = vsub.s32 %v2811, %v2813
  %v2815 = vrot.slane %v854, %v2814
  %v2816 = vcombine.low %v1764, %v2815
  %v2817 = vcombine.low %v1507, %v1516
  %v2819 = vunpack.c.l.s4 1983009808
  %v2820 = vunpack.c.0.s8 %v2819
  %v2821 = vlaneseq
  %v2822 = vshrl.u32 %v2821, 7
  %v2823 = vsub.s32 %v2820, %v2822
  %v2824 = vrot.slane %v896, %v2823
  %v2825 = vcombine.low %v1773, %v2824
  %v2826 = vcombine.low %v1540, %v1549
  %v2828 = vunpack.c.l.s4 1983009808
  %v2829 = vunpack.c.0.s8 %v2828
  %v2830 = vlaneseq
  %v2831 = vshrl.u32 %v2830, 7
  %v2832 = vsub.s32 %v2829, %v2831
  %v2833 = vrot.slane %v929, %v2832
  %v2834 = vcombine.low %v1782, %v2833
  %v2835 = vcombine.low %v1573, %v1582
  %v2837 = vunpack.c.l.s4 1983009808
  %v2838 = vunpack.c.0.s8 %v2837
  %v2839 = vlaneseq
  %v2840 = vshrl.u32 %v2839, 7
  %v2841 = vsub.s32 %v2838, %v2840
  %v2842 = vrot.slane %v965, %v2841
  %v2843 = vcombine.low %v1791, %v2842
  %v2844 = vcombine.low %v1606, %v1615
  %v2846 = vunpack.c.l.s4 1983009808
  %v2847 = vunpack.c.0.s8 %v2846
  %v2848 = vlaneseq
  %v2849 = vshrl.u32 %v2848, 7
  %v2850 = vsub.s32 %v2847, %v2849
  %v2851 = vrot.slane %v1007, %v2850
  %v2852 = vcombine.low %v1800, %v2851
  %v2853 = vcombine.low %v1639, %v1648
  %v2855 = vunpack.c.l.s4 1983009808
  %v2856 = vunpack.c.0.s8 %v2855
  %v2857 = vlaneseq
  %v2858 = vshrl.u32 %v2857, 7
  %v2859 = vsub.s32 %v2856, %v2858
  %v2860 = vrot.slane %v1049, %v2859
  %v2861 = vcombine.low %v1809, %v2860
  %2862 = vrot.lane.b32.xlu0 %v2736, 64
  %v2863 = vpop.permute.xlu0 %2862
  %2864 = vrot.lane.b32.xlu0 %v2744, 64
  %v2865 = vpop.permute.xlu0 %2864
  %2866 = vrot.lane.b32.xlu0 %v2745, 64
  %v2867 = vpop.permute.xlu0 %2866
  %2868 = vrot.lane.b32.xlu0 %v2753, 64
  %v2869 = vpop.permute.xlu0 %2868
  %2870 = vrot.lane.b32.xlu0 %v2754, 64
  %v2871 = vpop.permute.xlu0 %2870
  %2872 = vrot.lane.b32.xlu0 %v2762, 64
  %v2873 = vpop.permute.xlu0 %2872
  %2874 = vrot.lane.b32.xlu0 %v2763, 64
  %v2875 = vpop.permute.xlu0 %2874
  %2876 = vrot.lane.b32.xlu0 %v2771, 64
  %v2877 = vpop.permute.xlu0 %2876
  %2878 = vrot.lane.b32.xlu0 %v2772, 64
  %v2879 = vpop.permute.xlu0 %2878
  %2880 = vrot.lane.b32.xlu0 %v2780, 64
  %v2881 = vpop.permute.xlu0 %2880
  %2882 = vrot.lane.b32.xlu0 %v2781, 64
  %v2883 = vpop.permute.xlu0 %2882
  %2884 = vrot.lane.b32.xlu0 %v2789, 64
  %v2885 = vpop.permute.xlu0 %2884
  %2886 = vrot.lane.b32.xlu0 %v2790, 64
  %v2887 = vpop.permute.xlu0 %2886
  %2888 = vrot.lane.b32.xlu0 %v2798, 64
  %v2889 = vpop.permute.xlu0 %2888
  %2890 = vrot.lane.b32.xlu0 %v2799, 64
  %v2891 = vpop.permute.xlu0 %2890
  %2892 = vrot.lane.b32.xlu0 %v2807, 64
  %v2893 = vpop.permute.xlu0 %2892
  %2894 = vrot.lane.b32.xlu0 %v2808, 64
  %v2895 = vpop.permute.xlu0 %2894
  %2896 = vrot.lane.b32.xlu0 %v2816, 64
  %v2897 = vpop.permute.xlu0 %2896
  %2898 = vrot.lane.b32.xlu0 %v2817, 64
  %v2899 = vpop.permute.xlu0 %2898
  %2900 = vrot.lane.b32.xlu0 %v2825, 64
  %v2901 = vpop.permute.xlu0 %2900
  %2902 = vrot.lane.b32.xlu0 %v2826, 64
  %v2903 = vpop.permute.xlu0 %2902
  %2904 = vrot.lane.b32.xlu0 %v2834, 64
  %v2905 = vpop.permute.xlu0 %2904
  %2906 = vrot.lane.b32.xlu0 %v2835, 64
  %v2907 = vpop.permute.xlu0 %2906
  %2908 = vrot.lane.b32.xlu0 %v2843, 64
  %v2909 = vpop.permute.xlu0 %2908
  %2910 = vrot.lane.b32.xlu0 %v2844, 64
  %v2911 = vpop.permute.xlu0 %2910
  %2912 = vrot.lane.b32.xlu0 %v2852, 64
  %v2913 = vpop.permute.xlu0 %2912
  %2914 = vrot.lane.b32.xlu0 %v2853, 64
  %v2915 = vpop.permute.xlu0 %2914
  %2916 = vrot.lane.b32.xlu0 %v2861, 64
  %v2917 = vpop.permute.xlu0 %2916
  %vm2946 = vcmask 130048
  %v2947 = vsel %vm2946, %v1211, %v1855
  %v2948 = vsel %vm2946, %v1227, %v1857
  %v2949 = vsel %vm2946, %v1244, %v1859
  %v2950 = vsel %vm2946, %v1260, %v1861
  %v2951 = vsel %vm2946, %v1277, %v1863
  %v2952 = vsel %vm2946, %v1293, %v1865
  %v2953 = vsel %vm2946, %v1310, %v1867
  %v2954 = vsel %vm2946, %v1326, %v1869
  %v2955 = vsel %vm2946, %v1343, %v1871
  %v2956 = vsel %vm2946, %v1359, %v1873
  %v2957 = vsel %vm2946, %v1376, %v1875
  %v2958 = vsel %vm2946, %v1392, %v1877
  %v2959 = vsel %vm2946, %v1409, %v1879
  %v2960 = vsel %vm2946, %v1425, %v1881
  %v2961 = vsel %vm2946, %v1442, %v1883
  %v2962 = vsel %vm2946, %v1458, %v1885
  %v2963 = vsel %vm2946, %v1475, %v1887
  %v2964 = vsel %vm2946, %v1491, %v1889
  %v2965 = vsel %vm2946, %v1508, %v1891
  %v2966 = vsel %vm2946, %v1524, %v1893
  %v2967 = vsel %vm2946, %v1541, %v1895
  %v2968 = vsel %vm2946, %v1557, %v1897
  %v2969 = vsel %vm2946, %v1574, %v1899
  %v2970 = vsel %vm2946, %v1590, %v1901
  %v2971 = vsel %vm2946, %v1607, %v1903
  %v2972 = vsel %vm2946, %v1623, %v1905
  %v2973 = vsel %vm2946, %v1640, %v1907
  %v2974 = vsel %vm2946, %v1656, %v1909
  %vm2975 = vcmask 261120
  %v2976 = vsel %vm2975, %v2947, %v2401
  %v2977 = vsel %vm2975, %v2948, %v2403
  %v2978 = vsel %vm2975, %v2949, %v2405
  %v2979 = vsel %vm2975, %v2950, %v2407
  %v2980 = vsel %vm2975, %v2951, %v2409
  %v2981 = vsel %vm2975, %v2952, %v2411
  %v2982 = vsel %vm2975, %v2953, %v2413
  %v2983 = vsel %vm2975, %v2954, %v2415
  %v2984 = vsel %vm2975, %v2955, %v2417
  %v2985 = vsel %vm2975, %v2956, %v2419
  %v2986 = vsel %vm2975, %v2957, %v2421
  %v2987 = vsel %vm2975, %v2958, %v2423
  %v2988 = vsel %vm2975, %v2959, %v2425
  %v2989 = vsel %vm2975, %v2960, %v2427
  %v2990 = vsel %vm2975, %v2961, %v2429
  %v2991 = vsel %vm2975, %v2962, %v2431
  %v2992 = vsel %vm2975, %v2963, %v2433
  %v2993 = vsel %vm2975, %v2964, %v2435
  %v2994 = vsel %vm2975, %v2965, %v2437
  %v2995 = vsel %vm2975, %v2966, %v2439
  %v2996 = vsel %vm2975, %v2967, %v2441
  %v2997 = vsel %vm2975, %v2968, %v2443
  %v2998 = vsel %vm2975, %v2969, %v2445
  %v2999 = vsel %vm2975, %v2970, %v2447
  %v3000 = vsel %vm2975, %v2971, %v2449
  %v3001 = vsel %vm2975, %v2972, %v2451
  %v3002 = vsel %vm2975, %v2973, %v2453
  %v3003 = vsel %vm2975, %v2974, %v2455
  %vm3004 = vcmask 392192
  %v3005 = vsel %vm3004, %v2976, %v2653
  %v3006 = vsel %vm3004, %v2977, %v2655
  %v3007 = vsel %vm3004, %v2978, %v2657
  %v3008 = vsel %vm3004, %v2979, %v2659
  %v3009 = vsel %vm3004, %v2980, %v2661
  %v3010 = vsel %vm3004, %v2981, %v2663
  %v3011 = vsel %vm3004, %v2982, %v2665
  %v3012 = vsel %vm3004, %v2983, %v2667
  %v3013 = vsel %vm3004, %v2984, %v2669
  %v3014 = vsel %vm3004, %v2985, %v2671
  %v3015 = vsel %vm3004, %v2986, %v2673
  %v3016 = vsel %vm3004, %v2987, %v2675
  %v3017 = vsel %vm3004, %v2988, %v2677
  %v3018 = vsel %vm3004, %v2989, %v2679
  %v3019 = vsel %vm3004, %v2990, %v2681
  %v3020 = vsel %vm3004, %v2991, %v2683
  %v3021 = vsel %vm3004, %v2992, %v2685
  %v3022 = vsel %vm3004, %v2993, %v2687
  %v3023 = vsel %vm3004, %v2994, %v2689
  %v3024 = vsel %vm3004, %v2995, %v2691
  %v3025 = vsel %vm3004, %v2996, %v2693
  %v3026 = vsel %vm3004, %v2997, %v2695
  %v3027 = vsel %vm3004, %v2998, %v2697
  %v3028 = vsel %vm3004, %v2999, %v2699
  %v3029 = vsel %vm3004, %v3000, %v2701
  %v3030 = vsel %vm3004, %v3001, %v2703
  %v3031 = vsel %vm3004, %v3002, %v2705
  %v3032 = vsel %vm3004, %v3003, %v2707
  %vm3033 = vcmask 523264
  %v3034 = vsel %vm3033, %v3005, %v2863
  %v3035 = vsel %vm3033, %v3006, %v2865
  %v3036 = vsel %vm3033, %v3007, %v2867
  %v3037 = vsel %vm3033, %v3008, %v2869
  %v3038 = vsel %vm3033, %v3009, %v2871
  %v3039 = vsel %vm3033, %v3010, %v2873
  %v3040 = vsel %vm3033, %v3011, %v2875
  %v3041 = vsel %vm3033, %v3012, %v2877
  %v3042 = vsel %vm3033, %v3013, %v2879
  %v3043 = vsel %vm3033, %v3014, %v2881
  %v3044 = vsel %vm3033, %v3015, %v2883
  %v3045 = vsel %vm3033, %v3016, %v2885
  %v3046 = vsel %vm3033, %v3017, %v2887
  %v3047 = vsel %vm3033, %v3018, %v2889
  %v3048 = vsel %vm3033, %v3019, %v2891
  %v3049 = vsel %vm3033, %v3020, %v2893
  %v3050 = vsel %vm3033, %v3021, %v2895
  %v3051 = vsel %vm3033, %v3022, %v2897
  %v3052 = vsel %vm3033, %v3023, %v2899
  %v3053 = vsel %vm3033, %v3024, %v2901
  %v3054 = vsel %vm3033, %v3025, %v2903
  %v3055 = vsel %vm3033, %v3026, %v2905
  %v3056 = vsel %vm3033, %v3027, %v2907
  %v3057 = vsel %vm3033, %v3028, %v2909
  %v3058 = vsel %vm3033, %v3029, %v2911
  %v3059 = vsel %vm3033, %v3030, %v2913
  %v3060 = vsel %vm3033, %v3031, %v2915
  %v3061 = vsel %vm3033, %v3032, %v2917
  %vm3062 = vcmask 654336
  %3063 = vst.msk [vmem:[#allocation2] sm:$0xff] %vm3062, %v3034
  %vm3064 = vcmask 652288
  %3065 = vst.msk [vmem:[#allocation2 + $0x20] sm:$0x3f] %vm3064, %v3035
  %3066 = vst.msk [vmem:[#allocation2 + $0x40] sm:$0xff] %vm3062, %v3036
  %3067 = vst.msk [vmem:[#allocation2 + $0x60] sm:$0x3f] %vm3064, %v3037
  %3068 = vst.msk [vmem:[#allocation2 + $0x80] sm:$0xff] %vm3062, %v3038
  %3069 = vst.msk [vmem:[#allocation2 + $0xa0] sm:$0x3f] %vm3064, %v3039
  %3070 = vst.msk [vmem:[#allocation2 + $0xc0] sm:$0xff] %vm3062, %v3040
  %3071 = vst.msk [vmem:[#allocation2 + $0xe0] sm:$0x3f] %vm3064, %v3041
  %3072 = vst.msk [vmem:[#allocation2 + $0x100] sm:$0xff] %vm3062, %v3042
  %3073 = vst.msk [vmem:[#allocation2 + $0x120] sm:$0x3f] %vm3064, %v3043
  %3074 = vst.msk [vmem:[#allocation2 + $0x140] sm:$0xff] %vm3062, %v3044
  %3075 = vst.msk [vmem:[#allocation2 + $0x160] sm:$0x3f] %vm3064, %v3045
  %3076 = vst.msk [vmem:[#allocation2 + $0x180] sm:$0xff] %vm3062, %v3046
  %3077 = vst.msk [vmem:[#allocation2 + $0x1a0] sm:$0x3f] %vm3064, %v3047
  %3078 = vst.msk [vmem:[#allocation2 + $0x1c0] sm:$0xff] %vm3062, %v3048
  %3079 = vst.msk [vmem:[#allocation2 + $0x1e0] sm:$0x3f] %vm3064, %v3049
  %3080 = vst.msk [vmem:[#allocation2 + $0x200] sm:$0xff] %vm3062, %v3050
  %3081 = vst.msk [vmem:[#allocation2 + $0x220] sm:$0x3f] %vm3064, %v3051
  %3082 = vst.msk [vmem:[#allocation2 + $0x240] sm:$0xff] %vm3062, %v3052
  %3083 = vst.msk [vmem:[#allocation2 + $0x260] sm:$0x3f] %vm3064, %v3053
  %3084 = vst.msk [vmem:[#allocation2 + $0x280] sm:$0xff] %vm3062, %v3054
  %3085 = vst.msk [vmem:[#allocation2 + $0x2a0] sm:$0x3f] %vm3064, %v3055
  %3086 = vst.msk [vmem:[#allocation2 + $0x2c0] sm:$0xff] %vm3062, %v3056
  %3087 = vst.msk [vmem:[#allocation2 + $0x2e0] sm:$0x3f] %vm3064, %v3057
  %3088 = vst.msk [vmem:[#allocation2 + $0x300] sm:$0xff] %vm3062, %v3058
  %3089 = vst.msk [vmem:[#allocation2 + $0x320] sm:$0x3f] %vm3064, %v3059
  %3090 = vst.msk [vmem:[#allocation2 + $0x340] sm:$0xff] %vm3062, %v3060
  %3091 = vst.msk [vmem:[#allocation2 + $0x360] sm:$0x3f] %vm3064, %v3061
  %v3092 = vcombine.low %v1048, %v1050
  %v3093 = vcombine.low %v1058, %v1066
  %v3095 = vunpack.c.l.s4 1983009808
  %v3096 = vunpack.c.0.s8 %v3095
  %v3097 = vlaneseq
  %v3098 = vshrl.u32 %v3097, 7
  %v3099 = vsub.s32 %v3096, %v3098
  %v3100 = vrot.slane %v3092, %v3099
  %v3102 = vunpack.c.l.s4 1983009808
  %v3103 = vunpack.c.0.s8 %v3102
  %v3104 = vlaneseq
  %v3105 = vshrl.u32 %v3104, 7
  %v3106 = vsub.s32 %v3103, %v3105
  %v3107 = vrot.slane %v3093, %v3106
  %v3108 = vcombine.low %v3100, %v3107
  %v3109 = vcombine.low %v1065, %v1067
  %v3111 = vunpack.c.l.s4 1983009808
  %v3112 = vunpack.c.0.s8 %v3111
  %v3113 = vlaneseq
  %v3114 = vshrl.u32 %v3113, 7
  %v3115 = vsub.s32 %v3112, %v3114
  %v3116 = vrot.slane %v3109, %v3115
  %v3118 = vunpack.c.l.s4 1983009808
  %v3119 = vunpack.c.0.s8 %v3118
  %v3120 = vlaneseq
  %v3121 = vshrl.u32 %v3120, 7
  %v3122 = vsub.s32 %v3119, %v3121
  %v3123 = vrot.slane %v1075, %v3122
  %v3124 = vcombine.low %v3116, %v3123
  %v3127 = vcombine.low %v1075, %v1083
  %v3129 = vunpack.c.l.s4 1983009808
  %v3130 = vunpack.c.0.s8 %v3129
  %v3131 = vlaneseq
  %v3132 = vshrl.u32 %v3131, 7
  %v3133 = vsub.s32 %v3130, %v3132
  %v3134 = vrot.slane %v3127, %v3133
  %v3135 = vcombine.low %v3116, %v3134
  %v3136 = vrot.slane %v3108, 1
  %v3137 = vrot.slane %v3135, 1
  %v3138 = vsel %vm1811, %v3136, %v3137
  %3139 = vrot.lane.b32.xlu0 %v3138, 16
  %v3140 = vpop.permute.xlu0 %3139
  %3141 = vrot.lane.b32.xlu0 %v3137, 16
  %v3142 = vpop.permute.xlu0 %3141
  %v3145 = vcombine.low %v1050, %v1058
  %v3146 = vcombine.low %v1066, %v1065
  %v3148 = vunpack.c.l.s4 1983009808
  %v3149 = vunpack.c.0.s8 %v3148
  %v3150 = vlaneseq
  %v3151 = vshrl.u32 %v3150, 7
  %v3152 = vsub.s32 %v3149, %v3151
  %v3153 = vrot.slane %v3145, %v3152
  %v3155 = vunpack.c.l.s4 1983009808
  %v3156 = vunpack.c.0.s8 %v3155
  %v3157 = vlaneseq
  %v3158 = vshrl.u32 %v3157, 7
  %v3159 = vsub.s32 %v3156, %v3158
  %v3160 = vrot.slane %v3146, %v3159
  %v3161 = vcombine.low %v3153, %v3160
  %v3162 = vcombine.low %v1067, %v1075
  %v3164 = vunpack.c.l.s4 1983009808
  %v3165 = vunpack.c.0.s8 %v3164
  %v3166 = vlaneseq
  %v3167 = vshrl.u32 %v3166, 7
  %v3168 = vsub.s32 %v3165, %v3167
  %v3169 = vrot.slane %v3162, %v3168
  %v3171 = vunpack.c.l.s4 1983009808
  %v3172 = vunpack.c.0.s8 %v3171
  %v3173 = vlaneseq
  %v3174 = vshrl.u32 %v3173, 7
  %v3175 = vsub.s32 %v3172, %v3174
  %v3176 = vrot.slane %v1083, %v3175
  %v3177 = vcombine.low %v3169, %v3176
  %3178 = vrot.lane.b32.xlu0 %v3161, 32
  %v3179 = vpop.permute.xlu0 %3178
  %3180 = vrot.lane.b32.xlu0 %v3177, 32
  %v3181 = vpop.permute.xlu0 %3180
  %v3184 = vcombine.low %v1083, %v1082
  %v3186 = vunpack.c.l.s4 1983009808
  %v3187 = vunpack.c.0.s8 %v3186
  %v3188 = vlaneseq
  %v3189 = vshrl.u32 %v3188, 7
  %v3190 = vsub.s32 %v3187, %v3189
  %v3191 = vrot.slane %v3184, %v3190
  %v3192 = vcombine.low %v3169, %v3191
  %v3193 = vrot.slane %v3161, 1
  %v3194 = vrot.slane %v3192, 1
  %v3195 = vsel %vm1811, %v3193, %v3194
  %3196 = vrot.lane.b32.xlu0 %v3195, 48
  %v3197 = vpop.permute.xlu0 %3196
  %3198 = vrot.lane.b32.xlu0 %v3194, 48
  %v3199 = vpop.permute.xlu0 %3198
  %v3202 = vcombine.low %v3107, %v3116
  %v3204 = vunpack.c.l.s4 1983009808
  %v3205 = vunpack.c.0.s8 %v3204
  %v3206 = vlaneseq
  %v3207 = vshrl.u32 %v3206, 7
  %v3208 = vsub.s32 %v3205, %v3207
  %v3209 = vrot.slane %v1082, %v3208
  %v3210 = vcombine.low %v3134, %v3209
  %3211 = vrot.lane.b32.xlu0 %v3202, 64
  %v3212 = vpop.permute.xlu0 %3211
  %3213 = vrot.lane.b32.xlu0 %v3210, 64
  %v3214 = vpop.permute.xlu0 %3213
  %v3217 = vsel %vm2946, %v3108, %v3140
  %v3218 = vsel %vm2946, %v3124, %v3142
  %v3219 = vsel %vm2975, %v3217, %v3179
  %v3220 = vsel %vm2975, %v3218, %v3181
  %v3221 = vsel %vm3004, %v3219, %v3197
  %v3222 = vsel %vm3004, %v3220, %v3199
  %v3223 = vsel %vm3033, %v3221, %v3212
  %v3224 = vsel %vm3033, %v3222, %v3214
  %3253 = vrot.lane.b32.xlu0 %v3036, 80
  %v3254 = vpop.permute.xlu0 %3253
  %3255 = vrot.lane.b32.xlu0 %v3037, 80
  %v3256 = vpop.permute.xlu0 %3255
  %3257 = vrot.lane.b32.xlu0 %v3038, 80
  %v3258 = vpop.permute.xlu0 %3257
  %3259 = vrot.lane.b32.xlu0 %v3039, 80
  %v3260 = vpop.permute.xlu0 %3259
  %3261 = vrot.lane.b32.xlu0 %v3040, 80
  %v3262 = vpop.permute.xlu0 %3261
  %3263 = vrot.lane.b32.xlu0 %v3041, 80
  %v3264 = vpop.permute.xlu0 %3263
  %3265 = vrot.lane.b32.xlu0 %v3042, 80
  %v3266 = vpop.permute.xlu0 %3265
  %3267 = vrot.lane.b32.xlu0 %v3043, 80
  %v3268 = vpop.permute.xlu0 %3267
  %3269 = vrot.lane.b32.xlu0 %v3044, 80
  %v3270 = vpop.permute.xlu0 %3269
  %3271 = vrot.lane.b32.xlu0 %v3045, 80
  %v3272 = vpop.permute.xlu0 %3271
  %3273 = vrot.lane.b32.xlu0 %v3046, 80
  %v3274 = vpop.permute.xlu0 %3273
  %3275 = vrot.lane.b32.xlu0 %v3047, 80
  %v3276 = vpop.permute.xlu0 %3275
  %3277 = vrot.lane.b32.xlu0 %v3048, 80
  %v3278 = vpop.permute.xlu0 %3277
  %3279 = vrot.lane.b32.xlu0 %v3049, 80
  %v3280 = vpop.permute.xlu0 %3279
  %3281 = vrot.lane.b32.xlu0 %v3050, 80
  %v3282 = vpop.permute.xlu0 %3281
  %3283 = vrot.lane.b32.xlu0 %v3051, 80
  %v3284 = vpop.permute.xlu0 %3283
  %3285 = vrot.lane.b32.xlu0 %v3052, 80
  %v3286 = vpop.permute.xlu0 %3285
  %3287 = vrot.lane.b32.xlu0 %v3053, 80
  %v3288 = vpop.permute.xlu0 %3287
  %3289 = vrot.lane.b32.xlu0 %v3054, 80
  %v3290 = vpop.permute.xlu0 %3289
  %3291 = vrot.lane.b32.xlu0 %v3055, 80
  %v3292 = vpop.permute.xlu0 %3291
  %3293 = vrot.lane.b32.xlu0 %v3056, 80
  %v3294 = vpop.permute.xlu0 %3293
  %3295 = vrot.lane.b32.xlu0 %v3057, 80
  %v3296 = vpop.permute.xlu0 %3295
  %3297 = vrot.lane.b32.xlu0 %v3058, 80
  %v3298 = vpop.permute.xlu0 %3297
  %3299 = vrot.lane.b32.xlu0 %v3059, 80
  %v3300 = vpop.permute.xlu0 %3299
  %3301 = vrot.lane.b32.xlu0 %v3060, 80
  %v3302 = vpop.permute.xlu0 %3301
  %3303 = vrot.lane.b32.xlu0 %v3061, 80
  %v3304 = vpop.permute.xlu0 %3303
  %3305 = vrot.lane.b32.xlu0 %v3223, 80
  %v3306 = vpop.permute.xlu0 %3305
  %3307 = vrot.lane.b32.xlu0 %v3224, 80
  %v3308 = vpop.permute.xlu0 %3307
  %vm3337 = vcmask 1048192
  %3338 = vst.msk [vmem:[#allocation2] sm:$0xff] %vm3337, %v3254
  %3339 = vst.msk [vmem:[#allocation2 + $0x8] sm:$0xff] %vm2975, %v3254
  %vm3340 = vcmask 1046144
  %3341 = vst.msk [vmem:[#allocation2 + $0x20] sm:$0x3f] %vm3340, %v3256
  %vm3342 = vcmask 259072
  %3343 = vst.msk [vmem:[#allocation2 + $0x28] sm:$0x3f] %vm3342, %v3256
  %3344 = vst.msk [vmem:[#allocation2 + $0x40] sm:$0xff] %vm3337, %v3258
  %3345 = vst.msk [vmem:[#allocation2 + $0x48] sm:$0xff] %vm2975, %v3258
  %3346 = vst.msk [vmem:[#allocation2 + $0x60] sm:$0x3f] %vm3340, %v3260
  %3347 = vst.msk [vmem:[#allocation2 + $0x68] sm:$0x3f] %vm3342, %v3260
  %3348 = vst.msk [vmem:[#allocation2 + $0x80] sm:$0xff] %vm3337, %v3262
  %3349 = vst.msk [vmem:[#allocation2 + $0x88] sm:$0xff] %vm2975, %v3262
  %3350 = vst.msk [vmem:[#allocation2 + $0xa0] sm:$0x3f] %vm3340, %v3264
  %3351 = vst.msk [vmem:[#allocation2 + $0xa8] sm:$0x3f] %vm3342, %v3264
  %3352 = vst.msk [vmem:[#allocation2 + $0xc0] sm:$0xff] %vm3337, %v3266
  %3353 = vst.msk [vmem:[#allocation2 + $0xc8] sm:$0xff] %vm2975, %v3266
  %3354 = vst.msk [vmem:[#allocation2 + $0xe0] sm:$0x3f] %vm3340, %v3268
  %3355 = vst.msk [vmem:[#allocation2 + $0xe8] sm:$0x3f] %vm3342, %v3268
  %3356 = vst.msk [vmem:[#allocation2 + $0x100] sm:$0xff] %vm3337, %v3270
  %3357 = vst.msk [vmem:[#allocation2 + $0x108] sm:$0xff] %vm2975, %v3270
  %3358 = vst.msk [vmem:[#allocation2 + $0x120] sm:$0x3f] %vm3340, %v3272
  %3359 = vst.msk [vmem:[#allocation2 + $0x128] sm:$0x3f] %vm3342, %v3272
  %3360 = vst.msk [vmem:[#allocation2 + $0x140] sm:$0xff] %vm3337, %v3274
  %3361 = vst.msk [vmem:[#allocation2 + $0x148] sm:$0xff] %vm2975, %v3274
  %3362 = vst.msk [vmem:[#allocation2 + $0x160] sm:$0x3f] %vm3340, %v3276
  %3363 = vst.msk [vmem:[#allocation2 + $0x168] sm:$0x3f] %vm3342, %v3276
  %3364 = vst.msk [vmem:[#allocation2 + $0x180] sm:$0xff] %vm3337, %v3278
  %3365 = vst.msk [vmem:[#allocation2 + $0x188] sm:$0xff] %vm2975, %v3278
  %3366 = vst.msk [vmem:[#allocation2 + $0x1a0] sm:$0x3f] %vm3340, %v3280
  %3367 = vst.msk [vmem:[#allocation2 + $0x1a8] sm:$0x3f] %vm3342, %v3280
  %3368 = vst.msk [vmem:[#allocation2 + $0x1c0] sm:$0xff] %vm3337, %v3282
  %3369 = vst.msk [vmem:[#allocation2 + $0x1c8] sm:$0xff] %vm2975, %v3282
  %3370 = vst.msk [vmem:[#allocation2 + $0x1e0] sm:$0x3f] %vm3340, %v3284
  %3371 = vst.msk [vmem:[#allocation2 + $0x1e8] sm:$0x3f] %vm3342, %v3284
  %3372 = vst.msk [vmem:[#allocation2 + $0x200] sm:$0xff] %vm3337, %v3286
  %3373 = vst.msk [vmem:[#allocation2 + $0x208] sm:$0xff] %vm2975, %v3286
  %3374 = vst.msk [vmem:[#allocation2 + $0x220] sm:$0x3f] %vm3340, %v3288
  %3375 = vst.msk [vmem:[#allocation2 + $0x228] sm:$0x3f] %vm3342, %v3288
  %3376 = vst.msk [vmem:[#allocation2 + $0x240] sm:$0xff] %vm3337, %v3290
  %3377 = vst.msk [vmem:[#allocation2 + $0x248] sm:$0xff] %vm2975, %v3290
  %3378 = vst.msk [vmem:[#allocation2 + $0x260] sm:$0x3f] %vm3340, %v3292
  %3379 = vst.msk [vmem:[#allocation2 + $0x268] sm:$0x3f] %vm3342, %v3292
  %3380 = vst.msk [vmem:[#allocation2 + $0x280] sm:$0xff] %vm3337, %v3294
  %3381 = vst.msk [vmem:[#allocation2 + $0x288] sm:$0xff] %vm2975, %v3294
  %3382 = vst.msk [vmem:[#allocation2 + $0x2a0] sm:$0x3f] %vm3340, %v3296
  %3383 = vst.msk [vmem:[#allocation2 + $0x2a8] sm:$0x3f] %vm3342, %v3296
  %3384 = vst.msk [vmem:[#allocation2 + $0x2c0] sm:$0xff] %vm3337, %v3298
  %3385 = vst.msk [vmem:[#allocation2 + $0x2c8] sm:$0xff] %vm2975, %v3298
  %3386 = vst.msk [vmem:[#allocation2 + $0x2e0] sm:$0x3f] %vm3340, %v3300
  %3387 = vst.msk [vmem:[#allocation2 + $0x2e8] sm:$0x3f] %vm3342, %v3300
  %3388 = vst.msk [vmem:[#allocation2 + $0x300] sm:$0xff] %vm3337, %v3302
  %3389 = vst.msk [vmem:[#allocation2 + $0x308] sm:$0xff] %vm2975, %v3302
  %3390 = vst.msk [vmem:[#allocation2 + $0x320] sm:$0x3f] %vm3340, %v3304
  %3391 = vst.msk [vmem:[#allocation2 + $0x328] sm:$0x3f] %vm3342, %v3304
  %3392 = vst.msk [vmem:[#allocation2 + $0x340] sm:$0xff] %vm3337, %v3306
  %3393 = vst.msk [vmem:[#allocation2 + $0x348] sm:$0xff] %vm2975, %v3306
  %3394 = vst.msk [vmem:[#allocation2 + $0x360] sm:$0x3f] %vm3340, %v3308
  %3395 = vst.msk [vmem:[#allocation2 + $0x368] sm:$0x3f] %vm3342, %v3308
  %v3396 = vcombine.low %v1084, %v1092
  %v3397 = vcombine.low %v1100, %v1099
  %v3399 = vunpack.c.l.s4 1983009808
  %v3400 = vunpack.c.0.s8 %v3399
  %v3401 = vlaneseq
  %v3402 = vshrl.u32 %v3401, 7
  %v3403 = vsub.s32 %v3400, %v3402
  %v3404 = vrot.slane %v3396, %v3403
  %v3406 = vunpack.c.l.s4 1983009808
  %v3407 = vunpack.c.0.s8 %v3406
  %v3408 = vlaneseq
  %v3409 = vshrl.u32 %v3408, 7
  %v3410 = vsub.s32 %v3407, %v3409
  %v3411 = vrot.slane %v3397, %v3410
  %v3412 = vcombine.low %v3404, %v3411
  %v3413 = vcombine.low %v1101, %v1109
  %v3415 = vunpack.c.l.s4 1983009808
  %v3416 = vunpack.c.0.s8 %v3415
  %v3417 = vlaneseq
  %v3418 = vshrl.u32 %v3417, 7
  %v3419 = vsub.s32 %v3416, %v3418
  %v3420 = vrot.slane %v3413, %v3419
  %v3422 = vunpack.c.l.s4 1983009808
  %v3423 = vunpack.c.0.s8 %v3422
  %v3424 = vlaneseq
  %v3425 = vshrl.u32 %v3424, 7
  %v3426 = vsub.s32 %v3423, %v3425
  %v3427 = vrot.slane %v1117, %v3426
  %v3428 = vcombine.low %v3420, %v3427
  %v3431 = vcombine.low %v1117, %v1116
  %v3433 = vunpack.c.l.s4 1983009808
  %v3434 = vunpack.c.0.s8 %v3433
  %v3435 = vlaneseq
  %v3436 = vshrl.u32 %v3435, 7
  %v3437 = vsub.s32 %v3434, %v3436
  %v3438 = vrot.slane %v3431, %v3437
  %v3439 = vcombine.low %v3420, %v3438
  %v3440 = vrot.slane %v3412, 1
  %v3441 = vrot.slane %v3439, 1
  %v3442 = vsel %vm1811, %v3440, %v3441
  %3443 = vrot.lane.b32.xlu0 %v3442, 16
  %v3444 = vpop.permute.xlu0 %3443
  %3445 = vrot.lane.b32.xlu0 %v3441, 16
  %v3446 = vpop.permute.xlu0 %3445
  %v3449 = vcombine.low %v1092, %v1100
  %v3450 = vcombine.low %v1099, %v1101
  %v3452 = vunpack.c.l.s4 1983009808
  %v3453 = vunpack.c.0.s8 %v3452
  %v3454 = vlaneseq
  %v3455 = vshrl.u32 %v3454, 7
  %v3456 = vsub.s32 %v3453, %v3455
  %v3457 = vrot.slane %v3449, %v3456
  %v3459 = vunpack.c.l.s4 1983009808
  %v3460 = vunpack.c.0.s8 %v3459
  %v3461 = vlaneseq
  %v3462 = vshrl.u32 %v3461, 7
  %v3463 = vsub.s32 %v3460, %v3462
  %v3464 = vrot.slane %v3450, %v3463
  %v3465 = vcombine.low %v3457, %v3464
  %v3466 = vcombine.low %v1109, %v1117
  %v3468 = vunpack.c.l.s4 1983009808
  %v3469 = vunpack.c.0.s8 %v3468
  %v3470 = vlaneseq
  %v3471 = vshrl.u32 %v3470, 7
  %v3472 = vsub.s32 %v3469, %v3471
  %v3473 = vrot.slane %v3466, %v3472
  %v3475 = vunpack.c.l.s4 1983009808
  %v3476 = vunpack.c.0.s8 %v3475
  %v3477 = vlaneseq
  %v3478 = vshrl.u32 %v3477, 7
  %v3479 = vsub.s32 %v3476, %v3478
  %v3480 = vrot.slane %v1116, %v3479
  %v3481 = vcombine.low %v3473, %v3480
  %3482 = vrot.lane.b32.xlu0 %v3465, 32
  %v3483 = vpop.permute.xlu0 %3482
  %3484 = vrot.lane.b32.xlu0 %v3481, 32
  %v3485 = vpop.permute.xlu0 %3484
  %v3488 = vcombine.low %v1116, %v1118
  %v3490 = vunpack.c.l.s4 1983009808
  %v3491 = vunpack.c.0.s8 %v3490
  %v3492 = vlaneseq
  %v3493 = vshrl.u32 %v3492, 7
  %v3494 = vsub.s32 %v3491, %v3493
  %v3495 = vrot.slane %v3488, %v3494
  %v3496 = vcombine.low %v3473, %v3495
  %v3497 = vrot.slane %v3465, 1
  %v3498 = vrot.slane %v3496, 1
  %v3499 = vsel %vm1811, %v3497, %v3498
  %3500 = vrot.lane.b32.xlu0 %v3499, 48
  %v3501 = vpop.permute.xlu0 %3500
  %3502 = vrot.lane.b32.xlu0 %v3498, 48
  %v3503 = vpop.permute.xlu0 %3502
  %v3506 = vcombine.low %v3411, %v3420
  %v3508 = vunpack.c.l.s4 1983009808
  %v3509 = vunpack.c.0.s8 %v3508
  %v3510 = vlaneseq
  %v3511 = vshrl.u32 %v3510, 7
  %v3512 = vsub.s32 %v3509, %v3511
  %v3513 = vrot.slane %v1118, %v3512
  %v3514 = vcombine.low %v3438, %v3513
  %3515 = vrot.lane.b32.xlu0 %v3506, 64
  %v3516 = vpop.permute.xlu0 %3515
  %3517 = vrot.lane.b32.xlu0 %v3514, 64
  %v3518 = vpop.permute.xlu0 %3517
  %v3521 = vsel %vm2946, %v3412, %v3444
  %v3522 = vsel %vm2946, %v3428, %v3446
  %v3523 = vsel %vm2975, %v3521, %v3483
  %v3524 = vsel %vm2975, %v3522, %v3485
  %v3525 = vsel %vm3004, %v3523, %v3501
  %v3526 = vsel %vm3004, %v3524, %v3503
  %v3527 = vsel %vm3033, %v3525, %v3516
  %v3528 = vsel %vm3033, %v3526, %v3518
  %3531 = vrot.lane.b32.xlu0 %v3038, 32
  %v3532 = vpop.permute.xlu0 %3531
  %3533 = vrot.lane.b32.xlu0 %v3039, 32
  %v3534 = vpop.permute.xlu0 %3533
  %3535 = vrot.lane.b32.xlu0 %v3040, 32
  %v3536 = vpop.permute.xlu0 %3535
  %3537 = vrot.lane.b32.xlu0 %v3041, 32
  %v3538 = vpop.permute.xlu0 %3537
  %3539 = vrot.lane.b32.xlu0 %v3042, 32
  %v3540 = vpop.permute.xlu0 %3539
  %3541 = vrot.lane.b32.xlu0 %v3043, 32
  %v3542 = vpop.permute.xlu0 %3541
  %3543 = vrot.lane.b32.xlu0 %v3044, 32
  %v3544 = vpop.permute.xlu0 %3543
  %3545 = vrot.lane.b32.xlu0 %v3045, 32
  %v3546 = vpop.permute.xlu0 %3545
  %3547 = vrot.lane.b32.xlu0 %v3046, 32
  %v3548 = vpop.permute.xlu0 %3547
  %3549 = vrot.lane.b32.xlu0 %v3047, 32
  %v3550 = vpop.permute.xlu0 %3549
  %3551 = vrot.lane.b32.xlu0 %v3048, 32
  %v3552 = vpop.permute.xlu0 %3551
  %3553 = vrot.lane.b32.xlu0 %v3049, 32
  %v3554 = vpop.permute.xlu0 %3553
  %3555 = vrot.lane.b32.xlu0 %v3050, 32
  %v3556 = vpop.permute.xlu0 %3555
  %3557 = vrot.lane.b32.xlu0 %v3051, 32
  %v3558 = vpop.permute.xlu0 %3557
  %3559 = vrot.lane.b32.xlu0 %v3052, 32
  %v3560 = vpop.permute.xlu0 %3559
  %3561 = vrot.lane.b32.xlu0 %v3053, 32
  %v3562 = vpop.permute.xlu0 %3561
  %3563 = vrot.lane.b32.xlu0 %v3054, 32
  %v3564 = vpop.permute.xlu0 %3563
  %3565 = vrot.lane.b32.xlu0 %v3055, 32
  %v3566 = vpop.permute.xlu0 %3565
  %3567 = vrot.lane.b32.xlu0 %v3056, 32
  %v3568 = vpop.permute.xlu0 %3567
  %3569 = vrot.lane.b32.xlu0 %v3057, 32
  %v3570 = vpop.permute.xlu0 %3569
  %3571 = vrot.lane.b32.xlu0 %v3058, 32
  %v3572 = vpop.permute.xlu0 %3571
  %3573 = vrot.lane.b32.xlu0 %v3059, 32
  %v3574 = vpop.permute.xlu0 %3573
  %3575 = vrot.lane.b32.xlu0 %v3060, 32
  %v3576 = vpop.permute.xlu0 %3575
  %3577 = vrot.lane.b32.xlu0 %v3061, 32
  %v3578 = vpop.permute.xlu0 %3577
  %3579 = vrot.lane.b32.xlu0 %v3223, 32
  %v3580 = vpop.permute.xlu0 %3579
  %3581 = vrot.lane.b32.xlu0 %v3224, 32
  %v3582 = vpop.permute.xlu0 %3581
  %3583 = vrot.lane.b32.xlu0 %v3527, 32
  %v3584 = vpop.permute.xlu0 %3583
  %3585 = vrot.lane.b32.xlu0 %v3528, 32
  %v3586 = vpop.permute.xlu0 %3585
  %vm3615 = vcmask 916736
  %3616 = vst.msk [vmem:[#allocation2 + $0x8] sm:$0xff] %vm3615, %v3532
  %vm3617 = vcmask 914688
  %3618 = vst.msk [vmem:[#allocation2 + $0x28] sm:$0x3f] %vm3617, %v3534
  %3619 = vst.msk [vmem:[#allocation2 + $0x48] sm:$0xff] %vm3615, %v3536
  %3620 = vst.msk [vmem:[#allocation2 + $0x68] sm:$0x3f] %vm3617, %v3538
  %3621 = vst.msk [vmem:[#allocation2 + $0x88] sm:$0xff] %vm3615, %v3540
  %3622 = vst.msk [vmem:[#allocation2 + $0xa8] sm:$0x3f] %vm3617, %v3542
  %3623 = vst.msk [vmem:[#allocation2 + $0xc8] sm:$0xff] %vm3615, %v3544
  %3624 = vst.msk [vmem:[#allocation2 + $0xe8] sm:$0x3f] %vm3617, %v3546
  %3625 = vst.msk [vmem:[#allocation2 + $0x108] sm:$0xff] %vm3615, %v3548
  %3626 = vst.msk [vmem:[#allocation2 + $0x128] sm:$0x3f] %vm3617, %v3550
  %3627 = vst.msk [vmem:[#allocation2 + $0x148] sm:$0xff] %vm3615, %v3552
  %3628 = vst.msk [vmem:[#allocation2 + $0x168] sm:$0x3f] %vm3617, %v3554
  %3629 = vst.msk [vmem:[#allocation2 + $0x188] sm:$0xff] %vm3615, %v3556
  %3630 = vst.msk [vmem:[#allocation2 + $0x1a8] sm:$0x3f] %vm3617, %v3558
  %3631 = vst.msk [vmem:[#allocation2 + $0x1c8] sm:$0xff] %vm3615, %v3560
  %3632 = vst.msk [vmem:[#allocation2 + $0x1e8] sm:$0x3f] %vm3617, %v3562
  %3633 = vst.msk [vmem:[#allocation2 + $0x208] sm:$0xff] %vm3615, %v3564
  %3634 = vst.msk [vmem:[#allocation2 + $0x228] sm:$0x3f] %vm3617, %v3566
  %3635 = vst.msk [vmem:[#allocation2 + $0x248] sm:$0xff] %vm3615, %v3568
  %3636 = vst.msk [vmem:[#allocation2 + $0x268] sm:$0x3f] %vm3617, %v3570
  %3637 = vst.msk [vmem:[#allocation2 + $0x288] sm:$0xff] %vm3615, %v3572
  %3638 = vst.msk [vmem:[#allocation2 + $0x2a8] sm:$0x3f] %vm3617, %v3574
  %3639 = vst.msk [vmem:[#allocation2 + $0x2c8] sm:$0xff] %vm3615, %v3576
  %3640 = vst.msk [vmem:[#allocation2 + $0x2e8] sm:$0x3f] %vm3617, %v3578
  %3641 = vst.msk [vmem:[#allocation2 + $0x308] sm:$0xff] %vm3615, %v3580
  %3642 = vst.msk [vmem:[#allocation2 + $0x328] sm:$0x3f] %vm3617, %v3582
  %3643 = vst.msk [vmem:[#allocation2 + $0x348] sm:$0xff] %vm3615, %v3584
  %3644 = vst.msk [vmem:[#allocation2 + $0x368] sm:$0x3f] %vm3617, %v3586
  %v3645 = vcombine.low %v1126, %v1134
  %v3646 = vcombine.low %v1133, %v1135
  %v3648 = vunpack.c.l.s4 1983009808
  %v3649 = vunpack.c.0.s8 %v3648
  %v3650 = vlaneseq
  %v3651 = vshrl.u32 %v3650, 7
  %v3652 = vsub.s32 %v3649, %v3651
  %v3653 = vrot.slane %v3645, %v3652
  %v3655 = vunpack.c.l.s4 1983009808
  %v3656 = vunpack.c.0.s8 %v3655
  %v3657 = vlaneseq
  %v3658 = vshrl.u32 %v3657, 7
  %v3659 = vsub.s32 %v3656, %v3658
  %v3660 = vrot.slane %v3646, %v3659
  %v3661 = vcombine.low %v3653, %v3660
  %v3662 = vcombine.low %v1143, %v1151
  %v3664 = vunpack.c.l.s4 1983009808
  %v3665 = vunpack.c.0.s8 %v3664
  %v3666 = vlaneseq
  %v3667 = vshrl.u32 %v3666, 7
  %v3668 = vsub.s32 %v3665, %v3667
  %v3669 = vrot.slane %v3662, %v3668
  %v3671 = vunpack.c.l.s4 1983009808
  %v3672 = vunpack.c.0.s8 %v3671
  %v3673 = vlaneseq
  %v3674 = vshrl.u32 %v3673, 7
  %v3675 = vsub.s32 %v3672, %v3674
  %v3676 = vrot.slane %v1150, %v3675
  %v3677 = vcombine.low %v3669, %v3676
  %v3680 = vcombine.low %v1150, %v1152
  %v3682 = vunpack.c.l.s4 1983009808
  %v3683 = vunpack.c.0.s8 %v3682
  %v3684 = vlaneseq
  %v3685 = vshrl.u32 %v3684, 7
  %v3686 = vsub.s32 %v3683, %v3685
  %v3687 = vrot.slane %v3680, %v3686
  %v3688 = vcombine.low %v3669, %v3687
  %v3689 = vrot.slane %v3661, 1
  %v3690 = vrot.slane %v3688, 1
  %v3691 = vsel %vm1811, %v3689, %v3690
  %3692 = vrot.lane.b32.xlu0 %v3691, 16
  %v3693 = vpop.permute.xlu0 %3692
  %3694 = vrot.lane.b32.xlu0 %v3690, 16
  %v3695 = vpop.permute.xlu0 %3694
  %v3698 = vcombine.low %v1134, %v1133
  %v3699 = vcombine.low %v1135, %v1143
  %v3701 = vunpack.c.l.s4 1983009808
  %v3702 = vunpack.c.0.s8 %v3701
  %v3703 = vlaneseq
  %v3704 = vshrl.u32 %v3703, 7
  %v3705 = vsub.s32 %v3702, %v3704
  %v3706 = vrot.slane %v3698, %v3705
  %v3708 = vunpack.c.l.s4 1983009808
  %v3709 = vunpack.c.0.s8 %v3708
  %v3710 = vlaneseq
  %v3711 = vshrl.u32 %v3710, 7
  %v3712 = vsub.s32 %v3709, %v3711
  %v3713 = vrot.slane %v3699, %v3712
  %v3714 = vcombine.low %v3706, %v3713
  %v3715 = vcombine.low %v1151, %v1150
  %v3717 = vunpack.c.l.s4 1983009808
  %v3718 = vunpack.c.0.s8 %v3717
  %v3719 = vlaneseq
  %v3720 = vshrl.u32 %v3719, 7
  %v3721 = vsub.s32 %v3718, %v3720
  %v3722 = vrot.slane %v3715, %v3721
  %v3724 = vunpack.c.l.s4 1983009808
  %v3725 = vunpack.c.0.s8 %v3724
  %v3726 = vlaneseq
  %v3727 = vshrl.u32 %v3726, 7
  %v3728 = vsub.s32 %v3725, %v3727
  %v3729 = vrot.slane %v1152, %v3728
  %v3730 = vcombine.low %v3722, %v3729
  %3731 = vrot.lane.b32.xlu0 %v3714, 32
  %v3732 = vpop.permute.xlu0 %3731
  %3733 = vrot.lane.b32.xlu0 %v3730, 32
  %v3734 = vpop.permute.xlu0 %3733
  %v3737 = vcombine.low %v1152, %v1160
  %v3739 = vunpack.c.l.s4 1983009808
  %v3740 = vunpack.c.0.s8 %v3739
  %v3741 = vlaneseq
  %v3742 = vshrl.u32 %v3741, 7
  %v3743 = vsub.s32 %v3740, %v3742
  %v3744 = vrot.slane %v3737, %v3743
  %v3745 = vcombine.low %v3722, %v3744
  %v3746 = vrot.slane %v3714, 1
  %v3747 = vrot.slane %v3745, 1
  %v3748 = vsel %vm1811, %v3746, %v3747
  %3749 = vrot.lane.b32.xlu0 %v3748, 48
  %v3750 = vpop.permute.xlu0 %3749
  %3751 = vrot.lane.b32.xlu0 %v3747, 48
  %v3752 = vpop.permute.xlu0 %3751
  %v3755 = vcombine.low %v3660, %v3669
  %v3757 = vunpack.c.l.s4 1983009808
  %v3758 = vunpack.c.0.s8 %v3757
  %v3759 = vlaneseq
  %v3760 = vshrl.u32 %v3759, 7
  %v3761 = vsub.s32 %v3758, %v3760
  %v3762 = vrot.slane %v1160, %v3761
  %v3763 = vcombine.low %v3687, %v3762
  %3764 = vrot.lane.b32.xlu0 %v3755, 64
  %v3765 = vpop.permute.xlu0 %3764
  %3766 = vrot.lane.b32.xlu0 %v3763, 64
  %v3767 = vpop.permute.xlu0 %3766
  %v3770 = vsel %vm2946, %v3661, %v3693
  %v3771 = vsel %vm2946, %v3677, %v3695
  %v3772 = vsel %vm2975, %v3770, %v3732
  %v3773 = vsel %vm2975, %v3771, %v3734
  %v3774 = vsel %vm3004, %v3772, %v3750
  %v3775 = vsel %vm3004, %v3773, %v3752
  %v3776 = vsel %vm3033, %v3774, %v3765
  %v3777 = vsel %vm3033, %v3775, %v3767
  %3780 = vrot.lane.b32.xlu0 %v3040, 112
  %v3781 = vpop.permute.xlu0 %3780
  %3782 = vrot.lane.b32.xlu0 %v3041, 112
  %v3783 = vpop.permute.xlu0 %3782
  %3784 = vrot.lane.b32.xlu0 %v3042, 112
  %v3785 = vpop.permute.xlu0 %3784
  %3786 = vrot.lane.b32.xlu0 %v3043, 112
  %v3787 = vpop.permute.xlu0 %3786
  %3788 = vrot.lane.b32.xlu0 %v3044, 112
  %v3789 = vpop.permute.xlu0 %3788
  %3790 = vrot.lane.b32.xlu0 %v3045, 112
  %v3791 = vpop.permute.xlu0 %3790
  %3792 = vrot.lane.b32.xlu0 %v3046, 112
  %v3793 = vpop.permute.xlu0 %3792
  %3794 = vrot.lane.b32.xlu0 %v3047, 112
  %v3795 = vpop.permute.xlu0 %3794
  %3796 = vrot.lane.b32.xlu0 %v3048, 112
  %v3797 = vpop.permute.xlu0 %3796
  %3798 = vrot.lane.b32.xlu0 %v3049, 112
  %v3799 = vpop.permute.xlu0 %3798
  %3800 = vrot.lane.b32.xlu0 %v3050, 112
  %v3801 = vpop.permute.xlu0 %3800
  %3802 = vrot.lane.b32.xlu0 %v3051, 112
  %v3803 = vpop.permute.xlu0 %3802
  %3804 = vrot.lane.b32.xlu0 %v3052, 112
  %v3805 = vpop.permute.xlu0 %3804
  %3806 = vrot.lane.b32.xlu0 %v3053, 112
  %v3807 = vpop.permute.xlu0 %3806
  %3808 = vrot.lane.b32.xlu0 %v3054, 112
  %v3809 = vpop.permute.xlu0 %3808
  %3810 = vrot.lane.b32.xlu0 %v3055, 112
  %v3811 = vpop.permute.xlu0 %3810
  %3812 = vrot.lane.b32.xlu0 %v3056, 112
  %v3813 = vpop.permute.xlu0 %3812
  %3814 = vrot.lane.b32.xlu0 %v3057, 112
  %v3815 = vpop.permute.xlu0 %3814
  %3816 = vrot.lane.b32.xlu0 %v3058, 112
  %v3817 = vpop.permute.xlu0 %3816
  %3818 = vrot.lane.b32.xlu0 %v3059, 112
  %v3819 = vpop.permute.xlu0 %3818
  %3820 = vrot.lane.b32.xlu0 %v3060, 112
  %v3821 = vpop.permute.xlu0 %3820
  %3822 = vrot.lane.b32.xlu0 %v3061, 112
  %v3823 = vpop.permute.xlu0 %3822
  %3824 = vrot.lane.b32.xlu0 %v3223, 112
  %v3825 = vpop.permute.xlu0 %3824
  %3826 = vrot.lane.b32.xlu0 %v3224, 112
  %v3827 = vpop.permute.xlu0 %3826
  %3828 = vrot.lane.b32.xlu0 %v3527, 112
  %v3829 = vpop.permute.xlu0 %3828
  %3830 = vrot.lane.b32.xlu0 %v3528, 112
  %v3831 = vpop.permute.xlu0 %3830
  %3832 = vrot.lane.b32.xlu0 %v3776, 112
  %v3833 = vpop.permute.xlu0 %3832
  %3834 = vrot.lane.b32.xlu0 %v3777, 112
  %v3835 = vpop.permute.xlu0 %3834
  %vm3864 = vcmask 1048448
  %3865 = vst.msk [vmem:[#allocation2 + $0x8] sm:$0xff] %vm3864, %v3781
  %3866 = vst.msk [vmem:[#allocation2 + $0x10] sm:$0xff] %vm3033, %v3781
  %vm3867 = vcmask 1046400
  %3868 = vst.msk [vmem:[#allocation2 + $0x28] sm:$0x3f] %vm3867, %v3783
  %vm3869 = vcmask 521216
  %3870 = vst.msk [vmem:[#allocation2 + $0x30] sm:$0x3f] %vm3869, %v3783
  %3871 = vst.msk [vmem:[#allocation2 + $0x48] sm:$0xff] %vm3864, %v3785
  %3872 = vst.msk [vmem:[#allocation2 + $0x50] sm:$0xff] %vm3033, %v3785
  %3873 = vst.msk [vmem:[#allocation2 + $0x68] sm:$0x3f] %vm3867, %v3787
  %3874 = vst.msk [vmem:[#allocation2 + $0x70] sm:$0x3f] %vm3869, %v3787
  %3875 = vst.msk [vmem:[#allocation2 + $0x88] sm:$0xff] %vm3864, %v3789
  %3876 = vst.msk [vmem:[#allocation2 + $0x90] sm:$0xff] %vm3033, %v3789
  %3877 = vst.msk [vmem:[#allocation2 + $0xa8] sm:$0x3f] %vm3867, %v3791
  %3878 = vst.msk [vmem:[#allocation2 + $0xb0] sm:$0x3f] %vm3869, %v3791
  %3879 = vst.msk [vmem:[#allocation2 + $0xc8] sm:$0xff] %vm3864, %v3793
  %3880 = vst.msk [vmem:[#allocation2 + $0xd0] sm:$0xff] %vm3033, %v3793
  %3881 = vst.msk [vmem:[#allocation2 + $0xe8] sm:$0x3f] %vm3867, %v3795
  %3882 = vst.msk [vmem:[#allocation2 + $0xf0] sm:$0x3f] %vm3869, %v3795
  %3883 = vst.msk [vmem:[#allocation2 + $0x108] sm:$0xff] %vm3864, %v3797
  %3884 = vst.msk [vmem:[#allocation2 + $0x110] sm:$0xff] %vm3033, %v3797
  %3885 = vst.msk [vmem:[#allocation2 + $0x128] sm:$0x3f] %vm3867, %v3799
  %3886 = vst.msk [vmem:[#allocation2 + $0x130] sm:$0x3f] %vm3869, %v3799
  %3887 = vst.msk [vmem:[#allocation2 + $0x148] sm:$0xff] %vm3864, %v3801
  %3888 = vst.msk [vmem:[#allocation2 + $0x150] sm:$0xff] %vm3033, %v3801
  %3889 = vst.msk [vmem:[#allocation2 + $0x168] sm:$0x3f] %vm3867, %v3803
  %3890 = vst.msk [vmem:[#allocation2 + $0x170] sm:$0x3f] %vm3869, %v3803
  %3891 = vst.msk [vmem:[#allocation2 + $0x188] sm:$0xff] %vm3864, %v3805
  %3892 = vst.msk [vmem:[#allocation2 + $0x190] sm:$0xff] %vm3033, %v3805
  %3893 = vst.msk [vmem:[#allocation2 + $0x1a8] sm:$0x3f] %vm3867, %v3807
  %3894 = vst.msk [vmem:[#allocation2 + $0x1b0] sm:$0x3f] %vm3869, %v3807
  %3895 = vst.msk [vmem:[#allocation2 + $0x1c8] sm:$0xff] %vm3864, %v3809
  %3896 = vst.msk [vmem:[#allocation2 + $0x1d0] sm:$0xff] %vm3033, %v3809
  %3897 = vst.msk [vmem:[#allocation2 + $0x1e8] sm:$0x3f] %vm3867, %v3811
  %3898 = vst.msk [vmem:[#allocation2 + $0x1f0] sm:$0x3f] %vm3869, %v3811
  %3899 = vst.msk [vmem:[#allocation2 + $0x208] sm:$0xff] %vm3864, %v3813
  %3900 = vst.msk [vmem:[#allocation2 + $0x210] sm:$0xff] %vm3033, %v3813
  %3901 = vst.msk [vmem:[#allocation2 + $0x228] sm:$0x3f] %vm3867, %v3815
  %3902 = vst.msk [vmem:[#allocation2 + $0x230] sm:$0x3f] %vm3869, %v3815
  %3903 = vst.msk [vmem:[#allocation2 + $0x248] sm:$0xff] %vm3864, %v3817
  %3904 = vst.msk [vmem:[#allocation2 + $0x250] sm:$0xff] %vm3033, %v3817
  %3905 = vst.msk [vmem:[#allocation2 + $0x268] sm:$0x3f] %vm3867, %v3819
  %3906 = vst.msk [vmem:[#allocation2 + $0x270] sm:$0x3f] %vm3869, %v3819
  %3907 = vst.msk [vmem:[#allocation2 + $0x288] sm:$0xff] %vm3864, %v3821
  %3908 = vst.msk [vmem:[#allocation2 + $0x290] sm:$0xff] %vm3033, %v3821
  %3909 = vst.msk [vmem:[#allocation2 + $0x2a8] sm:$0x3f] %vm3867, %v3823
  %3910 = vst.msk [vmem:[#allocation2 + $0x2b0] sm:$0x3f] %vm3869, %v3823
  %3911 = vst.msk [vmem:[#allocation2 + $0x2c8] sm:$0xff] %vm3864, %v3825
  %3912 = vst.msk [vmem:[#allocation2 + $0x2d0] sm:$0xff] %vm3033, %v3825
  %3913 = vst.msk [vmem:[#allocation2 + $0x2e8] sm:$0x3f] %vm3867, %v3827
  %3914 = vst.msk [vmem:[#allocation2 + $0x2f0] sm:$0x3f] %vm3869, %v3827
  %3915 = vst.msk [vmem:[#allocation2 + $0x308] sm:$0xff] %vm3864, %v3829
  %3916 = vst.msk [vmem:[#allocation2 + $0x310] sm:$0xff] %vm3033, %v3829
  %3917 = vst.msk [vmem:[#allocation2 + $0x328] sm:$0x3f] %vm3867, %v3831
  %3918 = vst.msk [vmem:[#allocation2 + $0x330] sm:$0x3f] %vm3869, %v3831
  %3919 = vst.msk [vmem:[#allocation2 + $0x348] sm:$0xff] %vm3864, %v3833
  %3920 = vst.msk [vmem:[#allocation2 + $0x350] sm:$0xff] %vm3033, %v3833
  %3921 = vst.msk [vmem:[#allocation2 + $0x368] sm:$0x3f] %vm3867, %v3835
  %3922 = vst.msk [vmem:[#allocation2 + $0x370] sm:$0x3f] %vm3869, %v3835
  %v3923 = vcombine.low %v1168, %v1167
  %v3924 = vcombine.low %v1169, %v1177
  %v3926 = vunpack.c.l.s4 1983009808
  %v3927 = vunpack.c.0.s8 %v3926
  %v3928 = vlaneseq
  %v3929 = vshrl.u32 %v3928, 7
  %v3930 = vsub.s32 %v3927, %v3929
  %v3931 = vrot.slane %v3923, %v3930
  %v3933 = vunpack.c.l.s4 1983009808
  %v3934 = vunpack.c.0.s8 %v3933
  %v3935 = vlaneseq
  %v3936 = vshrl.u32 %v3935, 7
  %v3937 = vsub.s32 %v3934, %v3936
  %v3938 = vrot.slane %v3924, %v3937
  %v3939 = vcombine.low %v3931, %v3938
  %v3940 = vcombine.low %v1185, %v1184
  %v3942 = vunpack.c.l.s4 1983009808
  %v3943 = vunpack.c.0.s8 %v3942
  %v3944 = vlaneseq
  %v3945 = vshrl.u32 %v3944, 7
  %v3946 = vsub.s32 %v3943, %v3945
  %v3947 = vrot.slane %v3940, %v3946
  %v3949 = vunpack.c.l.s4 1983009808
  %v3950 = vunpack.c.0.s8 %v3949
  %v3951 = vlaneseq
  %v3952 = vshrl.u32 %v3951, 7
  %v3953 = vsub.s32 %v3950, %v3952
  %v3954 = vrot.slane %v1186, %v3953
  %v3955 = vcombine.low %v3947, %v3954
  %v3958 = vcombine.low %v1186, %v1193
  %v3960 = vunpack.c.l.s4 1983009808
  %v3961 = vunpack.c.0.s8 %v3960
  %v3962 = vlaneseq
  %v3963 = vshrl.u32 %v3962, 7
  %v3964 = vsub.s32 %v3961, %v3963
  %v3965 = vrot.slane %v3958, %v3964
  %v3966 = vcombine.low %v3947, %v3965
  %v3967 = vrot.slane %v3939, 1
  %v3968 = vrot.slane %v3966, 1
  %v3969 = vsel %vm1811, %v3967, %v3968
  %3970 = vrot.lane.b32.xlu0 %v3969, 16
  %v3971 = vpop.permute.xlu0 %3970
  %3972 = vrot.lane.b32.xlu0 %v3968, 16
  %v3973 = vpop.permute.xlu0 %3972
  %v3976 = vcombine.low %v1167, %v1169
  %v3977 = vcombine.low %v1177, %v1185
  %v3979 = vunpack.c.l.s4 1983009808
  %v3980 = vunpack.c.0.s8 %v3979
  %v3981 = vlaneseq
  %v3982 = vshrl.u32 %v3981, 7
  %v3983 = vsub.s32 %v3980, %v3982
  %v3984 = vrot.slane %v3976, %v3983
  %v3986 = vunpack.c.l.s4 1983009808
  %v3987 = vunpack.c.0.s8 %v3986
  %v3988 = vlaneseq
  %v3989 = vshrl.u32 %v3988, 7
  %v3990 = vsub.s32 %v3987, %v3989
  %v3991 = vrot.slane %v3977, %v3990
  %v3992 = vcombine.low %v3984, %v3991
  %v3993 = vcombine.low %v1184, %v1186
  %v3995 = vunpack.c.l.s4 1983009808
  %v3996 = vunpack.c.0.s8 %v3995
  %v3997 = vlaneseq
  %v3998 = vshrl.u32 %v3997, 7
  %v3999 = vsub.s32 %v3996, %v3998
  %v4000 = vrot.slane %v3993, %v3999
  %v4002 = vunpack.c.l.s4 1983009808
  %v4003 = vunpack.c.0.s8 %v4002
  %v4004 = vlaneseq
  %v4005 = vshrl.u32 %v4004, 7
  %v4006 = vsub.s32 %v4003, %v4005
  %v4007 = vrot.slane %v1193, %v4006
  %v4008 = vcombine.low %v4000, %v4007
  %4009 = vrot.lane.b32.xlu0 %v3992, 32
  %v4010 = vpop.permute.xlu0 %4009
  %4011 = vrot.lane.b32.xlu0 %v4008, 32
  %v4012 = vpop.permute.xlu0 %4011
  %v4015 = vcombine.low %v1193, %v1194
  %v4017 = vunpack.c.l.s4 1983009808
  %v4018 = vunpack.c.0.s8 %v4017
  %v4019 = vlaneseq
  %v4020 = vshrl.u32 %v4019, 7
  %v4021 = vsub.s32 %v4018, %v4020
  %v4022 = vrot.slane %v4015, %v4021
  %v4023 = vcombine.low %v4000, %v4022
  %v4024 = vrot.slane %v3992, 1
  %v4025 = vrot.slane %v4023, 1
  %v4026 = vsel %vm1811, %v4024, %v4025
  %4027 = vrot.lane.b32.xlu0 %v4026, 48
  %v4028 = vpop.permute.xlu0 %4027
  %4029 = vrot.lane.b32.xlu0 %v4025, 48
  %v4030 = vpop.permute.xlu0 %4029
  %v4033 = vcombine.low %v3938, %v3947
  %v4035 = vunpack.c.l.s4 1983009808
  %v4036 = vunpack.c.0.s8 %v4035
  %v4037 = vlaneseq
  %v4038 = vshrl.u32 %v4037, 7
  %v4039 = vsub.s32 %v4036, %v4038
  %v4040 = vrot.slane %v1194, %v4039
  %v4041 = vcombine.low %v3965, %v4040
  %4042 = vrot.lane.b32.xlu0 %v4033, 64
  %v4043 = vpop.permute.xlu0 %4042
  %4044 = vrot.lane.b32.xlu0 %v4041, 64
  %v4045 = vpop.permute.xlu0 %4044
  %v4048 = vsel %vm2946, %v3939, %v3971
  %v4049 = vsel %vm2946, %v3955, %v3973
  %v4050 = vsel %vm2975, %v4048, %v4010
  %v4051 = vsel %vm2975, %v4049, %v4012
  %v4052 = vsel %vm3004, %v4050, %v4028
  %v4053 = vsel %vm3004, %v4051, %v4030
  %v4054 = vsel %vm3033, %v4052, %v4043
  %v4055 = vsel %vm3033, %v4053, %v4045
  %4058 = vrot.lane.b32.xlu0 %v3042, 64
  %v4059 = vpop.permute.xlu0 %4058
  %4060 = vrot.lane.b32.xlu0 %v3043, 64
  %v4061 = vpop.permute.xlu0 %4060
  %4062 = vrot.lane.b32.xlu0 %v3044, 64
  %v4063 = vpop.permute.xlu0 %4062
  %4064 = vrot.lane.b32.xlu0 %v3045, 64
  %v4065 = vpop.permute.xlu0 %4064
  %4066 = vrot.lane.b32.xlu0 %v3046, 64
  %v4067 = vpop.permute.xlu0 %4066
  %4068 = vrot.lane.b32.xlu0 %v3047, 64
  %v4069 = vpop.permute.xlu0 %4068
  %4070 = vrot.lane.b32.xlu0 %v3048, 64
  %v4071 = vpop.permute.xlu0 %4070
  %4072 = vrot.lane.b32.xlu0 %v3049, 64
  %v4073 = vpop.permute.xlu0 %4072
  %4074 = vrot.lane.b32.xlu0 %v3050, 64
  %v4075 = vpop.permute.xlu0 %4074
  %4076 = vrot.lane.b32.xlu0 %v3051, 64
  %v4077 = vpop.permute.xlu0 %4076
  %4078 = vrot.lane.b32.xlu0 %v3052, 64
  %v4079 = vpop.permute.xlu0 %4078
  %4080 = vrot.lane.b32.xlu0 %v3053, 64
  %v4081 = vpop.permute.xlu0 %4080
  %4082 = vrot.lane.b32.xlu0 %v3054, 64
  %v4083 = vpop.permute.xlu0 %4082
  %4084 = vrot.lane.b32.xlu0 %v3055, 64
  %v4085 = vpop.permute.xlu0 %4084
  %4086 = vrot.lane.b32.xlu0 %v3056, 64
  %v4087 = vpop.permute.xlu0 %4086
  %4088 = vrot.lane.b32.xlu0 %v3057, 64
  %v4089 = vpop.permute.xlu0 %4088
  %4090 = vrot.lane.b32.xlu0 %v3058, 64
  %v4091 = vpop.permute.xlu0 %4090
  %4092 = vrot.lane.b32.xlu0 %v3059, 64
  %v4093 = vpop.permute.xlu0 %4092
  %4094 = vrot.lane.b32.xlu0 %v3060, 64
  %v4095 = vpop.permute.xlu0 %4094
  %4096 = vrot.lane.b32.xlu0 %v3061, 64
  %v4097 = vpop.permute.xlu0 %4096
  %4098 = vrot.lane.b32.xlu0 %v3223, 64
  %v4099 = vpop.permute.xlu0 %4098
  %4100 = vrot.lane.b32.xlu0 %v3224, 64
  %v4101 = vpop.permute.xlu0 %4100
  %4102 = vrot.lane.b32.xlu0 %v3527, 64
  %v4103 = vpop.permute.xlu0 %4102
  %4104 = vrot.lane.b32.xlu0 %v3528, 64
  %v4105 = vpop.permute.xlu0 %4104
  %4106 = vrot.lane.b32.xlu0 %v3776, 64
  %v4107 = vpop.permute.xlu0 %4106
  %4108 = vrot.lane.b32.xlu0 %v3777, 64
  %v4109 = vpop.permute.xlu0 %4108
  %4110 = vrot.lane.b32.xlu0 %v4054, 64
  %v4111 = vpop.permute.xlu0 %4110
  %4112 = vrot.lane.b32.xlu0 %v4055, 64
  %v4113 = vpop.permute.xlu0 %4112
  %vm4142 = vcmask 1048064
  %4143 = vst.msk [vmem:[#allocation2 + $0x10] sm:$0xff] %vm4142, %v4059
  %4144 = vst.msk [vmem:[#allocation2 + $0x18] sm:$0xff] %vm2946, %v4059
  %vm4145 = vcmask 1046016
  %4146 = vst.msk [vmem:[#allocation2 + $0x30] sm:$0x3f] %vm4145, %v4061
  %vm4147 = vcmask 128000
  %4148 = vst.msk [vmem:[#allocation2 + $0x38] sm:$0x3f] %vm4147, %v4061
  %4149 = vst.msk [vmem:[#allocation2 + $0x50] sm:$0xff] %vm4142, %v4063
  %4150 = vst.msk [vmem:[#allocation2 + $0x58] sm:$0xff] %vm2946, %v4063
  %4151 = vst.msk [vmem:[#allocation2 + $0x70] sm:$0x3f] %vm4145, %v4065
  %4152 = vst.msk [vmem:[#allocation2 + $0x78] sm:$0x3f] %vm4147, %v4065
  %4153 = vst.msk [vmem:[#allocation2 + $0x90] sm:$0xff] %vm4142, %v4067
  %4154 = vst.msk [vmem:[#allocation2 + $0x98] sm:$0xff] %vm2946, %v4067
  %4155 = vst.msk [vmem:[#allocation2 + $0xb0] sm:$0x3f] %vm4145, %v4069
  %4156 = vst.msk [vmem:[#allocation2 + $0xb8] sm:$0x3f] %vm4147, %v4069
  %4157 = vst.msk [vmem:[#allocation2 + $0xd0] sm:$0xff] %vm4142, %v4071
  %4158 = vst.msk [vmem:[#allocation2 + $0xd8] sm:$0xff] %vm2946, %v4071
  %4159 = vst.msk [vmem:[#allocation2 + $0xf0] sm:$0x3f] %vm4145, %v4073
  %4160 = vst.msk [vmem:[#allocation2 + $0xf8] sm:$0x3f] %vm4147, %v4073
  %4161 = vst.msk [vmem:[#allocation2 + $0x110] sm:$0xff] %vm4142, %v4075
  %4162 = vst.msk [vmem:[#allocation2 + $0x118] sm:$0xff] %vm2946, %v4075
  %4163 = vst.msk [vmem:[#allocation2 + $0x130] sm:$0x3f] %vm4145, %v4077
  %4164 = vst.msk [vmem:[#allocation2 + $0x138] sm:$0x3f] %vm4147, %v4077
  %4165 = vst.msk [vmem:[#allocation2 + $0x150] sm:$0xff] %vm4142, %v4079
  %4166 = vst.msk [vmem:[#allocation2 + $0x158] sm:$0xff] %vm2946, %v4079
  %4167 = vst.msk [vmem:[#allocation2 + $0x170] sm:$0x3f] %vm4145, %v4081
  %4168 = vst.msk [vmem:[#allocation2 + $0x178] sm:$0x3f] %vm4147, %v4081
  %4169 = vst.msk [vmem:[#allocation2 + $0x190] sm:$0xff] %vm4142, %v4083
  %4170 = vst.msk [vmem:[#allocation2 + $0x198] sm:$0xff] %vm2946, %v4083
  %4171 = vst.msk [vmem:[#allocation2 + $0x1b0] sm:$0x3f] %vm4145, %v4085
  %4172 = vst.msk [vmem:[#allocation2 + $0x1b8] sm:$0x3f] %vm4147, %v4085
  %4173 = vst.msk [vmem:[#allocation2 + $0x1d0] sm:$0xff] %vm4142, %v4087
  %4174 = vst.msk [vmem:[#allocation2 + $0x1d8] sm:$0xff] %vm2946, %v4087
  %4175 = vst.msk [vmem:[#allocation2 + $0x1f0] sm:$0x3f] %vm4145, %v4089
  %4176 = vst.msk [vmem:[#allocation2 + $0x1f8] sm:$0x3f] %vm4147, %v4089
  %4177 = vst.msk [vmem:[#allocation2 + $0x210] sm:$0xff] %vm4142, %v4091
  %4178 = vst.msk [vmem:[#allocation2 + $0x218] sm:$0xff] %vm2946, %v4091
  %4179 = vst.msk [vmem:[#allocation2 + $0x230] sm:$0x3f] %vm4145, %v4093
  %4180 = vst.msk [vmem:[#allocation2 + $0x238] sm:$0x3f] %vm4147, %v4093
  %4181 = vst.msk [vmem:[#allocation2 + $0x250] sm:$0xff] %vm4142, %v4095
  %4182 = vst.msk [vmem:[#allocation2 + $0x258] sm:$0xff] %vm2946, %v4095
  %4183 = vst.msk [vmem:[#allocation2 + $0x270] sm:$0x3f] %vm4145, %v4097
  %4184 = vst.msk [vmem:[#allocation2 + $0x278] sm:$0x3f] %vm4147, %v4097
  %4185 = vst.msk [vmem:[#allocation2 + $0x290] sm:$0xff] %vm4142, %v4099
  %4186 = vst.msk [vmem:[#allocation2 + $0x298] sm:$0xff] %vm2946, %v4099
  %4187 = vst.msk [vmem:[#allocation2 + $0x2b0] sm:$0x3f] %vm4145, %v4101
  %4188 = vst.msk [vmem:[#allocation2 + $0x2b8] sm:$0x3f] %vm4147, %v4101
  %4189 = vst.msk [vmem:[#allocation2 + $0x2d0] sm:$0xff] %vm4142, %v4103
  %4190 = vst.msk [vmem:[#allocation2 + $0x2d8] sm:$0xff] %vm2946, %v4103
  %4191 = vst.msk [vmem:[#allocation2 + $0x2f0] sm:$0x3f] %vm4145, %v4105
  %4192 = vst.msk [vmem:[#allocation2 + $0x2f8] sm:$0x3f] %vm4147, %v4105
  %4193 = vst.msk [vmem:[#allocation2 + $0x310] sm:$0xff] %vm4142, %v4107
  %4194 = vst.msk [vmem:[#allocation2 + $0x318] sm:$0xff] %vm2946, %v4107
  %4195 = vst.msk [vmem:[#allocation2 + $0x330] sm:$0x3f] %vm4145, %v4109
  %4196 = vst.msk [vmem:[#allocation2 + $0x338] sm:$0x3f] %vm4147, %v4109
  %4197 = vst.msk [vmem:[#allocation2 + $0x350] sm:$0xff] %vm4142, %v4111
  %4198 = vst.msk [vmem:[#allocation2 + $0x358] sm:$0xff] %vm2946, %v4111
  %4199 = vst.msk [vmem:[#allocation2 + $0x370] sm:$0x3f] %vm4145, %v4113
  %4200 = vst.msk [vmem:[#allocation2 + $0x378] sm:$0x3f] %vm4147, %v4113
  %v4201 = vld [vmem:[#allocation2] sm:$0xff]
  %v4202 = vld [vmem:[#allocation2 + $0x8] sm:$0xff]
  %v4203 = vld [vmem:[#allocation2 + $0x10] sm:$0xff]
  %v4204 = vld [vmem:[#allocation2 + $0x18] sm:$0xff]
  %v4205 = vld [vmem:[#allocation2 + $0x20] sm:$0x3f]
  %v4206 = vld [vmem:[#allocation2 + $0x28] sm:$0x3f]
  %v4207 = vld [vmem:[#allocation2 + $0x30] sm:$0x3f]
  %v4208 = vld [vmem:[#allocation2 + $0x38] sm:$0x3f]
  %v4209 = vld [vmem:[#allocation2 + $0x40] sm:$0xff]
  %v4210 = vld [vmem:[#allocation2 + $0x48] sm:$0xff]
  %v4211 = vld [vmem:[#allocation2 + $0x50] sm:$0xff]
  %v4212 = vld [vmem:[#allocation2 + $0x58] sm:$0xff]
  %v4213 = vld [vmem:[#allocation2 + $0x60] sm:$0x3f]
  %v4214 = vld [vmem:[#allocation2 + $0x68] sm:$0x3f]
  %v4215 = vld [vmem:[#allocation2 + $0x70] sm:$0x3f]
  %v4216 = vld [vmem:[#allocation2 + $0x78] sm:$0x3f]
  %v4217 = vld [vmem:[#allocation2 + $0x80] sm:$0xff]
  %v4218 = vld [vmem:[#allocation2 + $0x88] sm:$0xff]
  %v4219 = vld [vmem:[#allocation2 + $0x90] sm:$0xff]
  %v4220 = vld [vmem:[#allocation2 + $0x98] sm:$0xff]
  %v4221 = vld [vmem:[#allocation2 + $0xa0] sm:$0x3f]
  %v4222 = vld [vmem:[#allocation2 + $0xa8] sm:$0x3f]
  %v4223 = vld [vmem:[#allocation2 + $0xb0] sm:$0x3f]
  %v4224 = vld [vmem:[#allocation2 + $0xb8] sm:$0x3f]
  %v4225 = vld [vmem:[#allocation2 + $0xc0] sm:$0xff]
  %v4226 = vld [vmem:[#allocation2 + $0xc8] sm:$0xff]
  %v4227 = vld [vmem:[#allocation2 + $0xd0] sm:$0xff]
  %v4228 = vld [vmem:[#allocation2 + $0xd8] sm:$0xff]
  %v4229 = vld [vmem:[#allocation2 + $0xe0] sm:$0x3f]
  %v4230 = vld [vmem:[#allocation2 + $0xe8] sm:$0x3f]
  %v4231 = vld [vmem:[#allocation2 + $0xf0] sm:$0x3f]
  %v4232 = vld [vmem:[#allocation2 + $0xf8] sm:$0x3f]
  %v4233 = vld [vmem:[#allocation2 + $0x100] sm:$0xff]
  %v4234 = vld [vmem:[#allocation2 + $0x108] sm:$0xff]
  %v4235 = vld [vmem:[#allocation2 + $0x110] sm:$0xff]
  %v4236 = vld [vmem:[#allocation2 + $0x118] sm:$0xff]
  %v4237 = vld [vmem:[#allocation2 + $0x120] sm:$0x3f]
  %v4238 = vld [vmem:[#allocation2 + $0x128] sm:$0x3f]
  %v4239 = vld [vmem:[#allocation2 + $0x130] sm:$0x3f]
  %v4240 = vld [vmem:[#allocation2 + $0x138] sm:$0x3f]
  %v4241 = vld [vmem:[#allocation2 + $0x140] sm:$0xff]
  %v4242 = vld [vmem:[#allocation2 + $0x148] sm:$0xff]
  %v4243 = vld [vmem:[#allocation2 + $0x150] sm:$0xff]
  %v4244 = vld [vmem:[#allocation2 + $0x158] sm:$0xff]
  %v4245 = vld [vmem:[#allocation2 + $0x160] sm:$0x3f]
  %v4246 = vld [vmem:[#allocation2 + $0x168] sm:$0x3f]
  %v4247 = vld [vmem:[#allocation2 + $0x170] sm:$0x3f]
  %v4248 = vld [vmem:[#allocation2 + $0x178] sm:$0x3f]
  %v4249 = vld [vmem:[#allocation2 + $0x180] sm:$0xff]
  %v4250 = vld [vmem:[#allocation2 + $0x188] sm:$0xff]
  %v4251 = vld [vmem:[#allocation2 + $0x190] sm:$0xff]
  %v4252 = vld [vmem:[#allocation2 + $0x198] sm:$0xff]
  %v4253 = vld [vmem:[#allocation2 + $0x1a0] sm:$0x3f]
  %v4254 = vld [vmem:[#allocation2 + $0x1a8] sm:$0x3f]
  %v4255 = vld [vmem:[#allocation2 + $0x1b0] sm:$0x3f]
  %v4256 = vld [vmem:[#allocation2 + $0x1b8] sm:$0x3f]
  %v4257 = vld [vmem:[#allocation2 + $0x1c0] sm:$0xff]
  %v4258 = vld [vmem:[#allocation2 + $0x1c8] sm:$0xff]
  %v4259 = vld [vmem:[#allocation2 + $0x1d0] sm:$0xff]
  %v4260 = vld [vmem:[#allocation2 + $0x1d8] sm:$0xff]
  %v4261 = vld [vmem:[#allocation2 + $0x1e0] sm:$0x3f]
  %v4262 = vld [vmem:[#allocation2 + $0x1e8] sm:$0x3f]
  %v4263 = vld [vmem:[#allocation2 + $0x1f0] sm:$0x3f]
  %v4264 = vld [vmem:[#allocation2 + $0x1f8] sm:$0x3f]
  %v4265 = vld [vmem:[#allocation2 + $0x200] sm:$0xff]
  %v4266 = vld [vmem:[#allocation2 + $0x208] sm:$0xff]
  %v4267 = vld [vmem:[#allocation2 + $0x210] sm:$0xff]
  %v4268 = vld [vmem:[#allocation2 + $0x218] sm:$0xff]
  %v4269 = vld [vmem:[#allocation2 + $0x220] sm:$0x3f]
  %v4270 = vld [vmem:[#allocation2 + $0x228] sm:$0x3f]
  %v4271 = vld [vmem:[#allocation2 + $0x230] sm:$0x3f]
  %v4272 = vld [vmem:[#allocation2 + $0x238] sm:$0x3f]
  %v4273 = vld [vmem:[#allocation2 + $0x240] sm:$0xff]
  %v4274 = vld [vmem:[#allocation2 + $0x248] sm:$0xff]
  %v4275 = vld [vmem:[#allocation2 + $0x250] sm:$0xff]
  %v4276 = vld [vmem:[#allocation2 + $0x258] sm:$0xff]
  %v4277 = vld [vmem:[#allocation2 + $0x260] sm:$0x3f]
  %v4278 = vld [vmem:[#allocation2 + $0x268] sm:$0x3f]
  %v4279 = vld [vmem:[#allocation2 + $0x270] sm:$0x3f]
  %v4280 = vld [vmem:[#allocation2 + $0x278] sm:$0x3f]
  %v4281 = vld [vmem:[#allocation2 + $0x280] sm:$0xff]
  %v4282 = vld [vmem:[#allocation2 + $0x288] sm:$0xff]
  %v4283 = vld [vmem:[#allocation2 + $0x290] sm:$0xff]
  %v4284 = vld [vmem:[#allocation2 + $0x298] sm:$0xff]
  %v4285 = vld [vmem:[#allocation2 + $0x2a0] sm:$0x3f]
  %v4286 = vld [vmem:[#allocation2 + $0x2a8] sm:$0x3f]
  %v4287 = vld [vmem:[#allocation2 + $0x2b0] sm:$0x3f]
  %v4288 = vld [vmem:[#allocation2 + $0x2b8] sm:$0x3f]
  %v4289 = vld [vmem:[#allocation2 + $0x2c0] sm:$0xff]
  %v4290 = vld [vmem:[#allocation2 + $0x2c8] sm:$0xff]
  %v4291 = vld [vmem:[#allocation2 + $0x2d0] sm:$0xff]
  %v4292 = vld [vmem:[#allocation2 + $0x2d8] sm:$0xff]
  %v4293 = vld [vmem:[#allocation2 + $0x2e0] sm:$0x3f]
  %v4294 = vld [vmem:[#allocation2 + $0x2e8] sm:$0x3f]
  %v4295 = vld [vmem:[#allocation2 + $0x2f0] sm:$0x3f]
  %v4296 = vld [vmem:[#allocation2 + $0x2f8] sm:$0x3f]
  %v4297 = vld [vmem:[#allocation2 + $0x300] sm:$0xff]
  %v4298 = vld [vmem:[#allocation2 + $0x308] sm:$0xff]
  %v4299 = vld [vmem:[#allocation2 + $0x310] sm:$0xff]
  %v4300 = vld [vmem:[#allocation2 + $0x318] sm:$0xff]
  %v4301 = vld [vmem:[#allocation2 + $0x320] sm:$0x3f]
  %v4302 = vld [vmem:[#allocation2 + $0x328] sm:$0x3f]
  %v4303 = vld [vmem:[#allocation2 + $0x330] sm:$0x3f]
  %v4304 = vld [vmem:[#allocation2 + $0x338] sm:$0x3f]
  %v4305 = vld [vmem:[#allocation2 + $0x340] sm:$0xff]
  %v4306 = vld [vmem:[#allocation2 + $0x348] sm:$0xff]
  %v4307 = vld [vmem:[#allocation2 + $0x350] sm:$0xff]
  %v4308 = vld [vmem:[#allocation2 + $0x358] sm:$0xff]
  %v4309 = vld [vmem:[#allocation2 + $0x360] sm:$0x3f]
  %v4310 = vld [vmem:[#allocation2 + $0x368] sm:$0x3f]
  %v4311 = vld [vmem:[#allocation2 + $0x370] sm:$0x3f]
  %v4312 = vld [vmem:[#allocation2 + $0x378] sm:$0x3f]
  %v4425 = vcombine.low %v4201, %v4202
  %v4426 = vcombine.high %v4201, %v4202
  %v4427 = vcombine.low %v4203, %v4204
  %v4428 = vcombine.high %v4203, %v4204
  %v4430 = vunpack.c.l.s4 1983009808
  %v4431 = vunpack.c.0.s8 %v4430
  %v4432 = vlaneseq
  %v4433 = vshrl.u32 %v4432, 7
  %v4434 = vsub.s32 %v4431, %v4433
  %v4435 = vrot.slane %v4425, %v4434
  %v4437 = vunpack.c.l.s4 1983009808
  %v4438 = vunpack.c.0.s8 %v4437
  %v4439 = vlaneseq
  %v4440 = vshrl.u32 %v4439, 7
  %v4441 = vsub.s32 %v4438, %v4440
  %v4442 = vrot.slane %v4426, %v4441
  %v4444 = vunpack.c.l.s4 1983009808
  %v4445 = vunpack.c.0.s8 %v4444
  %v4446 = vlaneseq
  %v4447 = vshrl.u32 %v4446, 7
  %v4448 = vsub.s32 %v4445, %v4447
  %v4449 = vrot.slane %v4427, %v4448
  %v4451 = vunpack.c.l.s4 1983009808
  %v4452 = vunpack.c.0.s8 %v4451
  %v4453 = vlaneseq
  %v4454 = vshrl.u32 %v4453, 7
  %v4455 = vsub.s32 %v4452, %v4454
  %v4456 = vrot.slane %v4428, %v4455
  %v4457 = vcombine.low %v4435, %v4449
  %v4458 = vcombine.high %v4435, %v4449
  %v4459 = vcombine.low %v4442, %v4456
  %v4460 = vcombine.high %v4442, %v4456
  %v4461 = vcombine.low %v4205, %v4206
  %v4462 = vcombine.high %v4205, %v4206
  %v4463 = vcombine.low %v4207, %v4208
  %v4464 = vcombine.high %v4207, %v4208
  %v4466 = vunpack.c.l.s4 1983009808
  %v4467 = vunpack.c.0.s8 %v4466
  %v4468 = vlaneseq
  %v4469 = vshrl.u32 %v4468, 7
  %v4470 = vsub.s32 %v4467, %v4469
  %v4471 = vrot.slane %v4461, %v4470
  %v4473 = vunpack.c.l.s4 1983009808
  %v4474 = vunpack.c.0.s8 %v4473
  %v4475 = vlaneseq
  %v4476 = vshrl.u32 %v4475, 7
  %v4477 = vsub.s32 %v4474, %v4476
  %v4478 = vrot.slane %v4462, %v4477
  %v4480 = vunpack.c.l.s4 1983009808
  %v4481 = vunpack.c.0.s8 %v4480
  %v4482 = vlaneseq
  %v4483 = vshrl.u32 %v4482, 7
  %v4484 = vsub.s32 %v4481, %v4483
  %v4485 = vrot.slane %v4463, %v4484
  %v4487 = vunpack.c.l.s4 1983009808
  %v4488 = vunpack.c.0.s8 %v4487
  %v4489 = vlaneseq
  %v4490 = vshrl.u32 %v4489, 7
  %v4491 = vsub.s32 %v4488, %v4490
  %v4492 = vrot.slane %v4464, %v4491
  %v4493 = vcombine.low %v4471, %v4485
  %v4494 = vcombine.high %v4471, %v4485
  %v4495 = vcombine.low %v4478, %v4492
  %v4496 = vcombine.low %v4209, %v4210
  %v4497 = vcombine.high %v4209, %v4210
  %v4498 = vcombine.low %v4211, %v4212
  %v4499 = vcombine.high %v4211, %v4212
  %v4501 = vunpack.c.l.s4 1983009808
  %v4502 = vunpack.c.0.s8 %v4501
  %v4503 = vlaneseq
  %v4504 = vshrl.u32 %v4503, 7
  %v4505 = vsub.s32 %v4502, %v4504
  %v4506 = vrot.slane %v4496, %v4505
  %v4508 = vunpack.c.l.s4 1983009808
  %v4509 = vunpack.c.0.s8 %v4508
  %v4510 = vlaneseq
  %v4511 = vshrl.u32 %v4510, 7
  %v4512 = vsub.s32 %v4509, %v4511
  %v4513 = vrot.slane %v4497, %v4512
  %v4515 = vunpack.c.l.s4 1983009808
  %v4516 = vunpack.c.0.s8 %v4515
  %v4517 = vlaneseq
  %v4518 = vshrl.u32 %v4517, 7
  %v4519 = vsub.s32 %v4516, %v4518
  %v4520 = vrot.slane %v4498, %v4519
  %v4522 = vunpack.c.l.s4 1983009808
  %v4523 = vunpack.c.0.s8 %v4522
  %v4524 = vlaneseq
  %v4525 = vshrl.u32 %v4524, 7
  %v4526 = vsub.s32 %v4523, %v4525
  %v4527 = vrot.slane %v4499, %v4526
  %v4528 = vcombine.low %v4506, %v4520
  %v4529 = vcombine.high %v4506, %v4520
  %v4530 = vcombine.low %v4513, %v4527
  %v4531 = vcombine.high %v4513, %v4527
  %v4532 = vcombine.low %v4213, %v4214
  %v4533 = vcombine.high %v4213, %v4214
  %v4534 = vcombine.low %v4215, %v4216
  %v4535 = vcombine.high %v4215, %v4216
  %v4537 = vunpack.c.l.s4 1983009808
  %v4538 = vunpack.c.0.s8 %v4537
  %v4539 = vlaneseq
  %v4540 = vshrl.u32 %v4539, 7
  %v4541 = vsub.s32 %v4538, %v4540
  %v4542 = vrot.slane %v4532, %v4541
  %v4544 = vunpack.c.l.s4 1983009808
  %v4545 = vunpack.c.0.s8 %v4544
  %v4546 = vlaneseq
  %v4547 = vshrl.u32 %v4546, 7
  %v4548 = vsub.s32 %v4545, %v4547
  %v4549 = vrot.slane %v4533, %v4548
  %v4551 = vunpack.c.l.s4 1983009808
  %v4552 = vunpack.c.0.s8 %v4551
  %v4553 = vlaneseq
  %v4554 = vshrl.u32 %v4553, 7
  %v4555 = vsub.s32 %v4552, %v4554
  %v4556 = vrot.slane %v4534, %v4555
  %v4558 = vunpack.c.l.s4 1983009808
  %v4559 = vunpack.c.0.s8 %v4558
  %v4560 = vlaneseq
  %v4561 = vshrl.u32 %v4560, 7
  %v4562 = vsub.s32 %v4559, %v4561
  %v4563 = vrot.slane %v4535, %v4562
  %v4564 = vcombine.low %v4542, %v4556
  %v4565 = vcombine.high %v4542, %v4556
  %v4566 = vcombine.low %v4549, %v4563
  %v4567 = vcombine.low %v4217, %v4218
  %v4568 = vcombine.high %v4217, %v4218
  %v4569 = vcombine.low %v4219, %v4220
  %v4570 = vcombine.high %v4219, %v4220
  %v4572 = vunpack.c.l.s4 1983009808
  %v4573 = vunpack.c.0.s8 %v4572
  %v4574 = vlaneseq
  %v4575 = vshrl.u32 %v4574, 7
  %v4576 = vsub.s32 %v4573, %v4575
  %v4577 = vrot.slane %v4567, %v4576
  %v4579 = vunpack.c.l.s4 1983009808
  %v4580 = vunpack.c.0.s8 %v4579
  %v4581 = vlaneseq
  %v4582 = vshrl.u32 %v4581, 7
  %v4583 = vsub.s32 %v4580, %v4582
  %v4584 = vrot.slane %v4568, %v4583
  %v4586 = vunpack.c.l.s4 1983009808
  %v4587 = vunpack.c.0.s8 %v4586
  %v4588 = vlaneseq
  %v4589 = vshrl.u32 %v4588, 7
  %v4590 = vsub.s32 %v4587, %v4589
  %v4591 = vrot.slane %v4569, %v4590
  %v4593 = vunpack.c.l.s4 1983009808
  %v4594 = vunpack.c.0.s8 %v4593
  %v4595 = vlaneseq
  %v4596 = vshrl.u32 %v4595, 7
  %v4597 = vsub.s32 %v4594, %v4596
  %v4598 = vrot.slane %v4570, %v4597
  %v4599 = vcombine.low %v4577, %v4591
  %v4600 = vcombine.high %v4577, %v4591
  %v4601 = vcombine.low %v4584, %v4598
  %v4602 = vcombine.high %v4584, %v4598
  %v4603 = vcombine.low %v4221, %v4222
  %v4604 = vcombine.high %v4221, %v4222
  %v4605 = vcombine.low %v4223, %v4224
  %v4606 = vcombine.high %v4223, %v4224
  %v4608 = vunpack.c.l.s4 1983009808
  %v4609 = vunpack.c.0.s8 %v4608
  %v4610 = vlaneseq
  %v4611 = vshrl.u32 %v4610, 7
  %v4612 = vsub.s32 %v4609, %v4611
  %v4613 = vrot.slane %v4603, %v4612
  %v4615 = vunpack.c.l.s4 1983009808
  %v4616 = vunpack.c.0.s8 %v4615
  %v4617 = vlaneseq
  %v4618 = vshrl.u32 %v4617, 7
  %v4619 = vsub.s32 %v4616, %v4618
  %v4620 = vrot.slane %v4604, %v4619
  %v4622 = vunpack.c.l.s4 1983009808
  %v4623 = vunpack.c.0.s8 %v4622
  %v4624 = vlaneseq
  %v4625 = vshrl.u32 %v4624, 7
  %v4626 = vsub.s32 %v4623, %v4625
  %v4627 = vrot.slane %v4605, %v4626
  %v4629 = vunpack.c.l.s4 1983009808
  %v4630 = vunpack.c.0.s8 %v4629
  %v4631 = vlaneseq
  %v4632 = vshrl.u32 %v4631, 7
  %v4633 = vsub.s32 %v4630, %v4632
  %v4634 = vrot.slane %v4606, %v4633
  %v4635 = vcombine.low %v4613, %v4627
  %v4636 = vcombine.high %v4613, %v4627
  %v4637 = vcombine.low %v4620, %v4634
  %v4638 = vcombine.low %v4225, %v4226
  %v4639 = vcombine.high %v4225, %v4226
  %v4640 = vcombine.low %v4227, %v4228
  %v4641 = vcombine.high %v4227, %v4228
  %v4643 = vunpack.c.l.s4 1983009808
  %v4644 = vunpack.c.0.s8 %v4643
  %v4645 = vlaneseq
  %v4646 = vshrl.u32 %v4645, 7
  %v4647 = vsub.s32 %v4644, %v4646
  %v4648 = vrot.slane %v4638, %v4647
  %v4650 = vunpack.c.l.s4 1983009808
  %v4651 = vunpack.c.0.s8 %v4650
  %v4652 = vlaneseq
  %v4653 = vshrl.u32 %v4652, 7
  %v4654 = vsub.s32 %v4651, %v4653
  %v4655 = vrot.slane %v4639, %v4654
  %v4657 = vunpack.c.l.s4 1983009808
  %v4658 = vunpack.c.0.s8 %v4657
  %v4659 = vlaneseq
  %v4660 = vshrl.u32 %v4659, 7
  %v4661 = vsub.s32 %v4658, %v4660
  %v4662 = vrot.slane %v4640, %v4661
  %v4664 = vunpack.c.l.s4 1983009808
  %v4665 = vunpack.c.0.s8 %v4664
  %v4666 = vlaneseq
  %v4667 = vshrl.u32 %v4666, 7
  %v4668 = vsub.s32 %v4665, %v4667
  %v4669 = vrot.slane %v4641, %v4668
  %v4670 = vcombine.low %v4648, %v4662
  %v4671 = vcombine.high %v4648, %v4662
  %v4672 = vcombine.low %v4655, %v4669
  %v4673 = vcombine.high %v4655, %v4669
  %v4674 = vcombine.low %v4229, %v4230
  %v4675 = vcombine.high %v4229, %v4230
  %v4676 = vcombine.low %v4231, %v4232
  %v4677 = vcombine.high %v4231, %v4232
  %v4679 = vunpack.c.l.s4 1983009808
  %v4680 = vunpack.c.0.s8 %v4679
  %v4681 = vlaneseq
  %v4682 = vshrl.u32 %v4681, 7
  %v4683 = vsub.s32 %v4680, %v4682
  %v4684 = vrot.slane %v4674, %v4683
  %v4686 = vunpack.c.l.s4 1983009808
  %v4687 = vunpack.c.0.s8 %v4686
  %v4688 = vlaneseq
  %v4689 = vshrl.u32 %v4688, 7
  %v4690 = vsub.s32 %v4687, %v4689
  %v4691 = vrot.slane %v4675, %v4690
  %v4693 = vunpack.c.l.s4 1983009808
  %v4694 = vunpack.c.0.s8 %v4693
  %v4695 = vlaneseq
  %v4696 = vshrl.u32 %v4695, 7
  %v4697 = vsub.s32 %v4694, %v4696
  %v4698 = vrot.slane %v4676, %v4697
  %v4700 = vunpack.c.l.s4 1983009808
  %v4701 = vunpack.c.0.s8 %v4700
  %v4702 = vlaneseq
  %v4703 = vshrl.u32 %v4702, 7
  %v4704 = vsub.s32 %v4701, %v4703
  %v4705 = vrot.slane %v4677, %v4704
  %v4706 = vcombine.low %v4684, %v4698
  %v4707 = vcombine.high %v4684, %v4698
  %v4708 = vcombine.low %v4691, %v4705
  %v4709 = vcombine.low %v4233, %v4234
  %v4710 = vcombine.high %v4233, %v4234
  %v4711 = vcombine.low %v4235, %v4236
  %v4712 = vcombine.high %v4235, %v4236
  %v4714 = vunpack.c.l.s4 1983009808
  %v4715 = vunpack.c.0.s8 %v4714
  %v4716 = vlaneseq
  %v4717 = vshrl.u32 %v4716, 7
  %v4718 = vsub.s32 %v4715, %v4717
  %v4719 = vrot.slane %v4709, %v4718
  %v4721 = vunpack.c.l.s4 1983009808
  %v4722 = vunpack.c.0.s8 %v4721
  %v4723 = vlaneseq
  %v4724 = vshrl.u32 %v4723, 7
  %v4725 = vsub.s32 %v4722, %v4724
  %v4726 = vrot.slane %v4710, %v4725
  %v4728 = vunpack.c.l.s4 1983009808
  %v4729 = vunpack.c.0.s8 %v4728
  %v4730 = vlaneseq
  %v4731 = vshrl.u32 %v4730, 7
  %v4732 = vsub.s32 %v4729, %v4731
  %v4733 = vrot.slane %v4711, %v4732
  %v4735 = vunpack.c.l.s4 1983009808
  %v4736 = vunpack.c.0.s8 %v4735
  %v4737 = vlaneseq
  %v4738 = vshrl.u32 %v4737, 7
  %v4739 = vsub.s32 %v4736, %v4738
  %v4740 = vrot.slane %v4712, %v4739
  %v4741 = vcombine.low %v4719, %v4733
  %v4742 = vcombine.high %v4719, %v4733
  %v4743 = vcombine.low %v4726, %v4740
  %v4744 = vcombine.high %v4726, %v4740
  %v4745 = vcombine.low %v4237, %v4238
  %v4746 = vcombine.high %v4237, %v4238
  %v4747 = vcombine.low %v4239, %v4240
  %v4748 = vcombine.high %v4239, %v4240
  %v4750 = vunpack.c.l.s4 1983009808
  %v4751 = vunpack.c.0.s8 %v4750
  %v4752 = vlaneseq
  %v4753 = vshrl.u32 %v4752, 7
  %v4754 = vsub.s32 %v4751, %v4753
  %v4755 = vrot.slane %v4745, %v4754
  %v4757 = vunpack.c.l.s4 1983009808
  %v4758 = vunpack.c.0.s8 %v4757
  %v4759 = vlaneseq
  %v4760 = vshrl.u32 %v4759, 7
  %v4761 = vsub.s32 %v4758, %v4760
  %v4762 = vrot.slane %v4746, %v4761
  %v4764 = vunpack.c.l.s4 1983009808
  %v4765 = vunpack.c.0.s8 %v4764
  %v4766 = vlaneseq
  %v4767 = vshrl.u32 %v4766, 7
  %v4768 = vsub.s32 %v4765, %v4767
  %v4769 = vrot.slane %v4747, %v4768
  %v4771 = vunpack.c.l.s4 1983009808
  %v4772 = vunpack.c.0.s8 %v4771
  %v4773 = vlaneseq
  %v4774 = vshrl.u32 %v4773, 7
  %v4775 = vsub.s32 %v4772, %v4774
  %v4776 = vrot.slane %v4748, %v4775
  %v4777 = vcombine.low %v4755, %v4769
  %v4778 = vcombine.high %v4755, %v4769
  %v4779 = vcombine.low %v4762, %v4776
  %v4780 = vcombine.low %v4241, %v4242
  %v4781 = vcombine.high %v4241, %v4242
  %v4782 = vcombine.low %v4243, %v4244
  %v4783 = vcombine.high %v4243, %v4244
  %v4785 = vunpack.c.l.s4 1983009808
  %v4786 = vunpack.c.0.s8 %v4785
  %v4787 = vlaneseq
  %v4788 = vshrl.u32 %v4787, 7
  %v4789 = vsub.s32 %v4786, %v4788
  %v4790 = vrot.slane %v4780, %v4789
  %v4792 = vunpack.c.l.s4 1983009808
  %v4793 = vunpack.c.0.s8 %v4792
  %v4794 = vlaneseq
  %v4795 = vshrl.u32 %v4794, 7
  %v4796 = vsub.s32 %v4793, %v4795
  %v4797 = vrot.slane %v4781, %v4796
  %v4799 = vunpack.c.l.s4 1983009808
  %v4800 = vunpack.c.0.s8 %v4799
  %v4801 = vlaneseq
  %v4802 = vshrl.u32 %v4801, 7
  %v4803 = vsub.s32 %v4800, %v4802
  %v4804 = vrot.slane %v4782, %v4803
  %v4806 = vunpack.c.l.s4 1983009808
  %v4807 = vunpack.c.0.s8 %v4806
  %v4808 = vlaneseq
  %v4809 = vshrl.u32 %v4808, 7
  %v4810 = vsub.s32 %v4807, %v4809
  %v4811 = vrot.slane %v4783, %v4810
  %v4812 = vcombine.low %v4790, %v4804
  %v4813 = vcombine.high %v4790, %v4804
  %v4814 = vcombine.low %v4797, %v4811
  %v4815 = vcombine.high %v4797, %v4811
  %v4816 = vcombine.low %v4245, %v4246
  %v4817 = vcombine.high %v4245, %v4246
  %v4818 = vcombine.low %v4247, %v4248
  %v4819 = vcombine.high %v4247, %v4248
  %v4821 = vunpack.c.l.s4 1983009808
  %v4822 = vunpack.c.0.s8 %v4821
  %v4823 = vlaneseq
  %v4824 = vshrl.u32 %v4823, 7
  %v4825 = vsub.s32 %v4822, %v4824
  %v4826 = vrot.slane %v4816, %v4825
  %v4828 = vunpack.c.l.s4 1983009808
  %v4829 = vunpack.c.0.s8 %v4828
  %v4830 = vlaneseq
  %v4831 = vshrl.u32 %v4830, 7
  %v4832 = vsub.s32 %v4829, %v4831
  %v4833 = vrot.slane %v4817, %v4832
  %v4835 = vunpack.c.l.s4 1983009808
  %v4836 = vunpack.c.0.s8 %v4835
  %v4837 = vlaneseq
  %v4838 = vshrl.u32 %v4837, 7
  %v4839 = vsub.s32 %v4836, %v4838
  %v4840 = vrot.slane %v4818, %v4839
  %v4842 = vunpack.c.l.s4 1983009808
  %v4843 = vunpack.c.0.s8 %v4842
  %v4844 = vlaneseq
  %v4845 = vshrl.u32 %v4844, 7
  %v4846 = vsub.s32 %v4843, %v4845
  %v4847 = vrot.slane %v4819, %v4846
  %v4848 = vcombine.low %v4826, %v4840
  %v4849 = vcombine.high %v4826, %v4840
  %v4850 = vcombine.low %v4833, %v4847
  %v4851 = vcombine.low %v4249, %v4250
  %v4852 = vcombine.high %v4249, %v4250
  %v4853 = vcombine.low %v4251, %v4252
  %v4854 = vcombine.high %v4251, %v4252
  %v4856 = vunpack.c.l.s4 1983009808
  %v4857 = vunpack.c.0.s8 %v4856
  %v4858 = vlaneseq
  %v4859 = vshrl.u32 %v4858, 7
  %v4860 = vsub.s32 %v4857, %v4859
  %v4861 = vrot.slane %v4851, %v4860
  %v4863 = vunpack.c.l.s4 1983009808
  %v4864 = vunpack.c.0.s8 %v4863
  %v4865 = vlaneseq
  %v4866 = vshrl.u32 %v4865, 7
  %v4867 = vsub.s32 %v4864, %v4866
  %v4868 = vrot.slane %v4852, %v4867
  %v4870 = vunpack.c.l.s4 1983009808
  %v4871 = vunpack.c.0.s8 %v4870
  %v4872 = vlaneseq
  %v4873 = vshrl.u32 %v4872, 7
  %v4874 = vsub.s32 %v4871, %v4873
  %v4875 = vrot.slane %v4853, %v4874
  %v4877 = vunpack.c.l.s4 1983009808
  %v4878 = vunpack.c.0.s8 %v4877
  %v4879 = vlaneseq
  %v4880 = vshrl.u32 %v4879, 7
  %v4881 = vsub.s32 %v4878, %v4880
  %v4882 = vrot.slane %v4854, %v4881
  %v4883 = vcombine.low %v4861, %v4875
  %v4884 = vcombine.high %v4861, %v4875
  %v4885 = vcombine.low %v4868, %v4882
  %v4886 = vcombine.high %v4868, %v4882
  %v4887 = vcombine.low %v4253, %v4254
  %v4888 = vcombine.high %v4253, %v4254
  %v4889 = vcombine.low %v4255, %v4256
  %v4890 = vcombine.high %v4255, %v4256
  %v4892 = vunpack.c.l.s4 1983009808
  %v4893 = vunpack.c.0.s8 %v4892
  %v4894 = vlaneseq
  %v4895 = vshrl.u32 %v4894, 7
  %v4896 = vsub.s32 %v4893, %v4895
  %v4897 = vrot.slane %v4887, %v4896
  %v4899 = vunpack.c.l.s4 1983009808
  %v4900 = vunpack.c.0.s8 %v4899
  %v4901 = vlaneseq
  %v4902 = vshrl.u32 %v4901, 7
  %v4903 = vsub.s32 %v4900, %v4902
  %v4904 = vrot.slane %v4888, %v4903
  %v4906 = vunpack.c.l.s4 1983009808
  %v4907 = vunpack.c.0.s8 %v4906
  %v4908 = vlaneseq
  %v4909 = vshrl.u32 %v4908, 7
  %v4910 = vsub.s32 %v4907, %v4909
  %v4911 = vrot.slane %v4889, %v4910
  %v4913 = vunpack.c.l.s4 1983009808
  %v4914 = vunpack.c.0.s8 %v4913
  %v4915 = vlaneseq
  %v4916 = vshrl.u32 %v4915, 7
  %v4917 = vsub.s32 %v4914, %v4916
  %v4918 = vrot.slane %v4890, %v4917
  %v4919 = vcombine.low %v4897, %v4911
  %v4920 = vcombine.high %v4897, %v4911
  %v4921 = vcombine.low %v4904, %v4918
  %v4922 = vcombine.low %v4257, %v4258
  %v4923 = vcombine.high %v4257, %v4258
  %v4924 = vcombine.low %v4259, %v4260
  %v4925 = vcombine.high %v4259, %v4260
  %v4927 = vunpack.c.l.s4 1983009808
  %v4928 = vunpack.c.0.s8 %v4927
  %v4929 = vlaneseq
  %v4930 = vshrl.u32 %v4929, 7
  %v4931 = vsub.s32 %v4928, %v4930
  %v4932 = vrot.slane %v4922, %v4931
  %v4934 = vunpack.c.l.s4 1983009808
  %v4935 = vunpack.c.0.s8 %v4934
  %v4936 = vlaneseq
  %v4937 = vshrl.u32 %v4936, 7
  %v4938 = vsub.s32 %v4935, %v4937
  %v4939 = vrot.slane %v4923, %v4938
  %v4941 = vunpack.c.l.s4 1983009808
  %v4942 = vunpack.c.0.s8 %v4941
  %v4943 = vlaneseq
  %v4944 = vshrl.u32 %v4943, 7
  %v4945 = vsub.s32 %v4942, %v4944
  %v4946 = vrot.slane %v4924, %v4945
  %v4948 = vunpack.c.l.s4 1983009808
  %v4949 = vunpack.c.0.s8 %v4948
  %v4950 = vlaneseq
  %v4951 = vshrl.u32 %v4950, 7
  %v4952 = vsub.s32 %v4949, %v4951
  %v4953 = vrot.slane %v4925, %v4952
  %v4954 = vcombine.low %v4932, %v4946
  %v4955 = vcombine.high %v4932, %v4946
  %v4956 = vcombine.low %v4939, %v4953
  %v4957 = vcombine.high %v4939, %v4953
  %v4958 = vcombine.low %v4261, %v4262
  %v4959 = vcombine.high %v4261, %v4262
  %v4960 = vcombine.low %v4263, %v4264
  %v4961 = vcombine.high %v4263, %v4264
  %v4963 = vunpack.c.l.s4 1983009808
  %v4964 = vunpack.c.0.s8 %v4963
  %v4965 = vlaneseq
  %v4966 = vshrl.u32 %v4965, 7
  %v4967 = vsub.s32 %v4964, %v4966
  %v4968 = vrot.slane %v4958, %v4967
  %v4970 = vunpack.c.l.s4 1983009808
  %v4971 = vunpack.c.0.s8 %v4970
  %v4972 = vlaneseq
  %v4973 = vshrl.u32 %v4972, 7
  %v4974 = vsub.s32 %v4971, %v4973
  %v4975 = vrot.slane %v4959, %v4974
  %v4977 = vunpack.c.l.s4 1983009808
  %v4978 = vunpack.c.0.s8 %v4977
  %v4979 = vlaneseq
  %v4980 = vshrl.u32 %v4979, 7
  %v4981 = vsub.s32 %v4978, %v4980
  %v4982 = vrot.slane %v4960, %v4981
  %v4984 = vunpack.c.l.s4 1983009808
  %v4985 = vunpack.c.0.s8 %v4984
  %v4986 = vlaneseq
  %v4987 = vshrl.u32 %v4986, 7
  %v4988 = vsub.s32 %v4985, %v4987
  %v4989 = vrot.slane %v4961, %v4988
  %v4990 = vcombine.low %v4968, %v4982
  %v4991 = vcombine.high %v4968, %v4982
  %v4992 = vcombine.low %v4975, %v4989
  %v4993 = vcombine.low %v4265, %v4266
  %v4994 = vcombine.high %v4265, %v4266
  %v4995 = vcombine.low %v4267, %v4268
  %v4996 = vcombine.high %v4267, %v4268
  %v4998 = vunpack.c.l.s4 1983009808
  %v4999 = vunpack.c.0.s8 %v4998
  %v5000 = vlaneseq
  %v5001 = vshrl.u32 %v5000, 7
  %v5002 = vsub.s32 %v4999, %v5001
  %v5003 = vrot.slane %v4993, %v5002
  %v5005 = vunpack.c.l.s4 1983009808
  %v5006 = vunpack.c.0.s8 %v5005
  %v5007 = vlaneseq
  %v5008 = vshrl.u32 %v5007, 7
  %v5009 = vsub.s32 %v5006, %v5008
  %v5010 = vrot.slane %v4994, %v5009
  %v5012 = vunpack.c.l.s4 1983009808
  %v5013 = vunpack.c.0.s8 %v5012
  %v5014 = vlaneseq
  %v5015 = vshrl.u32 %v5014, 7
  %v5016 = vsub.s32 %v5013, %v5015
  %v5017 = vrot.slane %v4995, %v5016
  %v5019 = vunpack.c.l.s4 1983009808
  %v5020 = vunpack.c.0.s8 %v5019
  %v5021 = vlaneseq
  %v5022 = vshrl.u32 %v5021, 7
  %v5023 = vsub.s32 %v5020, %v5022
  %v5024 = vrot.slane %v4996, %v5023
  %v5025 = vcombine.low %v5003, %v5017
  %v5026 = vcombine.high %v5003, %v5017
  %v5027 = vcombine.low %v5010, %v5024
  %v5028 = vcombine.high %v5010, %v5024
  %v5029 = vcombine.low %v4269, %v4270
  %v5030 = vcombine.high %v4269, %v4270
  %v5031 = vcombine.low %v4271, %v4272
  %v5032 = vcombine.high %v4271, %v4272
  %v5034 = vunpack.c.l.s4 1983009808
  %v5035 = vunpack.c.0.s8 %v5034
  %v5036 = vlaneseq
  %v5037 = vshrl.u32 %v5036, 7
  %v5038 = vsub.s32 %v5035, %v5037
  %v5039 = vrot.slane %v5029, %v5038
  %v5041 = vunpack.c.l.s4 1983009808
  %v5042 = vunpack.c.0.s8 %v5041
  %v5043 = vlaneseq
  %v5044 = vshrl.u32 %v5043, 7
  %v5045 = vsub.s32 %v5042, %v5044
  %v5046 = vrot.slane %v5030, %v5045
  %v5048 = vunpack.c.l.s4 1983009808
  %v5049 = vunpack.c.0.s8 %v5048
  %v5050 = vlaneseq
  %v5051 = vshrl.u32 %v5050, 7
  %v5052 = vsub.s32 %v5049, %v5051
  %v5053 = vrot.slane %v5031, %v5052
  %v5055 = vunpack.c.l.s4 1983009808
  %v5056 = vunpack.c.0.s8 %v5055
  %v5057 = vlaneseq
  %v5058 = vshrl.u32 %v5057, 7
  %v5059 = vsub.s32 %v5056, %v5058
  %v5060 = vrot.slane %v5032, %v5059
  %v5061 = vcombine.low %v5039, %v5053
  %v5062 = vcombine.high %v5039, %v5053
  %v5063 = vcombine.low %v5046, %v5060
  %v5064 = vcombine.low %v4273, %v4274
  %v5065 = vcombine.high %v4273, %v4274
  %v5066 = vcombine.low %v4275, %v4276
  %v5067 = vcombine.high %v4275, %v4276
  %v5069 = vunpack.c.l.s4 1983009808
  %v5070 = vunpack.c.0.s8 %v5069
  %v5071 = vlaneseq
  %v5072 = vshrl.u32 %v5071, 7
  %v5073 = vsub.s32 %v5070, %v5072
  %v5074 = vrot.slane %v5064, %v5073
  %v5076 = vunpack.c.l.s4 1983009808
  %v5077 = vunpack.c.0.s8 %v5076
  %v5078 = vlaneseq
  %v5079 = vshrl.u32 %v5078, 7
  %v5080 = vsub.s32 %v5077, %v5079
  %v5081 = vrot.slane %v5065, %v5080
  %v5083 = vunpack.c.l.s4 1983009808
  %v5084 = vunpack.c.0.s8 %v5083
  %v5085 = vlaneseq
  %v5086 = vshrl.u32 %v5085, 7
  %v5087 = vsub.s32 %v5084, %v5086
  %v5088 = vrot.slane %v5066, %v5087
  %v5090 = vunpack.c.l.s4 1983009808
  %v5091 = vunpack.c.0.s8 %v5090
  %v5092 = vlaneseq
  %v5093 = vshrl.u32 %v5092, 7
  %v5094 = vsub.s32 %v5091, %v5093
  %v5095 = vrot.slane %v5067, %v5094
  %v5096 = vcombine.low %v5074, %v5088
  %v5097 = vcombine.high %v5074, %v5088
  %v5098 = vcombine.low %v5081, %v5095
  %v5099 = vcombine.high %v5081, %v5095
  %v5100 = vcombine.low %v4277, %v4278
  %v5101 = vcombine.high %v4277, %v4278
  %v5102 = vcombine.low %v4279, %v4280
  %v5103 = vcombine.high %v4279, %v4280
  %v5105 = vunpack.c.l.s4 1983009808
  %v5106 = vunpack.c.0.s8 %v5105
  %v5107 = vlaneseq
  %v5108 = vshrl.u32 %v5107, 7
  %v5109 = vsub.s32 %v5106, %v5108
  %v5110 = vrot.slane %v5100, %v5109
  %v5112 = vunpack.c.l.s4 1983009808
  %v5113 = vunpack.c.0.s8 %v5112
  %v5114 = vlaneseq
  %v5115 = vshrl.u32 %v5114, 7
  %v5116 = vsub.s32 %v5113, %v5115
  %v5117 = vrot.slane %v5101, %v5116
  %v5119 = vunpack.c.l.s4 1983009808
  %v5120 = vunpack.c.0.s8 %v5119
  %v5121 = vlaneseq
  %v5122 = vshrl.u32 %v5121, 7
  %v5123 = vsub.s32 %v5120, %v5122
  %v5124 = vrot.slane %v5102, %v5123
  %v5126 = vunpack.c.l.s4 1983009808
  %v5127 = vunpack.c.0.s8 %v5126
  %v5128 = vlaneseq
  %v5129 = vshrl.u32 %v5128, 7
  %v5130 = vsub.s32 %v5127, %v5129
  %v5131 = vrot.slane %v5103, %v5130
  %v5132 = vcombine.low %v5110, %v5124
  %v5133 = vcombine.high %v5110, %v5124
  %v5134 = vcombine.low %v5117, %v5131
  %v5135 = vcombine.low %v4281, %v4282
  %v5136 = vcombine.high %v4281, %v4282
  %v5137 = vcombine.low %v4283, %v4284
  %v5138 = vcombine.high %v4283, %v4284
  %v5140 = vunpack.c.l.s4 1983009808
  %v5141 = vunpack.c.0.s8 %v5140
  %v5142 = vlaneseq
  %v5143 = vshrl.u32 %v5142, 7
  %v5144 = vsub.s32 %v5141, %v5143
  %v5145 = vrot.slane %v5135, %v5144
  %v5147 = vunpack.c.l.s4 1983009808
  %v5148 = vunpack.c.0.s8 %v5147
  %v5149 = vlaneseq
  %v5150 = vshrl.u32 %v5149, 7
  %v5151 = vsub.s32 %v5148, %v5150
  %v5152 = vrot.slane %v5136, %v5151
  %v5154 = vunpack.c.l.s4 1983009808
  %v5155 = vunpack.c.0.s8 %v5154
  %v5156 = vlaneseq
  %v5157 = vshrl.u32 %v5156, 7
  %v5158 = vsub.s32 %v5155, %v5157
  %v5159 = vrot.slane %v5137, %v5158
  %v5161 = vunpack.c.l.s4 1983009808
  %v5162 = vunpack.c.0.s8 %v5161
  %v5163 = vlaneseq
  %v5164 = vshrl.u32 %v5163, 7
  %v5165 = vsub.s32 %v5162, %v5164
  %v5166 = vrot.slane %v5138, %v5165
  %v5167 = vcombine.low %v5145, %v5159
  %v5168 = vcombine.high %v5145, %v5159
  %v5169 = vcombine.low %v5152, %v5166
  %v5170 = vcombine.high %v5152, %v5166
  %v5171 = vcombine.low %v4285, %v4286
  %v5172 = vcombine.high %v4285, %v4286
  %v5173 = vcombine.low %v4287, %v4288
  %v5174 = vcombine.high %v4287, %v4288
  %v5176 = vunpack.c.l.s4 1983009808
  %v5177 = vunpack.c.0.s8 %v5176
  %v5178 = vlaneseq
  %v5179 = vshrl.u32 %v5178, 7
  %v5180 = vsub.s32 %v5177, %v5179
  %v5181 = vrot.slane %v5171, %v5180
  %v5183 = vunpack.c.l.s4 1983009808
  %v5184 = vunpack.c.0.s8 %v5183
  %v5185 = vlaneseq
  %v5186 = vshrl.u32 %v5185, 7
  %v5187 = vsub.s32 %v5184, %v5186
  %v5188 = vrot.slane %v5172, %v5187
  %v5190 = vunpack.c.l.s4 1983009808
  %v5191 = vunpack.c.0.s8 %v5190
  %v5192 = vlaneseq
  %v5193 = vshrl.u32 %v5192, 7
  %v5194 = vsub.s32 %v5191, %v5193
  %v5195 = vrot.slane %v5173, %v5194
  %v5197 = vunpack.c.l.s4 1983009808
  %v5198 = vunpack.c.0.s8 %v5197
  %v5199 = vlaneseq
  %v5200 = vshrl.u32 %v5199, 7
  %v5201 = vsub.s32 %v5198, %v5200
  %v5202 = vrot.slane %v5174, %v5201
  %v5203 = vcombine.low %v5181, %v5195
  %v5204 = vcombine.high %v5181, %v5195
  %v5205 = vcombine.low %v5188, %v5202
  %v5206 = vcombine.low %v4289, %v4290
  %v5207 = vcombine.high %v4289, %v4290
  %v5208 = vcombine.low %v4291, %v4292
  %v5209 = vcombine.high %v4291, %v4292
  %v5211 = vunpack.c.l.s4 1983009808
  %v5212 = vunpack.c.0.s8 %v5211
  %v5213 = vlaneseq
  %v5214 = vshrl.u32 %v5213, 7
  %v5215 = vsub.s32 %v5212, %v5214
  %v5216 = vrot.slane %v5206, %v5215
  %v5218 = vunpack.c.l.s4 1983009808
  %v5219 = vunpack.c.0.s8 %v5218
  %v5220 = vlaneseq
  %v5221 = vshrl.u32 %v5220, 7
  %v5222 = vsub.s32 %v5219, %v5221
  %v5223 = vrot.slane %v5207, %v5222
  %v5225 = vunpack.c.l.s4 1983009808
  %v5226 = vunpack.c.0.s8 %v5225
  %v5227 = vlaneseq
  %v5228 = vshrl.u32 %v5227, 7
  %v5229 = vsub.s32 %v5226, %v5228
  %v5230 = vrot.slane %v5208, %v5229
  %v5232 = vunpack.c.l.s4 1983009808
  %v5233 = vunpack.c.0.s8 %v5232
  %v5234 = vlaneseq
  %v5235 = vshrl.u32 %v5234, 7
  %v5236 = vsub.s32 %v5233, %v5235
  %v5237 = vrot.slane %v5209, %v5236
  %v5238 = vcombine.low %v5216, %v5230
  %v5239 = vcombine.high %v5216, %v5230
  %v5240 = vcombine.low %v5223, %v5237
  %v5241 = vcombine.high %v5223, %v5237
  %v5242 = vcombine.low %v4293, %v4294
  %v5243 = vcombine.high %v4293, %v4294
  %v5244 = vcombine.low %v4295, %v4296
  %v5245 = vcombine.high %v4295, %v4296
  %v5247 = vunpack.c.l.s4 1983009808
  %v5248 = vunpack.c.0.s8 %v5247
  %v5249 = vlaneseq
  %v5250 = vshrl.u32 %v5249, 7
  %v5251 = vsub.s32 %v5248, %v5250
  %v5252 = vrot.slane %v5242, %v5251
  %v5254 = vunpack.c.l.s4 1983009808
  %v5255 = vunpack.c.0.s8 %v5254
  %v5256 = vlaneseq
  %v5257 = vshrl.u32 %v5256, 7
  %v5258 = vsub.s32 %v5255, %v5257
  %v5259 = vrot.slane %v5243, %v5258
  %v5261 = vunpack.c.l.s4 1983009808
  %v5262 = vunpack.c.0.s8 %v5261
  %v5263 = vlaneseq
  %v5264 = vshrl.u32 %v5263, 7
  %v5265 = vsub.s32 %v5262, %v5264
  %v5266 = vrot.slane %v5244, %v5265
  %v5268 = vunpack.c.l.s4 1983009808
  %v5269 = vunpack.c.0.s8 %v5268
  %v5270 = vlaneseq
  %v5271 = vshrl.u32 %v5270, 7
  %v5272 = vsub.s32 %v5269, %v5271
  %v5273 = vrot.slane %v5245, %v5272
  %v5274 = vcombine.low %v5252, %v5266
  %v5275 = vcombine.high %v5252, %v5266
  %v5276 = vcombine.low %v5259, %v5273
  %v5277 = vcombine.low %v4297, %v4298
  %v5278 = vcombine.high %v4297, %v4298
  %v5279 = vcombine.low %v4299, %v4300
  %v5280 = vcombine.high %v4299, %v4300
  %v5282 = vunpack.c.l.s4 1983009808
  %v5283 = vunpack.c.0.s8 %v5282
  %v5284 = vlaneseq
  %v5285 = vshrl.u32 %v5284, 7
  %v5286 = vsub.s32 %v5283, %v5285
  %v5287 = vrot.slane %v5277, %v5286
  %v5289 = vunpack.c.l.s4 1983009808
  %v5290 = vunpack.c.0.s8 %v5289
  %v5291 = vlaneseq
  %v5292 = vshrl.u32 %v5291, 7
  %v5293 = vsub.s32 %v5290, %v5292
  %v5294 = vrot.slane %v5278, %v5293
  %v5296 = vunpack.c.l.s4 1983009808
  %v5297 = vunpack.c.0.s8 %v5296
  %v5298 = vlaneseq
  %v5299 = vshrl.u32 %v5298, 7
  %v5300 = vsub.s32 %v5297, %v5299
  %v5301 = vrot.slane %v5279, %v5300
  %v5303 = vunpack.c.l.s4 1983009808
  %v5304 = vunpack.c.0.s8 %v5303
  %v5305 = vlaneseq
  %v5306 = vshrl.u32 %v5305, 7
  %v5307 = vsub.s32 %v5304, %v5306
  %v5308 = vrot.slane %v5280, %v5307
  %v5309 = vcombine.low %v5287, %v5301
  %v5310 = vcombine.high %v5287, %v5301
  %v5311 = vcombine.low %v5294, %v5308
  %v5312 = vcombine.high %v5294, %v5308
  %v5313 = vcombine.low %v4301, %v4302
  %v5314 = vcombine.high %v4301, %v4302
  %v5315 = vcombine.low %v4303, %v4304
  %v5316 = vcombine.high %v4303, %v4304
  %v5318 = vunpack.c.l.s4 1983009808
  %v5319 = vunpack.c.0.s8 %v5318
  %v5320 = vlaneseq
  %v5321 = vshrl.u32 %v5320, 7
  %v5322 = vsub.s32 %v5319, %v5321
  %v5323 = vrot.slane %v5313, %v5322
  %v5325 = vunpack.c.l.s4 1983009808
  %v5326 = vunpack.c.0.s8 %v5325
  %v5327 = vlaneseq
  %v5328 = vshrl.u32 %v5327, 7
  %v5329 = vsub.s32 %v5326, %v5328
  %v5330 = vrot.slane %v5314, %v5329
  %v5332 = vunpack.c.l.s4 1983009808
  %v5333 = vunpack.c.0.s8 %v5332
  %v5334 = vlaneseq
  %v5335 = vshrl.u32 %v5334, 7
  %v5336 = vsub.s32 %v5333, %v5335
  %v5337 = vrot.slane %v5315, %v5336
  %v5339 = vunpack.c.l.s4 1983009808
  %v5340 = vunpack.c.0.s8 %v5339
  %v5341 = vlaneseq
  %v5342 = vshrl.u32 %v5341, 7
  %v5343 = vsub.s32 %v5340, %v5342
  %v5344 = vrot.slane %v5316, %v5343
  %v5345 = vcombine.low %v5323, %v5337
  %v5346 = vcombine.high %v5323, %v5337
  %v5347 = vcombine.low %v5330, %v5344
  %v5348 = vcombine.low %v4305, %v4306
  %v5349 = vcombine.high %v4305, %v4306
  %v5350 = vcombine.low %v4307, %v4308
  %v5351 = vcombine.high %v4307, %v4308
  %v5353 = vunpack.c.l.s4 1983009808
  %v5354 = vunpack.c.0.s8 %v5353
  %v5355 = vlaneseq
  %v5356 = vshrl.u32 %v5355, 7
  %v5357 = vsub.s32 %v5354, %v5356
  %v5358 = vrot.slane %v5348, %v5357
  %v5360 = vunpack.c.l.s4 1983009808
  %v5361 = vunpack.c.0.s8 %v5360
  %v5362 = vlaneseq
  %v5363 = vshrl.u32 %v5362, 7
  %v5364 = vsub.s32 %v5361, %v5363
  %v5365 = vrot.slane %v5349, %v5364
  %v5367 = vunpack.c.l.s4 1983009808
  %v5368 = vunpack.c.0.s8 %v5367
  %v5369 = vlaneseq
  %v5370 = vshrl.u32 %v5369, 7
  %v5371 = vsub.s32 %v5368, %v5370
  %v5372 = vrot.slane %v5350, %v5371
  %v5374 = vunpack.c.l.s4 1983009808
  %v5375 = vunpack.c.0.s8 %v5374
  %v5376 = vlaneseq
  %v5377 = vshrl.u32 %v5376, 7
  %v5378 = vsub.s32 %v5375, %v5377
  %v5379 = vrot.slane %v5351, %v5378
  %v5380 = vcombine.low %v5358, %v5372
  %v5381 = vcombine.high %v5358, %v5372
  %v5382 = vcombine.low %v5365, %v5379
  %v5383 = vcombine.high %v5365, %v5379
  %v5384 = vcombine.low %v4309, %v4310
  %v5385 = vcombine.high %v4309, %v4310
  %v5386 = vcombine.low %v4311, %v4312
  %v5387 = vcombine.high %v4311, %v4312
  %v5389 = vunpack.c.l.s4 1983009808
  %v5390 = vunpack.c.0.s8 %v5389
  %v5391 = vlaneseq
  %v5392 = vshrl.u32 %v5391, 7
  %v5393 = vsub.s32 %v5390, %v5392
  %v5394 = vrot.slane %v5384, %v5393
  %v5396 = vunpack.c.l.s4 1983009808
  %v5397 = vunpack.c.0.s8 %v5396
  %v5398 = vlaneseq
  %v5399 = vshrl.u32 %v5398, 7
  %v5400 = vsub.s32 %v5397, %v5399
  %v5401 = vrot.slane %v5385, %v5400
  %v5403 = vunpack.c.l.s4 1983009808
  %v5404 = vunpack.c.0.s8 %v5403
  %v5405 = vlaneseq
  %v5406 = vshrl.u32 %v5405, 7
  %v5407 = vsub.s32 %v5404, %v5406
  %v5408 = vrot.slane %v5386, %v5407
  %v5410 = vunpack.c.l.s4 1983009808
  %v5411 = vunpack.c.0.s8 %v5410
  %v5412 = vlaneseq
  %v5413 = vshrl.u32 %v5412, 7
  %v5414 = vsub.s32 %v5411, %v5413
  %v5415 = vrot.slane %v5387, %v5414
  %v5416 = vcombine.low %v5394, %v5408
  %v5417 = vcombine.high %v5394, %v5408
  %v5418 = vcombine.low %v5401, %v5415
  %v5419 = vld [vmem:[%s2] sm:$0xff]
  %v5420 = vld [vmem:[%s2 + $0x8] sm:$0xff]
  %v5421 = vld [vmem:[%s2 + $0x10] sm:$0xff]
  %v5422 = vld [vmem:[%s2 + $0x18] sm:$0xff]
  %v5423 = vld [vmem:[%s2 + $0x20] sm:$0xff]
  %v5424 = vld [vmem:[%s2 + $0x28] sm:$0xff]
  %v5425 = vld [vmem:[%s2 + $0x30] sm:$0xff]
  %v5426 = vld [vmem:[%s2 + $0x38] sm:$0xff]
  %v5427 = vld [vmem:[%s2 + $0x40] sm:$0xff]
  %v5428 = vld [vmem:[%s2 + $0x48] sm:$0xff]
  %v5429 = vld [vmem:[%s2 + $0x50] sm:$0xff]
  %v5430 = vld [vmem:[%s2 + $0x58] sm:$0xff]
  %v5431 = vld [vmem:[%s2 + $0x60] sm:$0xff]
  %v5432 = vld [vmem:[%s2 + $0x68] sm:$0xff]
  %v5433 = vld [vmem:[%s2 + $0x70] sm:$0xff]
  %v5434 = vld [vmem:[%s2 + $0x78] sm:$0xff]
  %v5435 = vld [vmem:[%s2 + $0x80] sm:$0xff]
  %v5436 = vld [vmem:[%s2 + $0x88] sm:$0xff]
  %v5437 = vld [vmem:[%s2 + $0x90] sm:$0xff]
  %v5438 = vld [vmem:[%s2 + $0x98] sm:$0xff]
  %v5439 = vld [vmem:[%s2 + $0xa0] sm:$0xff]
  %v5440 = vld [vmem:[%s2 + $0xa8] sm:$0xff]
  %v5441 = vld [vmem:[%s2 + $0xb0] sm:$0xff]
  %v5442 = vld [vmem:[%s2 + $0xb8] sm:$0xff]
  %v5443 = vld [vmem:[%s2 + $0xc0] sm:$0xff]
  %v5444 = vld [vmem:[%s2 + $0xc8] sm:$0xff]
  %v5445 = vld [vmem:[%s2 + $0xd0] sm:$0xff]
  %v5446 = vld [vmem:[%s2 + $0xd8] sm:$0xff]
  %v5447 = vld [vmem:[%s2 + $0xe0] sm:$0xff]
  %v5448 = vld [vmem:[%s2 + $0xe8] sm:$0xff]
  %v5449 = vld [vmem:[%s2 + $0xf0] sm:$0xff]
  %v5450 = vld [vmem:[%s2 + $0xf8] sm:$0xff]
  %v5451 = vld [vmem:[%s2 + $0x100] sm:$0xff]
  %v5452 = vld [vmem:[%s2 + $0x108] sm:$0xff]
  %v5453 = vld [vmem:[%s2 + $0x110] sm:$0xff]
  %v5454 = vld [vmem:[%s2 + $0x118] sm:$0xff]
  %v5455 = vld [vmem:[%s2 + $0x120] sm:$0xff]
  %v5456 = vld [vmem:[%s2 + $0x128] sm:$0xff]
  %v5457 = vld [vmem:[%s2 + $0x130] sm:$0xff]
  %v5458 = vld [vmem:[%s2 + $0x138] sm:$0xff]
  %v5459 = vld [vmem:[%s2 + $0x140] sm:$0xff]
  %v5460 = vld [vmem:[%s2 + $0x148] sm:$0xff]
  %v5461 = vld [vmem:[%s2 + $0x150] sm:$0xff]
  %v5462 = vld [vmem:[%s2 + $0x158] sm:$0xff]
  %v5463 = vld [vmem:[%s2 + $0x160] sm:$0xff]
  %v5464 = vld [vmem:[%s2 + $0x168] sm:$0xff]
  %v5465 = vld [vmem:[%s2 + $0x170] sm:$0xff]
  %v5466 = vld [vmem:[%s2 + $0x178] sm:$0xff]
  %v5467 = vld [vmem:[%s2 + $0x180] sm:$0xff]
  %v5468 = vld [vmem:[%s2 + $0x188] sm:$0xff]
  %v5469 = vcombine.low %v4457, %v4458
  %v5470 = vcombine.high %v4457, %v4458
  %v5471 = vcombine.low %v4459, %v4460
  %v5472 = vcombine.high %v4459, %v4460
  %v5474 = vunpack.c.l.s4 1983009808
  %v5475 = vunpack.c.0.s8 %v5474
  %v5476 = vlaneseq
  %v5477 = vshrl.u32 %v5476, 7
  %v5478 = vsub.s32 %v5475, %v5477
  %v5479 = vrot.slane %v5469, %v5478
  %v5481 = vunpack.c.l.s4 1983009808
  %v5482 = vunpack.c.0.s8 %v5481
  %v5483 = vlaneseq
  %v5484 = vshrl.u32 %v5483, 7
  %v5485 = vsub.s32 %v5482, %v5484
  %v5486 = vrot.slane %v5470, %v5485
  %v5488 = vunpack.c.l.s4 1983009808
  %v5489 = vunpack.c.0.s8 %v5488
  %v5490 = vlaneseq
  %v5491 = vshrl.u32 %v5490, 7
  %v5492 = vsub.s32 %v5489, %v5491
  %v5493 = vrot.slane %v5471, %v5492
  %v5495 = vunpack.c.l.s4 1983009808
  %v5496 = vunpack.c.0.s8 %v5495
  %v5497 = vlaneseq
  %v5498 = vshrl.u32 %v5497, 7
  %v5499 = vsub.s32 %v5496, %v5498
  %v5500 = vrot.slane %v5472, %v5499
  %v5501 = vcombine.low %v5479, %v5493
  %v5502 = vcombine.high %v5479, %v5493
  %v5503 = vcombine.low %v5486, %v5500
  %v5504 = vcombine.high %v5486, %v5500
  %v5505 = vcombine.low %v4493, %v4494
  %v5506 = vcombine.high %v4493, %v4494
  %v5507 = vcombine.low %v4495, %v4528
  %v5508 = vcombine.high %v4495, %v4528
  %v5510 = vunpack.c.l.s4 1983009808
  %v5511 = vunpack.c.0.s8 %v5510
  %v5512 = vlaneseq
  %v5513 = vshrl.u32 %v5512, 7
  %v5514 = vsub.s32 %v5511, %v5513
  %v5515 = vrot.slane %v5505, %v5514
  %v5517 = vunpack.c.l.s4 1983009808
  %v5518 = vunpack.c.0.s8 %v5517
  %v5519 = vlaneseq
  %v5520 = vshrl.u32 %v5519, 7
  %v5521 = vsub.s32 %v5518, %v5520
  %v5522 = vrot.slane %v5506, %v5521
  %v5524 = vunpack.c.l.s4 1983009808
  %v5525 = vunpack.c.0.s8 %v5524
  %v5526 = vlaneseq
  %v5527 = vshrl.u32 %v5526, 7
  %v5528 = vsub.s32 %v5525, %v5527
  %v5529 = vrot.slane %v5507, %v5528
  %v5531 = vunpack.c.l.s4 1983009808
  %v5532 = vunpack.c.0.s8 %v5531
  %v5533 = vlaneseq
  %v5534 = vshrl.u32 %v5533, 7
  %v5535 = vsub.s32 %v5532, %v5534
  %v5536 = vrot.slane %v5508, %v5535
  %v5537 = vcombine.low %v5515, %v5529
  %v5538 = vcombine.high %v5515, %v5529
  %v5539 = vcombine.low %v5522, %v5536
  %v5540 = vcombine.high %v5522, %v5536
  %v5541 = vcombine.low %v4529, %v4530
  %v5542 = vcombine.high %v4529, %v4530
  %v5543 = vcombine.low %v4531, %v4564
  %v5544 = vcombine.high %v4531, %v4564
  %v5546 = vunpack.c.l.s4 1983009808
  %v5547 = vunpack.c.0.s8 %v5546
  %v5548 = vlaneseq
  %v5549 = vshrl.u32 %v5548, 7
  %v5550 = vsub.s32 %v5547, %v5549
  %v5551 = vrot.slane %v5541, %v5550
  %v5553 = vunpack.c.l.s4 1983009808
  %v5554 = vunpack.c.0.s8 %v5553
  %v5555 = vlaneseq
  %v5556 = vshrl.u32 %v5555, 7
  %v5557 = vsub.s32 %v5554, %v5556
  %v5558 = vrot.slane %v5542, %v5557
  %v5560 = vunpack.c.l.s4 1983009808
  %v5561 = vunpack.c.0.s8 %v5560
  %v5562 = vlaneseq
  %v5563 = vshrl.u32 %v5562, 7
  %v5564 = vsub.s32 %v5561, %v5563
  %v5565 = vrot.slane %v5543, %v5564
  %v5567 = vunpack.c.l.s4 1983009808
  %v5568 = vunpack.c.0.s8 %v5567
  %v5569 = vlaneseq
  %v5570 = vshrl.u32 %v5569, 7
  %v5571 = vsub.s32 %v5568, %v5570
  %v5572 = vrot.slane %v5544, %v5571
  %v5573 = vcombine.low %v5551, %v5565
  %v5574 = vcombine.high %v5551, %v5565
  %v5575 = vcombine.low %v5558, %v5572
  %v5576 = vcombine.high %v5558, %v5572
  %v5577 = vcombine.low %v4565, %v4566
  %v5578 = vcombine.high %v4565, %v4566
  %v5579 = vcombine.low %v4599, %v4600
  %v5580 = vcombine.high %v4599, %v4600
  %v5582 = vunpack.c.l.s4 1983009808
  %v5583 = vunpack.c.0.s8 %v5582
  %v5584 = vlaneseq
  %v5585 = vshrl.u32 %v5584, 7
  %v5586 = vsub.s32 %v5583, %v5585
  %v5587 = vrot.slane %v5577, %v5586
  %v5589 = vunpack.c.l.s4 1983009808
  %v5590 = vunpack.c.0.s8 %v5589
  %v5591 = vlaneseq
  %v5592 = vshrl.u32 %v5591, 7
  %v5593 = vsub.s32 %v5590, %v5592
  %v5594 = vrot.slane %v5578, %v5593
  %v5596 = vunpack.c.l.s4 1983009808
  %v5597 = vunpack.c.0.s8 %v5596
  %v5598 = vlaneseq
  %v5599 = vshrl.u32 %v5598, 7
  %v5600 = vsub.s32 %v5597, %v5599
  %v5601 = vrot.slane %v5579, %v5600
  %v5603 = vunpack.c.l.s4 1983009808
  %v5604 = vunpack.c.0.s8 %v5603
  %v5605 = vlaneseq
  %v5606 = vshrl.u32 %v5605, 7
  %v5607 = vsub.s32 %v5604, %v5606
  %v5608 = vrot.slane %v5580, %v5607
  %v5609 = vcombine.low %v5587, %v5601
  %v5610 = vcombine.high %v5587, %v5601
  %v5611 = vcombine.low %v5594, %v5608
  %v5612 = vcombine.high %v5594, %v5608
  %v5613 = vcombine.low %v4601, %v4602
  %v5614 = vcombine.high %v4601, %v4602
  %v5615 = vcombine.low %v4635, %v4636
  %v5616 = vcombine.high %v4635, %v4636
  %v5618 = vunpack.c.l.s4 1983009808
  %v5619 = vunpack.c.0.s8 %v5618
  %v5620 = vlaneseq
  %v5621 = vshrl.u32 %v5620, 7
  %v5622 = vsub.s32 %v5619, %v5621
  %v5623 = vrot.slane %v5613, %v5622
  %v5625 = vunpack.c.l.s4 1983009808
  %v5626 = vunpack.c.0.s8 %v5625
  %v5627 = vlaneseq
  %v5628 = vshrl.u32 %v5627, 7
  %v5629 = vsub.s32 %v5626, %v5628
  %v5630 = vrot.slane %v5614, %v5629
  %v5632 = vunpack.c.l.s4 1983009808
  %v5633 = vunpack.c.0.s8 %v5632
  %v5634 = vlaneseq
  %v5635 = vshrl.u32 %v5634, 7
  %v5636 = vsub.s32 %v5633, %v5635
  %v5637 = vrot.slane %v5615, %v5636
  %v5639 = vunpack.c.l.s4 1983009808
  %v5640 = vunpack.c.0.s8 %v5639
  %v5641 = vlaneseq
  %v5642 = vshrl.u32 %v5641, 7
  %v5643 = vsub.s32 %v5640, %v5642
  %v5644 = vrot.slane %v5616, %v5643
  %v5645 = vcombine.low %v5623, %v5637
  %v5646 = vcombine.high %v5623, %v5637
  %v5647 = vcombine.low %v5630, %v5644
  %v5648 = vcombine.high %v5630, %v5644
  %v5649 = vcombine.low %v4637, %v4670
  %v5650 = vcombine.high %v4637, %v4670
  %v5651 = vcombine.low %v4671, %v4672
  %v5652 = vcombine.high %v4671, %v4672
  %v5654 = vunpack.c.l.s4 1983009808
  %v5655 = vunpack.c.0.s8 %v5654
  %v5656 = vlaneseq
  %v5657 = vshrl.u32 %v5656, 7
  %v5658 = vsub.s32 %v5655, %v5657
  %v5659 = vrot.slane %v5649, %v5658
  %v5661 = vunpack.c.l.s4 1983009808
  %v5662 = vunpack.c.0.s8 %v5661
  %v5663 = vlaneseq
  %v5664 = vshrl.u32 %v5663, 7
  %v5665 = vsub.s32 %v5662, %v5664
  %v5666 = vrot.slane %v5650, %v5665
  %v5668 = vunpack.c.l.s4 1983009808
  %v5669 = vunpack.c.0.s8 %v5668
  %v5670 = vlaneseq
  %v5671 = vshrl.u32 %v5670, 7
  %v5672 = vsub.s32 %v5669, %v5671
  %v5673 = vrot.slane %v5651, %v5672
  %v5675 = vunpack.c.l.s4 1983009808
  %v5676 = vunpack.c.0.s8 %v5675
  %v5677 = vlaneseq
  %v5678 = vshrl.u32 %v5677, 7
  %v5679 = vsub.s32 %v5676, %v5678
  %v5680 = vrot.slane %v5652, %v5679
  %v5681 = vcombine.low %v5659, %v5673
  %v5682 = vcombine.high %v5659, %v5673
  %v5683 = vcombine.low %v5666, %v5680
  %v5684 = vcombine.high %v5666, %v5680
  %v5685 = vcombine.low %v4673, %v4706
  %v5686 = vcombine.high %v4673, %v4706
  %v5687 = vcombine.low %v4707, %v4708
  %v5688 = vcombine.high %v4707, %v4708
  %v5690 = vunpack.c.l.s4 1983009808
  %v5691 = vunpack.c.0.s8 %v5690
  %v5692 = vlaneseq
  %v5693 = vshrl.u32 %v5692, 7
  %v5694 = vsub.s32 %v5691, %v5693
  %v5695 = vrot.slane %v5685, %v5694
  %v5697 = vunpack.c.l.s4 1983009808
  %v5698 = vunpack.c.0.s8 %v5697
  %v5699 = vlaneseq
  %v5700 = vshrl.u32 %v5699, 7
  %v5701 = vsub.s32 %v5698, %v5700
  %v5702 = vrot.slane %v5686, %v5701
  %v5704 = vunpack.c.l.s4 1983009808
  %v5705 = vunpack.c.0.s8 %v5704
  %v5706 = vlaneseq
  %v5707 = vshrl.u32 %v5706, 7
  %v5708 = vsub.s32 %v5705, %v5707
  %v5709 = vrot.slane %v5687, %v5708
  %v5711 = vunpack.c.l.s4 1983009808
  %v5712 = vunpack.c.0.s8 %v5711
  %v5713 = vlaneseq
  %v5714 = vshrl.u32 %v5713, 7
  %v5715 = vsub.s32 %v5712, %v5714
  %v5716 = vrot.slane %v5688, %v5715
  %v5717 = vcombine.low %v5695, %v5709
  %v5718 = vcombine.high %v5695, %v5709
  %v5719 = vcombine.low %v5702, %v5716
  %v5720 = vcombine.high %v5702, %v5716
  %v5721 = vcombine.low %v4741, %v4742
  %v5722 = vcombine.high %v4741, %v4742
  %v5723 = vcombine.low %v4743, %v4744
  %v5724 = vcombine.high %v4743, %v4744
  %v5726 = vunpack.c.l.s4 1983009808
  %v5727 = vunpack.c.0.s8 %v5726
  %v5728 = vlaneseq
  %v5729 = vshrl.u32 %v5728, 7
  %v5730 = vsub.s32 %v5727, %v5729
  %v5731 = vrot.slane %v5721, %v5730
  %v5733 = vunpack.c.l.s4 1983009808
  %v5734 = vunpack.c.0.s8 %v5733
  %v5735 = vlaneseq
  %v5736 = vshrl.u32 %v5735, 7
  %v5737 = vsub.s32 %v5734, %v5736
  %v5738 = vrot.slane %v5722, %v5737
  %v5740 = vunpack.c.l.s4 1983009808
  %v5741 = vunpack.c.0.s8 %v5740
  %v5742 = vlaneseq
  %v5743 = vshrl.u32 %v5742, 7
  %v5744 = vsub.s32 %v5741, %v5743
  %v5745 = vrot.slane %v5723, %v5744
  %v5747 = vunpack.c.l.s4 1983009808
  %v5748 = vunpack.c.0.s8 %v5747
  %v5749 = vlaneseq
  %v5750 = vshrl.u32 %v5749, 7
  %v5751 = vsub.s32 %v5748, %v5750
  %v5752 = vrot.slane %v5724, %v5751
  %v5753 = vcombine.low %v5731, %v5745
  %v5754 = vcombine.high %v5731, %v5745
  %v5755 = vcombine.low %v5738, %v5752
  %v5756 = vcombine.high %v5738, %v5752
  %v5757 = vcombine.low %v4777, %v4778
  %v5758 = vcombine.high %v4777, %v4778
  %v5759 = vcombine.low %v4779, %v4812
  %v5760 = vcombine.high %v4779, %v4812
  %v5762 = vunpack.c.l.s4 1983009808
  %v5763 = vunpack.c.0.s8 %v5762
  %v5764 = vlaneseq
  %v5765 = vshrl.u32 %v5764, 7
  %v5766 = vsub.s32 %v5763, %v5765
  %v5767 = vrot.slane %v5757, %v5766
  %v5769 = vunpack.c.l.s4 1983009808
  %v5770 = vunpack.c.0.s8 %v5769
  %v5771 = vlaneseq
  %v5772 = vshrl.u32 %v5771, 7
  %v5773 = vsub.s32 %v5770, %v5772
  %v5774 = vrot.slane %v5758, %v5773
  %v5776 = vunpack.c.l.s4 1983009808
  %v5777 = vunpack.c.0.s8 %v5776
  %v5778 = vlaneseq
  %v5779 = vshrl.u32 %v5778, 7
  %v5780 = vsub.s32 %v5777, %v5779
  %v5781 = vrot.slane %v5759, %v5780
  %v5783 = vunpack.c.l.s4 1983009808
  %v5784 = vunpack.c.0.s8 %v5783
  %v5785 = vlaneseq
  %v5786 = vshrl.u32 %v5785, 7
  %v5787 = vsub.s32 %v5784, %v5786
  %v5788 = vrot.slane %v5760, %v5787
  %v5789 = vcombine.low %v5767, %v5781
  %v5790 = vcombine.high %v5767, %v5781
  %v5791 = vcombine.low %v5774, %v5788
  %v5792 = vcombine.high %v5774, %v5788
  %v5793 = vcombine.low %v4813, %v4814
  %v5794 = vcombine.high %v4813, %v4814
  %v5795 = vcombine.low %v4815, %v4848
  %v5796 = vcombine.high %v4815, %v4848
  %v5798 = vunpack.c.l.s4 1983009808
  %v5799 = vunpack.c.0.s8 %v5798
  %v5800 = vlaneseq
  %v5801 = vshrl.u32 %v5800, 7
  %v5802 = vsub.s32 %v5799, %v5801
  %v5803 = vrot.slane %v5793, %v5802
  %v5805 = vunpack.c.l.s4 1983009808
  %v5806 = vunpack.c.0.s8 %v5805
  %v5807 = vlaneseq
  %v5808 = vshrl.u32 %v5807, 7
  %v5809 = vsub.s32 %v5806, %v5808
  %v5810 = vrot.slane %v5794, %v5809
  %v5812 = vunpack.c.l.s4 1983009808
  %v5813 = vunpack.c.0.s8 %v5812
  %v5814 = vlaneseq
  %v5815 = vshrl.u32 %v5814, 7
  %v5816 = vsub.s32 %v5813, %v5815
  %v5817 = vrot.slane %v5795, %v5816
  %v5819 = vunpack.c.l.s4 1983009808
  %v5820 = vunpack.c.0.s8 %v5819
  %v5821 = vlaneseq
  %v5822 = vshrl.u32 %v5821, 7
  %v5823 = vsub.s32 %v5820, %v5822
  %v5824 = vrot.slane %v5796, %v5823
  %v5825 = vcombine.low %v5803, %v5817
  %v5826 = vcombine.high %v5803, %v5817
  %v5827 = vcombine.low %v5810, %v5824
  %v5828 = vcombine.high %v5810, %v5824
  %v5829 = vcombine.low %v4849, %v4850
  %v5830 = vcombine.high %v4849, %v4850
  %v5831 = vcombine.low %v4883, %v4884
  %v5832 = vcombine.high %v4883, %v4884
  %v5834 = vunpack.c.l.s4 1983009808
  %v5835 = vunpack.c.0.s8 %v5834
  %v5836 = vlaneseq
  %v5837 = vshrl.u32 %v5836, 7
  %v5838 = vsub.s32 %v5835, %v5837
  %v5839 = vrot.slane %v5829, %v5838
  %v5841 = vunpack.c.l.s4 1983009808
  %v5842 = vunpack.c.0.s8 %v5841
  %v5843 = vlaneseq
  %v5844 = vshrl.u32 %v5843, 7
  %v5845 = vsub.s32 %v5842, %v5844
  %v5846 = vrot.slane %v5830, %v5845
  %v5848 = vunpack.c.l.s4 1983009808
  %v5849 = vunpack.c.0.s8 %v5848
  %v5850 = vlaneseq
  %v5851 = vshrl.u32 %v5850, 7
  %v5852 = vsub.s32 %v5849, %v5851
  %v5853 = vrot.slane %v5831, %v5852
  %v5855 = vunpack.c.l.s4 1983009808
  %v5856 = vunpack.c.0.s8 %v5855
  %v5857 = vlaneseq
  %v5858 = vshrl.u32 %v5857, 7
  %v5859 = vsub.s32 %v5856, %v5858
  %v5860 = vrot.slane %v5832, %v5859
  %v5861 = vcombine.low %v5839, %v5853
  %v5862 = vcombine.high %v5839, %v5853
  %v5863 = vcombine.low %v5846, %v5860
  %v5864 = vcombine.high %v5846, %v5860
  %v5865 = vcombine.low %v4885, %v4886
  %v5866 = vcombine.high %v4885, %v4886
  %v5867 = vcombine.low %v4919, %v4920
  %v5868 = vcombine.high %v4919, %v4920
  %v5870 = vunpack.c.l.s4 1983009808
  %v5871 = vunpack.c.0.s8 %v5870
  %v5872 = vlaneseq
  %v5873 = vshrl.u32 %v5872, 7
  %v5874 = vsub.s32 %v5871, %v5873
  %v5875 = vrot.slane %v5865, %v5874
  %v5877 = vunpack.c.l.s4 1983009808
  %v5878 = vunpack.c.0.s8 %v5877
  %v5879 = vlaneseq
  %v5880 = vshrl.u32 %v5879, 7
  %v5881 = vsub.s32 %v5878, %v5880
  %v5882 = vrot.slane %v5866, %v5881
  %v5884 = vunpack.c.l.s4 1983009808
  %v5885 = vunpack.c.0.s8 %v5884
  %v5886 = vlaneseq
  %v5887 = vshrl.u32 %v5886, 7
  %v5888 = vsub.s32 %v5885, %v5887
  %v5889 = vrot.slane %v5867, %v5888
  %v5891 = vunpack.c.l.s4 1983009808
  %v5892 = vunpack.c.0.s8 %v5891
  %v5893 = vlaneseq
  %v5894 = vshrl.u32 %v5893, 7
  %v5895 = vsub.s32 %v5892, %v5894
  %v5896 = vrot.slane %v5868, %v5895
  %v5897 = vcombine.low %v5875, %v5889
  %v5898 = vcombine.high %v5875, %v5889
  %v5899 = vcombine.low %v5882, %v5896
  %v5900 = vcombine.high %v5882, %v5896
  %v5901 = vcombine.low %v4921, %v4954
  %v5902 = vcombine.high %v4921, %v4954
  %v5903 = vcombine.low %v4955, %v4956
  %v5904 = vcombine.high %v4955, %v4956
  %v5906 = vunpack.c.l.s4 1983009808
  %v5907 = vunpack.c.0.s8 %v5906
  %v5908 = vlaneseq
  %v5909 = vshrl.u32 %v5908, 7
  %v5910 = vsub.s32 %v5907, %v5909
  %v5911 = vrot.slane %v5901, %v5910
  %v5913 = vunpack.c.l.s4 1983009808
  %v5914 = vunpack.c.0.s8 %v5913
  %v5915 = vlaneseq
  %v5916 = vshrl.u32 %v5915, 7
  %v5917 = vsub.s32 %v5914, %v5916
  %v5918 = vrot.slane %v5902, %v5917
  %v5920 = vunpack.c.l.s4 1983009808
  %v5921 = vunpack.c.0.s8 %v5920
  %v5922 = vlaneseq
  %v5923 = vshrl.u32 %v5922, 7
  %v5924 = vsub.s32 %v5921, %v5923
  %v5925 = vrot.slane %v5903, %v5924
  %v5927 = vunpack.c.l.s4 1983009808
  %v5928 = vunpack.c.0.s8 %v5927
  %v5929 = vlaneseq
  %v5930 = vshrl.u32 %v5929, 7
  %v5931 = vsub.s32 %v5928, %v5930
  %v5932 = vrot.slane %v5904, %v5931
  %v5933 = vcombine.low %v5911, %v5925
  %v5934 = vcombine.high %v5911, %v5925
  %v5935 = vcombine.low %v5918, %v5932
  %v5936 = vcombine.high %v5918, %v5932
  %v5937 = vcombine.low %v4957, %v4990
  %v5938 = vcombine.high %v4957, %v4990
  %v5939 = vcombine.low %v4991, %v4992
  %v5940 = vcombine.high %v4991, %v4992
  %v5942 = vunpack.c.l.s4 1983009808
  %v5943 = vunpack.c.0.s8 %v5942
  %v5944 = vlaneseq
  %v5945 = vshrl.u32 %v5944, 7
  %v5946 = vsub.s32 %v5943, %v5945
  %v5947 = vrot.slane %v5937, %v5946
  %v5949 = vunpack.c.l.s4 1983009808
  %v5950 = vunpack.c.0.s8 %v5949
  %v5951 = vlaneseq
  %v5952 = vshrl.u32 %v5951, 7
  %v5953 = vsub.s32 %v5950, %v5952
  %v5954 = vrot.slane %v5938, %v5953
  %v5956 = vunpack.c.l.s4 1983009808
  %v5957 = vunpack.c.0.s8 %v5956
  %v5958 = vlaneseq
  %v5959 = vshrl.u32 %v5958, 7
  %v5960 = vsub.s32 %v5957, %v5959
  %v5961 = vrot.slane %v5939, %v5960
  %v5963 = vunpack.c.l.s4 1983009808
  %v5964 = vunpack.c.0.s8 %v5963
  %v5965 = vlaneseq
  %v5966 = vshrl.u32 %v5965, 7
  %v5967 = vsub.s32 %v5964, %v5966
  %v5968 = vrot.slane %v5940, %v5967
  %v5969 = vcombine.low %v5947, %v5961
  %v5970 = vcombine.high %v5947, %v5961
  %v5971 = vcombine.low %v5954, %v5968
  %v5972 = vcombine.high %v5954, %v5968
  %v5973 = vcombine.low %v5025, %v5026
  %v5974 = vcombine.high %v5025, %v5026
  %v5975 = vcombine.low %v5027, %v5028
  %v5976 = vcombine.high %v5027, %v5028
  %v5978 = vunpack.c.l.s4 1983009808
  %v5979 = vunpack.c.0.s8 %v5978
  %v5980 = vlaneseq
  %v5981 = vshrl.u32 %v5980, 7
  %v5982 = vsub.s32 %v5979, %v5981
  %v5983 = vrot.slane %v5973, %v5982
  %v5985 = vunpack.c.l.s4 1983009808
  %v5986 = vunpack.c.0.s8 %v5985
  %v5987 = vlaneseq
  %v5988 = vshrl.u32 %v5987, 7
  %v5989 = vsub.s32 %v5986, %v5988
  %v5990 = vrot.slane %v5974, %v5989
  %v5992 = vunpack.c.l.s4 1983009808
  %v5993 = vunpack.c.0.s8 %v5992
  %v5994 = vlaneseq
  %v5995 = vshrl.u32 %v5994, 7
  %v5996 = vsub.s32 %v5993, %v5995
  %v5997 = vrot.slane %v5975, %v5996
  %v5999 = vunpack.c.l.s4 1983009808
  %v6000 = vunpack.c.0.s8 %v5999
  %v6001 = vlaneseq
  %v6002 = vshrl.u32 %v6001, 7
  %v6003 = vsub.s32 %v6000, %v6002
  %v6004 = vrot.slane %v5976, %v6003
  %v6005 = vcombine.low %v5983, %v5997
  %v6006 = vcombine.high %v5983, %v5997
  %v6007 = vcombine.low %v5990, %v6004
  %v6008 = vcombine.high %v5990, %v6004
  %v6009 = vcombine.low %v5061, %v5062
  %v6010 = vcombine.high %v5061, %v5062
  %v6011 = vcombine.low %v5063, %v5096
  %v6012 = vcombine.high %v5063, %v5096
  %v6014 = vunpack.c.l.s4 1983009808
  %v6015 = vunpack.c.0.s8 %v6014
  %v6016 = vlaneseq
  %v6017 = vshrl.u32 %v6016, 7
  %v6018 = vsub.s32 %v6015, %v6017
  %v6019 = vrot.slane %v6009, %v6018
  %v6021 = vunpack.c.l.s4 1983009808
  %v6022 = vunpack.c.0.s8 %v6021
  %v6023 = vlaneseq
  %v6024 = vshrl.u32 %v6023, 7
  %v6025 = vsub.s32 %v6022, %v6024
  %v6026 = vrot.slane %v6010, %v6025
  %v6028 = vunpack.c.l.s4 1983009808
  %v6029 = vunpack.c.0.s8 %v6028
  %v6030 = vlaneseq
  %v6031 = vshrl.u32 %v6030, 7
  %v6032 = vsub.s32 %v6029, %v6031
  %v6033 = vrot.slane %v6011, %v6032
  %v6035 = vunpack.c.l.s4 1983009808
  %v6036 = vunpack.c.0.s8 %v6035
  %v6037 = vlaneseq
  %v6038 = vshrl.u32 %v6037, 7
  %v6039 = vsub.s32 %v6036, %v6038
  %v6040 = vrot.slane %v6012, %v6039
  %v6041 = vcombine.low %v6019, %v6033
  %v6042 = vcombine.high %v6019, %v6033
  %v6043 = vcombine.low %v6026, %v6040
  %v6044 = vcombine.high %v6026, %v6040
  %v6045 = vcombine.low %v5097, %v5098
  %v6046 = vcombine.high %v5097, %v5098
  %v6047 = vcombine.low %v5099, %v5132
  %v6048 = vcombine.high %v5099, %v5132
  %v6050 = vunpack.c.l.s4 1983009808
  %v6051 = vunpack.c.0.s8 %v6050
  %v6052 = vlaneseq
  %v6053 = vshrl.u32 %v6052, 7
  %v6054 = vsub.s32 %v6051, %v6053
  %v6055 = vrot.slane %v6045, %v6054
  %v6057 = vunpack.c.l.s4 1983009808
  %v6058 = vunpack.c.0.s8 %v6057
  %v6059 = vlaneseq
  %v6060 = vshrl.u32 %v6059, 7
  %v6061 = vsub.s32 %v6058, %v6060
  %v6062 = vrot.slane %v6046, %v6061
  %v6064 = vunpack.c.l.s4 1983009808
  %v6065 = vunpack.c.0.s8 %v6064
  %v6066 = vlaneseq
  %v6067 = vshrl.u32 %v6066, 7
  %v6068 = vsub.s32 %v6065, %v6067
  %v6069 = vrot.slane %v6047, %v6068
  %v6071 = vunpack.c.l.s4 1983009808
  %v6072 = vunpack.c.0.s8 %v6071
  %v6073 = vlaneseq
  %v6074 = vshrl.u32 %v6073, 7
  %v6075 = vsub.s32 %v6072, %v6074
  %v6076 = vrot.slane %v6048, %v6075
  %v6077 = vcombine.low %v6055, %v6069
  %v6078 = vcombine.high %v6055, %v6069
  %v6079 = vcombine.low %v6062, %v6076
  %v6080 = vcombine.high %v6062, %v6076
  %v6081 = vcombine.low %v5133, %v5134
  %v6082 = vcombine.high %v5133, %v5134
  %v6083 = vcombine.low %v5167, %v5168
  %v6084 = vcombine.high %v5167, %v5168
  %v6086 = vunpack.c.l.s4 1983009808
  %v6087 = vunpack.c.0.s8 %v6086
  %v6088 = vlaneseq
  %v6089 = vshrl.u32 %v6088, 7
  %v6090 = vsub.s32 %v6087, %v6089
  %v6091 = vrot.slane %v6081, %v6090
  %v6093 = vunpack.c.l.s4 1983009808
  %v6094 = vunpack.c.0.s8 %v6093
  %v6095 = vlaneseq
  %v6096 = vshrl.u32 %v6095, 7
  %v6097 = vsub.s32 %v6094, %v6096
  %v6098 = vrot.slane %v6082, %v6097
  %v6100 = vunpack.c.l.s4 1983009808
  %v6101 = vunpack.c.0.s8 %v6100
  %v6102 = vlaneseq
  %v6103 = vshrl.u32 %v6102, 7
  %v6104 = vsub.s32 %v6101, %v6103
  %v6105 = vrot.slane %v6083, %v6104
  %v6107 = vunpack.c.l.s4 1983009808
  %v6108 = vunpack.c.0.s8 %v6107
  %v6109 = vlaneseq
  %v6110 = vshrl.u32 %v6109, 7
  %v6111 = vsub.s32 %v6108, %v6110
  %v6112 = vrot.slane %v6084, %v6111
  %v6113 = vcombine.low %v6091, %v6105
  %v6114 = vcombine.high %v6091, %v6105
  %v6115 = vcombine.low %v6098, %v6112
  %v6116 = vcombine.high %v6098, %v6112
  %v6117 = vcombine.low %v5169, %v5170
  %v6118 = vcombine.high %v5169, %v5170
  %v6119 = vcombine.low %v5203, %v5204
  %v6120 = vcombine.high %v5203, %v5204
  %v6122 = vunpack.c.l.s4 1983009808
  %v6123 = vunpack.c.0.s8 %v6122
  %v6124 = vlaneseq
  %v6125 = vshrl.u32 %v6124, 7
  %v6126 = vsub.s32 %v6123, %v6125
  %v6127 = vrot.slane %v6117, %v6126
  %v6129 = vunpack.c.l.s4 1983009808
  %v6130 = vunpack.c.0.s8 %v6129
  %v6131 = vlaneseq
  %v6132 = vshrl.u32 %v6131, 7
  %v6133 = vsub.s32 %v6130, %v6132
  %v6134 = vrot.slane %v6118, %v6133
  %v6136 = vunpack.c.l.s4 1983009808
  %v6137 = vunpack.c.0.s8 %v6136
  %v6138 = vlaneseq
  %v6139 = vshrl.u32 %v6138, 7
  %v6140 = vsub.s32 %v6137, %v6139
  %v6141 = vrot.slane %v6119, %v6140
  %v6143 = vunpack.c.l.s4 1983009808
  %v6144 = vunpack.c.0.s8 %v6143
  %v6145 = vlaneseq
  %v6146 = vshrl.u32 %v6145, 7
  %v6147 = vsub.s32 %v6144, %v6146
  %v6148 = vrot.slane %v6120, %v6147
  %v6149 = vcombine.low %v6127, %v6141
  %v6150 = vcombine.high %v6127, %v6141
  %v6151 = vcombine.low %v6134, %v6148
  %v6152 = vcombine.high %v6134, %v6148
  %v6153 = vcombine.low %v5205, %v5238
  %v6154 = vcombine.high %v5205, %v5238
  %v6155 = vcombine.low %v5239, %v5240
  %v6156 = vcombine.high %v5239, %v5240
  %v6158 = vunpack.c.l.s4 1983009808
  %v6159 = vunpack.c.0.s8 %v6158
  %v6160 = vlaneseq
  %v6161 = vshrl.u32 %v6160, 7
  %v6162 = vsub.s32 %v6159, %v6161
  %v6163 = vrot.slane %v6153, %v6162
  %v6165 = vunpack.c.l.s4 1983009808
  %v6166 = vunpack.c.0.s8 %v6165
  %v6167 = vlaneseq
  %v6168 = vshrl.u32 %v6167, 7
  %v6169 = vsub.s32 %v6166, %v6168
  %v6170 = vrot.slane %v6154, %v6169
  %v6172 = vunpack.c.l.s4 1983009808
  %v6173 = vunpack.c.0.s8 %v6172
  %v6174 = vlaneseq
  %v6175 = vshrl.u32 %v6174, 7
  %v6176 = vsub.s32 %v6173, %v6175
  %v6177 = vrot.slane %v6155, %v6176
  %v6179 = vunpack.c.l.s4 1983009808
  %v6180 = vunpack.c.0.s8 %v6179
  %v6181 = vlaneseq
  %v6182 = vshrl.u32 %v6181, 7
  %v6183 = vsub.s32 %v6180, %v6182
  %v6184 = vrot.slane %v6156, %v6183
  %v6185 = vcombine.low %v6163, %v6177
  %v6186 = vcombine.high %v6163, %v6177
  %v6187 = vcombine.low %v6170, %v6184
  %v6188 = vcombine.high %v6170, %v6184
  %v6189 = vcombine.low %v5241, %v5274
  %v6190 = vcombine.high %v5241, %v5274
  %v6191 = vcombine.low %v5275, %v5276
  %v6192 = vcombine.high %v5275, %v5276
  %v6194 = vunpack.c.l.s4 1983009808
  %v6195 = vunpack.c.0.s8 %v6194
  %v6196 = vlaneseq
  %v6197 = vshrl.u32 %v6196, 7
  %v6198 = vsub.s32 %v6195, %v6197
  %v6199 = vrot.slane %v6189, %v6198
  %v6201 = vunpack.c.l.s4 1983009808
  %v6202 = vunpack.c.0.s8 %v6201
  %v6203 = vlaneseq
  %v6204 = vshrl.u32 %v6203, 7
  %v6205 = vsub.s32 %v6202, %v6204
  %v6206 = vrot.slane %v6190, %v6205
  %v6208 = vunpack.c.l.s4 1983009808
  %v6209 = vunpack.c.0.s8 %v6208
  %v6210 = vlaneseq
  %v6211 = vshrl.u32 %v6210, 7
  %v6212 = vsub.s32 %v6209, %v6211
  %v6213 = vrot.slane %v6191, %v6212
  %v6215 = vunpack.c.l.s4 1983009808
  %v6216 = vunpack.c.0.s8 %v6215
  %v6217 = vlaneseq
  %v6218 = vshrl.u32 %v6217, 7
  %v6219 = vsub.s32 %v6216, %v6218
  %v6220 = vrot.slane %v6192, %v6219
  %v6221 = vcombine.low %v6199, %v6213
  %v6222 = vcombine.high %v6199, %v6213
  %v6223 = vcombine.low %v6206, %v6220
  %v6224 = vcombine.high %v6206, %v6220
  %v6225 = vcombine.low %v5309, %v5310
  %v6226 = vcombine.high %v5309, %v5310
  %v6227 = vcombine.low %v5311, %v5312
  %v6228 = vcombine.high %v5311, %v5312
  %v6230 = vunpack.c.l.s4 1983009808
  %v6231 = vunpack.c.0.s8 %v6230
  %v6232 = vlaneseq
  %v6233 = vshrl.u32 %v6232, 7
  %v6234 = vsub.s32 %v6231, %v6233
  %v6235 = vrot.slane %v6225, %v6234
  %v6237 = vunpack.c.l.s4 1983009808
  %v6238 = vunpack.c.0.s8 %v6237
  %v6239 = vlaneseq
  %v6240 = vshrl.u32 %v6239, 7
  %v6241 = vsub.s32 %v6238, %v6240
  %v6242 = vrot.slane %v6226, %v6241
  %v6244 = vunpack.c.l.s4 1983009808
  %v6245 = vunpack.c.0.s8 %v6244
  %v6246 = vlaneseq
  %v6247 = vshrl.u32 %v6246, 7
  %v6248 = vsub.s32 %v6245, %v6247
  %v6249 = vrot.slane %v6227, %v6248
  %v6251 = vunpack.c.l.s4 1983009808
  %v6252 = vunpack.c.0.s8 %v6251
  %v6253 = vlaneseq
  %v6254 = vshrl.u32 %v6253, 7
  %v6255 = vsub.s32 %v6252, %v6254
  %v6256 = vrot.slane %v6228, %v6255
  %v6257 = vcombine.low %v6235, %v6249
  %v6258 = vcombine.high %v6235, %v6249
  %v6259 = vcombine.low %v6242, %v6256
  %v6260 = vcombine.high %v6242, %v6256
  %v6261 = vcombine.low %v5345, %v5346
  %v6262 = vcombine.high %v5345, %v5346
  %v6263 = vcombine.low %v5347, %v5380
  %v6264 = vcombine.high %v5347, %v5380
  %v6266 = vunpack.c.l.s4 1983009808
  %v6267 = vunpack.c.0.s8 %v6266
  %v6268 = vlaneseq
  %v6269 = vshrl.u32 %v6268, 7
  %v6270 = vsub.s32 %v6267, %v6269
  %v6271 = vrot.slane %v6261, %v6270
  %v6273 = vunpack.c.l.s4 1983009808
  %v6274 = vunpack.c.0.s8 %v6273
  %v6275 = vlaneseq
  %v6276 = vshrl.u32 %v6275, 7
  %v6277 = vsub.s32 %v6274, %v6276
  %v6278 = vrot.slane %v6262, %v6277
  %v6280 = vunpack.c.l.s4 1983009808
  %v6281 = vunpack.c.0.s8 %v6280
  %v6282 = vlaneseq
  %v6283 = vshrl.u32 %v6282, 7
  %v6284 = vsub.s32 %v6281, %v6283
  %v6285 = vrot.slane %v6263, %v6284
  %v6287 = vunpack.c.l.s4 1983009808
  %v6288 = vunpack.c.0.s8 %v6287
  %v6289 = vlaneseq
  %v6290 = vshrl.u32 %v6289, 7
  %v6291 = vsub.s32 %v6288, %v6290
  %v6292 = vrot.slane %v6264, %v6291
  %v6293 = vcombine.low %v6271, %v6285
  %v6294 = vcombine.high %v6271, %v6285
  %v6295 = vcombine.low %v6278, %v6292
  %v6296 = vcombine.high %v6278, %v6292
  %v6297 = vcombine.low %v5381, %v5382
  %v6298 = vcombine.high %v5381, %v5382
  %v6299 = vcombine.low %v5383, %v5416
  %v6300 = vcombine.high %v5383, %v5416
  %v6302 = vunpack.c.l.s4 1983009808
  %v6303 = vunpack.c.0.s8 %v6302
  %v6304 = vlaneseq
  %v6305 = vshrl.u32 %v6304, 7
  %v6306 = vsub.s32 %v6303, %v6305
  %v6307 = vrot.slane %v6297, %v6306
  %v6309 = vunpack.c.l.s4 1983009808
  %v6310 = vunpack.c.0.s8 %v6309
  %v6311 = vlaneseq
  %v6312 = vshrl.u32 %v6311, 7
  %v6313 = vsub.s32 %v6310, %v6312
  %v6314 = vrot.slane %v6298, %v6313
  %v6316 = vunpack.c.l.s4 1983009808
  %v6317 = vunpack.c.0.s8 %v6316
  %v6318 = vlaneseq
  %v6319 = vshrl.u32 %v6318, 7
  %v6320 = vsub.s32 %v6317, %v6319
  %v6321 = vrot.slane %v6299, %v6320
  %v6323 = vunpack.c.l.s4 1983009808
  %v6324 = vunpack.c.0.s8 %v6323
  %v6325 = vlaneseq
  %v6326 = vshrl.u32 %v6325, 7
  %v6327 = vsub.s32 %v6324, %v6326
  %v6328 = vrot.slane %v6300, %v6327
  %v6329 = vcombine.low %v6307, %v6321
  %v6330 = vcombine.high %v6307, %v6321
  %v6331 = vcombine.low %v6314, %v6328
  %v6332 = vcombine.high %v6314, %v6328
  %v6333 = vcombine.low %v5417, %v5418
  %v6334 = vcombine.high %v5417, %v5418
  %v6336 = vunpack.c.l.s4 1983009808
  %v6337 = vunpack.c.0.s8 %v6336
  %v6338 = vlaneseq
  %v6339 = vshrl.u32 %v6338, 7
  %v6340 = vsub.s32 %v6337, %v6339
  %v6341 = vrot.slane %v6333, %v6340
  %v6343 = vunpack.c.l.s4 1983009808
  %v6344 = vunpack.c.0.s8 %v6343
  %v6345 = vlaneseq
  %v6346 = vshrl.u32 %v6345, 7
  %v6347 = vsub.s32 %v6344, %v6346
  %v6348 = vrot.slane %v6334, %v6347
  %v6349 = vcombine.high %v6341, %v6341
  %v6350 = vcombine.high %v6348, %v6348
  %v6426 = vsel %vm2946, %v5504, 0
  %v6428 = vsel %vm2946, %v5540, 0
  %v6430 = vsel %vm2946, %v5576, 0
  %v6432 = vsel %vm2946, %v5612, 0
  %v6434 = vsel %vm2946, %v5648, 0
  %v6436 = vsel %vm2946, %v5684, 0
  %v6438 = vsel %vm2946, %v5720, 0
  %v6440 = vsel %vm2946, %v5756, 0
  %v6442 = vsel %vm2946, %v5792, 0
  %v6444 = vsel %vm2946, %v5828, 0
  %v6446 = vsel %vm2946, %v5864, 0
  %v6448 = vsel %vm2946, %v5900, 0
  %v6450 = vsel %vm2946, %v5936, 0
  %v6452 = vsel %vm2946, %v5972, 0
  %v6454 = vsel %vm2946, %v6008, 0
  %v6456 = vsel %vm2946, %v6044, 0
  %v6458 = vsel %vm2946, %v6080, 0
  %v6460 = vsel %vm2946, %v6116, 0
  %v6462 = vsel %vm2946, %v6152, 0
  %v6464 = vsel %vm2946, %v6188, 0
  %v6466 = vsel %vm2946, %v6224, 0
  %v6468 = vsel %vm2946, %v6260, 0
  %v6470 = vsel %vm2946, %v6296, 0
  %v6472 = vsel %vm2946, %v6332, 0
  %v6474 = vsel %vm2946, %v6350, 0
  %6476 = vmatprep.subr.mxu0 0.0
  %6477 = vmatpush1.msra.mxu0 %v5419
  %6478 = vmatprep.subr.mxu0 0.0
  %6479 = vmatpush1.msra.mxu0 %v5420
  %6480 = vmatprep.subr.mxu0 0.0
  %6481 = vmatpush1.msra.mxu0 %v5421
  %6482 = vmatprep.subr.mxu0 0.0
  %6483 = vmatpush1.msra.mxu0 %v5422
  %6484 = vmatprep.subr.mxu0 0.0
  %6485 = vmatpush1.msra.mxu0 %v5423
  %6486 = vmatprep.subr.mxu0 0.0
  %6487 = vmatpush1.msra.mxu0 %v5424
  %6488 = vmatprep.subr.mxu0 0.0
  %6489 = vmatpush1.msra.mxu0 %v5425
  %6490 = vmatprep.subr.mxu0 0.0
  %6491 = vmatpush1.msra.mxu0 %v5426
  %6492 = vmatprep.subr.mxu0 0.0
  %6493 = vmatpush1.msra.mxu0 %v5427
  %6494 = vmatprep.subr.mxu0 0.0
  %6495 = vmatpush1.msra.mxu0 %v5428
  %6496 = vmatprep.subr.mxu0 0.0
  %6497 = vmatpush1.msra.mxu0 %v5429
  %6498 = vmatprep.subr.mxu0 0.0
  %6499 = vmatpush1.msra.mxu0 %v5430
  %6500 = vmatprep.subr.mxu0 0.0
  %6501 = vmatpush1.msra.mxu0 %v5431
  %6502 = vmatprep.subr.mxu0 0.0
  %6503 = vmatpush1.msra.mxu0 %v5432
  %6504 = vmatprep.subr.mxu0 0.0
  %6505 = vmatpush1.msra.mxu0 %v5433
  %6506 = vmatprep.subr.mxu0 0.0
  %6507 = vmatpush1.msra.mxu0 %v5434
  %6508 = vmatprep.subr.mxu0 0.0
  %6509 = vmatpush1.msra.mxu0 %v5435
  %6510 = vmatprep.subr.mxu0 0.0
  %6511 = vmatpush1.msra.mxu0 %v5436
  %6512 = vmatprep.subr.mxu0 0.0
  %6513 = vmatpush1.msra.mxu0 %v5437
  %6514 = vmatprep.subr.mxu0 0.0
  %6515 = vmatpush1.msra.mxu0 %v5438
  %6516 = vmatprep.subr.mxu0 0.0
  %6517 = vmatpush1.msra.mxu0 %v5439
  %6518 = vmatprep.subr.mxu0 0.0
  %6519 = vmatpush1.msra.mxu0 %v5440
  %6520 = vmatprep.subr.mxu0 0.0
  %6521 = vmatpush1.msra.mxu0 %v5441
  %6522 = vmatprep.subr.mxu0 0.0
  %6523 = vmatpush1.msra.mxu0 %v5442
  %6524 = vmatprep.subr.mxu0 0.0
  %6525 = vmatpush1.msra.mxu0 %v5443
  %6526 = vmatprep.subr.mxu0 0.0
  %6527 = vmatpush1.msra.mxu0 %v5444
  %6528 = vmatprep.subr.mxu0 0.0
  %6529 = vmatpush1.msra.mxu0 %v5445
  %6530 = vmatprep.subr.mxu0 0.0
  %6531 = vmatpush1.msra.mxu0 %v5446
  %6532 = vmatprep.subr.mxu0 0.0
  %6533 = vmatpush1.msra.mxu0 %v5447
  %6534 = vmatprep.subr.mxu0 0.0
  %6535 = vmatpush1.msra.mxu0 %v5448
  %6536 = vmatprep.subr.mxu0 0.0
  %6537 = vmatpush1.msra.mxu0 %v5449
  %6538 = vmatprep.subr.mxu0 0.0
  %6539 = vmatpush1.msra.mxu0 %v5450
  %6540 = vmatprep.mubr.f32.mxu0 %v5502
  %6541 = vmatmul.mubr.f32.gmra.mrb[0].mxu0 %v5501
  %v6542 = vpop.f32.mrb[0].mxu0
  %v6543 = vadd.f32 0.0, %v6542
  %v6544 = vpop.f32.mrb[0].mxu0
  %6545 = vmatprep.mubr.f32.mxu0 %v5538
  %6546 = vmatmul.mubr.f32.gmra.mrb[0].mxu0 %v5537
  %v6547 = vpop.f32.mrb[0].mxu0
  %v6548 = vadd.f32 0.0, %v6547
  %v6549 = vpop.f32.mrb[0].mxu0
  %6550 = vmatprep.mubr.f32.mxu0 %v5574
  %6551 = vmatmul.mubr.f32.gmra.mrb[0].mxu0 %v5573
  %v6552 = vpop.f32.mrb[0].mxu0
  %v6553 = vadd.f32 0.0, %v6552
  %v6554 = vpop.f32.mrb[0].mxu0
  %6555 = vmatprep.mubr.f32.mxu0 %v5610
  %6556 = vmatmul.mubr.f32.gmra.mrb[0].mxu0 %v5609
  %v6557 = vpop.f32.mrb[0].mxu0
  %v6558 = vadd.f32 0.0, %v6557
  %v6559 = vpop.f32.mrb[0].mxu0
  %6560 = vmatprep.mubr.f32.mxu0 %v5646
  %6561 = vmatmul.mubr.f32.gmra.mrb[0].mxu0 %v5645
  %v6562 = vpop.f32.mrb[0].mxu0
  %v6563 = vadd.f32 0.0, %v6562
  %v6564 = vpop.f32.mrb[0].mxu0
  %6565 = vmatprep.mubr.f32.mxu0 %v5682
  %6566 = vmatmul.mubr.f32.gmra.mrb[0].mxu0 %v5681
  %v6567 = vpop.f32.mrb[0].mxu0
  %v6568 = vadd.f32 0.0, %v6567
  %v6569 = vpop.f32.mrb[0].mxu0
  %6570 = vmatprep.mubr.f32.mxu0 %v5718
  %6571 = vmatmul.mubr.f32.gmra.mrb[0].mxu0 %v5717
  %v6572 = vpop.f32.mrb[0].mxu0
  %v6573 = vadd.f32 0.0, %v6572
  %v6574 = vpop.f32.mrb[0].mxu0
  %6575 = vmatprep.mubr.f32.mxu0 %v5754
  %6576 = vmatmul.mubr.f32.gmra.mrb[0].mxu0 %v5753
  %v6577 = vpop.f32.mrb[0].mxu0
  %v6578 = vadd.f32 0.0, %v6577
  %v6579 = vpop.f32.mrb[0].mxu0
  %6580 = vmatprep.mubr.f32.mxu0 %v5790
  %6581 = vmatmul.mubr.f32.gmra.mrb[0].mxu0 %v5789
  %v6582 = vpop.f32.mrb[0].mxu0
  %v6583 = vadd.f32 0.0, %v6582
  %v6584 = vpop.f32.mrb[0].mxu0
  %6585 = vmatprep.mubr.f32.mxu0 %v5826
  %6586 = vmatmul.mubr.f32.gmra.mrb[0].mxu0 %v5825
  %v6587 = vpop.f32.mrb[0].mxu0
  %v6588 = vadd.f32 0.0, %v6587
  %v6589 = vpop.f32.mrb[0].mxu0
  %6590 = vmatprep.mubr.f32.mxu0 %v5862
  %6591 = vmatmul.mubr.f32.gmra.mrb[0].mxu0 %v5861
  %v6592 = vpop.f32.mrb[0].mxu0
  %v6593 = vadd.f32 0.0, %v6592
  %v6594 = vpop.f32.mrb[0].mxu0
  %6595 = vmatprep.mubr.f32.mxu0 %v5898
  %6596 = vmatmul.mubr.f32.gmra.mrb[0].mxu0 %v5897
  %v6597 = vpop.f32.mrb[0].mxu0
  %v6598 = vadd.f32 0.0, %v6597
  %v6599 = vpop.f32.mrb[0].mxu0
  %6600 = vmatprep.mubr.f32.mxu0 %v5934
  %6601 = vmatmul.mubr.f32.gmra.mrb[0].mxu0 %v5933
  %v6602 = vpop.f32.mrb[0].mxu0
  %v6603 = vadd.f32 0.0, %v6602
  %v6604 = vpop.f32.mrb[0].mxu0
  %6605 = vmatprep.mubr.f32.mxu0 %v5970
  %6606 = vmatmul.mubr.f32.gmra.mrb[0].mxu0 %v5969
  %v6607 = vpop.f32.mrb[0].mxu0
  %v6608 = vadd.f32 0.0, %v6607
  %v6609 = vpop.f32.mrb[0].mxu0
  %6610 = vmatprep.mubr.f32.mxu0 %v6006
  %6611 = vmatmul.mubr.f32.gmra.mrb[0].mxu0 %v6005
  %v6612 = vpop.f32.mrb[0].mxu0
  %v6613 = vadd.f32 0.0, %v6612
  %v6614 = vpop.f32.mrb[0].mxu0
  %6615 = vmatprep.mubr.f32.mxu0 %v6042
  %6616 = vmatmul.mubr.f32.gmra.mrb[0].mxu0 %v6041
  %v6617 = vpop.f32.mrb[0].mxu0
  %v6618 = vadd.f32 0.0, %v6617
  %v6619 = vpop.f32.mrb[0].mxu0
  %6620 = vmatprep.mubr.f32.mxu0 %v6078
  %6621 = vmatmul.mubr.f32.gmra.mrb[0].mxu0 %v6077
  %v6622 = vpop.f32.mrb[0].mxu0
  %v6623 = vadd.f32 0.0, %v6622
  %v6624 = vpop.f32.mrb[0].mxu0
  %6625 = vmatprep.mubr.f32.mxu0 %v6114
  %6626 = vmatmul.mubr.f32.gmra.mrb[0].mxu0 %v6113
  %v6627 = vpop.f32.mrb[0].mxu0
  %v6628 = vadd.f32 0.0, %v6627
  %v6629 = vpop.f32.mrb[0].mxu0
  %6630 = vmatprep.mubr.f32.mxu0 %v6150
  %6631 = vmatmul.mubr.f32.gmra.mrb[0].mxu0 %v6149
  %v6632 = vpop.f32.mrb[0].mxu0
  %v6633 = vadd.f32 0.0, %v6632
  %v6634 = vpop.f32.mrb[0].mxu0
  %6635 = vmatprep.mubr.f32.mxu0 %v6186
  %6636 = vmatmul.mubr.f32.gmra.mrb[0].mxu0 %v6185
  %v6637 = vpop.f32.mrb[0].mxu0
  %v6638 = vadd.f32 0.0, %v6637
  %v6639 = vpop.f32.mrb[0].mxu0
  %6640 = vmatprep.mubr.f32.mxu0 %v6222
  %6641 = vmatmul.mubr.f32.gmra.mrb[0].mxu0 %v6221
  %v6642 = vpop.f32.mrb[0].mxu0
  %v6643 = vadd.f32 0.0, %v6642
  %v6644 = vpop.f32.mrb[0].mxu0
  %6645 = vmatprep.mubr.f32.mxu0 %v6258
  %6646 = vmatmul.mubr.f32.gmra.mrb[0].mxu0 %v6257
  %v6647 = vpop.f32.mrb[0].mxu0
  %v6648 = vadd.f32 0.0, %v6647
  %v6649 = vpop.f32.mrb[0].mxu0
  %6650 = vmatprep.mubr.f32.mxu0 %v6294
  %6651 = vmatmul.mubr.f32.gmra.mrb[0].mxu0 %v6293
  %v6652 = vpop.f32.mrb[0].mxu0
  %v6653 = vadd.f32 0.0, %v6652
  %v6654 = vpop.f32.mrb[0].mxu0
  %6655 = vmatprep.mubr.f32.mxu0 %v6330
  %6656 = vmatmul.mubr.f32.gmra.mrb[0].mxu0 %v6329
  %v6657 = vpop.f32.mrb[0].mxu0
  %v6658 = vadd.f32 0.0, %v6657
  %v6659 = vpop.f32.mrb[0].mxu0
  %6660 = vmatprep.mubr.f32.mxu0 %v6349
  %6661 = vmatmul.mubr.f32.gmra.mrb[0].mxu0 %v6341
  %v6662 = vpop.f32.mrb[0].mxu0
  %v6663 = vadd.f32 0.0, %v6662
  %v6664 = vpop.f32.mrb[0].mxu0
  %6665 = vdwg.mxu0
  %6666 = vmatprep.subr.mxu0 0.0
  %6667 = vmatpush1.msra.mxu0 %v5451
  %6668 = vmatprep.subr.mxu0 0.0
  %6669 = vmatpush1.msra.mxu0 %v5452
  %6670 = vmatprep.subr.mxu0 0.0
  %6671 = vmatpush1.msra.mxu0 %v5453
  %6672 = vmatprep.subr.mxu0 0.0
  %6673 = vmatpush1.msra.mxu0 %v5454
  %6674 = vmatprep.subr.mxu0 0.0
  %6675 = vmatpush1.msra.mxu0 %v5455
  %6676 = vmatprep.subr.mxu0 0.0
  %6677 = vmatpush1.msra.mxu0 %v5456
  %6678 = vmatprep.subr.mxu0 0.0
  %6679 = vmatpush1.msra.mxu0 %v5457
  %6680 = vmatprep.subr.mxu0 0.0
  %6681 = vmatpush1.msra.mxu0 %v5458
  %6682 = vmatprep.subr.mxu0 0.0
  %6683 = vmatpush1.msra.mxu0 %v5459
  %6684 = vmatprep.subr.mxu0 0.0
  %6685 = vmatpush1.msra.mxu0 %v5460
  %6686 = vmatprep.subr.mxu0 0.0
  %6687 = vmatpush1.msra.mxu0 %v5461
  %6688 = vmatprep.subr.mxu0 0.0
  %6689 = vmatpush1.msra.mxu0 %v5462
  %6690 = vmatprep.subr.mxu0 0.0
  %6691 = vmatpush1.msra.mxu0 %v5463
  %6692 = vmatprep.subr.mxu0 0.0
  %6693 = vmatpush1.msra.mxu0 %v5464
  %6694 = vmatprep.subr.mxu0 0.0
  %6695 = vmatpush1.msra.mxu0 %v5465
  %6696 = vmatprep.subr.mxu0 0.0
  %6697 = vmatpush1.msra.mxu0 %v5466
  %6698 = vmatprep.subr.mxu0 0.0
  %6699 = vmatpush1.msra.mxu0 %v5467
  %6700 = vmatprep.subr.mxu0 0.0
  %6701 = vmatpush1.msra.mxu0 %v5468
  %6702 = vmatprep.subr.mxu0 0.0
  %6703 = vmatpush1.msra.mxu0 0.0
  %6704 = vmatprep.subr.mxu0 0.0
  %6705 = vmatpush1.msra.mxu0 0.0
  %6706 = vmatprep.subr.mxu0 0.0
  %6707 = vmatpush1.msra.mxu0 0.0
  %6708 = vmatprep.subr.mxu0 0.0
  %6709 = vmatpush1.msra.mxu0 0.0
  %6710 = vmatprep.subr.mxu0 0.0
  %6711 = vmatpush1.msra.mxu0 0.0
  %6712 = vmatprep.subr.mxu0 0.0
  %6713 = vmatpush1.msra.mxu0 0.0
  %6714 = vmatprep.subr.mxu0 0.0
  %6715 = vmatpush1.msra.mxu0 0.0
  %6716 = vmatprep.subr.mxu0 0.0
  %6717 = vmatpush1.msra.mxu0 0.0
  %6718 = vmatprep.subr.mxu0 0.0
  %6719 = vmatpush1.msra.mxu0 0.0
  %6720 = vmatprep.subr.mxu0 0.0
  %6721 = vmatpush1.msra.mxu0 0.0
  %6722 = vmatprep.subr.mxu0 0.0
  %6723 = vmatpush1.msra.mxu0 0.0
  %6724 = vmatprep.subr.mxu0 0.0
  %6725 = vmatpush1.msra.mxu0 0.0
  %6726 = vmatprep.subr.mxu0 0.0
  %6727 = vmatpush1.msra.mxu0 0.0
  %6728 = vmatprep.subr.mxu0 0.0
  %6729 = vmatpush1.msra.mxu0 0.0
  %6730 = vmatprep.mubr.f32.mxu0 %v6426
  %6731 = vmatmul.mubr.f32.gmra.mrb[0].mxu0 %v5503
  %v6732 = vpop.f32.mrb[0].mxu0
  %v6733 = vadd.f32 %v6543, %v6732
  %v6734 = vpop.f32.mrb[0].mxu0
  %6735 = vmatprep.mubr.f32.mxu0 %v6428
  %6736 = vmatmul.mubr.f32.gmra.mrb[0].mxu0 %v5539
  %v6737 = vpop.f32.mrb[0].mxu0
  %v6738 = vadd.f32 %v6548, %v6737
  %v6739 = vpop.f32.mrb[0].mxu0
  %6740 = vmatprep.mubr.f32.mxu0 %v6430
  %6741 = vmatmul.mubr.f32.gmra.mrb[0].mxu0 %v5575
  %v6742 = vpop.f32.mrb[0].mxu0
  %v6743 = vadd.f32 %v6553, %v6742
  %v6744 = vpop.f32.mrb[0].mxu0
  %6745 = vmatprep.mubr.f32.mxu0 %v6432
  %6746 = vmatmul.mubr.f32.gmra.mrb[0].mxu0 %v5611
  %v6747 = vpop.f32.mrb[0].mxu0
  %v6748 = vadd.f32 %v6558, %v6747
  %v6749 = vpop.f32.mrb[0].mxu0
  %6750 = vmatprep.mubr.f32.mxu0 %v6434
  %6751 = vmatmul.mubr.f32.gmra.mrb[0].mxu0 %v5647
  %v6752 = vpop.f32.mrb[0].mxu0
  %v6753 = vadd.f32 %v6563, %v6752
  %v6754 = vpop.f32.mrb[0].mxu0
  %6755 = vmatprep.mubr.f32.mxu0 %v6436
  %6756 = vmatmul.mubr.f32.gmra.mrb[0].mxu0 %v5683
  %v6757 = vpop.f32.mrb[0].mxu0
  %v6758 = vadd.f32 %v6568, %v6757
  %v6759 = vpop.f32.mrb[0].mxu0
  %6760 = vmatprep.mubr.f32.mxu0 %v6438
  %6761 = vmatmul.mubr.f32.gmra.mrb[0].mxu0 %v5719
  %v6762 = vpop.f32.mrb[0].mxu0
  %v6763 = vadd.f32 %v6573, %v6762
  %v6764 = vpop.f32.mrb[0].mxu0
  %6765 = vmatprep.mubr.f32.mxu0 %v6440
  %6766 = vmatmul.mubr.f32.gmra.mrb[0].mxu0 %v5755
  %v6767 = vpop.f32.mrb[0].mxu0
  %v6768 = vadd.f32 %v6578, %v6767
  %v6769 = vpop.f32.mrb[0].mxu0
  %6770 = vmatprep.mubr.f32.mxu0 %v6442
  %6771 = vmatmul.mubr.f32.gmra.mrb[0].mxu0 %v5791
  %v6772 = vpop.f32.mrb[0].mxu0
  %v6773 = vadd.f32 %v6583, %v6772
  %v6774 = vpop.f32.mrb[0].mxu0
  %6775 = vmatprep.mubr.f32.mxu0 %v6444
  %6776 = vmatmul.mubr.f32.gmra.mrb[0].mxu0 %v5827
  %v6777 = vpop.f32.mrb[0].mxu0
  %v6778 = vadd.f32 %v6588, %v6777
  %v6779 = vpop.f32.mrb[0].mxu0
  %6780 = vmatprep.mubr.f32.mxu0 %v6446
  %6781 = vmatmul.mubr.f32.gmra.mrb[0].mxu0 %v5863
  %v6782 = vpop.f32.mrb[0].mxu0
  %v6783 = vadd.f32 %v6593, %v6782
  %v6784 = vpop.f32.mrb[0].mxu0
  %6785 = vmatprep.mubr.f32.mxu0 %v6448
  %6786 = vmatmul.mubr.f32.gmra.mrb[0].mxu0 %v5899
  %v6787 = vpop.f32.mrb[0].mxu0
  %v6788 = vadd.f32 %v6598, %v6787
  %v6789 = vpop.f32.mrb[0].mxu0
  %6790 = vmatprep.mubr.f32.mxu0 %v6450
  %6791 = vmatmul.mubr.f32.gmra.mrb[0].mxu0 %v5935
  %v6792 = vpop.f32.mrb[0].mxu0
  %v6793 = vadd.f32 %v6603, %v6792
  %v6794 = vpop.f32.mrb[0].mxu0
  %6795 = vmatprep.mubr.f32.mxu0 %v6452
  %6796 = vmatmul.mubr.f32.gmra.mrb[0].mxu0 %v5971
  %v6797 = vpop.f32.mrb[0].mxu0
  %v6798 = vadd.f32 %v6608, %v6797
  %v6799 = vpop.f32.mrb[0].mxu0
  %6800 = vmatprep.mubr.f32.mxu0 %v6454
  %6801 = vmatmul.mubr.f32.gmra.mrb[0].mxu0 %v6007
  %v6802 = vpop.f32.mrb[0].mxu0
  %v6803 = vadd.f32 %v6613, %v6802
  %v6804 = vpop.f32.mrb[0].mxu0
  %6805 = vmatprep.mubr.f32.mxu0 %v6456
  %6806 = vmatmul.mubr.f32.gmra.mrb[0].mxu0 %v6043
  %v6807 = vpop.f32.mrb[0].mxu0
  %v6808 = vadd.f32 %v6618, %v6807
  %v6809 = vpop.f32.mrb[0].mxu0
  %6810 = vmatprep.mubr.f32.mxu0 %v6458
  %6811 = vmatmul.mubr.f32.gmra.mrb[0].mxu0 %v6079
  %v6812 = vpop.f32.mrb[0].mxu0
  %v6813 = vadd.f32 %v6623, %v6812
  %v6814 = vpop.f32.mrb[0].mxu0
  %6815 = vmatprep.mubr.f32.mxu0 %v6460
  %6816 = vmatmul.mubr.f32.gmra.mrb[0].mxu0 %v6115
  %v6817 = vpop.f32.mrb[0].mxu0
  %v6818 = vadd.f32 %v6628, %v6817
  %v6819 = vpop.f32.mrb[0].mxu0
  %6820 = vmatprep.mubr.f32.mxu0 %v6462
  %6821 = vmatmul.mubr.f32.gmra.mrb[0].mxu0 %v6151
  %v6822 = vpop.f32.mrb[0].mxu0
  %v6823 = vadd.f32 %v6633, %v6822
  %v6824 = vpop.f32.mrb[0].mxu0
  %6825 = vmatprep.mubr.f32.mxu0 %v6464
  %6826 = vmatmul.mubr.f32.gmra.mrb[0].mxu0 %v6187
  %v6827 = vpop.f32.mrb[0].mxu0
  %v6828 = vadd.f32 %v6638, %v6827
  %v6829 = vpop.f32.mrb[0].mxu0
  %6830 = vmatprep.mubr.f32.mxu0 %v6466
  %6831 = vmatmul.mubr.f32.gmra.mrb[0].mxu0 %v6223
  %v6832 = vpop.f32.mrb[0].mxu0
  %v6833 = vadd.f32 %v6643, %v6832
  %v6834 = vpop.f32.mrb[0].mxu0
  %6835 = vmatprep.mubr.f32.mxu0 %v6468
  %6836 = vmatmul.mubr.f32.gmra.mrb[0].mxu0 %v6259
  %v6837 = vpop.f32.mrb[0].mxu0
  %v6838 = vadd.f32 %v6648, %v6837
  %v6839 = vpop.f32.mrb[0].mxu0
  %6840 = vmatprep.mubr.f32.mxu0 %v6470
  %6841 = vmatmul.mubr.f32.gmra.mrb[0].mxu0 %v6295
  %v6842 = vpop.f32.mrb[0].mxu0
  %v6843 = vadd.f32 %v6653, %v6842
  %v6844 = vpop.f32.mrb[0].mxu0
  %6845 = vmatprep.mubr.f32.mxu0 %v6472
  %6846 = vmatmul.mubr.f32.gmra.mrb[0].mxu0 %v6331
  %v6847 = vpop.f32.mrb[0].mxu0
  %v6848 = vadd.f32 %v6658, %v6847
  %v6849 = vpop.f32.mrb[0].mxu0
  %6850 = vmatprep.mubr.f32.mxu0 %v6474
  %6851 = vmatmul.mubr.f32.gmra.mrb[0].mxu0 %v6348
  %v6852 = vpop.f32.mrb[0].mxu0
  %v6853 = vadd.f32 %v6663, %v6852
  %v6854 = vpop.f32.mrb[0].mxu0
  %6855 = vdwg.mxu0
  %v6881 = vcombine.high %v6733, %v6733
  %v6883 = vunpack.c.l.s4 1983009808
  %v6884 = vunpack.c.0.s8 %v6883
  %v6885 = vlaneseq
  %v6886 = vshrl.u32 %v6885, 7
  %v6887 = vsub.s32 %v6884, %v6886
  %v6888 = vrot.slane %v6733, %v6887
  %v6890 = vunpack.c.l.s4 1983009808
  %v6891 = vunpack.c.0.s8 %v6890
  %v6892 = vlaneseq
  %v6893 = vshrl.u32 %v6892, 7
  %v6894 = vsub.s32 %v6891, %v6893
  %v6895 = vrot.slane %v6881, %v6894
  %v6896 = vcombine.high %v6888, %v6888
  %v6897 = vcombine.high %v6895, %v6895
  %v6898 = vcombine.high %v6738, %v6738
  %v6900 = vunpack.c.l.s4 1983009808
  %v6901 = vunpack.c.0.s8 %v6900
  %v6902 = vlaneseq
  %v6903 = vshrl.u32 %v6902, 7
  %v6904 = vsub.s32 %v6901, %v6903
  %v6905 = vrot.slane %v6738, %v6904
  %v6907 = vunpack.c.l.s4 1983009808
  %v6908 = vunpack.c.0.s8 %v6907
  %v6909 = vlaneseq
  %v6910 = vshrl.u32 %v6909, 7
  %v6911 = vsub.s32 %v6908, %v6910
  %v6912 = vrot.slane %v6898, %v6911
  %v6913 = vcombine.high %v6905, %v6905
  %v6914 = vcombine.high %v6912, %v6912
  %v6915 = vcombine.high %v6743, %v6743
  %v6917 = vunpack.c.l.s4 1983009808
  %v6918 = vunpack.c.0.s8 %v6917
  %v6919 = vlaneseq
  %v6920 = vshrl.u32 %v6919, 7
  %v6921 = vsub.s32 %v6918, %v6920
  %v6922 = vrot.slane %v6743, %v6921
  %v6924 = vunpack.c.l.s4 1983009808
  %v6925 = vunpack.c.0.s8 %v6924
  %v6926 = vlaneseq
  %v6927 = vshrl.u32 %v6926, 7
  %v6928 = vsub.s32 %v6925, %v6927
  %v6929 = vrot.slane %v6915, %v6928
  %v6930 = vcombine.high %v6922, %v6922
  %v6931 = vcombine.high %v6929, %v6929
  %v6932 = vcombine.high %v6748, %v6748
  %v6934 = vunpack.c.l.s4 1983009808
  %v6935 = vunpack.c.0.s8 %v6934
  %v6936 = vlaneseq
  %v6937 = vshrl.u32 %v6936, 7
  %v6938 = vsub.s32 %v6935, %v6937
  %v6939 = vrot.slane %v6748, %v6938
  %v6941 = vunpack.c.l.s4 1983009808
  %v6942 = vunpack.c.0.s8 %v6941
  %v6943 = vlaneseq
  %v6944 = vshrl.u32 %v6943, 7
  %v6945 = vsub.s32 %v6942, %v6944
  %v6946 = vrot.slane %v6932, %v6945
  %v6947 = vcombine.high %v6939, %v6939
  %v6948 = vcombine.high %v6946, %v6946
  %v6949 = vcombine.high %v6753, %v6753
  %v6951 = vunpack.c.l.s4 1983009808
  %v6952 = vunpack.c.0.s8 %v6951
  %v6953 = vlaneseq
  %v6954 = vshrl.u32 %v6953, 7
  %v6955 = vsub.s32 %v6952, %v6954
  %v6956 = vrot.slane %v6753, %v6955
  %v6958 = vunpack.c.l.s4 1983009808
  %v6959 = vunpack.c.0.s8 %v6958
  %v6960 = vlaneseq
  %v6961 = vshrl.u32 %v6960, 7
  %v6962 = vsub.s32 %v6959, %v6961
  %v6963 = vrot.slane %v6949, %v6962
  %v6964 = vcombine.high %v6956, %v6956
  %v6965 = vcombine.high %v6963, %v6963
  %v6966 = vcombine.high %v6758, %v6758
  %v6968 = vunpack.c.l.s4 1983009808
  %v6969 = vunpack.c.0.s8 %v6968
  %v6970 = vlaneseq
  %v6971 = vshrl.u32 %v6970, 7
  %v6972 = vsub.s32 %v6969, %v6971
  %v6973 = vrot.slane %v6758, %v6972
  %v6975 = vunpack.c.l.s4 1983009808
  %v6976 = vunpack.c.0.s8 %v6975
  %v6977 = vlaneseq
  %v6978 = vshrl.u32 %v6977, 7
  %v6979 = vsub.s32 %v6976, %v6978
  %v6980 = vrot.slane %v6966, %v6979
  %v6981 = vcombine.high %v6973, %v6973
  %v6982 = vcombine.high %v6980, %v6980
  %v6983 = vcombine.high %v6763, %v6763
  %v6985 = vunpack.c.l.s4 1983009808
  %v6986 = vunpack.c.0.s8 %v6985
  %v6987 = vlaneseq
  %v6988 = vshrl.u32 %v6987, 7
  %v6989 = vsub.s32 %v6986, %v6988
  %v6990 = vrot.slane %v6763, %v6989
  %v6992 = vunpack.c.l.s4 1983009808
  %v6993 = vunpack.c.0.s8 %v6992
  %v6994 = vlaneseq
  %v6995 = vshrl.u32 %v6994, 7
  %v6996 = vsub.s32 %v6993, %v6995
  %v6997 = vrot.slane %v6983, %v6996
  %v6998 = vcombine.high %v6990, %v6990
  %v6999 = vcombine.high %v6997, %v6997
  %v7000 = vcombine.high %v6768, %v6768
  %v7002 = vunpack.c.l.s4 1983009808
  %v7003 = vunpack.c.0.s8 %v7002
  %v7004 = vlaneseq
  %v7005 = vshrl.u32 %v7004, 7
  %v7006 = vsub.s32 %v7003, %v7005
  %v7007 = vrot.slane %v6768, %v7006
  %v7009 = vunpack.c.l.s4 1983009808
  %v7010 = vunpack.c.0.s8 %v7009
  %v7011 = vlaneseq
  %v7012 = vshrl.u32 %v7011, 7
  %v7013 = vsub.s32 %v7010, %v7012
  %v7014 = vrot.slane %v7000, %v7013
  %v7015 = vcombine.high %v7007, %v7007
  %v7016 = vcombine.high %v7014, %v7014
  %v7017 = vcombine.high %v6773, %v6773
  %v7019 = vunpack.c.l.s4 1983009808
  %v7020 = vunpack.c.0.s8 %v7019
  %v7021 = vlaneseq
  %v7022 = vshrl.u32 %v7021, 7
  %v7023 = vsub.s32 %v7020, %v7022
  %v7024 = vrot.slane %v6773, %v7023
  %v7026 = vunpack.c.l.s4 1983009808
  %v7027 = vunpack.c.0.s8 %v7026
  %v7028 = vlaneseq
  %v7029 = vshrl.u32 %v7028, 7
  %v7030 = vsub.s32 %v7027, %v7029
  %v7031 = vrot.slane %v7017, %v7030
  %v7032 = vcombine.high %v7024, %v7024
  %v7033 = vcombine.high %v7031, %v7031
  %v7034 = vcombine.high %v6778, %v6778
  %v7036 = vunpack.c.l.s4 1983009808
  %v7037 = vunpack.c.0.s8 %v7036
  %v7038 = vlaneseq
  %v7039 = vshrl.u32 %v7038, 7
  %v7040 = vsub.s32 %v7037, %v7039
  %v7041 = vrot.slane %v6778, %v7040
  %v7043 = vunpack.c.l.s4 1983009808
  %v7044 = vunpack.c.0.s8 %v7043
  %v7045 = vlaneseq
  %v7046 = vshrl.u32 %v7045, 7
  %v7047 = vsub.s32 %v7044, %v7046
  %v7048 = vrot.slane %v7034, %v7047
  %v7049 = vcombine.high %v7041, %v7041
  %v7050 = vcombine.high %v7048, %v7048
  %v7051 = vcombine.high %v6783, %v6783
  %v7053 = vunpack.c.l.s4 1983009808
  %v7054 = vunpack.c.0.s8 %v7053
  %v7055 = vlaneseq
  %v7056 = vshrl.u32 %v7055, 7
  %v7057 = vsub.s32 %v7054, %v7056
  %v7058 = vrot.slane %v6783, %v7057
  %v7060 = vunpack.c.l.s4 1983009808
  %v7061 = vunpack.c.0.s8 %v7060
  %v7062 = vlaneseq
  %v7063 = vshrl.u32 %v7062, 7
  %v7064 = vsub.s32 %v7061, %v7063
  %v7065 = vrot.slane %v7051, %v7064
  %v7066 = vcombine.high %v7058, %v7058
  %v7067 = vcombine.high %v7065, %v7065
  %v7068 = vcombine.high %v6788, %v6788
  %v7070 = vunpack.c.l.s4 1983009808
  %v7071 = vunpack.c.0.s8 %v7070
  %v7072 = vlaneseq
  %v7073 = vshrl.u32 %v7072, 7
  %v7074 = vsub.s32 %v7071, %v7073
  %v7075 = vrot.slane %v6788, %v7074
  %v7077 = vunpack.c.l.s4 1983009808
  %v7078 = vunpack.c.0.s8 %v7077
  %v7079 = vlaneseq
  %v7080 = vshrl.u32 %v7079, 7
  %v7081 = vsub.s32 %v7078, %v7080
  %v7082 = vrot.slane %v7068, %v7081
  %v7083 = vcombine.high %v7075, %v7075
  %v7084 = vcombine.high %v7082, %v7082
  %v7085 = vcombine.high %v6793, %v6793
  %v7087 = vunpack.c.l.s4 1983009808
  %v7088 = vunpack.c.0.s8 %v7087
  %v7089 = vlaneseq
  %v7090 = vshrl.u32 %v7089, 7
  %v7091 = vsub.s32 %v7088, %v7090
  %v7092 = vrot.slane %v6793, %v7091
  %v7094 = vunpack.c.l.s4 1983009808
  %v7095 = vunpack.c.0.s8 %v7094
  %v7096 = vlaneseq
  %v7097 = vshrl.u32 %v7096, 7
  %v7098 = vsub.s32 %v7095, %v7097
  %v7099 = vrot.slane %v7085, %v7098
  %v7100 = vcombine.high %v7092, %v7092
  %v7101 = vcombine.high %v7099, %v7099
  %v7102 = vcombine.high %v6798, %v6798
  %v7104 = vunpack.c.l.s4 1983009808
  %v7105 = vunpack.c.0.s8 %v7104
  %v7106 = vlaneseq
  %v7107 = vshrl.u32 %v7106, 7
  %v7108 = vsub.s32 %v7105, %v7107
  %v7109 = vrot.slane %v6798, %v7108
  %v7111 = vunpack.c.l.s4 1983009808
  %v7112 = vunpack.c.0.s8 %v7111
  %v7113 = vlaneseq
  %v7114 = vshrl.u32 %v7113, 7
  %v7115 = vsub.s32 %v7112, %v7114
  %v7116 = vrot.slane %v7102, %v7115
  %v7117 = vcombine.high %v7109, %v7109
  %v7118 = vcombine.high %v7116, %v7116
  %v7119 = vcombine.high %v6803, %v6803
  %v7121 = vunpack.c.l.s4 1983009808
  %v7122 = vunpack.c.0.s8 %v7121
  %v7123 = vlaneseq
  %v7124 = vshrl.u32 %v7123, 7
  %v7125 = vsub.s32 %v7122, %v7124
  %v7126 = vrot.slane %v6803, %v7125
  %v7128 = vunpack.c.l.s4 1983009808
  %v7129 = vunpack.c.0.s8 %v7128
  %v7130 = vlaneseq
  %v7131 = vshrl.u32 %v7130, 7
  %v7132 = vsub.s32 %v7129, %v7131
  %v7133 = vrot.slane %v7119, %v7132
  %v7134 = vcombine.high %v7126, %v7126
  %v7135 = vcombine.high %v7133, %v7133
  %v7136 = vcombine.high %v6808, %v6808
  %v7138 = vunpack.c.l.s4 1983009808
  %v7139 = vunpack.c.0.s8 %v7138
  %v7140 = vlaneseq
  %v7141 = vshrl.u32 %v7140, 7
  %v7142 = vsub.s32 %v7139, %v7141
  %v7143 = vrot.slane %v6808, %v7142
  %v7145 = vunpack.c.l.s4 1983009808
  %v7146 = vunpack.c.0.s8 %v7145
  %v7147 = vlaneseq
  %v7148 = vshrl.u32 %v7147, 7
  %v7149 = vsub.s32 %v7146, %v7148
  %v7150 = vrot.slane %v7136, %v7149
  %v7151 = vcombine.high %v7143, %v7143
  %v7152 = vcombine.high %v7150, %v7150
  %v7153 = vcombine.high %v6813, %v6813
  %v7155 = vunpack.c.l.s4 1983009808
  %v7156 = vunpack.c.0.s8 %v7155
  %v7157 = vlaneseq
  %v7158 = vshrl.u32 %v7157, 7
  %v7159 = vsub.s32 %v7156, %v7158
  %v7160 = vrot.slane %v6813, %v7159
  %v7162 = vunpack.c.l.s4 1983009808
  %v7163 = vunpack.c.0.s8 %v7162
  %v7164 = vlaneseq
  %v7165 = vshrl.u32 %v7164, 7
  %v7166 = vsub.s32 %v7163, %v7165
  %v7167 = vrot.slane %v7153, %v7166
  %v7168 = vcombine.high %v7160, %v7160
  %v7169 = vcombine.high %v7167, %v7167
  %v7170 = vcombine.high %v6818, %v6818
  %v7172 = vunpack.c.l.s4 1983009808
  %v7173 = vunpack.c.0.s8 %v7172
  %v7174 = vlaneseq
  %v7175 = vshrl.u32 %v7174, 7
  %v7176 = vsub.s32 %v7173, %v7175
  %v7177 = vrot.slane %v6818, %v7176
  %v7179 = vunpack.c.l.s4 1983009808
  %v7180 = vunpack.c.0.s8 %v7179
  %v7181 = vlaneseq
  %v7182 = vshrl.u32 %v7181, 7
  %v7183 = vsub.s32 %v7180, %v7182
  %v7184 = vrot.slane %v7170, %v7183
  %v7185 = vcombine.high %v7177, %v7177
  %v7186 = vcombine.high %v7184, %v7184
  %v7187 = vcombine.high %v6823, %v6823
  %v7189 = vunpack.c.l.s4 1983009808
  %v7190 = vunpack.c.0.s8 %v7189
  %v7191 = vlaneseq
  %v7192 = vshrl.u32 %v7191, 7
  %v7193 = vsub.s32 %v7190, %v7192
  %v7194 = vrot.slane %v6823, %v7193
  %v7196 = vunpack.c.l.s4 1983009808
  %v7197 = vunpack.c.0.s8 %v7196
  %v7198 = vlaneseq
  %v7199 = vshrl.u32 %v7198, 7
  %v7200 = vsub.s32 %v7197, %v7199
  %v7201 = vrot.slane %v7187, %v7200
  %v7202 = vcombine.high %v7194, %v7194
  %v7203 = vcombine.high %v7201, %v7201
  %v7204 = vcombine.high %v6828, %v6828
  %v7206 = vunpack.c.l.s4 1983009808
  %v7207 = vunpack.c.0.s8 %v7206
  %v7208 = vlaneseq
  %v7209 = vshrl.u32 %v7208, 7
  %v7210 = vsub.s32 %v7207, %v7209
  %v7211 = vrot.slane %v6828, %v7210
  %v7213 = vunpack.c.l.s4 1983009808
  %v7214 = vunpack.c.0.s8 %v7213
  %v7215 = vlaneseq
  %v7216 = vshrl.u32 %v7215, 7
  %v7217 = vsub.s32 %v7214, %v7216
  %v7218 = vrot.slane %v7204, %v7217
  %v7219 = vcombine.high %v7211, %v7211
  %v7220 = vcombine.high %v7218, %v7218
  %v7221 = vcombine.high %v6833, %v6833
  %v7223 = vunpack.c.l.s4 1983009808
  %v7224 = vunpack.c.0.s8 %v7223
  %v7225 = vlaneseq
  %v7226 = vshrl.u32 %v7225, 7
  %v7227 = vsub.s32 %v7224, %v7226
  %v7228 = vrot.slane %v6833, %v7227
  %v7230 = vunpack.c.l.s4 1983009808
  %v7231 = vunpack.c.0.s8 %v7230
  %v7232 = vlaneseq
  %v7233 = vshrl.u32 %v7232, 7
  %v7234 = vsub.s32 %v7231, %v7233
  %v7235 = vrot.slane %v7221, %v7234
  %v7236 = vcombine.high %v7228, %v7228
  %v7237 = vcombine.high %v7235, %v7235
  %v7238 = vcombine.high %v6838, %v6838
  %v7240 = vunpack.c.l.s4 1983009808
  %v7241 = vunpack.c.0.s8 %v7240
  %v7242 = vlaneseq
  %v7243 = vshrl.u32 %v7242, 7
  %v7244 = vsub.s32 %v7241, %v7243
  %v7245 = vrot.slane %v6838, %v7244
  %v7247 = vunpack.c.l.s4 1983009808
  %v7248 = vunpack.c.0.s8 %v7247
  %v7249 = vlaneseq
  %v7250 = vshrl.u32 %v7249, 7
  %v7251 = vsub.s32 %v7248, %v7250
  %v7252 = vrot.slane %v7238, %v7251
  %v7253 = vcombine.high %v7245, %v7245
  %v7254 = vcombine.high %v7252, %v7252
  %v7255 = vcombine.high %v6843, %v6843
  %v7257 = vunpack.c.l.s4 1983009808
  %v7258 = vunpack.c.0.s8 %v7257
  %v7259 = vlaneseq
  %v7260 = vshrl.u32 %v7259, 7
  %v7261 = vsub.s32 %v7258, %v7260
  %v7262 = vrot.slane %v6843, %v7261
  %v7264 = vunpack.c.l.s4 1983009808
  %v7265 = vunpack.c.0.s8 %v7264
  %v7266 = vlaneseq
  %v7267 = vshrl.u32 %v7266, 7
  %v7268 = vsub.s32 %v7265, %v7267
  %v7269 = vrot.slane %v7255, %v7268
  %v7270 = vcombine.high %v7262, %v7262
  %v7271 = vcombine.high %v7269, %v7269
  %v7272 = vcombine.high %v6848, %v6848
  %v7274 = vunpack.c.l.s4 1983009808
  %v7275 = vunpack.c.0.s8 %v7274
  %v7276 = vlaneseq
  %v7277 = vshrl.u32 %v7276, 7
  %v7278 = vsub.s32 %v7275, %v7277
  %v7279 = vrot.slane %v6848, %v7278
  %v7281 = vunpack.c.l.s4 1983009808
  %v7282 = vunpack.c.0.s8 %v7281
  %v7283 = vlaneseq
  %v7284 = vshrl.u32 %v7283, 7
  %v7285 = vsub.s32 %v7282, %v7284
  %v7286 = vrot.slane %v7272, %v7285
  %v7287 = vcombine.high %v7279, %v7279
  %v7288 = vcombine.high %v7286, %v7286
  %v7290 = vunpack.c.l.s4 1983009808
  %v7291 = vunpack.c.0.s8 %v7290
  %v7292 = vlaneseq
  %v7293 = vshrl.u32 %v7292, 7
  %v7294 = vsub.s32 %v7291, %v7293
  %v7295 = vrot.slane %v6853, %v7294
  %v7296 = vcombine.high %v7295, %v7295
  %v7297 = vcombine.low %v6888, %v6896
  %v7298 = vcombine.low %v6895, %v6897
  %v7300 = vunpack.c.l.s4 1983009808
  %v7301 = vunpack.c.0.s8 %v7300
  %v7302 = vlaneseq
  %v7303 = vshrl.u32 %v7302, 7
  %v7304 = vsub.s32 %v7301, %v7303
  %v7305 = vrot.slane %v7297, %v7304
  %v7307 = vunpack.c.l.s4 1983009808
  %v7308 = vunpack.c.0.s8 %v7307
  %v7309 = vlaneseq
  %v7310 = vshrl.u32 %v7309, 7
  %v7311 = vsub.s32 %v7308, %v7310
  %v7312 = vrot.slane %v7298, %v7311
  %v7313 = vcombine.low %v7305, %v7312
  %v7314 = vcombine.low %v6905, %v6913
  %v7316 = vunpack.c.l.s4 1983009808
  %v7317 = vunpack.c.0.s8 %v7316
  %v7318 = vlaneseq
  %v7319 = vshrl.u32 %v7318, 7
  %v7320 = vsub.s32 %v7317, %v7319
  %v7321 = vrot.slane %v7314, %v7320
  %v7322 = vcombine.low %v6914, %v6922
  %v7323 = vcombine.low %v6930, %v6929
  %v7325 = vunpack.c.l.s4 1983009808
  %v7326 = vunpack.c.0.s8 %v7325
  %v7327 = vlaneseq
  %v7328 = vshrl.u32 %v7327, 7
  %v7329 = vsub.s32 %v7326, %v7328
  %v7330 = vrot.slane %v7322, %v7329
  %v7332 = vunpack.c.l.s4 1983009808
  %v7333 = vunpack.c.0.s8 %v7332
  %v7334 = vlaneseq
  %v7335 = vshrl.u32 %v7334, 7
  %v7336 = vsub.s32 %v7333, %v7335
  %v7337 = vrot.slane %v7323, %v7336
  %v7338 = vcombine.low %v7330, %v7337
  %v7339 = vcombine.low %v6931, %v6939
  %v7341 = vunpack.c.l.s4 1983009808
  %v7342 = vunpack.c.0.s8 %v7341
  %v7343 = vlaneseq
  %v7344 = vshrl.u32 %v7343, 7
  %v7345 = vsub.s32 %v7342, %v7344
  %v7346 = vrot.slane %v7339, %v7345
  %v7347 = vcombine.low %v6946, %v6948
  %v7348 = vcombine.low %v6956, %v6964
  %v7350 = vunpack.c.l.s4 1983009808
  %v7351 = vunpack.c.0.s8 %v7350
  %v7352 = vlaneseq
  %v7353 = vshrl.u32 %v7352, 7
  %v7354 = vsub.s32 %v7351, %v7353
  %v7355 = vrot.slane %v7347, %v7354
  %v7357 = vunpack.c.l.s4 1983009808
  %v7358 = vunpack.c.0.s8 %v7357
  %v7359 = vlaneseq
  %v7360 = vshrl.u32 %v7359, 7
  %v7361 = vsub.s32 %v7358, %v7360
  %v7362 = vrot.slane %v7348, %v7361
  %v7363 = vcombine.low %v7355, %v7362
  %v7364 = vcombine.low %v6963, %v6965
  %v7366 = vunpack.c.l.s4 1983009808
  %v7367 = vunpack.c.0.s8 %v7366
  %v7368 = vlaneseq
  %v7369 = vshrl.u32 %v7368, 7
  %v7370 = vsub.s32 %v7367, %v7369
  %v7371 = vrot.slane %v7364, %v7370
  %v7372 = vcombine.low %v6981, %v6980
  %v7373 = vcombine.low %v6982, %v6990
  %v7375 = vunpack.c.l.s4 1983009808
  %v7376 = vunpack.c.0.s8 %v7375
  %v7377 = vlaneseq
  %v7378 = vshrl.u32 %v7377, 7
  %v7379 = vsub.s32 %v7376, %v7378
  %v7380 = vrot.slane %v7372, %v7379
  %v7382 = vunpack.c.l.s4 1983009808
  %v7383 = vunpack.c.0.s8 %v7382
  %v7384 = vlaneseq
  %v7385 = vshrl.u32 %v7384, 7
  %v7386 = vsub.s32 %v7383, %v7385
  %v7387 = vrot.slane %v7373, %v7386
  %v7388 = vcombine.low %v7380, %v7387
  %v7389 = vcombine.low %v6998, %v6997
  %v7391 = vunpack.c.l.s4 1983009808
  %v7392 = vunpack.c.0.s8 %v7391
  %v7393 = vlaneseq
  %v7394 = vshrl.u32 %v7393, 7
  %v7395 = vsub.s32 %v7392, %v7394
  %v7396 = vrot.slane %v7389, %v7395
  %v7397 = vcombine.low %v7007, %v7015
  %v7398 = vcombine.low %v7014, %v7016
  %v7400 = vunpack.c.l.s4 1983009808
  %v7401 = vunpack.c.0.s8 %v7400
  %v7402 = vlaneseq
  %v7403 = vshrl.u32 %v7402, 7
  %v7404 = vsub.s32 %v7401, %v7403
  %v7405 = vrot.slane %v7397, %v7404
  %v7407 = vunpack.c.l.s4 1983009808
  %v7408 = vunpack.c.0.s8 %v7407
  %v7409 = vlaneseq
  %v7410 = vshrl.u32 %v7409, 7
  %v7411 = vsub.s32 %v7408, %v7410
  %v7412 = vrot.slane %v7398, %v7411
  %v7413 = vcombine.low %v7405, %v7412
  %v7414 = vcombine.low %v7024, %v7032
  %v7416 = vunpack.c.l.s4 1983009808
  %v7417 = vunpack.c.0.s8 %v7416
  %v7418 = vlaneseq
  %v7419 = vshrl.u32 %v7418, 7
  %v7420 = vsub.s32 %v7417, %v7419
  %v7421 = vrot.slane %v7414, %v7420
  %v7422 = vcombine.low %v7033, %v7041
  %v7423 = vcombine.low %v7049, %v7048
  %v7425 = vunpack.c.l.s4 1983009808
  %v7426 = vunpack.c.0.s8 %v7425
  %v7427 = vlaneseq
  %v7428 = vshrl.u32 %v7427, 7
  %v7429 = vsub.s32 %v7426, %v7428
  %v7430 = vrot.slane %v7422, %v7429
  %v7432 = vunpack.c.l.s4 1983009808
  %v7433 = vunpack.c.0.s8 %v7432
  %v7434 = vlaneseq
  %v7435 = vshrl.u32 %v7434, 7
  %v7436 = vsub.s32 %v7433, %v7435
  %v7437 = vrot.slane %v7423, %v7436
  %v7438 = vcombine.low %v7430, %v7437
  %v7439 = vcombine.low %v7050, %v7058
  %v7441 = vunpack.c.l.s4 1983009808
  %v7442 = vunpack.c.0.s8 %v7441
  %v7443 = vlaneseq
  %v7444 = vshrl.u32 %v7443, 7
  %v7445 = vsub.s32 %v7442, %v7444
  %v7446 = vrot.slane %v7439, %v7445
  %v7447 = vcombine.low %v7065, %v7067
  %v7448 = vcombine.low %v7075, %v7083
  %v7450 = vunpack.c.l.s4 1983009808
  %v7451 = vunpack.c.0.s8 %v7450
  %v7452 = vlaneseq
  %v7453 = vshrl.u32 %v7452, 7
  %v7454 = vsub.s32 %v7451, %v7453
  %v7455 = vrot.slane %v7447, %v7454
  %v7457 = vunpack.c.l.s4 1983009808
  %v7458 = vunpack.c.0.s8 %v7457
  %v7459 = vlaneseq
  %v7460 = vshrl.u32 %v7459, 7
  %v7461 = vsub.s32 %v7458, %v7460
  %v7462 = vrot.slane %v7448, %v7461
  %v7463 = vcombine.low %v7455, %v7462
  %v7464 = vcombine.low %v7082, %v7084
  %v7466 = vunpack.c.l.s4 1983009808
  %v7467 = vunpack.c.0.s8 %v7466
  %v7468 = vlaneseq
  %v7469 = vshrl.u32 %v7468, 7
  %v7470 = vsub.s32 %v7467, %v7469
  %v7471 = vrot.slane %v7464, %v7470
  %v7472 = vcombine.low %v7100, %v7099
  %v7473 = vcombine.low %v7101, %v7109
  %v7475 = vunpack.c.l.s4 1983009808
  %v7476 = vunpack.c.0.s8 %v7475
  %v7477 = vlaneseq
  %v7478 = vshrl.u32 %v7477, 7
  %v7479 = vsub.s32 %v7476, %v7478
  %v7480 = vrot.slane %v7472, %v7479
  %v7482 = vunpack.c.l.s4 1983009808
  %v7483 = vunpack.c.0.s8 %v7482
  %v7484 = vlaneseq
  %v7485 = vshrl.u32 %v7484, 7
  %v7486 = vsub.s32 %v7483, %v7485
  %v7487 = vrot.slane %v7473, %v7486
  %v7488 = vcombine.low %v7480, %v7487
  %v7489 = vcombine.low %v7117, %v7116
  %v7491 = vunpack.c.l.s4 1983009808
  %v7492 = vunpack.c.0.s8 %v7491
  %v7493 = vlaneseq
  %v7494 = vshrl.u32 %v7493, 7
  %v7495 = vsub.s32 %v7492, %v7494
  %v7496 = vrot.slane %v7489, %v7495
  %v7497 = vcombine.low %v7126, %v7134
  %v7498 = vcombine.low %v7133, %v7135
  %v7500 = vunpack.c.l.s4 1983009808
  %v7501 = vunpack.c.0.s8 %v7500
  %v7502 = vlaneseq
  %v7503 = vshrl.u32 %v7502, 7
  %v7504 = vsub.s32 %v7501, %v7503
  %v7505 = vrot.slane %v7497, %v7504
  %v7507 = vunpack.c.l.s4 1983009808
  %v7508 = vunpack.c.0.s8 %v7507
  %v7509 = vlaneseq
  %v7510 = vshrl.u32 %v7509, 7
  %v7511 = vsub.s32 %v7508, %v7510
  %v7512 = vrot.slane %v7498, %v7511
  %v7513 = vcombine.low %v7505, %v7512
  %v7514 = vcombine.low %v7143, %v7151
  %v7516 = vunpack.c.l.s4 1983009808
  %v7517 = vunpack.c.0.s8 %v7516
  %v7518 = vlaneseq
  %v7519 = vshrl.u32 %v7518, 7
  %v7520 = vsub.s32 %v7517, %v7519
  %v7521 = vrot.slane %v7514, %v7520
  %v7522 = vcombine.low %v7152, %v7160
  %v7523 = vcombine.low %v7168, %v7167
  %v7525 = vunpack.c.l.s4 1983009808
  %v7526 = vunpack.c.0.s8 %v7525
  %v7527 = vlaneseq
  %v7528 = vshrl.u32 %v7527, 7
  %v7529 = vsub.s32 %v7526, %v7528
  %v7530 = vrot.slane %v7522, %v7529
  %v7532 = vunpack.c.l.s4 1983009808
  %v7533 = vunpack.c.0.s8 %v7532
  %v7534 = vlaneseq
  %v7535 = vshrl.u32 %v7534, 7
  %v7536 = vsub.s32 %v7533, %v7535
  %v7537 = vrot.slane %v7523, %v7536
  %v7538 = vcombine.low %v7530, %v7537
  %v7539 = vcombine.low %v7169, %v7177
  %v7541 = vunpack.c.l.s4 1983009808
  %v7542 = vunpack.c.0.s8 %v7541
  %v7543 = vlaneseq
  %v7544 = vshrl.u32 %v7543, 7
  %v7545 = vsub.s32 %v7542, %v7544
  %v7546 = vrot.slane %v7539, %v7545
  %v7547 = vcombine.low %v7184, %v7186
  %v7548 = vcombine.low %v7194, %v7202
  %v7550 = vunpack.c.l.s4 1983009808
  %v7551 = vunpack.c.0.s8 %v7550
  %v7552 = vlaneseq
  %v7553 = vshrl.u32 %v7552, 7
  %v7554 = vsub.s32 %v7551, %v7553
  %v7555 = vrot.slane %v7547, %v7554
  %v7557 = vunpack.c.l.s4 1983009808
  %v7558 = vunpack.c.0.s8 %v7557
  %v7559 = vlaneseq
  %v7560 = vshrl.u32 %v7559, 7
  %v7561 = vsub.s32 %v7558, %v7560
  %v7562 = vrot.slane %v7548, %v7561
  %v7563 = vcombine.low %v7555, %v7562
  %v7564 = vcombine.low %v7201, %v7203
  %v7566 = vunpack.c.l.s4 1983009808
  %v7567 = vunpack.c.0.s8 %v7566
  %v7568 = vlaneseq
  %v7569 = vshrl.u32 %v7568, 7
  %v7570 = vsub.s32 %v7567, %v7569
  %v7571 = vrot.slane %v7564, %v7570
  %v7572 = vcombine.low %v7219, %v7218
  %v7573 = vcombine.low %v7220, %v7228
  %v7575 = vunpack.c.l.s4 1983009808
  %v7576 = vunpack.c.0.s8 %v7575
  %v7577 = vlaneseq
  %v7578 = vshrl.u32 %v7577, 7
  %v7579 = vsub.s32 %v7576, %v7578
  %v7580 = vrot.slane %v7572, %v7579
  %v7582 = vunpack.c.l.s4 1983009808
  %v7583 = vunpack.c.0.s8 %v7582
  %v7584 = vlaneseq
  %v7585 = vshrl.u32 %v7584, 7
  %v7586 = vsub.s32 %v7583, %v7585
  %v7587 = vrot.slane %v7573, %v7586
  %v7588 = vcombine.low %v7580, %v7587
  %v7589 = vcombine.low %v7236, %v7235
  %v7591 = vunpack.c.l.s4 1983009808
  %v7592 = vunpack.c.0.s8 %v7591
  %v7593 = vlaneseq
  %v7594 = vshrl.u32 %v7593, 7
  %v7595 = vsub.s32 %v7592, %v7594
  %v7596 = vrot.slane %v7589, %v7595
  %v7622 = vunpack.c.l.s4 1983009808
  %v7623 = vunpack.c.0.s8 %v7622
  %v7624 = vlaneseq
  %v7625 = vshrl.u32 %v7624, 7
  %v7626 = vsub.s32 %v7623, %v7625
  %v7627 = vrot.slane %v6912, %v7626
  %v7628 = vcombine.low %v7321, %v7627
  %v7630 = vunpack.c.l.s4 1983009808
  %v7631 = vunpack.c.0.s8 %v7630
  %v7632 = vlaneseq
  %v7633 = vshrl.u32 %v7632, 7
  %v7634 = vsub.s32 %v7631, %v7633
  %v7635 = vrot.slane %v6947, %v7634
  %v7636 = vcombine.low %v7346, %v7635
  %v7638 = vunpack.c.l.s4 1983009808
  %v7639 = vunpack.c.0.s8 %v7638
  %v7640 = vlaneseq
  %v7641 = vshrl.u32 %v7640, 7
  %v7642 = vsub.s32 %v7639, %v7641
  %v7643 = vrot.slane %v6973, %v7642
  %v7644 = vcombine.low %v7371, %v7643
  %v7646 = vunpack.c.l.s4 1983009808
  %v7647 = vunpack.c.0.s8 %v7646
  %v7648 = vlaneseq
  %v7649 = vshrl.u32 %v7648, 7
  %v7650 = vsub.s32 %v7647, %v7649
  %v7651 = vrot.slane %v6999, %v7650
  %v7652 = vcombine.low %v7396, %v7651
  %v7654 = vunpack.c.l.s4 1983009808
  %v7655 = vunpack.c.0.s8 %v7654
  %v7656 = vlaneseq
  %v7657 = vshrl.u32 %v7656, 7
  %v7658 = vsub.s32 %v7655, %v7657
  %v7659 = vrot.slane %v7031, %v7658
  %v7660 = vcombine.low %v7421, %v7659
  %v7662 = vunpack.c.l.s4 1983009808
  %v7663 = vunpack.c.0.s8 %v7662
  %v7664 = vlaneseq
  %v7665 = vshrl.u32 %v7664, 7
  %v7666 = vsub.s32 %v7663, %v7665
  %v7667 = vrot.slane %v7066, %v7666
  %v7668 = vcombine.low %v7446, %v7667
  %v7670 = vunpack.c.l.s4 1983009808
  %v7671 = vunpack.c.0.s8 %v7670
  %v7672 = vlaneseq
  %v7673 = vshrl.u32 %v7672, 7
  %v7674 = vsub.s32 %v7671, %v7673
  %v7675 = vrot.slane %v7092, %v7674
  %v7676 = vcombine.low %v7471, %v7675
  %v7678 = vunpack.c.l.s4 1983009808
  %v7679 = vunpack.c.0.s8 %v7678
  %v7680 = vlaneseq
  %v7681 = vshrl.u32 %v7680, 7
  %v7682 = vsub.s32 %v7679, %v7681
  %v7683 = vrot.slane %v7118, %v7682
  %v7684 = vcombine.low %v7496, %v7683
  %v7686 = vunpack.c.l.s4 1983009808
  %v7687 = vunpack.c.0.s8 %v7686
  %v7688 = vlaneseq
  %v7689 = vshrl.u32 %v7688, 7
  %v7690 = vsub.s32 %v7687, %v7689
  %v7691 = vrot.slane %v7150, %v7690
  %v7692 = vcombine.low %v7521, %v7691
  %v7694 = vunpack.c.l.s4 1983009808
  %v7695 = vunpack.c.0.s8 %v7694
  %v7696 = vlaneseq
  %v7697 = vshrl.u32 %v7696, 7
  %v7698 = vsub.s32 %v7695, %v7697
  %v7699 = vrot.slane %v7185, %v7698
  %v7700 = vcombine.low %v7546, %v7699
  %v7702 = vunpack.c.l.s4 1983009808
  %v7703 = vunpack.c.0.s8 %v7702
  %v7704 = vlaneseq
  %v7705 = vshrl.u32 %v7704, 7
  %v7706 = vsub.s32 %v7703, %v7705
  %v7707 = vrot.slane %v7211, %v7706
  %v7708 = vcombine.low %v7571, %v7707
  %v7710 = vunpack.c.l.s4 1983009808
  %v7711 = vunpack.c.0.s8 %v7710
  %v7712 = vlaneseq
  %v7713 = vshrl.u32 %v7712, 7
  %v7714 = vsub.s32 %v7711, %v7713
  %v7715 = vrot.slane %v7237, %v7714
  %v7716 = vcombine.low %v7596, %v7715
  %v7717 = vrot.slane %v7313, 1
  %v7718 = vrot.slane %v7628, 1
  %v7719 = vsel %vm1811, %v7717, %v7718
  %v7720 = vrot.slane %v7338, 1
  %v7721 = vrot.slane %v7636, 1
  %v7722 = vsel %vm1811, %v7720, %v7721
  %v7723 = vrot.slane %v7363, 1
  %v7724 = vrot.slane %v7644, 1
  %v7725 = vsel %vm1811, %v7723, %v7724
  %v7726 = vrot.slane %v7388, 1
  %v7727 = vrot.slane %v7652, 1
  %v7728 = vsel %vm1811, %v7726, %v7727
  %v7729 = vrot.slane %v7413, 1
  %v7730 = vrot.slane %v7660, 1
  %v7731 = vsel %vm1811, %v7729, %v7730
  %v7732 = vrot.slane %v7438, 1
  %v7733 = vrot.slane %v7668, 1
  %v7734 = vsel %vm1811, %v7732, %v7733
  %v7735 = vrot.slane %v7463, 1
  %v7736 = vrot.slane %v7676, 1
  %v7737 = vsel %vm1811, %v7735, %v7736
  %v7738 = vrot.slane %v7488, 1
  %v7739 = vrot.slane %v7684, 1
  %v7740 = vsel %vm1811, %v7738, %v7739
  %v7741 = vrot.slane %v7513, 1
  %v7742 = vrot.slane %v7692, 1
  %v7743 = vsel %vm1811, %v7741, %v7742
  %v7744 = vrot.slane %v7538, 1
  %v7745 = vrot.slane %v7700, 1
  %v7746 = vsel %vm1811, %v7744, %v7745
  %v7747 = vrot.slane %v7563, 1
  %v7748 = vrot.slane %v7708, 1
  %v7749 = vsel %vm1811, %v7747, %v7748
  %v7750 = vrot.slane %v7588, 1
  %v7751 = vrot.slane %v7716, 1
  %v7752 = vsel %vm1811, %v7750, %v7751
  %7753 = vrot.lane.b32.xlu0 %v7719, 16
  %v7754 = vpop.permute.xlu0 %7753
  %7755 = vrot.lane.b32.xlu0 %v7718, 16
  %v7756 = vpop.permute.xlu0 %7755
  %7757 = vrot.lane.b32.xlu0 %v7722, 16
  %v7758 = vpop.permute.xlu0 %7757
  %7759 = vrot.lane.b32.xlu0 %v7721, 16
  %v7760 = vpop.permute.xlu0 %7759
  %7761 = vrot.lane.b32.xlu0 %v7725, 16
  %v7762 = vpop.permute.xlu0 %7761
  %7763 = vrot.lane.b32.xlu0 %v7724, 16
  %v7764 = vpop.permute.xlu0 %7763
  %7765 = vrot.lane.b32.xlu0 %v7728, 16
  %v7766 = vpop.permute.xlu0 %7765
  %7767 = vrot.lane.b32.xlu0 %v7727, 16
  %v7768 = vpop.permute.xlu0 %7767
  %7769 = vrot.lane.b32.xlu0 %v7731, 16
  %v7770 = vpop.permute.xlu0 %7769
  %7771 = vrot.lane.b32.xlu0 %v7730, 16
  %v7772 = vpop.permute.xlu0 %7771
  %7773 = vrot.lane.b32.xlu0 %v7734, 16
  %v7774 = vpop.permute.xlu0 %7773
  %7775 = vrot.lane.b32.xlu0 %v7733, 16
  %v7776 = vpop.permute.xlu0 %7775
  %7777 = vrot.lane.b32.xlu0 %v7737, 16
  %v7778 = vpop.permute.xlu0 %7777
  %7779 = vrot.lane.b32.xlu0 %v7736, 16
  %v7780 = vpop.permute.xlu0 %7779
  %7781 = vrot.lane.b32.xlu0 %v7740, 16
  %v7782 = vpop.permute.xlu0 %7781
  %7783 = vrot.lane.b32.xlu0 %v7739, 16
  %v7784 = vpop.permute.xlu0 %7783
  %7785 = vrot.lane.b32.xlu0 %v7743, 16
  %v7786 = vpop.permute.xlu0 %7785
  %7787 = vrot.lane.b32.xlu0 %v7742, 16
  %v7788 = vpop.permute.xlu0 %7787
  %7789 = vrot.lane.b32.xlu0 %v7746, 16
  %v7790 = vpop.permute.xlu0 %7789
  %7791 = vrot.lane.b32.xlu0 %v7745, 16
  %v7792 = vpop.permute.xlu0 %7791
  %7793 = vrot.lane.b32.xlu0 %v7749, 16
  %v7794 = vpop.permute.xlu0 %7793
  %7795 = vrot.lane.b32.xlu0 %v7748, 16
  %v7796 = vpop.permute.xlu0 %7795
  %7797 = vrot.lane.b32.xlu0 %v7752, 16
  %v7798 = vpop.permute.xlu0 %7797
  %7799 = vrot.lane.b32.xlu0 %v7751, 16
  %v7800 = vpop.permute.xlu0 %7799
  %v7825 = vcombine.low %v6896, %v6895
  %v7826 = vcombine.low %v6897, %v6905
  %v7828 = vunpack.c.l.s4 1983009808
  %v7829 = vunpack.c.0.s8 %v7828
  %v7830 = vlaneseq
  %v7831 = vshrl.u32 %v7830, 7
  %v7832 = vsub.s32 %v7829, %v7831
  %v7833 = vrot.slane %v7825, %v7832
  %v7835 = vunpack.c.l.s4 1983009808
  %v7836 = vunpack.c.0.s8 %v7835
  %v7837 = vlaneseq
  %v7838 = vshrl.u32 %v7837, 7
  %v7839 = vsub.s32 %v7836, %v7838
  %v7840 = vrot.slane %v7826, %v7839
  %v7841 = vcombine.low %v7833, %v7840
  %v7842 = vcombine.low %v6913, %v6912
  %v7844 = vunpack.c.l.s4 1983009808
  %v7845 = vunpack.c.0.s8 %v7844
  %v7846 = vlaneseq
  %v7847 = vshrl.u32 %v7846, 7
  %v7848 = vsub.s32 %v7845, %v7847
  %v7849 = vrot.slane %v7842, %v7848
  %v7850 = vcombine.low %v6922, %v6930
  %v7851 = vcombine.low %v6929, %v6931
  %v7853 = vunpack.c.l.s4 1983009808
  %v7854 = vunpack.c.0.s8 %v7853
  %v7855 = vlaneseq
  %v7856 = vshrl.u32 %v7855, 7
  %v7857 = vsub.s32 %v7854, %v7856
  %v7858 = vrot.slane %v7850, %v7857
  %v7860 = vunpack.c.l.s4 1983009808
  %v7861 = vunpack.c.0.s8 %v7860
  %v7862 = vlaneseq
  %v7863 = vshrl.u32 %v7862, 7
  %v7864 = vsub.s32 %v7861, %v7863
  %v7865 = vrot.slane %v7851, %v7864
  %v7866 = vcombine.low %v7858, %v7865
  %v7867 = vcombine.low %v6939, %v6947
  %v7869 = vunpack.c.l.s4 1983009808
  %v7870 = vunpack.c.0.s8 %v7869
  %v7871 = vlaneseq
  %v7872 = vshrl.u32 %v7871, 7
  %v7873 = vsub.s32 %v7870, %v7872
  %v7874 = vrot.slane %v7867, %v7873
  %v7875 = vcombine.low %v6948, %v6956
  %v7876 = vcombine.low %v6964, %v6963
  %v7878 = vunpack.c.l.s4 1983009808
  %v7879 = vunpack.c.0.s8 %v7878
  %v7880 = vlaneseq
  %v7881 = vshrl.u32 %v7880, 7
  %v7882 = vsub.s32 %v7879, %v7881
  %v7883 = vrot.slane %v7875, %v7882
  %v7885 = vunpack.c.l.s4 1983009808
  %v7886 = vunpack.c.0.s8 %v7885
  %v7887 = vlaneseq
  %v7888 = vshrl.u32 %v7887, 7
  %v7889 = vsub.s32 %v7886, %v7888
  %v7890 = vrot.slane %v7876, %v7889
  %v7891 = vcombine.low %v7883, %v7890
  %v7892 = vcombine.low %v6965, %v6973
  %v7894 = vunpack.c.l.s4 1983009808
  %v7895 = vunpack.c.0.s8 %v7894
  %v7896 = vlaneseq
  %v7897 = vshrl.u32 %v7896, 7
  %v7898 = vsub.s32 %v7895, %v7897
  %v7899 = vrot.slane %v7892, %v7898
  %v7900 = vcombine.low %v6980, %v6982
  %v7901 = vcombine.low %v6990, %v6998
  %v7903 = vunpack.c.l.s4 1983009808
  %v7904 = vunpack.c.0.s8 %v7903
  %v7905 = vlaneseq
  %v7906 = vshrl.u32 %v7905, 7
  %v7907 = vsub.s32 %v7904, %v7906
  %v7908 = vrot.slane %v7900, %v7907
  %v7910 = vunpack.c.l.s4 1983009808
  %v7911 = vunpack.c.0.s8 %v7910
  %v7912 = vlaneseq
  %v7913 = vshrl.u32 %v7912, 7
  %v7914 = vsub.s32 %v7911, %v7913
  %v7915 = vrot.slane %v7901, %v7914
  %v7916 = vcombine.low %v7908, %v7915
  %v7917 = vcombine.low %v6997, %v6999
  %v7919 = vunpack.c.l.s4 1983009808
  %v7920 = vunpack.c.0.s8 %v7919
  %v7921 = vlaneseq
  %v7922 = vshrl.u32 %v7921, 7
  %v7923 = vsub.s32 %v7920, %v7922
  %v7924 = vrot.slane %v7917, %v7923
  %v7925 = vcombine.low %v7015, %v7014
  %v7926 = vcombine.low %v7016, %v7024
  %v7928 = vunpack.c.l.s4 1983009808
  %v7929 = vunpack.c.0.s8 %v7928
  %v7930 = vlaneseq
  %v7931 = vshrl.u32 %v7930, 7
  %v7932 = vsub.s32 %v7929, %v7931
  %v7933 = vrot.slane %v7925, %v7932
  %v7935 = vunpack.c.l.s4 1983009808
  %v7936 = vunpack.c.0.s8 %v7935
  %v7937 = vlaneseq
  %v7938 = vshrl.u32 %v7937, 7
  %v7939 = vsub.s32 %v7936, %v7938
  %v7940 = vrot.slane %v7926, %v7939
  %v7941 = vcombine.low %v7933, %v7940
  %v7942 = vcombine.low %v7032, %v7031
  %v7944 = vunpack.c.l.s4 1983009808
  %v7945 = vunpack.c.0.s8 %v7944
  %v7946 = vlaneseq
  %v7947 = vshrl.u32 %v7946, 7
  %v7948 = vsub.s32 %v7945, %v7947
  %v7949 = vrot.slane %v7942, %v7948
  %v7950 = vcombine.low %v7041, %v7049
  %v7951 = vcombine.low %v7048, %v7050
  %v7953 = vunpack.c.l.s4 1983009808
  %v7954 = vunpack.c.0.s8 %v7953
  %v7955 = vlaneseq
  %v7956 = vshrl.u32 %v7955, 7
  %v7957 = vsub.s32 %v7954, %v7956
  %v7958 = vrot.slane %v7950, %v7957
  %v7960 = vunpack.c.l.s4 1983009808
  %v7961 = vunpack.c.0.s8 %v7960
  %v7962 = vlaneseq
  %v7963 = vshrl.u32 %v7962, 7
  %v7964 = vsub.s32 %v7961, %v7963
  %v7965 = vrot.slane %v7951, %v7964
  %v7966 = vcombine.low %v7958, %v7965
  %v7967 = vcombine.low %v7058, %v7066
  %v7969 = vunpack.c.l.s4 1983009808
  %v7970 = vunpack.c.0.s8 %v7969
  %v7971 = vlaneseq
  %v7972 = vshrl.u32 %v7971, 7
  %v7973 = vsub.s32 %v7970, %v7972
  %v7974 = vrot.slane %v7967, %v7973
  %v7975 = vcombine.low %v7067, %v7075
  %v7976 = vcombine.low %v7083, %v7082
  %v7978 = vunpack.c.l.s4 1983009808
  %v7979 = vunpack.c.0.s8 %v7978
  %v7980 = vlaneseq
  %v7981 = vshrl.u32 %v7980, 7
  %v7982 = vsub.s32 %v7979, %v7981
  %v7983 = vrot.slane %v7975, %v7982
  %v7985 = vunpack.c.l.s4 1983009808
  %v7986 = vunpack.c.0.s8 %v7985
  %v7987 = vlaneseq
  %v7988 = vshrl.u32 %v7987, 7
  %v7989 = vsub.s32 %v7986, %v7988
  %v7990 = vrot.slane %v7976, %v7989
  %v7991 = vcombine.low %v7983, %v7990
  %v7992 = vcombine.low %v7084, %v7092
  %v7994 = vunpack.c.l.s4 1983009808
  %v7995 = vunpack.c.0.s8 %v7994
  %v7996 = vlaneseq
  %v7997 = vshrl.u32 %v7996, 7
  %v7998 = vsub.s32 %v7995, %v7997
  %v7999 = vrot.slane %v7992, %v7998
  %v8000 = vcombine.low %v7099, %v7101
  %v8001 = vcombine.low %v7109, %v7117
  %v8003 = vunpack.c.l.s4 1983009808
  %v8004 = vunpack.c.0.s8 %v8003
  %v8005 = vlaneseq
  %v8006 = vshrl.u32 %v8005, 7
  %v8007 = vsub.s32 %v8004, %v8006
  %v8008 = vrot.slane %v8000, %v8007
  %v8010 = vunpack.c.l.s4 1983009808
  %v8011 = vunpack.c.0.s8 %v8010
  %v8012 = vlaneseq
  %v8013 = vshrl.u32 %v8012, 7
  %v8014 = vsub.s32 %v8011, %v8013
  %v8015 = vrot.slane %v8001, %v8014
  %v8016 = vcombine.low %v8008, %v8015
  %v8017 = vcombine.low %v7116, %v7118
  %v8019 = vunpack.c.l.s4 1983009808
  %v8020 = vunpack.c.0.s8 %v8019
  %v8021 = vlaneseq
  %v8022 = vshrl.u32 %v8021, 7
  %v8023 = vsub.s32 %v8020, %v8022
  %v8024 = vrot.slane %v8017, %v8023
  %v8025 = vcombine.low %v7134, %v7133
  %v8026 = vcombine.low %v7135, %v7143
  %v8028 = vunpack.c.l.s4 1983009808
  %v8029 = vunpack.c.0.s8 %v8028
  %v8030 = vlaneseq
  %v8031 = vshrl.u32 %v8030, 7
  %v8032 = vsub.s32 %v8029, %v8031
  %v8033 = vrot.slane %v8025, %v8032
  %v8035 = vunpack.c.l.s4 1983009808
  %v8036 = vunpack.c.0.s8 %v8035
  %v8037 = vlaneseq
  %v8038 = vshrl.u32 %v8037, 7
  %v8039 = vsub.s32 %v8036, %v8038
  %v8040 = vrot.slane %v8026, %v8039
  %v8041 = vcombine.low %v8033, %v8040
  %v8042 = vcombine.low %v7151, %v7150
  %v8044 = vunpack.c.l.s4 1983009808
  %v8045 = vunpack.c.0.s8 %v8044
  %v8046 = vlaneseq
  %v8047 = vshrl.u32 %v8046, 7
  %v8048 = vsub.s32 %v8045, %v8047
  %v8049 = vrot.slane %v8042, %v8048
  %v8050 = vcombine.low %v7160, %v7168
  %v8051 = vcombine.low %v7167, %v7169
  %v8053 = vunpack.c.l.s4 1983009808
  %v8054 = vunpack.c.0.s8 %v8053
  %v8055 = vlaneseq
  %v8056 = vshrl.u32 %v8055, 7
  %v8057 = vsub.s32 %v8054, %v8056
  %v8058 = vrot.slane %v8050, %v8057
  %v8060 = vunpack.c.l.s4 1983009808
  %v8061 = vunpack.c.0.s8 %v8060
  %v8062 = vlaneseq
  %v8063 = vshrl.u32 %v8062, 7
  %v8064 = vsub.s32 %v8061, %v8063
  %v8065 = vrot.slane %v8051, %v8064
  %v8066 = vcombine.low %v8058, %v8065
  %v8067 = vcombine.low %v7177, %v7185
  %v8069 = vunpack.c.l.s4 1983009808
  %v8070 = vunpack.c.0.s8 %v8069
  %v8071 = vlaneseq
  %v8072 = vshrl.u32 %v8071, 7
  %v8073 = vsub.s32 %v8070, %v8072
  %v8074 = vrot.slane %v8067, %v8073
  %v8075 = vcombine.low %v7186, %v7194
  %v8076 = vcombine.low %v7202, %v7201
  %v8078 = vunpack.c.l.s4 1983009808
  %v8079 = vunpack.c.0.s8 %v8078
  %v8080 = vlaneseq
  %v8081 = vshrl.u32 %v8080, 7
  %v8082 = vsub.s32 %v8079, %v8081
  %v8083 = vrot.slane %v8075, %v8082
  %v8085 = vunpack.c.l.s4 1983009808
  %v8086 = vunpack.c.0.s8 %v8085
  %v8087 = vlaneseq
  %v8088 = vshrl.u32 %v8087, 7
  %v8089 = vsub.s32 %v8086, %v8088
  %v8090 = vrot.slane %v8076, %v8089
  %v8091 = vcombine.low %v8083, %v8090
  %v8092 = vcombine.low %v7203, %v7211
  %v8094 = vunpack.c.l.s4 1983009808
  %v8095 = vunpack.c.0.s8 %v8094
  %v8096 = vlaneseq
  %v8097 = vshrl.u32 %v8096, 7
  %v8098 = vsub.s32 %v8095, %v8097
  %v8099 = vrot.slane %v8092, %v8098
  %v8100 = vcombine.low %v7218, %v7220
  %v8101 = vcombine.low %v7228, %v7236
  %v8103 = vunpack.c.l.s4 1983009808
  %v8104 = vunpack.c.0.s8 %v8103
  %v8105 = vlaneseq
  %v8106 = vshrl.u32 %v8105, 7
  %v8107 = vsub.s32 %v8104, %v8106
  %v8108 = vrot.slane %v8100, %v8107
  %v8110 = vunpack.c.l.s4 1983009808
  %v8111 = vunpack.c.0.s8 %v8110
  %v8112 = vlaneseq
  %v8113 = vshrl.u32 %v8112, 7
  %v8114 = vsub.s32 %v8111, %v8113
  %v8115 = vrot.slane %v8101, %v8114
  %v8116 = vcombine.low %v8108, %v8115
  %v8117 = vcombine.low %v7235, %v7237
  %v8119 = vunpack.c.l.s4 1983009808
  %v8120 = vunpack.c.0.s8 %v8119
  %v8121 = vlaneseq
  %v8122 = vshrl.u32 %v8121, 7
  %v8123 = vsub.s32 %v8120, %v8122
  %v8124 = vrot.slane %v8117, %v8123
  %8125 = vrot.lane.b32.xlu0 %v7841, 32
  %v8126 = vpop.permute.xlu0 %8125
  %8127 = vrot.lane.b32.xlu0 %v7849, 32
  %v8128 = vpop.permute.xlu0 %8127
  %8129 = vrot.lane.b32.xlu0 %v7866, 32
  %v8130 = vpop.permute.xlu0 %8129
  %8131 = vrot.lane.b32.xlu0 %v7874, 32
  %v8132 = vpop.permute.xlu0 %8131
  %8133 = vrot.lane.b32.xlu0 %v7891, 32
  %v8134 = vpop.permute.xlu0 %8133
  %8135 = vrot.lane.b32.xlu0 %v7899, 32
  %v8136 = vpop.permute.xlu0 %8135
  %8137 = vrot.lane.b32.xlu0 %v7916, 32
  %v8138 = vpop.permute.xlu0 %8137
  %8139 = vrot.lane.b32.xlu0 %v7924, 32
  %v8140 = vpop.permute.xlu0 %8139
  %8141 = vrot.lane.b32.xlu0 %v7941, 32
  %v8142 = vpop.permute.xlu0 %8141
  %8143 = vrot.lane.b32.xlu0 %v7949, 32
  %v8144 = vpop.permute.xlu0 %8143
  %8145 = vrot.lane.b32.xlu0 %v7966, 32
  %v8146 = vpop.permute.xlu0 %8145
  %8147 = vrot.lane.b32.xlu0 %v7974, 32
  %v8148 = vpop.permute.xlu0 %8147
  %8149 = vrot.lane.b32.xlu0 %v7991, 32
  %v8150 = vpop.permute.xlu0 %8149
  %8151 = vrot.lane.b32.xlu0 %v7999, 32
  %v8152 = vpop.permute.xlu0 %8151
  %8153 = vrot.lane.b32.xlu0 %v8016, 32
  %v8154 = vpop.permute.xlu0 %8153
  %8155 = vrot.lane.b32.xlu0 %v8024, 32
  %v8156 = vpop.permute.xlu0 %8155
  %8157 = vrot.lane.b32.xlu0 %v8041, 32
  %v8158 = vpop.permute.xlu0 %8157
  %8159 = vrot.lane.b32.xlu0 %v8049, 32
  %v8160 = vpop.permute.xlu0 %8159
  %8161 = vrot.lane.b32.xlu0 %v8066, 32
  %v8162 = vpop.permute.xlu0 %8161
  %8163 = vrot.lane.b32.xlu0 %v8074, 32
  %v8164 = vpop.permute.xlu0 %8163
  %8165 = vrot.lane.b32.xlu0 %v8091, 32
  %v8166 = vpop.permute.xlu0 %8165
  %8167 = vrot.lane.b32.xlu0 %v8099, 32
  %v8168 = vpop.permute.xlu0 %8167
  %8169 = vrot.lane.b32.xlu0 %v8116, 32
  %v8170 = vpop.permute.xlu0 %8169
  %8171 = vrot.lane.b32.xlu0 %v8124, 32
  %v8172 = vpop.permute.xlu0 %8171
  %v8197 = vsel %vm2946, %v7313, %v7754
  %v8198 = vsel %vm2946, %v7321, %v7756
  %v8199 = vsel %vm2946, %v7338, %v7758
  %v8200 = vsel %vm2946, %v7346, %v7760
  %v8201 = vsel %vm2946, %v7363, %v7762
  %v8202 = vsel %vm2946, %v7371, %v7764
  %v8203 = vsel %vm2946, %v7388, %v7766
  %v8204 = vsel %vm2946, %v7396, %v7768
  %v8205 = vsel %vm2946, %v7413, %v7770
  %v8206 = vsel %vm2946, %v7421, %v7772
  %v8207 = vsel %vm2946, %v7438, %v7774
  %v8208 = vsel %vm2946, %v7446, %v7776
  %v8209 = vsel %vm2946, %v7463, %v7778
  %v8210 = vsel %vm2946, %v7471, %v7780
  %v8211 = vsel %vm2946, %v7488, %v7782
  %v8212 = vsel %vm2946, %v7496, %v7784
  %v8213 = vsel %vm2946, %v7513, %v7786
  %v8214 = vsel %vm2946, %v7521, %v7788
  %v8215 = vsel %vm2946, %v7538, %v7790
  %v8216 = vsel %vm2946, %v7546, %v7792
  %v8217 = vsel %vm2946, %v7563, %v7794
  %v8218 = vsel %vm2946, %v7571, %v7796
  %v8219 = vsel %vm2946, %v7588, %v7798
  %v8220 = vsel %vm2946, %v7596, %v7800
  %v8221 = vsel %vm2975, %v8197, %v8126
  %v8222 = vsel %vm2975, %v8198, %v8128
  %v8223 = vsel %vm2975, %v8199, %v8130
  %v8224 = vsel %vm2975, %v8200, %v8132
  %v8225 = vsel %vm2975, %v8201, %v8134
  %v8226 = vsel %vm2975, %v8202, %v8136
  %v8227 = vsel %vm2975, %v8203, %v8138
  %v8228 = vsel %vm2975, %v8204, %v8140
  %v8229 = vsel %vm2975, %v8205, %v8142
  %v8230 = vsel %vm2975, %v8206, %v8144
  %v8231 = vsel %vm2975, %v8207, %v8146
  %v8232 = vsel %vm2975, %v8208, %v8148
  %v8233 = vsel %vm2975, %v8209, %v8150
  %v8234 = vsel %vm2975, %v8210, %v8152
  %v8235 = vsel %vm2975, %v8211, %v8154
  %v8236 = vsel %vm2975, %v8212, %v8156
  %v8237 = vsel %vm2975, %v8213, %v8158
  %v8238 = vsel %vm2975, %v8214, %v8160
  %v8239 = vsel %vm2975, %v8215, %v8162
  %v8240 = vsel %vm2975, %v8216, %v8164
  %v8241 = vsel %vm2975, %v8217, %v8166
  %v8242 = vsel %vm2975, %v8218, %v8168
  %v8243 = vsel %vm2975, %v8219, %v8170
  %v8244 = vsel %vm2975, %v8220, %v8172
  %8245 = vst.msk [vmem:[#allocation3] sm:$0xff] %vm3004, %v8221
  %vm8246 = vcmask 388096
  %8247 = vst.msk [vmem:[#allocation3 + $0x10] sm:$0xf] %vm8246, %v8222
  %8248 = vst.msk [vmem:[#allocation3 + $0x20] sm:$0xff] %vm3004, %v8223
  %8249 = vst.msk [vmem:[#allocation3 + $0x30] sm:$0xf] %vm8246, %v8224
  %8250 = vst.msk [vmem:[#allocation3 + $0x40] sm:$0xff] %vm3004, %v8225
  %8251 = vst.msk [vmem:[#allocation3 + $0x50] sm:$0xf] %vm8246, %v8226
  %8252 = vst.msk [vmem:[#allocation3 + $0x60] sm:$0xff] %vm3004, %v8227
  %8253 = vst.msk [vmem:[#allocation3 + $0x70] sm:$0xf] %vm8246, %v8228
  %8254 = vst.msk [vmem:[#allocation3 + $0x80] sm:$0xff] %vm3004, %v8229
  %8255 = vst.msk [vmem:[#allocation3 + $0x90] sm:$0xf] %vm8246, %v8230
  %8256 = vst.msk [vmem:[#allocation3 + $0xa0] sm:$0xff] %vm3004, %v8231
  %8257 = vst.msk [vmem:[#allocation3 + $0xb0] sm:$0xf] %vm8246, %v8232
  %8258 = vst.msk [vmem:[#allocation3 + $0xc0] sm:$0xff] %vm3004, %v8233
  %8259 = vst.msk [vmem:[#allocation3 + $0xd0] sm:$0xf] %vm8246, %v8234
  %8260 = vst.msk [vmem:[#allocation3 + $0xe0] sm:$0xff] %vm3004, %v8235
  %8261 = vst.msk [vmem:[#allocation3 + $0xf0] sm:$0xf] %vm8246, %v8236
  %8262 = vst.msk [vmem:[#allocation3 + $0x100] sm:$0xff] %vm3004, %v8237
  %8263 = vst.msk [vmem:[#allocation3 + $0x110] sm:$0xf] %vm8246, %v8238
  %8264 = vst.msk [vmem:[#allocation3 + $0x120] sm:$0xff] %vm3004, %v8239
  %8265 = vst.msk [vmem:[#allocation3 + $0x130] sm:$0xf] %vm8246, %v8240
  %8266 = vst.msk [vmem:[#allocation3 + $0x140] sm:$0xff] %vm3004, %v8241
  %8267 = vst.msk [vmem:[#allocation3 + $0x150] sm:$0xf] %vm8246, %v8242
  %8268 = vst.msk [vmem:[#allocation3 + $0x160] sm:$0xff] %vm3004, %v8243
  %8269 = vst.msk [vmem:[#allocation3 + $0x170] sm:$0xf] %vm8246, %v8244
  %v8270 = vcombine.low %v7245, %v7253
  %v8271 = vcombine.low %v7252, %v7254
  %v8273 = vunpack.c.l.s4 1983009808
  %v8274 = vunpack.c.0.s8 %v8273
  %v8275 = vlaneseq
  %v8276 = vshrl.u32 %v8275, 7
  %v8277 = vsub.s32 %v8274, %v8276
  %v8278 = vrot.slane %v8270, %v8277
  %v8280 = vunpack.c.l.s4 1983009808
  %v8281 = vunpack.c.0.s8 %v8280
  %v8282 = vlaneseq
  %v8283 = vshrl.u32 %v8282, 7
  %v8284 = vsub.s32 %v8281, %v8283
  %v8285 = vrot.slane %v8271, %v8284
  %v8286 = vcombine.low %v8278, %v8285
  %v8287 = vcombine.low %v7262, %v7270
  %v8289 = vunpack.c.l.s4 1983009808
  %v8290 = vunpack.c.0.s8 %v8289
  %v8291 = vlaneseq
  %v8292 = vshrl.u32 %v8291, 7
  %v8293 = vsub.s32 %v8290, %v8292
  %v8294 = vrot.slane %v8287, %v8293
  %v8298 = vunpack.c.l.s4 1983009808
  %v8299 = vunpack.c.0.s8 %v8298
  %v8300 = vlaneseq
  %v8301 = vshrl.u32 %v8300, 7
  %v8302 = vsub.s32 %v8299, %v8301
  %v8303 = vrot.slane %v7269, %v8302
  %v8304 = vcombine.low %v8294, %v8303
  %v8305 = vrot.slane %v8286, 1
  %v8306 = vrot.slane %v8304, 1
  %v8307 = vsel %vm1811, %v8305, %v8306
  %8308 = vrot.lane.b32.xlu0 %v8307, 16
  %v8309 = vpop.permute.xlu0 %8308
  %8310 = vrot.lane.b32.xlu0 %v8306, 16
  %v8311 = vpop.permute.xlu0 %8310
  %v8314 = vcombine.low %v7253, %v7252
  %v8315 = vcombine.low %v7254, %v7262
  %v8317 = vunpack.c.l.s4 1983009808
  %v8318 = vunpack.c.0.s8 %v8317
  %v8319 = vlaneseq
  %v8320 = vshrl.u32 %v8319, 7
  %v8321 = vsub.s32 %v8318, %v8320
  %v8322 = vrot.slane %v8314, %v8321
  %v8324 = vunpack.c.l.s4 1983009808
  %v8325 = vunpack.c.0.s8 %v8324
  %v8326 = vlaneseq
  %v8327 = vshrl.u32 %v8326, 7
  %v8328 = vsub.s32 %v8325, %v8327
  %v8329 = vrot.slane %v8315, %v8328
  %v8330 = vcombine.low %v8322, %v8329
  %v8331 = vcombine.low %v7270, %v7269
  %v8333 = vunpack.c.l.s4 1983009808
  %v8334 = vunpack.c.0.s8 %v8333
  %v8335 = vlaneseq
  %v8336 = vshrl.u32 %v8335, 7
  %v8337 = vsub.s32 %v8334, %v8336
  %v8338 = vrot.slane %v8331, %v8337
  %8339 = vrot.lane.b32.xlu0 %v8330, 32
  %v8340 = vpop.permute.xlu0 %8339
  %8341 = vrot.lane.b32.xlu0 %v8338, 32
  %v8342 = vpop.permute.xlu0 %8341
  %v8345 = vsel %vm2946, %v8286, %v8309
  %v8346 = vsel %vm2946, %v8294, %v8311
  %v8347 = vsel %vm2975, %v8345, %v8340
  %v8348 = vsel %vm2975, %v8346, %v8342
  %8373 = vrot.lane.b32.xlu0 %v8223, 48
  %v8374 = vpop.permute.xlu0 %8373
  %8375 = vrot.lane.b32.xlu0 %v8224, 48
  %v8376 = vpop.permute.xlu0 %8375
  %8377 = vrot.lane.b32.xlu0 %v8225, 48
  %v8378 = vpop.permute.xlu0 %8377
  %8379 = vrot.lane.b32.xlu0 %v8226, 48
  %v8380 = vpop.permute.xlu0 %8379
  %8381 = vrot.lane.b32.xlu0 %v8227, 48
  %v8382 = vpop.permute.xlu0 %8381
  %8383 = vrot.lane.b32.xlu0 %v8228, 48
  %v8384 = vpop.permute.xlu0 %8383
  %8385 = vrot.lane.b32.xlu0 %v8229, 48
  %v8386 = vpop.permute.xlu0 %8385
  %8387 = vrot.lane.b32.xlu0 %v8230, 48
  %v8388 = vpop.permute.xlu0 %8387
  %8389 = vrot.lane.b32.xlu0 %v8231, 48
  %v8390 = vpop.permute.xlu0 %8389
  %8391 = vrot.lane.b32.xlu0 %v8232, 48
  %v8392 = vpop.permute.xlu0 %8391
  %8393 = vrot.lane.b32.xlu0 %v8233, 48
  %v8394 = vpop.permute.xlu0 %8393
  %8395 = vrot.lane.b32.xlu0 %v8234, 48
  %v8396 = vpop.permute.xlu0 %8395
  %8397 = vrot.lane.b32.xlu0 %v8235, 48
  %v8398 = vpop.permute.xlu0 %8397
  %8399 = vrot.lane.b32.xlu0 %v8236, 48
  %v8400 = vpop.permute.xlu0 %8399
  %8401 = vrot.lane.b32.xlu0 %v8237, 48
  %v8402 = vpop.permute.xlu0 %8401
  %8403 = vrot.lane.b32.xlu0 %v8238, 48
  %v8404 = vpop.permute.xlu0 %8403
  %8405 = vrot.lane.b32.xlu0 %v8239, 48
  %v8406 = vpop.permute.xlu0 %8405
  %8407 = vrot.lane.b32.xlu0 %v8240, 48
  %v8408 = vpop.permute.xlu0 %8407
  %8409 = vrot.lane.b32.xlu0 %v8241, 48
  %v8410 = vpop.permute.xlu0 %8409
  %8411 = vrot.lane.b32.xlu0 %v8242, 48
  %v8412 = vpop.permute.xlu0 %8411
  %8413 = vrot.lane.b32.xlu0 %v8243, 48
  %v8414 = vpop.permute.xlu0 %8413
  %8415 = vrot.lane.b32.xlu0 %v8244, 48
  %v8416 = vpop.permute.xlu0 %8415
  %8417 = vrot.lane.b32.xlu0 %v8347, 48
  %v8418 = vpop.permute.xlu0 %8417
  %8419 = vrot.lane.b32.xlu0 %v8348, 48
  %v8420 = vpop.permute.xlu0 %8419
  %vm8445 = vcmask 785792
  %8446 = vst.msk [vmem:[#allocation3] sm:$0xff] %vm8445, %v8374
  %vm8447 = vcmask 781696
  %8448 = vst.msk [vmem:[#allocation3 + $0x10] sm:$0xf] %vm8447, %v8376
  %8449 = vst.msk [vmem:[#allocation3 + $0x20] sm:$0xff] %vm8445, %v8378
  %8450 = vst.msk [vmem:[#allocation3 + $0x30] sm:$0xf] %vm8447, %v8380
  %8451 = vst.msk [vmem:[#allocation3 + $0x40] sm:$0xff] %vm8445, %v8382
  %8452 = vst.msk [vmem:[#allocation3 + $0x50] sm:$0xf] %vm8447, %v8384
  %8453 = vst.msk [vmem:[#allocation3 + $0x60] sm:$0xff] %vm8445, %v8386
  %8454 = vst.msk [vmem:[#allocation3 + $0x70] sm:$0xf] %vm8447, %v8388
  %8455 = vst.msk [vmem:[#allocation3 + $0x80] sm:$0xff] %vm8445, %v8390
  %8456 = vst.msk [vmem:[#allocation3 + $0x90] sm:$0xf] %vm8447, %v8392
  %8457 = vst.msk [vmem:[#allocation3 + $0xa0] sm:$0xff] %vm8445, %v8394
  %8458 = vst.msk [vmem:[#allocation3 + $0xb0] sm:$0xf] %vm8447, %v8396
  %8459 = vst.msk [vmem:[#allocation3 + $0xc0] sm:$0xff] %vm8445, %v8398
  %8460 = vst.msk [vmem:[#allocation3 + $0xd0] sm:$0xf] %vm8447, %v8400
  %8461 = vst.msk [vmem:[#allocation3 + $0xe0] sm:$0xff] %vm8445, %v8402
  %8462 = vst.msk [vmem:[#allocation3 + $0xf0] sm:$0xf] %vm8447, %v8404
  %8463 = vst.msk [vmem:[#allocation3 + $0x100] sm:$0xff] %vm8445, %v8406
  %8464 = vst.msk [vmem:[#allocation3 + $0x110] sm:$0xf] %vm8447, %v8408
  %8465 = vst.msk [vmem:[#allocation3 + $0x120] sm:$0xff] %vm8445, %v8410
  %8466 = vst.msk [vmem:[#allocation3 + $0x130] sm:$0xf] %vm8447, %v8412
  %8467 = vst.msk [vmem:[#allocation3 + $0x140] sm:$0xff] %vm8445, %v8414
  %8468 = vst.msk [vmem:[#allocation3 + $0x150] sm:$0xf] %vm8447, %v8416
  %8469 = vst.msk [vmem:[#allocation3 + $0x160] sm:$0xff] %vm8445, %v8418
  %8470 = vst.msk [vmem:[#allocation3 + $0x170] sm:$0xf] %vm8447, %v8420
  %v8471 = vcombine.low %v7271, %v7279
  %v8472 = vcombine.low %v7287, %v7286
  %v8474 = vunpack.c.l.s4 1983009808
  %v8475 = vunpack.c.0.s8 %v8474
  %v8476 = vlaneseq
  %v8477 = vshrl.u32 %v8476, 7
  %v8478 = vsub.s32 %v8475, %v8477
  %v8479 = vrot.slane %v8471, %v8478
  %v8481 = vunpack.c.l.s4 1983009808
  %v8482 = vunpack.c.0.s8 %v8481
  %v8483 = vlaneseq
  %v8484 = vshrl.u32 %v8483, 7
  %v8485 = vsub.s32 %v8482, %v8484
  %v8486 = vrot.slane %v8472, %v8485
  %v8487 = vcombine.low %v8479, %v8486
  %v8488 = vcombine.low %v7288, %v7295
  %v8490 = vunpack.c.l.s4 1983009808
  %v8491 = vunpack.c.0.s8 %v8490
  %v8492 = vlaneseq
  %v8493 = vshrl.u32 %v8492, 7
  %v8494 = vsub.s32 %v8491, %v8493
  %v8495 = vrot.slane %v8488, %v8494
  %v8499 = vunpack.c.l.s4 1983009808
  %v8500 = vunpack.c.0.s8 %v8499
  %v8501 = vlaneseq
  %v8502 = vshrl.u32 %v8501, 7
  %v8503 = vsub.s32 %v8500, %v8502
  %v8504 = vrot.slane %v7296, %v8503
  %v8505 = vcombine.low %v8495, %v8504
  %v8506 = vrot.slane %v8487, 1
  %v8507 = vrot.slane %v8505, 1
  %v8508 = vsel %vm1811, %v8506, %v8507
  %8509 = vrot.lane.b32.xlu0 %v8508, 16
  %v8510 = vpop.permute.xlu0 %8509
  %8511 = vrot.lane.b32.xlu0 %v8507, 16
  %v8512 = vpop.permute.xlu0 %8511
  %v8515 = vcombine.low %v7279, %v7287
  %v8516 = vcombine.low %v7286, %v7288
  %v8518 = vunpack.c.l.s4 1983009808
  %v8519 = vunpack.c.0.s8 %v8518
  %v8520 = vlaneseq
  %v8521 = vshrl.u32 %v8520, 7
  %v8522 = vsub.s32 %v8519, %v8521
  %v8523 = vrot.slane %v8515, %v8522
  %v8525 = vunpack.c.l.s4 1983009808
  %v8526 = vunpack.c.0.s8 %v8525
  %v8527 = vlaneseq
  %v8528 = vshrl.u32 %v8527, 7
  %v8529 = vsub.s32 %v8526, %v8528
  %v8530 = vrot.slane %v8516, %v8529
  %v8531 = vcombine.low %v8523, %v8530
  %v8532 = vcombine.low %v7295, %v7296
  %v8534 = vunpack.c.l.s4 1983009808
  %v8535 = vunpack.c.0.s8 %v8534
  %v8536 = vlaneseq
  %v8537 = vshrl.u32 %v8536, 7
  %v8538 = vsub.s32 %v8535, %v8537
  %v8539 = vrot.slane %v8532, %v8538
  %8540 = vrot.lane.b32.xlu0 %v8531, 32
  %v8541 = vpop.permute.xlu0 %8540
  %8542 = vrot.lane.b32.xlu0 %v8539, 32
  %v8543 = vpop.permute.xlu0 %8542
  %v8546 = vsel %vm2946, %v8487, %v8510
  %v8547 = vsel %vm2946, %v8495, %v8512
  %v8548 = vsel %vm2975, %v8546, %v8541
  %v8549 = vsel %vm2975, %v8547, %v8543
  %8552 = vrot.lane.b32.xlu0 %v8225, 96
  %v8553 = vpop.permute.xlu0 %8552
  %8554 = vrot.lane.b32.xlu0 %v8226, 96
  %v8555 = vpop.permute.xlu0 %8554
  %8556 = vrot.lane.b32.xlu0 %v8227, 96
  %v8557 = vpop.permute.xlu0 %8556
  %8558 = vrot.lane.b32.xlu0 %v8228, 96
  %v8559 = vpop.permute.xlu0 %8558
  %8560 = vrot.lane.b32.xlu0 %v8229, 96
  %v8561 = vpop.permute.xlu0 %8560
  %8562 = vrot.lane.b32.xlu0 %v8230, 96
  %v8563 = vpop.permute.xlu0 %8562
  %8564 = vrot.lane.b32.xlu0 %v8231, 96
  %v8565 = vpop.permute.xlu0 %8564
  %8566 = vrot.lane.b32.xlu0 %v8232, 96
  %v8567 = vpop.permute.xlu0 %8566
  %8568 = vrot.lane.b32.xlu0 %v8233, 96
  %v8569 = vpop.permute.xlu0 %8568
  %8570 = vrot.lane.b32.xlu0 %v8234, 96
  %v8571 = vpop.permute.xlu0 %8570
  %8572 = vrot.lane.b32.xlu0 %v8235, 96
  %v8573 = vpop.permute.xlu0 %8572
  %8574 = vrot.lane.b32.xlu0 %v8236, 96
  %v8575 = vpop.permute.xlu0 %8574
  %8576 = vrot.lane.b32.xlu0 %v8237, 96
  %v8577 = vpop.permute.xlu0 %8576
  %8578 = vrot.lane.b32.xlu0 %v8238, 96
  %v8579 = vpop.permute.xlu0 %8578
  %8580 = vrot.lane.b32.xlu0 %v8239, 96
  %v8581 = vpop.permute.xlu0 %8580
  %8582 = vrot.lane.b32.xlu0 %v8240, 96
  %v8583 = vpop.permute.xlu0 %8582
  %8584 = vrot.lane.b32.xlu0 %v8241, 96
  %v8585 = vpop.permute.xlu0 %8584
  %8586 = vrot.lane.b32.xlu0 %v8242, 96
  %v8587 = vpop.permute.xlu0 %8586
  %8588 = vrot.lane.b32.xlu0 %v8243, 96
  %v8589 = vpop.permute.xlu0 %8588
  %8590 = vrot.lane.b32.xlu0 %v8244, 96
  %v8591 = vpop.permute.xlu0 %8590
  %8592 = vrot.lane.b32.xlu0 %v8347, 96
  %v8593 = vpop.permute.xlu0 %8592
  %8594 = vrot.lane.b32.xlu0 %v8348, 96
  %v8595 = vpop.permute.xlu0 %8594
  %8596 = vrot.lane.b32.xlu0 %v8548, 96
  %v8597 = vpop.permute.xlu0 %8596
  %8598 = vrot.lane.b32.xlu0 %v8549, 96
  %v8599 = vpop.permute.xlu0 %8598
  %vm8624 = vcmask 1048320
  %8625 = vst.msk [vmem:[#allocation3] sm:$0xff] %vm8624, %v8553
  %8626 = vst.msk [vmem:[#allocation3 + $0x8] sm:$0xff] %vm2946, %v8553
  %vm8627 = vcmask 1044224
  %8628 = vst.msk [vmem:[#allocation3 + $0x10] sm:$0xf] %vm8627, %v8555
  %vm8629 = vcmask 125952
  %8630 = vst.msk [vmem:[#allocation3 + $0x18] sm:$0xf] %vm8629, %v8555
  %8631 = vst.msk [vmem:[#allocation3 + $0x20] sm:$0xff] %vm8624, %v8557
  %8632 = vst.msk [vmem:[#allocation3 + $0x28] sm:$0xff] %vm2946, %v8557
  %8633 = vst.msk [vmem:[#allocation3 + $0x30] sm:$0xf] %vm8627, %v8559
  %8634 = vst.msk [vmem:[#allocation3 + $0x38] sm:$0xf] %vm8629, %v8559
  %8635 = vst.msk [vmem:[#allocation3 + $0x40] sm:$0xff] %vm8624, %v8561
  %8636 = vst.msk [vmem:[#allocation3 + $0x48] sm:$0xff] %vm2946, %v8561
  %8637 = vst.msk [vmem:[#allocation3 + $0x50] sm:$0xf] %vm8627, %v8563
  %8638 = vst.msk [vmem:[#allocation3 + $0x58] sm:$0xf] %vm8629, %v8563
  %8639 = vst.msk [vmem:[#allocation3 + $0x60] sm:$0xff] %vm8624, %v8565
  %8640 = vst.msk [vmem:[#allocation3 + $0x68] sm:$0xff] %vm2946, %v8565
  %8641 = vst.msk [vmem:[#allocation3 + $0x70] sm:$0xf] %vm8627, %v8567
  %8642 = vst.msk [vmem:[#allocation3 + $0x78] sm:$0xf] %vm8629, %v8567
  %8643 = vst.msk [vmem:[#allocation3 + $0x80] sm:$0xff] %vm8624, %v8569
  %8644 = vst.msk [vmem:[#allocation3 + $0x88] sm:$0xff] %vm2946, %v8569
  %8645 = vst.msk [vmem:[#allocation3 + $0x90] sm:$0xf] %vm8627, %v8571
  %8646 = vst.msk [vmem:[#allocation3 + $0x98] sm:$0xf] %vm8629, %v8571
  %8647 = vst.msk [vmem:[#allocation3 + $0xa0] sm:$0xff] %vm8624, %v8573
  %8648 = vst.msk [vmem:[#allocation3 + $0xa8] sm:$0xff] %vm2946, %v8573
  %8649 = vst.msk [vmem:[#allocation3 + $0xb0] sm:$0xf] %vm8627, %v8575
  %8650 = vst.msk [vmem:[#allocation3 + $0xb8] sm:$0xf] %vm8629, %v8575
  %8651 = vst.msk [vmem:[#allocation3 + $0xc0] sm:$0xff] %vm8624, %v8577
  %8652 = vst.msk [vmem:[#allocation3 + $0xc8] sm:$0xff] %vm2946, %v8577
  %8653 = vst.msk [vmem:[#allocation3 + $0xd0] sm:$0xf] %vm8627, %v8579
  %8654 = vst.msk [vmem:[#allocation3 + $0xd8] sm:$0xf] %vm8629, %v8579
  %8655 = vst.msk [vmem:[#allocation3 + $0xe0] sm:$0xff] %vm8624, %v8581
  %8656 = vst.msk [vmem:[#allocation3 + $0xe8] sm:$0xff] %vm2946, %v8581
  %8657 = vst.msk [vmem:[#allocation3 + $0xf0] sm:$0xf] %vm8627, %v8583
  %8658 = vst.msk [vmem:[#allocation3 + $0xf8] sm:$0xf] %vm8629, %v8583
  %8659 = vst.msk [vmem:[#allocation3 + $0x100] sm:$0xff] %vm8624, %v8585
  %8660 = vst.msk [vmem:[#allocation3 + $0x108] sm:$0xff] %vm2946, %v8585
  %8661 = vst.msk [vmem:[#allocation3 + $0x110] sm:$0xf] %vm8627, %v8587
  %8662 = vst.msk [vmem:[#allocation3 + $0x118] sm:$0xf] %vm8629, %v8587
  %8663 = vst.msk [vmem:[#allocation3 + $0x120] sm:$0xff] %vm8624, %v8589
  %8664 = vst.msk [vmem:[#allocation3 + $0x128] sm:$0xff] %vm2946, %v8589
  %8665 = vst.msk [vmem:[#allocation3 + $0x130] sm:$0xf] %vm8627, %v8591
  %8666 = vst.msk [vmem:[#allocation3 + $0x138] sm:$0xf] %vm8629, %v8591
  %8667 = vst.msk [vmem:[#allocation3 + $0x140] sm:$0xff] %vm8624, %v8593
  %8668 = vst.msk [vmem:[#allocation3 + $0x148] sm:$0xff] %vm2946, %v8593
  %8669 = vst.msk [vmem:[#allocation3 + $0x150] sm:$0xf] %vm8627, %v8595
  %8670 = vst.msk [vmem:[#allocation3 + $0x158] sm:$0xf] %vm8629, %v8595
  %8671 = vst.msk [vmem:[#allocation3 + $0x160] sm:$0xff] %vm8624, %v8597
  %8672 = vst.msk [vmem:[#allocation3 + $0x168] sm:$0xff] %vm2946, %v8597
  %8673 = vst.msk [vmem:[#allocation3 + $0x170] sm:$0xf] %vm8627, %v8599
  %8674 = vst.msk [vmem:[#allocation3 + $0x178] sm:$0xf] %vm8629, %v8599
  %v8675 = vld [vmem:[#allocation3] sm:$0xff]
  %v8676 = vld [vmem:[#allocation3 + $0x8] sm:$0xff]
  %v8677 = vld [vmem:[#allocation3 + $0x10] sm:$0xf]
  %v8678 = vld [vmem:[#allocation3 + $0x18] sm:$0xf]
  %v8679 = vld [vmem:[#allocation3 + $0x20] sm:$0xff]
  %v8680 = vld [vmem:[#allocation3 + $0x28] sm:$0xff]
  %v8681 = vld [vmem:[#allocation3 + $0x30] sm:$0xf]
  %v8682 = vld [vmem:[#allocation3 + $0x38] sm:$0xf]
  %v8683 = vld [vmem:[#allocation3 + $0x40] sm:$0xff]
  %v8684 = vld [vmem:[#allocation3 + $0x48] sm:$0xff]
  %v8685 = vld [vmem:[#allocation3 + $0x50] sm:$0xf]
  %v8686 = vld [vmem:[#allocation3 + $0x58] sm:$0xf]
  %v8687 = vld [vmem:[#allocation3 + $0x60] sm:$0xff]
  %v8688 = vld [vmem:[#allocation3 + $0x68] sm:$0xff]
  %v8689 = vld [vmem:[#allocation3 + $0x70] sm:$0xf]
  %v8690 = vld [vmem:[#allocation3 + $0x78] sm:$0xf]
  %v8691 = vld [vmem:[#allocation3 + $0x80] sm:$0xff]
  %v8692 = vld [vmem:[#allocation3 + $0x88] sm:$0xff]
  %v8693 = vld [vmem:[#allocation3 + $0x90] sm:$0xf]
  %v8694 = vld [vmem:[#allocation3 + $0x98] sm:$0xf]
  %v8695 = vld [vmem:[#allocation3 + $0xa0] sm:$0xff]
  %v8696 = vld [vmem:[#allocation3 + $0xa8] sm:$0xff]
  %v8697 = vld [vmem:[#allocation3 + $0xb0] sm:$0xf]
  %v8698 = vld [vmem:[#allocation3 + $0xb8] sm:$0xf]
  %v8699 = vld [vmem:[#allocation3 + $0xc0] sm:$0xff]
  %v8700 = vld [vmem:[#allocation3 + $0xc8] sm:$0xff]
  %v8701 = vld [vmem:[#allocation3 + $0xd0] sm:$0xf]
  %v8702 = vld [vmem:[#allocation3 + $0xd8] sm:$0xf]
  %v8703 = vld [vmem:[#allocation3 + $0xe0] sm:$0xff]
  %v8704 = vld [vmem:[#allocation3 + $0xe8] sm:$0xff]
  %v8705 = vld [vmem:[#allocation3 + $0xf0] sm:$0xf]
  %v8706 = vld [vmem:[#allocation3 + $0xf8] sm:$0xf]
  %v8707 = vld [vmem:[#allocation3 + $0x100] sm:$0xff]
  %v8708 = vld [vmem:[#allocation3 + $0x108] sm:$0xff]
  %v8709 = vld [vmem:[#allocation3 + $0x110] sm:$0xf]
  %v8710 = vld [vmem:[#allocation3 + $0x118] sm:$0xf]
  %v8711 = vld [vmem:[#allocation3 + $0x120] sm:$0xff]
  %v8712 = vld [vmem:[#allocation3 + $0x128] sm:$0xff]
  %v8713 = vld [vmem:[#allocation3 + $0x130] sm:$0xf]
  %v8714 = vld [vmem:[#allocation3 + $0x138] sm:$0xf]
  %v8715 = vld [vmem:[#allocation3 + $0x140] sm:$0xff]
  %v8716 = vld [vmem:[#allocation3 + $0x148] sm:$0xff]
  %v8717 = vld [vmem:[#allocation3 + $0x150] sm:$0xf]
  %v8718 = vld [vmem:[#allocation3 + $0x158] sm:$0xf]
  %v8719 = vld [vmem:[#allocation3 + $0x160] sm:$0xff]
  %v8720 = vld [vmem:[#allocation3 + $0x168] sm:$0xff]
  %v8721 = vld [vmem:[#allocation3 + $0x170] sm:$0xf]
  %v8722 = vld [vmem:[#allocation3 + $0x178] sm:$0xf]
  %v8771 = vcombine.low %v8675, %v8676
  %v8772 = vcombine.high %v8675, %v8676
  %v8773 = vcombine.low %v8677, %v8678
  %v8774 = vcombine.low %v8679, %v8680
  %v8775 = vcombine.high %v8679, %v8680
  %v8776 = vcombine.low %v8681, %v8682
  %v8777 = vcombine.low %v8683, %v8684
  %v8778 = vcombine.high %v8683, %v8684
  %v8779 = vcombine.low %v8685, %v8686
  %v8780 = vcombine.low %v8687, %v8688
  %v8781 = vcombine.high %v8687, %v8688
  %v8782 = vcombine.low %v8689, %v8690
  %v8783 = vcombine.low %v8691, %v8692
  %v8784 = vcombine.high %v8691, %v8692
  %v8785 = vcombine.low %v8693, %v8694
  %v8786 = vcombine.low %v8695, %v8696
  %v8787 = vcombine.high %v8695, %v8696
  %v8788 = vcombine.low %v8697, %v8698
  %v8789 = vcombine.low %v8699, %v8700
  %v8790 = vcombine.high %v8699, %v8700
  %v8791 = vcombine.low %v8701, %v8702
  %v8792 = vcombine.low %v8703, %v8704
  %v8793 = vcombine.high %v8703, %v8704
  %v8794 = vcombine.low %v8705, %v8706
  %v8795 = vcombine.low %v8707, %v8708
  %v8796 = vcombine.high %v8707, %v8708
  %v8797 = vcombine.low %v8709, %v8710
  %v8798 = vcombine.low %v8711, %v8712
  %v8799 = vcombine.high %v8711, %v8712
  %v8800 = vcombine.low %v8713, %v8714
  %v8801 = vcombine.low %v8715, %v8716
  %v8802 = vcombine.high %v8715, %v8716
  %v8803 = vcombine.low %v8717, %v8718
  %v8804 = vcombine.low %v8719, %v8720
  %v8805 = vcombine.high %v8719, %v8720
  %v8806 = vcombine.low %v8721, %v8722
  %v8807 = vld [vmem:[%s3] sm:$0xff]
  %v8808 = vld [vmem:[%s3 + $0x8] sm:$0xff]
  %v8809 = vld [vmem:[%s3 + $0x10] sm:$0xff]
  %v8810 = vld [vmem:[%s3 + $0x18] sm:$0xff]
  %v8811 = vld [vmem:[%s3 + $0x20] sm:$0xff]
  %v8812 = vld [vmem:[%s3 + $0x28] sm:$0xff]
  %v8813 = vld [vmem:[%s3 + $0x30] sm:$0xff]
  %v8814 = vld [vmem:[%s3 + $0x38] sm:$0xff]
  %v8815 = vld [vmem:[%s3 + $0x40] sm:$0xff]
  %v8816 = vld [vmem:[%s3 + $0x48] sm:$0xff]
  %v8817 = vld [vmem:[%s3 + $0x50] sm:$0xff]
  %v8818 = vld [vmem:[%s3 + $0x58] sm:$0xff]
  %v8819 = vld [vmem:[%s3 + $0x60] sm:$0xff]
  %v8820 = vld [vmem:[%s3 + $0x68] sm:$0xff]
  %v8821 = vld [vmem:[%s3 + $0x70] sm:$0xff]
  %v8822 = vld [vmem:[%s3 + $0x78] sm:$0xff]
  %v8823 = vld [vmem:[%s3 + $0x80] sm:$0xff]
  %v8824 = vld [vmem:[%s3 + $0x88] sm:$0xff]
  %v8825 = vcombine.low %v8771, %v8772
  %v8826 = vcombine.high %v8771, %v8772
  %v8827 = vcombine.low %v8773, %v8774
  %v8828 = vcombine.high %v8773, %v8774
  %v8829 = vcombine.low %v8775, %v8776
  %v8830 = vcombine.high %v8775, %v8776
  %v8831 = vcombine.low %v8777, %v8778
  %v8832 = vcombine.high %v8777, %v8778
  %v8833 = vcombine.low %v8779, %v8780
  %v8834 = vcombine.high %v8779, %v8780
  %v8835 = vcombine.low %v8781, %v8782
  %v8836 = vcombine.high %v8781, %v8782
  %v8837 = vcombine.low %v8783, %v8784
  %v8838 = vcombine.high %v8783, %v8784
  %v8839 = vcombine.low %v8785, %v8786
  %v8840 = vcombine.high %v8785, %v8786
  %v8841 = vcombine.low %v8787, %v8788
  %v8842 = vcombine.high %v8787, %v8788
  %v8843 = vcombine.low %v8789, %v8790
  %v8844 = vcombine.high %v8789, %v8790
  %v8845 = vcombine.low %v8791, %v8792
  %v8846 = vcombine.high %v8791, %v8792
  %v8847 = vcombine.low %v8793, %v8794
  %v8848 = vcombine.high %v8793, %v8794
  %v8849 = vcombine.low %v8795, %v8796
  %v8850 = vcombine.high %v8795, %v8796
  %v8851 = vcombine.low %v8797, %v8798
  %v8852 = vcombine.high %v8797, %v8798
  %v8853 = vcombine.low %v8799, %v8800
  %v8854 = vcombine.high %v8799, %v8800
  %v8855 = vcombine.low %v8801, %v8802
  %v8856 = vcombine.high %v8801, %v8802
  %v8857 = vcombine.low %v8803, %v8804
  %v8858 = vcombine.high %v8803, %v8804
  %v8859 = vcombine.low %v8805, %v8806
  %v8860 = vcombine.high %v8805, %v8806
  %v8879 = vsel %vm2946, %v8826, 0
  %v8881 = vsel %vm2946, %v8828, 0
  %v8883 = vsel %vm2946, %v8830, 0
  %v8885 = vsel %vm2946, %v8832, 0
  %v8887 = vsel %vm2946, %v8834, 0
  %v8889 = vsel %vm2946, %v8836, 0
  %v8891 = vsel %vm2946, %v8838, 0
  %v8893 = vsel %vm2946, %v8840, 0
  %v8895 = vsel %vm2946, %v8842, 0
  %v8897 = vsel %vm2946, %v8844, 0
  %v8899 = vsel %vm2946, %v8846, 0
  %v8901 = vsel %vm2946, %v8848, 0
  %v8903 = vsel %vm2946, %v8850, 0
  %v8905 = vsel %vm2946, %v8852, 0
  %v8907 = vsel %vm2946, %v8854, 0
  %v8909 = vsel %vm2946, %v8856, 0
  %v8911 = vsel %vm2946, %v8858, 0
  %v8913 = vsel %vm2946, %v8860, 0
  %8915 = vmatprep.subr.mxu0 0.0
  %8916 = vmatpush1.msra.mxu0 %v8807
  %8917 = vmatprep.subr.mxu0 0.0
  %8918 = vmatpush1.msra.mxu0 %v8808
  %8919 = vmatprep.subr.mxu0 0.0
  %8920 = vmatpush1.msra.mxu0 %v8809
  %8921 = vmatprep.subr.mxu0 0.0
  %8922 = vmatpush1.msra.mxu0 %v8810
  %8923 = vmatprep.subr.mxu0 0.0
  %8924 = vmatpush1.msra.mxu0 %v8811
  %8925 = vmatprep.subr.mxu0 0.0
  %8926 = vmatpush1.msra.mxu0 %v8812
  %8927 = vmatprep.subr.mxu0 0.0
  %8928 = vmatpush1.msra.mxu0 %v8813
  %8929 = vmatprep.subr.mxu0 0.0
  %8930 = vmatpush1.msra.mxu0 %v8814
  %8931 = vmatprep.subr.mxu0 0.0
  %8932 = vmatpush1.msra.mxu0 %v8815
  %8933 = vmatprep.subr.mxu0 0.0
  %8934 = vmatpush1.msra.mxu0 %v8816
  %8935 = vmatprep.subr.mxu0 0.0
  %8936 = vmatpush1.msra.mxu0 %v8817
  %8937 = vmatprep.subr.mxu0 0.0
  %8938 = vmatpush1.msra.mxu0 %v8818
  %8939 = vmatprep.subr.mxu0 0.0
  %8940 = vmatpush1.msra.mxu0 %v8819
  %8941 = vmatprep.subr.mxu0 0.0
  %8942 = vmatpush1.msra.mxu0 %v8820
  %8943 = vmatprep.subr.mxu0 0.0
  %8944 = vmatpush1.msra.mxu0 %v8821
  %8945 = vmatprep.subr.mxu0 0.0
  %8946 = vmatpush1.msra.mxu0 %v8822
  %8947 = vmatprep.subr.mxu0 0.0
  %8948 = vmatpush1.msra.mxu0 %v8823
  %8949 = vmatprep.subr.mxu0 0.0
  %8950 = vmatpush1.msra.mxu0 %v8824
  %8951 = vmatprep.subr.mxu0 0.0
  %8952 = vmatpush1.msra.mxu0 0.0
  %8953 = vmatprep.subr.mxu0 0.0
  %8954 = vmatpush1.msra.mxu0 0.0
  %8955 = vmatprep.subr.mxu0 0.0
  %8956 = vmatpush1.msra.mxu0 0.0
  %8957 = vmatprep.subr.mxu0 0.0
  %8958 = vmatpush1.msra.mxu0 0.0
  %8959 = vmatprep.subr.mxu0 0.0
  %8960 = vmatpush1.msra.mxu0 0.0
  %8961 = vmatprep.subr.mxu0 0.0
  %8962 = vmatpush1.msra.mxu0 0.0
  %8963 = vmatprep.subr.mxu0 0.0
  %8964 = vmatpush1.msra.mxu0 0.0
  %8965 = vmatprep.subr.mxu0 0.0
  %8966 = vmatpush1.msra.mxu0 0.0
  %8967 = vmatprep.subr.mxu0 0.0
  %8968 = vmatpush1.msra.mxu0 0.0
  %8969 = vmatprep.subr.mxu0 0.0
  %8970 = vmatpush1.msra.mxu0 0.0
  %8971 = vmatprep.subr.mxu0 0.0
  %8972 = vmatpush1.msra.mxu0 0.0
  %8973 = vmatprep.subr.mxu0 0.0
  %8974 = vmatpush1.msra.mxu0 0.0
  %8975 = vmatprep.subr.mxu0 0.0
  %8976 = vmatpush1.msra.mxu0 0.0
  %8977 = vmatprep.subr.mxu0 0.0
  %8978 = vmatpush1.msra.mxu0 0.0
  %8979 = vmatprep.mubr.f32.mxu0 %v8879
  %8980 = vmatmul.mubr.f32.gmra.mrb[0].mxu0 %v8825
  %v8981 = vpop.f32.mrb[0].mxu0
  %v8982 = vadd.f32 0.0, %v8981
  %v8983 = vpop.f32.mrb[0].mxu0
  %8984 = vmatprep.mubr.f32.mxu0 %v8881
  %8985 = vmatmul.mubr.f32.gmra.mrb[0].mxu0 %v8827
  %v8986 = vpop.f32.mrb[0].mxu0
  %v8987 = vadd.f32 0.0, %v8986
  %v8988 = vpop.f32.mrb[0].mxu0
  %8989 = vmatprep.mubr.f32.mxu0 %v8883
  %8990 = vmatmul.mubr.f32.gmra.mrb[0].mxu0 %v8829
  %v8991 = vpop.f32.mrb[0].mxu0
  %v8992 = vadd.f32 0.0, %v8991
  %v8993 = vpop.f32.mrb[0].mxu0
  %8994 = vmatprep.mubr.f32.mxu0 %v8885
  %8995 = vmatmul.mubr.f32.gmra.mrb[0].mxu0 %v8831
  %v8996 = vpop.f32.mrb[0].mxu0
  %v8997 = vadd.f32 0.0, %v8996
  %v8998 = vpop.f32.mrb[0].mxu0
  %8999 = vmatprep.mubr.f32.mxu0 %v8887
  %9000 = vmatmul.mubr.f32.gmra.mrb[0].mxu0 %v8833
  %v9001 = vpop.f32.mrb[0].mxu0
  %v9002 = vadd.f32 0.0, %v9001
  %v9003 = vpop.f32.mrb[0].mxu0
  %9004 = vmatprep.mubr.f32.mxu0 %v8889
  %9005 = vmatmul.mubr.f32.gmra.mrb[0].mxu0 %v8835
  %v9006 = vpop.f32.mrb[0].mxu0
  %v9007 = vadd.f32 0.0, %v9006
  %v9008 = vpop.f32.mrb[0].mxu0
  %9009 = vmatprep.mubr.f32.mxu0 %v8891
  %9010 = vmatmul.mubr.f32.gmra.mrb[0].mxu0 %v8837
  %v9011 = vpop.f32.mrb[0].mxu0
  %v9012 = vadd.f32 0.0, %v9011
  %v9013 = vpop.f32.mrb[0].mxu0
  %9014 = vmatprep.mubr.f32.mxu0 %v8893
  %9015 = vmatmul.mubr.f32.gmra.mrb[0].mxu0 %v8839
  %v9016 = vpop.f32.mrb[0].mxu0
  %v9017 = vadd.f32 0.0, %v9016
  %v9018 = vpop.f32.mrb[0].mxu0
  %9019 = vmatprep.mubr.f32.mxu0 %v8895
  %9020 = vmatmul.mubr.f32.gmra.mrb[0].mxu0 %v8841
  %v9021 = vpop.f32.mrb[0].mxu0
  %v9022 = vadd.f32 0.0, %v9021
  %v9023 = vpop.f32.mrb[0].mxu0
  %9024 = vmatprep.mubr.f32.mxu0 %v8897
  %9025 = vmatmul.mubr.f32.gmra.mrb[0].mxu0 %v8843
  %v9026 = vpop.f32.mrb[0].mxu0
  %v9027 = vadd.f32 0.0, %v9026
  %v9028 = vpop.f32.mrb[0].mxu0
  %9029 = vmatprep.mubr.f32.mxu0 %v8899
  %9030 = vmatmul.mubr.f32.gmra.mrb[0].mxu0 %v8845
  %v9031 = vpop.f32.mrb[0].mxu0
  %v9032 = vadd.f32 0.0, %v9031
  %v9033 = vpop.f32.mrb[0].mxu0
  %9034 = vmatprep.mubr.f32.mxu0 %v8901
  %9035 = vmatmul.mubr.f32.gmra.mrb[0].mxu0 %v8847
  %v9036 = vpop.f32.mrb[0].mxu0
  %v9037 = vadd.f32 0.0, %v9036
  %v9038 = vpop.f32.mrb[0].mxu0
  %9039 = vmatprep.mubr.f32.mxu0 %v8903
  %9040 = vmatmul.mubr.f32.gmra.mrb[0].mxu0 %v8849
  %v9041 = vpop.f32.mrb[0].mxu0
  %v9042 = vadd.f32 0.0, %v9041
  %v9043 = vpop.f32.mrb[0].mxu0
  %9044 = vmatprep.mubr.f32.mxu0 %v8905
  %9045 = vmatmul.mubr.f32.gmra.mrb[0].mxu0 %v8851
  %v9046 = vpop.f32.mrb[0].mxu0
  %v9047 = vadd.f32 0.0, %v9046
  %v9048 = vpop.f32.mrb[0].mxu0
  %9049 = vmatprep.mubr.f32.mxu0 %v8907
  %9050 = vmatmul.mubr.f32.gmra.mrb[0].mxu0 %v8853
  %v9051 = vpop.f32.mrb[0].mxu0
  %v9052 = vadd.f32 0.0, %v9051
  %v9053 = vpop.f32.mrb[0].mxu0
  %9054 = vmatprep.mubr.f32.mxu0 %v8909
  %9055 = vmatmul.mubr.f32.gmra.mrb[0].mxu0 %v8855
  %v9056 = vpop.f32.mrb[0].mxu0
  %v9057 = vadd.f32 0.0, %v9056
  %v9058 = vpop.f32.mrb[0].mxu0
  %9059 = vmatprep.mubr.f32.mxu0 %v8911
  %9060 = vmatmul.mubr.f32.gmra.mrb[0].mxu0 %v8857
  %v9061 = vpop.f32.mrb[0].mxu0
  %v9062 = vadd.f32 0.0, %v9061
  %v9063 = vpop.f32.mrb[0].mxu0
  %9064 = vmatprep.mubr.f32.mxu0 %v8913
  %9065 = vmatmul.mubr.f32.gmra.mrb[0].mxu0 %v8859
  %v9066 = vpop.f32.mrb[0].mxu0
  %v9067 = vadd.f32 0.0, %v9066
  %v9068 = vpop.f32.mrb[0].mxu0
  %9069 = vdwg.mxu0
  %v9070 = vld [vmem:[%s4] sm:$0x1]
  %v9072 = vsel %vm2946, %v9070, 0
  %v9075 = vsel %vm2946, %v8982, 0
  %v9078 = vsel %vm2946, %v8987, 0
  %v9081 = vsel %vm2946, %v8992, 0
  %v9084 = vsel %vm2946, %v8997, 0
  %v9087 = vsel %vm2946, %v9002, 0
  %v9090 = vsel %vm2946, %v9007, 0
  %v9093 = vsel %vm2946, %v9012, 0
  %v9096 = vsel %vm2946, %v9017, 0
  %v9099 = vsel %vm2946, %v9022, 0
  %v9102 = vsel %vm2946, %v9027, 0
  %v9105 = vsel %vm2946, %v9032, 0
  %v9108 = vsel %vm2946, %v9037, 0
  %v9111 = vsel %vm2946, %v9042, 0
  %v9114 = vsel %vm2946, %v9047, 0
  %v9117 = vsel %vm2946, %v9052, 0
  %v9120 = vsel %vm2946, %v9057, 0
  %v9123 = vsel %vm2946, %v9062, 0
  %v9126 = vsel %vm2946, %v9067, 0
  %9128 = vmatprep.subr.mxu0 0.0
  %9129 = vmatpush1.xpose.msra.mxu0 %v9075
  %9130 = vmatprep.subr.mxu0 0.0
  %9131 = vmatpush1.xpose.msra.mxu0 %v9078
  %9132 = vmatprep.subr.mxu0 0.0
  %9133 = vmatpush1.xpose.msra.mxu0 %v9081
  %9134 = vmatprep.subr.mxu0 0.0
  %9135 = vmatpush1.xpose.msra.mxu0 %v9084
  %9136 = vmatprep.subr.mxu0 0.0
  %9137 = vmatpush1.xpose.msra.mxu0 %v9087
  %9138 = vmatprep.subr.mxu0 0.0
  %9139 = vmatpush1.xpose.msra.mxu0 %v9090
  %9140 = vmatprep.subr.mxu0 0.0
  %9141 = vmatpush1.xpose.msra.mxu0 %v9093
  %9142 = vmatprep.subr.mxu0 0.0
  %9143 = vmatpush1.xpose.msra.mxu0 %v9096
  %9144 = vmatprep.subr.mxu0 0.0
  %9145 = vmatpush1.xpose.msra.mxu0 %v9099
  %9146 = vmatprep.subr.mxu0 0.0
  %9147 = vmatpush1.xpose.msra.mxu0 %v9102
  %9148 = vmatprep.subr.mxu0 0.0
  %9149 = vmatpush1.xpose.msra.mxu0 %v9105
  %9150 = vmatprep.subr.mxu0 0.0
  %9151 = vmatpush1.xpose.msra.mxu0 %v9108
  %9152 = vmatprep.subr.mxu0 0.0
  %9153 = vmatpush1.xpose.msra.mxu0 %v9111
  %9154 = vmatprep.subr.mxu0 0.0
  %9155 = vmatpush1.xpose.msra.mxu0 %v9114
  %9156 = vmatprep.subr.mxu0 0.0
  %9157 = vmatpush1.xpose.msra.mxu0 %v9117
  %9158 = vmatprep.subr.mxu0 0.0
  %9159 = vmatpush1.xpose.msra.mxu0 %v9120
  %9160 = vmatprep.subr.mxu0 0.0
  %9161 = vmatpush1.xpose.msra.mxu0 %v9123
  %9162 = vmatprep.subr.mxu0 0.0
  %9163 = vmatpush1.xpose.msra.mxu0 %v9126
  %9164 = vmatprep.subr.mxu0 0.0
  %9165 = vmatpush1.xpose.msra.mxu0 0.0
  %9166 = vmatprep.subr.mxu0 0.0
  %9167 = vmatpush1.xpose.msra.mxu0 0.0
  %9168 = vmatprep.subr.mxu0 0.0
  %9169 = vmatpush1.xpose.msra.mxu0 0.0
  %9170 = vmatprep.subr.mxu0 0.0
  %9171 = vmatpush1.xpose.msra.mxu0 0.0
  %9172 = vmatprep.subr.mxu0 0.0
  %9173 = vmatpush1.xpose.msra.mxu0 0.0
  %9174 = vmatprep.subr.mxu0 0.0
  %9175 = vmatpush1.xpose.msra.mxu0 0.0
  %9176 = vmatprep.subr.mxu0 0.0
  %9177 = vmatpush1.xpose.msra.mxu0 0.0
  %9178 = vmatprep.subr.mxu0 0.0
  %9179 = vmatpush1.xpose.msra.mxu0 0.0
  %9180 = vmatprep.subr.mxu0 0.0
  %9181 = vmatpush1.xpose.msra.mxu0 0.0
  %9182 = vmatprep.subr.mxu0 0.0
  %9183 = vmatpush1.xpose.msra.mxu0 0.0
  %9184 = vmatprep.subr.mxu0 0.0
  %9185 = vmatpush1.xpose.msra.mxu0 0.0
  %9186 = vmatprep.subr.mxu0 0.0
  %9187 = vmatpush1.xpose.msra.mxu0 0.0
  %9188 = vmatprep.subr.mxu0 0.0
  %9189 = vmatpush1.xpose.msra.mxu0 0.0
  %9190 = vmatprep.subr.mxu0 0.0
  %9191 = vmatpush1.xpose.msra.mxu0 0.0
  %9192 = vmatprep.mubr.f32.mxu0 0.0
  %9193 = vmatmul.mubr.f32.gmra.mrb[0].mxu0 %v9072
  %v9194 = vpop.f32.mrb[0].mxu0
  %v9195 = vadd.f32 0.0, %v9194
  %v9196 = vpop.f32.mrb[0].mxu0
  %v9197 = vadd.f32 0.0, %v9196
  %9198 = vdwg.mxu0
  %v9201 = vcombine.low %v9195, %v9197
  %v9203 = vunpack.c.l.s4 1966171168
  %v9204 = vunpack.c.0.s8 %v9203
  %v9205 = vlaneseq
  %v9206 = vshrl.u32 %v9205, 7
  %v9207 = vsub.s32 %v9204, %v9206
  %v9208 = vrot.slane %v9201, %v9207
  %v9210 = vunpack.c.l.s4 1966171168
  %v9211 = vunpack.c.0.s8 %v9210
  %v9212 = vlaneseq
  %v9213 = vshrl.u32 %v9212, 7
  %v9214 = vsub.s32 %v9211, %v9213
  %v9215 = vrot.slane %v9208, %v9214
  %v9217 = vlaneseq
  %vm9218 = vcmp.ge.s32.totalorder %v9217, 0
  %vm9219 = vcmp.lt.s32.totalorder %v9217, 144
  %vm9220 = vmand %vm9218, %vm9219
  %9221 = vst.msk [vmem:[%s5] sm:$0x3] %vm9220, %v9215
  // Predicated region
  $region22: #{_generator_forward.1} parent=0 // pred_check
    _
  $region23: #{_generator_forward.1} parent=0 // pred_check_branch
    %9223 = sbr.rel (0) target = $region25
  $region24: #{_generator_forward.1} parent=0 // pred_region
    _
  $region25: #{_generator_forward.1} parent=0 // pred_fallthru
    _
  // Predicated region
  $region26: #{_generator_forward.1} parent=0 // pred_check
    _
  $region27: #{_generator_forward.1} parent=0 // pred_check_branch
    %9225 = sbr.rel (0) target = $region29
  $region28: #{_generator_forward.1} parent=0 // pred_region
    _
  $region29: #{_generator_forward.1} parent=0 // pred_fallthru
    _

</llo_original>
